<compile_context>
chip_gen: v5e
topology: v5e:2x2
jax: 0.10.0
libtpu: 0.0.40
codegen_flags: <defaults>
</compile_context>

<pallas_src>
import jax
import jax.numpy as jnp
from jax.experimental import pallas as pl
from jax.experimental.pallas import tpu as pltpu

LANE = 128


def _pick_tile(n, max_tile):
    """Largest tile <= max_tile that evenly divides n (keeps blocks exact, no OOB masking)."""
    if n <= max_tile:
        return n
    for t in range(max_tile, 0, -1):
        if n % t == 0:
            return t
    return n


def mm_head(vit_pooled, deberta_lasthid, t5_lasthid, params, *, batch_tile=128, seq_tile=128):
    """Pallas fusion-head forward of MM: mean-pool(deberta/t5), relu(trans1/2/3),
    concat+relu(lin1) (as split matmul), out."""
    B = vit_pooled.shape[0]
    S = deberta_lasthid.shape[1]
    n_out = params["wo"].shape[-1]
    n_out_pad = max(LANE, ((n_out + LANE - 1) // LANE) * LANE)

    TB = _pick_tile(B, batch_tile)
    TS = _pick_tile(S, seq_tile)
    n_b = B // TB
    n_s = S // TS

    # Lane-dense classifier head: pad wo/bo to a multiple of 128 once, slice result outside.
    wo = jnp.pad(params["wo"], ((0, 0), (0, n_out_pad - n_out)))
    bo = jnp.pad(params["bo"], ((0, 0), (0, n_out_pad - n_out)))

    f32 = jnp.float32
    bf16 = jnp.bfloat16
    inv_s = 1.0 / float(S)  # fold the mean's 1/S once into the pooled sums

    def kernel(vit_ref, deb_ref, t5_ref,
               w1_ref, b1_ref, w2_ref, b2_ref, w3_ref, b3_ref,
               wl1_ref, wl2_ref, wl3_ref, bl_ref, wo_ref, bo_ref,
               out_ref, deb_acc, t5_acc):
        s = pl.program_id(1)

        @pl.when(s == 0)
        def _():
            deb_acc[...] = jnp.zeros_like(deb_acc)
            t5_acc[...] = jnp.zeros_like(t5_acc)

        # Partial sums over this S tile (f32 accumulation for the mean-pool).
        deb_acc[...] += jnp.sum(deb_ref[...].astype(f32), axis=1)
        t5_acc[...] += jnp.sum(t5_ref[...].astype(f32), axis=1)

        @pl.when(s == n_s - 1)
        def _():
            # Finalize means; cast activations to bf16 for native-MXU matmuls (f32 accumulate).
            vit_p = vit_ref[...].astype(bf16)                       # [TB, 768]
            deb_p = (deb_acc[...] * inv_s).astype(bf16)             # [TB, 1536]
            t5_p = (t5_acc[...] * inv_s).astype(bf16)               # [TB, 1024]

            # trans1/2/3 + ReLU
            vit_mm = jnp.maximum(
                jnp.dot(vit_p, w1_ref[...], preferred_element_type=f32) + b1_ref[...], 0.0)
            deb_mm = jnp.maximum(
                jnp.dot(deb_p, w2_ref[...], preferred_element_type=f32) + b2_ref[...], 0.0)
            t5_mm = jnp.maximum(
                jnp.dot(t5_p, w3_ref[...], preferred_element_type=f32) + b3_ref[...], 0.0)

            # fused = concat([vit_mm, deb_mm, t5_mm]); out1 = relu(lin1(fused))
            # implemented as the equivalent split matmul (no in-kernel concatenate).
            out1 = (
                jnp.dot(vit_mm.astype(bf16), wl1_ref[...], preferred_element_type=f32)
                + jnp.dot(deb_mm.astype(bf16), wl2_ref[...], preferred_element_type=f32)
                + jnp.dot(t5_mm.astype(bf16), wl3_ref[...], preferred_element_type=f32)
                + bl_ref[...])
            out1 = jnp.maximum(out1, 0.0)

            # final classifier head (lane-dense padded width)
            out = jnp.dot(out1.astype(bf16), wo_ref[...], preferred_element_type=f32) + bo_ref[...]
            out_ref[...] = out.astype(out_ref.dtype)

    # Weights/biases stay VMEM-resident across the whole grid (block index always (0, 0)).
    in_specs = [
        pl.BlockSpec((TB, 768), lambda b, s: (b, 0)),           # vit_pooled
        pl.BlockSpec((TB, TS, 1536), lambda b, s: (b, s, 0)),   # deberta hidden
        pl.BlockSpec((TB, TS, 1024), lambda b, s: (b, s, 0)),   # t5 hidden
        pl.BlockSpec((768, 512), lambda b, s: (0, 0)),          # w1
        pl.BlockSpec((1, 512), lambda b, s: (0, 0)),            # b1
        pl.BlockSpec((1536, 512), lambda b, s: (0, 0)),         # w2
        pl.BlockSpec((1, 512), lambda b, s: (0, 0)),            # b2
        pl.BlockSpec((1024, 512), lambda b, s: (0, 0)),         # w3
        pl.BlockSpec((1, 512), lambda b, s: (0, 0)),            # b3
        pl.BlockSpec((512, 512), lambda b, s: (0, 0)),          # wl1
        pl.BlockSpec((512, 512), lambda b, s: (0, 0)),          # wl2
        pl.BlockSpec((512, 512), lambda b, s: (0, 0)),          # wl3
        pl.BlockSpec((1, 512), lambda b, s: (0, 0)),            # bl
        pl.BlockSpec((512, n_out_pad), lambda b, s: (0, 0)),    # wo (padded)
        pl.BlockSpec((1, n_out_pad), lambda b, s: (0, 0)),      # bo (padded)
    ]
    out_spec = pl.BlockSpec((TB, n_out_pad), lambda b, s: (b, 0))

    args = (
        vit_pooled, deberta_lasthid, t5_lasthid,
        params["w1"], params["b1"], params["w2"], params["b2"],
        params["w3"], params["b3"],
        params["wl1"], params["wl2"], params["wl3"], params["bl"],
        wo, bo,
    )

    # Advisory cost estimate so XLA schedules the surrounding graph sensibly.
    nbytes = lambda a: a.size * a.dtype.itemsize
    flops = 2 * B * (768 * 512 + 1536 * 512 + 1024 * 512 + 3 * 512 * 512 + 512 * n_out_pad)
    flops += B * S * (1536 + 1024)  # mean-pool adds
    bytes_accessed = sum(nbytes(a) for a in args) + B * n_out_pad * 4
    cost = pl.CostEstimate(flops=flops, transcendentals=0, bytes_accessed=bytes_accessed)

    out_padded = pl.pallas_call(
        kernel,
        out_shape=jax.ShapeDtypeStruct((B, n_out_pad), jnp.float32),
        grid_spec=pltpu.PrefetchScalarGridSpec(
            num_scalar_prefetch=0,
            grid=(n_b, n_s),
            in_specs=in_specs,
            out_specs=out_spec,
            scratch_shapes=[
                pltpu.VMEM((TB, 1536), jnp.float32),  # deberta pooled-sum accumulator
                pltpu.VMEM((TB, 1024), jnp.float32),  # t5 pooled-sum accumulator
            ],
        ),
        compiler_params=pltpu.CompilerParams(
            dimension_semantics=("parallel", "arbitrary"),
            vmem_limit_bytes=32 << 20,  # fits v5e/v6e/v7x; actual footprint ~6 MB of bf16 weights
        ),
        cost_estimate=cost,
    )(*args)

    return out_padded[:, :n_out]


def init_params(key, n_out):
    """Deterministic init matching MM.__init__ layer shapes.
    Weights stored [in, out] in bfloat16 (halves HBM traffic; MXU-native); biases f32."""
    ks = jax.random.split(key, 10)

    def lin(kw, kb, fan_in, fan_out):
        bound = 1.0 / (fan_in ** 0.5)
        w = jax.random.uniform(kw, (fan_in, fan_out), jnp.float32, -bound, bound)
        b = jax.random.uniform(kb, (1, fan_out), jnp.float32, -bound, bound)
        return w.astype(jnp.bfloat16), b

    w1, b1 = lin(ks[0], ks[1], 768, 512)     # trans1
    w2, b2 = lin(ks[2], ks[3], 1536, 512)    # trans2
    w3, b3 = lin(ks[4], ks[5], 1024, 512)    # trans3
    wl, bl = lin(ks[6], ks[7], 1536, 512)    # lin1
    wo, bo = lin(ks[8], ks[9], 512, n_out)   # out

    return {
        "w1": w1, "b1": b1,
        "w2": w2, "b2": b2,
        "w3": w3, "b3": b3,
        "wl1": wl[:512], "wl2": wl[512:1024], "wl3": wl[1024:], "bl": bl,
        "wo": wo, "bo": bo,
    }


def reference(vit_pooled, deberta_lasthid, t5_lasthid, p):
    """Pure-JAX f32 reference of the same head (bf16 weights upcast) for a sanity check."""
    f32 = jnp.float32
    relu = lambda x: jnp.maximum(x, 0.0)
    w = lambda k: p[k].astype(f32)
    deb_pooled = jnp.mean(deberta_lasthid, axis=1)
    t5_pooled = jnp.mean(t5_lasthid, axis=1)
    vit_mm = relu(vit_pooled @ w("w1") + p["b1"])
    dberta_mm = relu(deb_pooled @ w("w2") + p["b2"])
    t5_mm = relu(t5_pooled @ w("w3") + p["b3"])
    fused = jnp.concatenate([vit_mm, dberta_mm, t5_mm], axis=1)
    wl = jnp.concatenate([w("wl1"), w("wl2"), w("wl3")], axis=0)
    out1 = relu(fused @ wl + p["bl"])
    return out1 @ w("wo") + p["bo"]


if __name__ == "__main__":
    # TODO(synk): the pretrained ViT / DeBERTa-v2 / T5 backbones (and the returned
    # T5_output / deBERTa loss) have no clean Pallas equivalent; their pooled/last-hidden
    # outputs are synthesized here and the fusion head is what the kernel implements.
    B, S, N_OUT = 2, 8, 8

    key = jax.random.PRNGKey(0)
    k_in, k_p = jax.random.split(key)
    k1, k2, k3 = jax.random.split(k_in, 3)

    vit_pooled = jax.random.normal(k1, (B, 768), jnp.float32)           # ViT pooler_output
    deberta_lasthid = jax.random.normal(k2, (B, S, 1536), jnp.float32)  # DeBERTa hidden_states[-1]
    t5_lasthid = jax.random.normal(k3, (B, S, 1024), jnp.float32)       # T5 decoder_hidden_states[-1]

    params = init_params(k_p, N_OUT)

    out = mm_head(vit_pooled, deberta_lasthid, t5_lasthid, params)
    out = jax.block_until_ready(out)

    ref = reference(vit_pooled, deberta_lasthid, t5_lasthid, params)
    assert out.shape == (B, N_OUT), f"bad shape {out.shape}"
    # bf16-activation matmuls vs f32 reference: expect ~1% relative error.
    rel_err = float(jnp.max(jnp.abs(out - ref)) / (jnp.max(jnp.abs(ref)) + 1e-6))
    assert rel_err < 2e-2, f"mismatch vs reference, rel_err={rel_err}"

    print("KERNEL_OK")
</pallas_src>

<mosaic_0001>
module attributes {stable_mosaic.version = 11 : i64} {
  func.func @kernel(%arg0: i32, %arg1: i32, %arg2: memref<2x768xf32, #tpu.memory_space<vmem>>, %arg3: memref<2x8x1536xf32, #tpu.memory_space<vmem>>, %arg4: memref<2x8x1024xf32, #tpu.memory_space<vmem>>, %arg5: memref<768x512xbf16, #tpu.memory_space<vmem>>, %arg6: memref<1x512xf32, #tpu.memory_space<vmem>>, %arg7: memref<1536x512xbf16, #tpu.memory_space<vmem>>, %arg8: memref<1x512xf32, #tpu.memory_space<vmem>>, %arg9: memref<1024x512xbf16, #tpu.memory_space<vmem>>, %arg10: memref<1x512xf32, #tpu.memory_space<vmem>>, %arg11: memref<512x512xbf16, #tpu.memory_space<vmem>>, %arg12: memref<512x512xbf16, #tpu.memory_space<vmem>>, %arg13: memref<512x512xbf16, #tpu.memory_space<vmem>>, %arg14: memref<1x512xf32, #tpu.memory_space<vmem>>, %arg15: memref<512x128xbf16, #tpu.memory_space<vmem>>, %arg16: memref<1x128xf32, #tpu.memory_space<vmem>>, %arg17: memref<2x128xf32, #tpu.memory_space<vmem>>, %arg18: memref<2x1536xf32, #tpu.memory_space<vmem>>, %arg19: memref<2x1024xf32, #tpu.memory_space<vmem>>) attributes {dimension_semantics = [#tpu.dimension_semantics<parallel>, #tpu.dimension_semantics<arbitrary>], iteration_bounds = array<i64: 1, 1>, scalar_prefetch = 0 : i64, scratch_operands = 2 : i64, tpu.core_type = #tpu.core_type<tc>, window_params = [{transform_indices = @transform_0, window_bounds = array<i64: 2, 768>}, {transform_indices = @transform_1, window_bounds = array<i64: 2, 8, 1536>}, {transform_indices = @transform_2, window_bounds = array<i64: 2, 8, 1024>}, {pipeline_mode = #tpu.pipeline_mode<synchronous>, transform_indices = @transform_3, window_bounds = array<i64: 768, 512>}, {pipeline_mode = #tpu.pipeline_mode<synchronous>, transform_indices = @transform_4, window_bounds = array<i64: 1, 512>}, {pipeline_mode = #tpu.pipeline_mode<synchronous>, transform_indices = @transform_5, window_bounds = array<i64: 1536, 512>}, {pipeline_mode = #tpu.pipeline_mode<synchronous>, transform_indices = @transform_6, window_bounds = array<i64: 1, 512>}, {pipeline_mode = #tpu.pipeline_mode<synchronous>, transform_indices = @transform_7, window_bounds = array<i64: 1024, 512>}, {pipeline_mode = #tpu.pipeline_mode<synchronous>, transform_indices = @transform_8, window_bounds = array<i64: 1, 512>}, {pipeline_mode = #tpu.pipeline_mode<synchronous>, transform_indices = @transform_9, window_bounds = array<i64: 512, 512>}, {pipeline_mode = #tpu.pipeline_mode<synchronous>, transform_indices = @transform_10, window_bounds = array<i64: 512, 512>}, {pipeline_mode = #tpu.pipeline_mode<synchronous>, transform_indices = @transform_11, window_bounds = array<i64: 512, 512>}, {pipeline_mode = #tpu.pipeline_mode<synchronous>, transform_indices = @transform_12, window_bounds = array<i64: 1, 512>}, {pipeline_mode = #tpu.pipeline_mode<synchronous>, transform_indices = @transform_13, window_bounds = array<i64: 512, 128>}, {pipeline_mode = #tpu.pipeline_mode<synchronous>, transform_indices = @transform_14, window_bounds = array<i64: 1, 128>}, {transform_indices = @transform_15, window_bounds = array<i64: 2, 128>}]} {
    %c0_i32 = arith.constant 0 : i32
    %0 = arith.cmpi eq, %arg1, %c0_i32 : i32
    %1 = arith.extui %0 : i1 to i32
    %c0_i32_0 = arith.constant 0 : i32
    %2 = arith.cmpi ne, %1, %c0_i32_0 : i32
    scf.if %2 {
      %cst_17 = arith.constant 0.000000e+00 : f32
      %16 = vector.broadcast %cst_17 : f32 to vector<2x1536xf32>
      %c0_18 = arith.constant 0 : index
      %c0_19 = arith.constant 0 : index
      %17 = vector.load %arg18[%c0_18, %c0_19] : memref<2x1536xf32, #tpu.memory_space<vmem>>, vector<2x1536xf32>
      tpu.vector_store %arg18[%c0_18, %c0_19], %16 {strides = array<i32>} : memref<2x1536xf32, #tpu.memory_space<vmem>>, vector<2x1536xf32>,
      %cst_20 = arith.constant 0.000000e+00 : f32
      %18 = vector.broadcast %cst_20 : f32 to vector<2x1024xf32>
      %c0_21 = arith.constant 0 : index
      %c0_22 = arith.constant 0 : index
      %19 = vector.load %arg19[%c0_21, %c0_22] : memref<2x1024xf32, #tpu.memory_space<vmem>>, vector<2x1024xf32>
      tpu.vector_store %arg19[%c0_21, %c0_22], %18 {strides = array<i32>} : memref<2x1024xf32, #tpu.memory_space<vmem>>, vector<2x1024xf32>,
    } else {
    }
    %c0 = arith.constant 0 : index
    %c0_1 = arith.constant 0 : index
    %3 = vector.load %arg18[%c0, %c0_1] : memref<2x1536xf32, #tpu.memory_space<vmem>>, vector<2x1536xf32>
    %c0_2 = arith.constant 0 : index
    %c0_3 = arith.constant 0 : index
    %c0_4 = arith.constant 0 : index
    %4 = vector.load %arg3[%c0_2, %c0_3, %c0_4] : memref<2x8x1536xf32, #tpu.memory_space<vmem>>, vector<2x8x1536xf32>
    %cst = arith.constant dense<0.000000e+00> : vector<2x1536xf32>
    %5 = vector.multi_reduction <add>, %4, %cst [1] : vector<2x8x1536xf32> to vector<2x1536xf32>
    %6 = arith.addf %3, %5 : vector<2x1536xf32>
    %c0_5 = arith.constant 0 : index
    %c0_6 = arith.constant 0 : index
    %7 = vector.load %arg18[%c0_5, %c0_6] : memref<2x1536xf32, #tpu.memory_space<vmem>>, vector<2x1536xf32>
    tpu.vector_store %arg18[%c0_5, %c0_6], %6 {strides = array<i32>} : memref<2x1536xf32, #tpu.memory_space<vmem>>, vector<2x1536xf32>,
    %c0_7 = arith.constant 0 : index
    %c0_8 = arith.constant 0 : index
    %8 = vector.load %arg19[%c0_7, %c0_8] : memref<2x1024xf32, #tpu.memory_space<vmem>>, vector<2x1024xf32>
    %c0_9 = arith.constant 0 : index
    %c0_10 = arith.constant 0 : index
    %c0_11 = arith.constant 0 : index
    %9 = vector.load %arg4[%c0_9, %c0_10, %c0_11] : memref<2x8x1024xf32, #tpu.memory_space<vmem>>, vector<2x8x1024xf32>
    %cst_12 = arith.constant dense<0.000000e+00> : vector<2x1024xf32>
    %10 = vector.multi_reduction <add>, %9, %cst_12 [1] : vector<2x8x1024xf32> to vector<2x1024xf32>
    %11 = arith.addf %8, %10 : vector<2x1024xf32>
    %c0_13 = arith.constant 0 : index
    %c0_14 = arith.constant 0 : index
    %12 = vector.load %arg19[%c0_13, %c0_14] : memref<2x1024xf32, #tpu.memory_space<vmem>>, vector<2x1024xf32>
    tpu.vector_store %arg19[%c0_13, %c0_14], %11 {strides = array<i32>} : memref<2x1024xf32, #tpu.memory_space<vmem>>, vector<2x1024xf32>,
    %c0_i32_15 = arith.constant 0 : i32
    %13 = arith.cmpi eq, %arg1, %c0_i32_15 : i32
    %14 = arith.extui %13 : i1 to i32
    %c0_i32_16 = arith.constant 0 : i32
    %15 = arith.cmpi ne, %14, %c0_i32_16 : i32
    scf.if %15 {
      %c0_17 = arith.constant 0 : index
      %c0_18 = arith.constant 0 : index
      %16 = vector.load %arg2[%c0_17, %c0_18] : memref<2x768xf32, #tpu.memory_space<vmem>>, vector<2x768xf32>
      %17 = arith.truncf %16 : vector<2x768xf32> to vector<2x768xbf16>
      %c0_19 = arith.constant 0 : index
      %c0_20 = arith.constant 0 : index
      %18 = vector.load %arg18[%c0_19, %c0_20] : memref<2x1536xf32, #tpu.memory_space<vmem>>, vector<2x1536xf32>
      %cst_21 = arith.constant 1.250000e-01 : f32
      %19 = vector.broadcast %cst_21 : f32 to vector<2x1536xf32>
      %20 = arith.mulf %18, %19 : vector<2x1536xf32>
      %21 = arith.truncf %20 : vector<2x1536xf32> to vector<2x1536xbf16>
      %c0_22 = arith.constant 0 : index
      %c0_23 = arith.constant 0 : index
      %22 = vector.load %arg19[%c0_22, %c0_23] : memref<2x1024xf32, #tpu.memory_space<vmem>>, vector<2x1024xf32>
      %cst_24 = arith.constant 1.250000e-01 : f32
      %23 = vector.broadcast %cst_24 : f32 to vector<2x1024xf32>
      %24 = arith.mulf %22, %23 : vector<2x1024xf32>
      %25 = arith.truncf %24 : vector<2x1024xf32> to vector<2x1024xbf16>
      %c0_25 = arith.constant 0 : index
      %c0_26 = arith.constant 0 : index
      %26 = vector.load %arg5[%c0_25, %c0_26] : memref<768x512xbf16, #tpu.memory_space<vmem>>, vector<768x512xbf16>
      %cst_27 = arith.constant dense<0.000000e+00> : vector<2x512xf32>
      %27 = tpu.matmul %17, %26, %cst_27 {dimension_numbers = #tpu.dot_dimension_numbers<[1], [0], [0], [1], [0, 0, 1, 1], [], []>} : vector<2x768xbf16>, vector<768x512xbf16>, vector<2x512xf32> -> vector<2x512xf32>
      %c0_28 = arith.constant 0 : index
      %c0_29 = arith.constant 0 : index
      %28 = vector.load %arg6[%c0_28, %c0_29] : memref<1x512xf32, #tpu.memory_space<vmem>>, vector<1x512xf32>
      %29 = vector.broadcast %28 : vector<1x512xf32> to vector<2x512xf32>
      %30 = arith.addf %27, %29 : vector<2x512xf32>
      %cst_30 = arith.constant 0.000000e+00 : f32
      %31 = vector.broadcast %cst_30 : f32 to vector<2x512xf32>
      %32 = arith.maximumf %30, %31 : vector<2x512xf32>
      %c0_31 = arith.constant 0 : index
      %c0_32 = arith.constant 0 : index
      %33 = vector.load %arg7[%c0_31, %c0_32] : memref<1536x512xbf16, #tpu.memory_space<vmem>>, vector<1536x512xbf16>
      %cst_33 = arith.constant dense<0.000000e+00> : vector<2x512xf32>
      %34 = tpu.matmul %21, %33, %cst_33 {dimension_numbers = #tpu.dot_dimension_numbers<[1], [0], [0], [1], [0, 0, 1, 1], [], []>} : vector<2x1536xbf16>, vector<1536x512xbf16>, vector<2x512xf32> -> vector<2x512xf32>
      %c0_34 = arith.constant 0 : index
      %c0_35 = arith.constant 0 : index
      %35 = vector.load %arg8[%c0_34, %c0_35] : memref<1x512xf32, #tpu.memory_space<vmem>>, vector<1x512xf32>
      %36 = vector.broadcast %35 : vector<1x512xf32> to vector<2x512xf32>
      %37 = arith.addf %34, %36 : vector<2x512xf32>
      %cst_36 = arith.constant 0.000000e+00 : f32
      %38 = vector.broadcast %cst_36 : f32 to vector<2x512xf32>
      %39 = arith.maximumf %37, %38 : vector<2x512xf32>
      %c0_37 = arith.constant 0 : index
      %c0_38 = arith.constant 0 : index
      %40 = vector.load %arg9[%c0_37, %c0_38] : memref<1024x512xbf16, #tpu.memory_space<vmem>>, vector<1024x512xbf16>
      %cst_39 = arith.constant dense<0.000000e+00> : vector<2x512xf32>
      %41 = tpu.matmul %25, %40, %cst_39 {dimension_numbers = #tpu.dot_dimension_numbers<[1], [0], [0], [1], [0, 0, 1, 1], [], []>} : vector<2x1024xbf16>, vector<1024x512xbf16>, vector<2x512xf32> -> vector<2x512xf32>
      %c0_40 = arith.constant 0 : index
      %c0_41 = arith.constant 0 : index
      %42 = vector.load %arg10[%c0_40, %c0_41] : memref<1x512xf32, #tpu.memory_space<vmem>>, vector<1x512xf32>
      %43 = vector.broadcast %42 : vector<1x512xf32> to vector<2x512xf32>
      %44 = arith.addf %41, %43 : vector<2x512xf32>
      %cst_42 = arith.constant 0.000000e+00 : f32
      %45 = vector.broadcast %cst_42 : f32 to vector<2x512xf32>
      %46 = arith.maximumf %44, %45 : vector<2x512xf32>
      %47 = arith.truncf %32 : vector<2x512xf32> to vector<2x512xbf16>
      %c0_43 = arith.constant 0 : index
      %c0_44 = arith.constant 0 : index
      %48 = vector.load %arg11[%c0_43, %c0_44] : memref<512x512xbf16, #tpu.memory_space<vmem>>, vector<512x512xbf16>
      %cst_45 = arith.constant dense<0.000000e+00> : vector<2x512xf32>
      %49 = tpu.matmul %47, %48, %cst_45 {dimension_numbers = #tpu.dot_dimension_numbers<[1], [0], [0], [1], [0, 0, 1, 1], [], []>} : vector<2x512xbf16>, vector<512x512xbf16>, vector<2x512xf32> -> vector<2x512xf32>
      %50 = arith.truncf %39 : vector<2x512xf32> to vector<2x512xbf16>
      %c0_46 = arith.constant 0 : index
      %c0_47 = arith.constant 0 : index
      %51 = vector.load %arg12[%c0_46, %c0_47] : memref<512x512xbf16, #tpu.memory_space<vmem>>, vector<512x512xbf16>
      %cst_48 = arith.constant dense<0.000000e+00> : vector<2x512xf32>
      %52 = tpu.matmul %50, %51, %cst_48 {dimension_numbers = #tpu.dot_dimension_numbers<[1], [0], [0], [1], [0, 0, 1, 1], [], []>} : vector<2x512xbf16>, vector<512x512xbf16>, vector<2x512xf32> -> vector<2x512xf32>
      %53 = arith.addf %49, %52 : vector<2x512xf32>
      %54 = arith.truncf %46 : vector<2x512xf32> to vector<2x512xbf16>
      %c0_49 = arith.constant 0 : index
      %c0_50 = arith.constant 0 : index
      %55 = vector.load %arg13[%c0_49, %c0_50] : memref<512x512xbf16, #tpu.memory_space<vmem>>, vector<512x512xbf16>
      %cst_51 = arith.constant dense<0.000000e+00> : vector<2x512xf32>
      %56 = tpu.matmul %54, %55, %cst_51 {dimension_numbers = #tpu.dot_dimension_numbers<[1], [0], [0], [1], [0, 0, 1, 1], [], []>} : vector<2x512xbf16>, vector<512x512xbf16>, vector<2x512xf32> -> vector<2x512xf32>
      %57 = arith.addf %53, %56 : vector<2x512xf32>
      %c0_52 = arith.constant 0 : index
      %c0_53 = arith.constant 0 : index
      %58 = vector.load %arg14[%c0_52, %c0_53] : memref<1x512xf32, #tpu.memory_space<vmem>>, vector<1x512xf32>
      %59 = vector.broadcast %58 : vector<1x512xf32> to vector<2x512xf32>
      %60 = arith.addf %57, %59 : vector<2x512xf32>
      %cst_54 = arith.constant 0.000000e+00 : f32
      %61 = vector.broadcast %cst_54 : f32 to vector<2x512xf32>
      %62 = arith.maximumf %60, %61 : vector<2x512xf32>
      %63 = arith.truncf %62 : vector<2x512xf32> to vector<2x512xbf16>
      %c0_55 = arith.constant 0 : index
      %c0_56 = arith.constant 0 : index
      %64 = vector.load %arg15[%c0_55, %c0_56] : memref<512x128xbf16, #tpu.memory_space<vmem>>, vector<512x128xbf16>
      %cst_57 = arith.constant dense<0.000000e+00> : vector<2x128xf32>
      %65 = tpu.matmul %63, %64, %cst_57 {dimension_numbers = #tpu.dot_dimension_numbers<[1], [0], [0], [1], [0, 0, 1, 1], [], []>} : vector<2x512xbf16>, vector<512x128xbf16>, vector<2x128xf32> -> vector<2x128xf32>
      %c0_58 = arith.constant 0 : index
      %c0_59 = arith.constant 0 : index
      %66 = vector.load %arg16[%c0_58, %c0_59] : memref<1x128xf32, #tpu.memory_space<vmem>>, vector<1x128xf32>
      %67 = vector.broadcast %66 : vector<1x128xf32> to vector<2x128xf32>
      %68 = arith.addf %65, %67 : vector<2x128xf32>
      %c0_60 = arith.constant 0 : index
      %c0_61 = arith.constant 0 : index
      %69 = vector.load %arg17[%c0_60, %c0_61] : memref<2x128xf32, #tpu.memory_space<vmem>>, vector<2x128xf32>
      tpu.vector_store %arg17[%c0_60, %c0_61], %68 {strides = array<i32>} : memref<2x128xf32, #tpu.memory_space<vmem>>, vector<2x128xf32>,
    } else {
    }
    return
  }
  func.func @transform_0(%arg0: i32, %arg1: i32) -> (i32, i32) {
    %c0_i32 = arith.constant 0 : i32
    %c0_i32_0 = arith.constant 0 : i32
    return %arg0, %c0_i32 : i32, i32
  }
  func.func @transform_1(%arg0: i32, %arg1: i32) -> (i32, i32, i32) {
    %c0_i32 = arith.constant 0 : i32
    %c0_i32_0 = arith.constant 0 : i32
    return %arg0, %arg1, %c0_i32 : i32, i32, i32
  }
  func.func @transform_2(%arg0: i32, %arg1: i32) -> (i32, i32, i32) {
    %c0_i32 = arith.constant 0 : i32
    %c0_i32_0 = arith.constant 0 : i32
    return %arg0, %arg1, %c0_i32 : i32, i32, i32
  }
  func.func @transform_3(%arg0: i32, %arg1: i32) -> (i32, i32) {
    %c0_i32 = arith.constant 0 : i32
    %c0_i32_0 = arith.constant 0 : i32
    %c0_i32_1 = arith.constant 0 : i32
    return %c0_i32, %c0_i32_0 : i32, i32
  }
  func.func @transform_4(%arg0: i32, %arg1: i32) -> (i32, i32) {
    %c0_i32 = arith.constant 0 : i32
    %c0_i32_0 = arith.constant 0 : i32
    %c0_i32_1 = arith.constant 0 : i32
    return %c0_i32, %c0_i32_0 : i32, i32
  }
  func.func @transform_5(%arg0: i32, %arg1: i32) -> (i32, i32) {
    %c0_i32 = arith.constant 0 : i32
    %c0_i32_0 = arith.constant 0 : i32
    %c0_i32_1 = arith.constant 0 : i32
    return %c0_i32, %c0_i32_0 : i32, i32
  }
  func.func @transform_6(%arg0: i32, %arg1: i32) -> (i32, i32) {
    %c0_i32 = arith.constant 0 : i32
    %c0_i32_0 = arith.constant 0 : i32
    %c0_i32_1 = arith.constant 0 : i32
    return %c0_i32, %c0_i32_0 : i32, i32
  }
  func.func @transform_7(%arg0: i32, %arg1: i32) -> (i32, i32) {
    %c0_i32 = arith.constant 0 : i32
    %c0_i32_0 = arith.constant 0 : i32
    %c0_i32_1 = arith.constant 0 : i32
    return %c0_i32, %c0_i32_0 : i32, i32
  }
  func.func @transform_8(%arg0: i32, %arg1: i32) -> (i32, i32) {
    %c0_i32 = arith.constant 0 : i32
    %c0_i32_0 = arith.constant 0 : i32
    %c0_i32_1 = arith.constant 0 : i32
    return %c0_i32, %c0_i32_0 : i32, i32
  }
  func.func @transform_9(%arg0: i32, %arg1: i32) -> (i32, i32) {
    %c0_i32 = arith.constant 0 : i32
    %c0_i32_0 = arith.constant 0 : i32
    %c0_i32_1 = arith.constant 0 : i32
    return %c0_i32, %c0_i32_0 : i32, i32
  }
  func.func @transform_10(%arg0: i32, %arg1: i32) -> (i32, i32) {
    %c0_i32 = arith.constant 0 : i32
    %c0_i32_0 = arith.constant 0 : i32
    %c0_i32_1 = arith.constant 0 : i32
    return %c0_i32, %c0_i32_0 : i32, i32
  }
  func.func @transform_11(%arg0: i32, %arg1: i32) -> (i32, i32) {
    %c0_i32 = arith.constant 0 : i32
    %c0_i32_0 = arith.constant 0 : i32
    %c0_i32_1 = arith.constant 0 : i32
    return %c0_i32, %c0_i32_0 : i32, i32
  }
  func.func @transform_12(%arg0: i32, %arg1: i32) -> (i32, i32) {
    %c0_i32 = arith.constant 0 : i32
    %c0_i32_0 = arith.constant 0 : i32
    %c0_i32_1 = arith.constant 0 : i32
    return %c0_i32, %c0_i32_0 : i32, i32
  }
  func.func @transform_13(%arg0: i32, %arg1: i32) -> (i32, i32) {
    %c0_i32 = arith.constant 0 : i32
    %c0_i32_0 = arith.constant 0 : i32
    %c0_i32_1 = arith.constant 0 : i32
    return %c0_i32, %c0_i32_0 : i32, i32
  }
  func.func @transform_14(%arg0: i32, %arg1: i32) -> (i32, i32) {
    %c0_i32 = arith.constant 0 : i32
    %c0_i32_0 = arith.constant 0 : i32
    %c0_i32_1 = arith.constant 0 : i32
    return %c0_i32, %c0_i32_0 : i32, i32
  }
  func.func @transform_15(%arg0: i32, %arg1: i32) -> (i32, i32) {
    %c0_i32 = arith.constant 0 : i32
    %c0_i32_0 = arith.constant 0 : i32
    return %arg0, %c0_i32 : i32, i32
  }
}

</mosaic_0001>

<llo_original>
// kernel: tpu_custom_call.1
$region0: #{tpu_custom_call.1}
  #allocation0 [shape = 'u32[]', space=smem, size = 0x4, offset = 0x4, fixed_abs, tag = 'smem constant byte address 0x4 - core index']
  #allocation1 [shape = 'u32[72,128]{1,0:T(1,128)}', space=vmem, size = 0x9000, scoped, tag = 'internal scratch']
  #allocation2 [shape = 'f32[2,1536]{1,0:T(2,128)}', space=vmem, size = 0x3000, scoped, tag = 'scratch operand']
  #allocation3 [shape = 'f32[2,1024]{1,0:T(2,128)}', space=vmem, size = 0x2000, scoped, tag = 'scratch operand']
  %s0 = inlined_call_operand.hbm [shape: f32[2,768], index: 0, kind: input, shape index: {}]
  %s1 = inlined_call_operand.hbm [shape: f32[2,8,1536], index: 1, kind: input, shape index: {}]
  %s2 = inlined_call_operand.hbm [shape: f32[2,8,1024], index: 2, kind: input, shape index: {}]
  %s3 = inlined_call_operand.hbm [shape: bf16[768,512], index: 3, kind: input, shape index: {}]
  %s4 = inlined_call_operand.hbm [shape: f32[1,512], index: 4, kind: input, shape index: {}]
  %s5 = inlined_call_operand.hbm [shape: bf16[1536,512], index: 5, kind: input, shape index: {}]
  %s6 = inlined_call_operand.hbm [shape: f32[1,512], index: 6, kind: input, shape index: {}]
  %s7 = inlined_call_operand.hbm [shape: bf16[1024,512], index: 7, kind: input, shape index: {}]
  %s8 = inlined_call_operand.hbm [shape: f32[1,512], index: 8, kind: input, shape index: {}]
  %s9 = inlined_call_operand.hbm [shape: bf16[512,512], index: 9, kind: input, shape index: {}]
  %s10 = inlined_call_operand.hbm [shape: bf16[512,512], index: 10, kind: input, shape index: {}]
  %s11 = inlined_call_operand.hbm [shape: bf16[512,512], index: 11, kind: input, shape index: {}]
  %s12 = inlined_call_operand.hbm [shape: f32[1,512], index: 12, kind: input, shape index: {}]
  %s13 = inlined_call_operand.hbm [shape: bf16[512,128], index: 13, kind: input, shape index: {}]
  %s14 = inlined_call_operand.hbm [shape: f32[1,128], index: 14, kind: input, shape index: {}]
  %s15 = inlined_call_operand.hbm [shape: f32[2,128], index: 15, kind: output, shape index: {}]
  %s16 = sld [smem:[#allocation0]]
  $region138: #{tpu_custom_call.1} parent=0
    _
  %s18 = ssub.s32 1, %s16
  %s19 = scalar_select 0, %s18, %s16
  $region1: #{tpu_custom_call.1} parent=0
    #allocation4 [shape = 'u8[6144]{0}', space=vmem, size = 0x1800, scoped, tag = 'input window, operand 0, single buffered']
    #allocation5 [shape = 's32[1]{0}', space=sflag, size = 0x4, scoped, tag = 'scoped memory for tpu_custom_call.1']
    #allocation6 [shape = 's32[1]{0}', space=sflag, size = 0x4, scoped, tag = 'scoped memory for tpu_custom_call.1']
    #allocation7 [shape = 'u8[98304]{0}', space=vmem, size = 0x18000, scoped, tag = 'input window, operand 1, single buffered']
    #allocation8 [shape = 's32[1]{0}', space=sflag, size = 0x4, scoped, tag = 'scoped memory for tpu_custom_call.1']
    #allocation9 [shape = 'u8[65536]{0}', space=vmem, size = 0x10000, scoped, tag = 'input window, operand 2, single buffered']
    #allocation10 [shape = 'u8[786432]{0}', space=vmem, size = 0xc0000, scoped, tag = 'input window, operand 3, single buffered']
    #allocation11 [shape = 's32[1]{0}', space=sflag, size = 0x4, scoped, tag = 'scoped memory for tpu_custom_call.1']
    #allocation12 [shape = 'u8[2048]{0}', space=vmem, size = 0x800, scoped, tag = 'input window, operand 4, single buffered']
    #allocation13 [shape = 'u8[1572864]{0}', space=vmem, size = 0x180000, scoped, tag = 'input window, operand 5, single buffered']
    #allocation14 [shape = 's32[1]{0}', space=sflag, size = 0x4, scoped, tag = 'scoped memory for tpu_custom_call.1']
    #allocation15 [shape = 'u8[2048]{0}', space=vmem, size = 0x800, scoped, tag = 'input window, operand 6, single buffered']
    #allocation16 [shape = 'u8[1048576]{0}', space=vmem, size = 0x100000, scoped, tag = 'input window, operand 7, single buffered']
    #allocation17 [shape = 's32[1]{0}', space=sflag, size = 0x4, scoped, tag = 'scoped memory for tpu_custom_call.1']
    #allocation18 [shape = 'u8[2048]{0}', space=vmem, size = 0x800, scoped, tag = 'input window, operand 8, single buffered']
    #allocation19 [shape = 'u8[524288]{0}', space=vmem, size = 0x80000, scoped, tag = 'input window, operand 9, single buffered']
    #allocation20 [shape = 's32[1]{0}', space=sflag, size = 0x4, scoped, tag = 'scoped memory for tpu_custom_call.1']
    #allocation21 [shape = 'u8[524288]{0}', space=vmem, size = 0x80000, scoped, tag = 'input window, operand 10, single buffered']
    #allocation22 [shape = 'u8[524288]{0}', space=vmem, size = 0x80000, scoped, tag = 'input window, operand 11, single buffered']
    #allocation23 [shape = 's32[1]{0}', space=sflag, size = 0x4, scoped, tag = 'scoped memory for tpu_custom_call.1']
    #allocation24 [shape = 'u8[2048]{0}', space=vmem, size = 0x800, scoped, tag = 'input window, operand 12, single buffered']
    #allocation25 [shape = 'u8[131072]{0}', space=vmem, size = 0x20000, scoped, tag = 'input window, operand 13, single buffered']
    #allocation26 [shape = 's32[1]{0}', space=sflag, size = 0x4, scoped, tag = 'scoped memory for tpu_custom_call.1']
    #allocation27 [shape = 'u8[512]{0}', space=vmem, size = 0x400, scoped, tag = 'input window, operand 14, single buffered']
    #allocation28 [shape = 'u8[1024]{0}', space=vmem, size = 0x400, scoped, tag = 'output window, operand 0, single buffered']
    %20 = vsyncpa [#allocation5], 0
    %21 = vsyncpa [#allocation8], 0
    %22 = vsyncpa [#allocation11], 0
    %23 = vsyncpa [#allocation14], 0
    %24 = vsyncpa [#allocation17], 0
    %25 = vsyncpa [#allocation20], 0
    %26 = vsyncpa [#allocation23], 0
    %27 = vsyncpa [#allocation26], 0
    %28 = vsyncpa [#allocation6], 0
    // Predicated region
    $region2: #{tpu_custom_call.1} parent=1 // pred_check
      _
    $region3: #{tpu_custom_call.1} parent=1 // pred_check_branch
      %30 = sbr.rel (0) target = $region5
    $region4: #{tpu_custom_call.1} parent=1 // pred_region
      %32 = vsyncadd [#allocation5], 0
      %s34 = sshll.u32 %s0, 4
      %s35 = int_to_ptr.hbm [resolvable:$true] %s34
      %s36 = sshll.u32 [#allocation4], 4
      %s37 = int_to_ptr.vmem [resolvable:$true] %s36
      %39 = dma.hbm_to_vmem [thread:$0]  %s35, 192, %s37, [#allocation5]
    $region5: #{tpu_custom_call.1} parent=1 // pred_fallthru
      _
    // Predicated region
    $region6: #{tpu_custom_call.1} parent=1 // pred_check
      _
    $region7: #{tpu_custom_call.1} parent=1 // pred_check_branch
      %41 = sbr.rel (0) target = $region9
    $region8: #{tpu_custom_call.1} parent=1 // pred_region
      %43 = vsyncadd [#allocation8], 0
      %s44 = sshll.u32 %s1, 4
      %s45 = int_to_ptr.hbm [resolvable:$true] %s44
      %s46 = sshll.u32 [#allocation7], 4
      %s47 = int_to_ptr.vmem [resolvable:$true] %s46
      %52 = dma.hbm_to_vmem [thread:$0]  %s45, 3072, %s47, [#allocation8], 1536, 1536, 96
    $region9: #{tpu_custom_call.1} parent=1 // pred_fallthru
      _
    // Predicated region
    $region10: #{tpu_custom_call.1} parent=1 // pred_check
      _
    $region11: #{tpu_custom_call.1} parent=1 // pred_check_branch
      %54 = sbr.rel (0) target = $region13
    $region12: #{tpu_custom_call.1} parent=1 // pred_region
      %56 = vsyncadd [#allocation8], 0
      %s57 = sshll.u32 %s2, 4
      %s58 = int_to_ptr.hbm [resolvable:$true] %s57
      %s59 = sshll.u32 [#allocation9], 4
      %s60 = int_to_ptr.vmem [resolvable:$true] %s59
      %65 = dma.hbm_to_vmem [thread:$0]  %s58, 2048, %s60, [#allocation8], 1024, 1024, 64
    $region13: #{tpu_custom_call.1} parent=1 // pred_fallthru
      _
    // Predicated region
    $region14: #{tpu_custom_call.1} parent=1 // pred_check
      _
    $region15: #{tpu_custom_call.1} parent=1 // pred_check_branch
      %67 = sbr.rel (0) target = $region17
    $region16: #{tpu_custom_call.1} parent=1 // pred_region
      %69 = vsyncadd [#allocation11], 0
      %s70 = sshll.u32 %s3, 4
      %s71 = int_to_ptr.hbm [resolvable:$true] %s70
      %s72 = sshll.u32 [#allocation10], 4
      %s73 = int_to_ptr.vmem [resolvable:$true] %s72
      %78 = dma.hbm_to_vmem [thread:$0]  %s71, 24576, %s73, [#allocation11], 256, 256, 16
    $region17: #{tpu_custom_call.1} parent=1 // pred_fallthru
      _
    // Predicated region
    $region18: #{tpu_custom_call.1} parent=1 // pred_check
      _
    $region19: #{tpu_custom_call.1} parent=1 // pred_check_branch
      %80 = sbr.rel (0) target = $region21
    $region20: #{tpu_custom_call.1} parent=1 // pred_region
      %82 = vsyncadd [#allocation11], 0
      %s84 = sshll.u32 %s4, 4
      %s85 = int_to_ptr.hbm [resolvable:$true] %s84
      %s86 = sshll.u32 [#allocation12], 4
      %s87 = int_to_ptr.vmem [resolvable:$true] %s86
      %89 = dma.hbm_to_vmem [thread:$0]  %s85, 64, %s87, [#allocation11]
    $region21: #{tpu_custom_call.1} parent=1 // pred_fallthru
      _
    // Predicated region
    $region22: #{tpu_custom_call.1} parent=1 // pred_check
      _
    $region23: #{tpu_custom_call.1} parent=1 // pred_check_branch
      %91 = sbr.rel (0) target = $region25
    $region24: #{tpu_custom_call.1} parent=1 // pred_region
      %93 = vsyncadd [#allocation14], 0
      %s94 = sshll.u32 %s5, 4
      %s95 = int_to_ptr.hbm [resolvable:$true] %s94
      %s96 = sshll.u32 [#allocation13], 4
      %s97 = int_to_ptr.vmem [resolvable:$true] %s96
      %102 = dma.hbm_to_vmem [thread:$0]  %s95, 49152, %s97, [#allocation14], 256, 256, 16
    $region25: #{tpu_custom_call.1} parent=1 // pred_fallthru
      _
    // Predicated region
    $region26: #{tpu_custom_call.1} parent=1 // pred_check
      _
    $region27: #{tpu_custom_call.1} parent=1 // pred_check_branch
      %104 = sbr.rel (0) target = $region29
    $region28: #{tpu_custom_call.1} parent=1 // pred_region
      %106 = vsyncadd [#allocation14], 0
      %s108 = sshll.u32 %s6, 4
      %s109 = int_to_ptr.hbm [resolvable:$true] %s108
      %s110 = sshll.u32 [#allocation15], 4
      %s111 = int_to_ptr.vmem [resolvable:$true] %s110
      %113 = dma.hbm_to_vmem [thread:$0]  %s109, 64, %s111, [#allocation14]
    $region29: #{tpu_custom_call.1} parent=1 // pred_fallthru
      _
    // Predicated region
    $region30: #{tpu_custom_call.1} parent=1 // pred_check
      _
    $region31: #{tpu_custom_call.1} parent=1 // pred_check_branch
      %115 = sbr.rel (0) target = $region33
    $region32: #{tpu_custom_call.1} parent=1 // pred_region
      %117 = vsyncadd [#allocation17], 0
      %s118 = sshll.u32 %s7, 4
      %s119 = int_to_ptr.hbm [resolvable:$true] %s118
      %s120 = sshll.u32 [#allocation16], 4
      %s121 = int_to_ptr.vmem [resolvable:$true] %s120
      %126 = dma.hbm_to_vmem [thread:$0]  %s119, 32768, %s121, [#allocation17], 256, 256, 16
    $region33: #{tpu_custom_call.1} parent=1 // pred_fallthru
      _
    // Predicated region
    $region34: #{tpu_custom_call.1} parent=1 // pred_check
      _
    $region35: #{tpu_custom_call.1} parent=1 // pred_check_branch
      %128 = sbr.rel (0) target = $region37
    $region36: #{tpu_custom_call.1} parent=1 // pred_region
      %130 = vsyncadd [#allocation17], 0
      %s132 = sshll.u32 %s8, 4
      %s133 = int_to_ptr.hbm [resolvable:$true] %s132
      %s134 = sshll.u32 [#allocation18], 4
      %s135 = int_to_ptr.vmem [resolvable:$true] %s134
      %137 = dma.hbm_to_vmem [thread:$0]  %s133, 64, %s135, [#allocation17]
    $region37: #{tpu_custom_call.1} parent=1 // pred_fallthru
      _
    // Predicated region
    $region38: #{tpu_custom_call.1} parent=1 // pred_check
      _
    $region39: #{tpu_custom_call.1} parent=1 // pred_check_branch
      %139 = sbr.rel (0) target = $region41
    $region40: #{tpu_custom_call.1} parent=1 // pred_region
      %141 = vsyncadd [#allocation20], 0
      %s142 = sshll.u32 %s9, 4
      %s143 = int_to_ptr.hbm [resolvable:$true] %s142
      %s144 = sshll.u32 [#allocation19], 4
      %s145 = int_to_ptr.vmem [resolvable:$true] %s144
      %150 = dma.hbm_to_vmem [thread:$0]  %s143, 16384, %s145, [#allocation20], 256, 256, 16
    $region41: #{tpu_custom_call.1} parent=1 // pred_fallthru
      _
    // Predicated region
    $region42: #{tpu_custom_call.1} parent=1 // pred_check
      _
    $region43: #{tpu_custom_call.1} parent=1 // pred_check_branch
      %152 = sbr.rel (0) target = $region45
    $region44: #{tpu_custom_call.1} parent=1 // pred_region
      %154 = vsyncadd [#allocation20], 0
      %s155 = sshll.u32 %s10, 4
      %s156 = int_to_ptr.hbm [resolvable:$true] %s155
      %s157 = sshll.u32 [#allocation21], 4
      %s158 = int_to_ptr.vmem [resolvable:$true] %s157
      %163 = dma.hbm_to_vmem [thread:$0]  %s156, 16384, %s158, [#allocation20], 256, 256, 16
    $region45: #{tpu_custom_call.1} parent=1 // pred_fallthru
      _
    // Predicated region
    $region46: #{tpu_custom_call.1} parent=1 // pred_check
      _
    $region47: #{tpu_custom_call.1} parent=1 // pred_check_branch
      %165 = sbr.rel (0) target = $region49
    $region48: #{tpu_custom_call.1} parent=1 // pred_region
      %167 = vsyncadd [#allocation23], 0
      %s168 = sshll.u32 %s11, 4
      %s169 = int_to_ptr.hbm [resolvable:$true] %s168
      %s170 = sshll.u32 [#allocation22], 4
      %s171 = int_to_ptr.vmem [resolvable:$true] %s170
      %176 = dma.hbm_to_vmem [thread:$0]  %s169, 16384, %s171, [#allocation23], 256, 256, 16
    $region49: #{tpu_custom_call.1} parent=1 // pred_fallthru
      _
    // Predicated region
    $region50: #{tpu_custom_call.1} parent=1 // pred_check
      _
    $region51: #{tpu_custom_call.1} parent=1 // pred_check_branch
      %178 = sbr.rel (0) target = $region53
    $region52: #{tpu_custom_call.1} parent=1 // pred_region
      %180 = vsyncadd [#allocation23], 0
      %s182 = sshll.u32 %s12, 4
      %s183 = int_to_ptr.hbm [resolvable:$true] %s182
      %s184 = sshll.u32 [#allocation24], 4
      %s185 = int_to_ptr.vmem [resolvable:$true] %s184
      %187 = dma.hbm_to_vmem [thread:$0]  %s183, 64, %s185, [#allocation23]
    $region53: #{tpu_custom_call.1} parent=1 // pred_fallthru
      _
    // Predicated region
    $region54: #{tpu_custom_call.1} parent=1 // pred_check
      _
    $region55: #{tpu_custom_call.1} parent=1 // pred_check_branch
      %189 = sbr.rel (0) target = $region57
    $region56: #{tpu_custom_call.1} parent=1 // pred_region
      %191 = vsyncadd [#allocation26], 0
      %s192 = sshll.u32 %s13, 4
      %s193 = int_to_ptr.hbm [resolvable:$true] %s192
      %s194 = sshll.u32 [#allocation25], 4
      %s195 = int_to_ptr.vmem [resolvable:$true] %s194
      %200 = dma.hbm_to_vmem [thread:$0]  %s193, 4096, %s195, [#allocation26], 64, 64, 4
    $region57: #{tpu_custom_call.1} parent=1 // pred_fallthru
      _
    // Predicated region
    $region58: #{tpu_custom_call.1} parent=1 // pred_check
      _
    $region59: #{tpu_custom_call.1} parent=1 // pred_check_branch
      %202 = sbr.rel (0) target = $region61
    $region60: #{tpu_custom_call.1} parent=1 // pred_region
      %204 = vsyncadd [#allocation26], 0
      %s206 = sshll.u32 %s14, 4
      %s207 = int_to_ptr.hbm [resolvable:$true] %s206
      %s208 = sshll.u32 [#allocation27], 4
      %s209 = int_to_ptr.vmem [resolvable:$true] %s208
      %211 = dma.hbm_to_vmem [thread:$0]  %s207, 16, %s209, [#allocation26]
    $region61: #{tpu_custom_call.1} parent=1 // pred_fallthru
      _
    // Predicated region
    $region62: #{tpu_custom_call.1} parent=1 // pred_check
      _
    $region63: #{tpu_custom_call.1} parent=1 // pred_check_branch
      %213 = sbr.rel (0) target = $region65
    $region64: #{tpu_custom_call.1} parent=1 // pred_region
      %215 = dma.done [#allocation5], 192
    $region65: #{tpu_custom_call.1} parent=1 // pred_fallthru
      _
    // Predicated region
    $region66: #{tpu_custom_call.1} parent=1 // pred_check
      _
    $region67: #{tpu_custom_call.1} parent=1 // pred_check_branch
      %217 = sbr.rel (0) target = $region69
    $region68: #{tpu_custom_call.1} parent=1 // pred_region
      %219 = dma.done [#allocation8], 3072
    $region69: #{tpu_custom_call.1} parent=1 // pred_fallthru
      _
    // Predicated region
    $region70: #{tpu_custom_call.1} parent=1 // pred_check
      _
    $region71: #{tpu_custom_call.1} parent=1 // pred_check_branch
      %221 = sbr.rel (0) target = $region73
    $region72: #{tpu_custom_call.1} parent=1 // pred_region
      %223 = dma.done [#allocation8], 2048
    $region73: #{tpu_custom_call.1} parent=1 // pred_fallthru
      _
    // Predicated region
    $region74: #{tpu_custom_call.1} parent=1 // pred_check
      _
    $region75: #{tpu_custom_call.1} parent=1 // pred_check_branch
      %225 = sbr.rel (0) target = $region77
    $region76: #{tpu_custom_call.1} parent=1 // pred_region
      %227 = dma.done [#allocation11], 24576
    $region77: #{tpu_custom_call.1} parent=1 // pred_fallthru
      _
    // Predicated region
    $region78: #{tpu_custom_call.1} parent=1 // pred_check
      _
    $region79: #{tpu_custom_call.1} parent=1 // pred_check_branch
      %229 = sbr.rel (0) target = $region81
    $region80: #{tpu_custom_call.1} parent=1 // pred_region
      %231 = dma.done [#allocation11], 64
    $region81: #{tpu_custom_call.1} parent=1 // pred_fallthru
      _
    // Predicated region
    $region82: #{tpu_custom_call.1} parent=1 // pred_check
      _
    $region83: #{tpu_custom_call.1} parent=1 // pred_check_branch
      %233 = sbr.rel (0) target = $region85
    $region84: #{tpu_custom_call.1} parent=1 // pred_region
      %235 = dma.done [#allocation14], 49152
    $region85: #{tpu_custom_call.1} parent=1 // pred_fallthru
      _
    // Predicated region
    $region86: #{tpu_custom_call.1} parent=1 // pred_check
      _
    $region87: #{tpu_custom_call.1} parent=1 // pred_check_branch
      %237 = sbr.rel (0) target = $region89
    $region88: #{tpu_custom_call.1} parent=1 // pred_region
      %239 = dma.done [#allocation14], 64
    $region89: #{tpu_custom_call.1} parent=1 // pred_fallthru
      _
    // Predicated region
    $region90: #{tpu_custom_call.1} parent=1 // pred_check
      _
    $region91: #{tpu_custom_call.1} parent=1 // pred_check_branch
      %241 = sbr.rel (0) target = $region93
    $region92: #{tpu_custom_call.1} parent=1 // pred_region
      %243 = dma.done [#allocation17], 32768
    $region93: #{tpu_custom_call.1} parent=1 // pred_fallthru
      _
    // Predicated region
    $region94: #{tpu_custom_call.1} parent=1 // pred_check
      _
    $region95: #{tpu_custom_call.1} parent=1 // pred_check_branch
      %245 = sbr.rel (0) target = $region97
    $region96: #{tpu_custom_call.1} parent=1 // pred_region
      %247 = dma.done [#allocation17], 64
    $region97: #{tpu_custom_call.1} parent=1 // pred_fallthru
      _
    // Predicated region
    $region98: #{tpu_custom_call.1} parent=1 // pred_check
      _
    $region99: #{tpu_custom_call.1} parent=1 // pred_check_branch
      %249 = sbr.rel (0) target = $region101
    $region100: #{tpu_custom_call.1} parent=1 // pred_region
      %251 = dma.done [#allocation20], 16384
    $region101: #{tpu_custom_call.1} parent=1 // pred_fallthru
      _
    // Predicated region
    $region102: #{tpu_custom_call.1} parent=1 // pred_check
      _
    $region103: #{tpu_custom_call.1} parent=1 // pred_check_branch
      %253 = sbr.rel (0) target = $region105
    $region104: #{tpu_custom_call.1} parent=1 // pred_region
      %255 = dma.done [#allocation20], 16384
    $region105: #{tpu_custom_call.1} parent=1 // pred_fallthru
      _
    // Predicated region
    $region106: #{tpu_custom_call.1} parent=1 // pred_check
      _
    $region107: #{tpu_custom_call.1} parent=1 // pred_check_branch
      %257 = sbr.rel (0) target = $region109
    $region108: #{tpu_custom_call.1} parent=1 // pred_region
      %259 = dma.done [#allocation23], 16384
    $region109: #{tpu_custom_call.1} parent=1 // pred_fallthru
      _
    // Predicated region
    $region110: #{tpu_custom_call.1} parent=1 // pred_check
      _
    $region111: #{tpu_custom_call.1} parent=1 // pred_check_branch
      %261 = sbr.rel (0) target = $region113
    $region112: #{tpu_custom_call.1} parent=1 // pred_region
      %263 = dma.done [#allocation23], 64
    $region113: #{tpu_custom_call.1} parent=1 // pred_fallthru
      _
    // Predicated region
    $region114: #{tpu_custom_call.1} parent=1 // pred_check
      _
    $region115: #{tpu_custom_call.1} parent=1 // pred_check_branch
      %265 = sbr.rel (0) target = $region117
    $region116: #{tpu_custom_call.1} parent=1 // pred_region
      %267 = dma.done [#allocation26], 4096
    $region117: #{tpu_custom_call.1} parent=1 // pred_fallthru
      _
    // Predicated region
    $region118: #{tpu_custom_call.1} parent=1 // pred_check
      _
    $region119: #{tpu_custom_call.1} parent=1 // pred_check_branch
      %269 = sbr.rel (0) target = $region121
    $region120: #{tpu_custom_call.1} parent=1 // pred_region
      %271 = dma.done [#allocation26], 16
    $region121: #{tpu_custom_call.1} parent=1 // pred_fallthru
      _
    %p272 = scmp.eq.s32.totalorder 0, 0
    // Predicated region
    $region122: #{tpu_custom_call.1} parent=1 // pred_check
      %p273 = pneg %p272
    $region123: #{tpu_custom_call.1} parent=1 // pred_check_branch
      %275 = sbr.rel (%p273) target = $region125
    $region124: #{tpu_custom_call.1} parent=1 // pred_region
      %276 = vst [vmem:[#allocation2] sm:$0xff] 0.0
      %277 = vst [vmem:[#allocation2 + $0x8] sm:$0xff] 0.0
      %278 = vst [vmem:[#allocation2 + $0x10] sm:$0xff] 0.0
      %279 = vst [vmem:[#allocation3] sm:$0xff] 0.0
      %280 = vst [vmem:[#allocation3 + $0x8] sm:$0xff] 0.0
    $region125: #{tpu_custom_call.1} parent=1 // pred_fallthru
      _
    %v281 = vld [vmem:[#allocation2] sm:$0xff]
    %v282 = vld [vmem:[#allocation2 + $0x8] sm:$0xff]
    %v283 = vld [vmem:[#allocation2 + $0x10] sm:$0xff]
    %v284 = vld [vmem:[#allocation7] sm:$0xff]
    %v285 = vld [vmem:[#allocation7 + $0x8] sm:$0xff]
    %v286 = vld [vmem:[#allocation7 + $0x10] sm:$0xff]
    %v287 = vld [vmem:[#allocation7 + $0x18] sm:$0xff]
    %v288 = vld [vmem:[#allocation7 + $0x20] sm:$0xff]
    %v289 = vld [vmem:[#allocation7 + $0x28] sm:$0xff]
    %v290 = vld [vmem:[#allocation7 + $0x30] sm:$0xff]
    %v291 = vld [vmem:[#allocation7 + $0x38] sm:$0xff]
    %v292 = vld [vmem:[#allocation7 + $0x40] sm:$0xff]
    %v293 = vld [vmem:[#allocation7 + $0x48] sm:$0xff]
    %v294 = vld [vmem:[#allocation7 + $0x50] sm:$0xff]
    %v295 = vld [vmem:[#allocation7 + $0x58] sm:$0xff]
    %v296 = vld [vmem:[#allocation7 + $0x60] sm:$0xff]
    %v297 = vld [vmem:[#allocation7 + $0x68] sm:$0xff]
    %v298 = vld [vmem:[#allocation7 + $0x70] sm:$0xff]
    %v299 = vld [vmem:[#allocation7 + $0x78] sm:$0xff]
    %v300 = vld [vmem:[#allocation7 + $0x80] sm:$0xff]
    %v301 = vld [vmem:[#allocation7 + $0x88] sm:$0xff]
    %v302 = vld [vmem:[#allocation7 + $0x90] sm:$0xff]
    %v303 = vld [vmem:[#allocation7 + $0x98] sm:$0xff]
    %v304 = vld [vmem:[#allocation7 + $0xa0] sm:$0xff]
    %v305 = vld [vmem:[#allocation7 + $0xa8] sm:$0xff]
    %v306 = vld [vmem:[#allocation7 + $0xb0] sm:$0xff]
    %v307 = vld [vmem:[#allocation7 + $0xb8] sm:$0xff]
    %v308 = vrot.slane %v284, 4
    %v309 = vadd.f32 %v284, %v308
    %v310 = vrot.slane %v309, 2
    %v311 = vadd.f32 %v309, %v310
    %v312 = vrot.slane %v311, 1
    %v313 = vadd.f32 %v311, %v312
    %v314 = vrot.slane %v285, 4
    %v315 = vadd.f32 %v285, %v314
    %v316 = vrot.slane %v315, 2
    %v317 = vadd.f32 %v315, %v316
    %v318 = vrot.slane %v317, 1
    %v319 = vadd.f32 %v317, %v318
    %v320 = vrot.slane %v286, 4
    %v321 = vadd.f32 %v286, %v320
    %v322 = vrot.slane %v321, 2
    %v323 = vadd.f32 %v321, %v322
    %v324 = vrot.slane %v323, 1
    %v325 = vadd.f32 %v323, %v324
    %v326 = vrot.slane %v287, 4
    %v327 = vadd.f32 %v287, %v326
    %v328 = vrot.slane %v327, 2
    %v329 = vadd.f32 %v327, %v328
    %v330 = vrot.slane %v329, 1
    %v331 = vadd.f32 %v329, %v330
    %v332 = vrot.slane %v288, 4
    %v333 = vadd.f32 %v288, %v332
    %v334 = vrot.slane %v333, 2
    %v335 = vadd.f32 %v333, %v334
    %v336 = vrot.slane %v335, 1
    %v337 = vadd.f32 %v335, %v336
    %v338 = vrot.slane %v289, 4
    %v339 = vadd.f32 %v289, %v338
    %v340 = vrot.slane %v339, 2
    %v341 = vadd.f32 %v339, %v340
    %v342 = vrot.slane %v341, 1
    %v343 = vadd.f32 %v341, %v342
    %v344 = vrot.slane %v290, 4
    %v345 = vadd.f32 %v290, %v344
    %v346 = vrot.slane %v345, 2
    %v347 = vadd.f32 %v345, %v346
    %v348 = vrot.slane %v347, 1
    %v349 = vadd.f32 %v347, %v348
    %v350 = vrot.slane %v291, 4
    %v351 = vadd.f32 %v291, %v350
    %v352 = vrot.slane %v351, 2
    %v353 = vadd.f32 %v351, %v352
    %v354 = vrot.slane %v353, 1
    %v355 = vadd.f32 %v353, %v354
    %v356 = vrot.slane %v292, 4
    %v357 = vadd.f32 %v292, %v356
    %v358 = vrot.slane %v357, 2
    %v359 = vadd.f32 %v357, %v358
    %v360 = vrot.slane %v359, 1
    %v361 = vadd.f32 %v359, %v360
    %v362 = vrot.slane %v293, 4
    %v363 = vadd.f32 %v293, %v362
    %v364 = vrot.slane %v363, 2
    %v365 = vadd.f32 %v363, %v364
    %v366 = vrot.slane %v365, 1
    %v367 = vadd.f32 %v365, %v366
    %v368 = vrot.slane %v294, 4
    %v369 = vadd.f32 %v294, %v368
    %v370 = vrot.slane %v369, 2
    %v371 = vadd.f32 %v369, %v370
    %v372 = vrot.slane %v371, 1
    %v373 = vadd.f32 %v371, %v372
    %v374 = vrot.slane %v295, 4
    %v375 = vadd.f32 %v295, %v374
    %v376 = vrot.slane %v375, 2
    %v377 = vadd.f32 %v375, %v376
    %v378 = vrot.slane %v377, 1
    %v379 = vadd.f32 %v377, %v378
    %v380 = vrot.slane %v296, 4
    %v381 = vadd.f32 %v296, %v380
    %v382 = vrot.slane %v381, 2
    %v383 = vadd.f32 %v381, %v382
    %v384 = vrot.slane %v383, 1
    %v385 = vadd.f32 %v383, %v384
    %v386 = vrot.slane %v297, 4
    %v387 = vadd.f32 %v297, %v386
    %v388 = vrot.slane %v387, 2
    %v389 = vadd.f32 %v387, %v388
    %v390 = vrot.slane %v389, 1
    %v391 = vadd.f32 %v389, %v390
    %v392 = vrot.slane %v298, 4
    %v393 = vadd.f32 %v298, %v392
    %v394 = vrot.slane %v393, 2
    %v395 = vadd.f32 %v393, %v394
    %v396 = vrot.slane %v395, 1
    %v397 = vadd.f32 %v395, %v396
    %v398 = vrot.slane %v299, 4
    %v399 = vadd.f32 %v299, %v398
    %v400 = vrot.slane %v399, 2
    %v401 = vadd.f32 %v399, %v400
    %v402 = vrot.slane %v401, 1
    %v403 = vadd.f32 %v401, %v402
    %v404 = vrot.slane %v300, 4
    %v405 = vadd.f32 %v300, %v404
    %v406 = vrot.slane %v405, 2
    %v407 = vadd.f32 %v405, %v406
    %v408 = vrot.slane %v407, 1
    %v409 = vadd.f32 %v407, %v408
    %v410 = vrot.slane %v301, 4
    %v411 = vadd.f32 %v301, %v410
    %v412 = vrot.slane %v411, 2
    %v413 = vadd.f32 %v411, %v412
    %v414 = vrot.slane %v413, 1
    %v415 = vadd.f32 %v413, %v414
    %v416 = vrot.slane %v302, 4
    %v417 = vadd.f32 %v302, %v416
    %v418 = vrot.slane %v417, 2
    %v419 = vadd.f32 %v417, %v418
    %v420 = vrot.slane %v419, 1
    %v421 = vadd.f32 %v419, %v420
    %v422 = vrot.slane %v303, 4
    %v423 = vadd.f32 %v303, %v422
    %v424 = vrot.slane %v423, 2
    %v425 = vadd.f32 %v423, %v424
    %v426 = vrot.slane %v425, 1
    %v427 = vadd.f32 %v425, %v426
    %v428 = vrot.slane %v304, 4
    %v429 = vadd.f32 %v304, %v428
    %v430 = vrot.slane %v429, 2
    %v431 = vadd.f32 %v429, %v430
    %v432 = vrot.slane %v431, 1
    %v433 = vadd.f32 %v431, %v432
    %v434 = vrot.slane %v305, 4
    %v435 = vadd.f32 %v305, %v434
    %v436 = vrot.slane %v435, 2
    %v437 = vadd.f32 %v435, %v436
    %v438 = vrot.slane %v437, 1
    %v439 = vadd.f32 %v437, %v438
    %v440 = vrot.slane %v306, 4
    %v441 = vadd.f32 %v306, %v440
    %v442 = vrot.slane %v441, 2
    %v443 = vadd.f32 %v441, %v442
    %v444 = vrot.slane %v443, 1
    %v445 = vadd.f32 %v443, %v444
    %v446 = vrot.slane %v307, 4
    %v447 = vadd.f32 %v307, %v446
    %v448 = vrot.slane %v447, 2
    %v449 = vadd.f32 %v447, %v448
    %v450 = vrot.slane %v449, 1
    %v451 = vadd.f32 %v449, %v450
    %v476 = vrot.slane %v319, 6
    %v477 = vrot.slane %v325, 4
    %v478 = vrot.slane %v331, 2
    %v479 = vrot.slane %v343, 6
    %v480 = vrot.slane %v349, 4
    %v481 = vrot.slane %v355, 2
    %v482 = vrot.slane %v367, 6
    %v483 = vrot.slane %v373, 4
    %v484 = vrot.slane %v379, 2
    %v485 = vrot.slane %v391, 6
    %v486 = vrot.slane %v397, 4
    %v487 = vrot.slane %v403, 2
    %v488 = vrot.slane %v415, 6
    %v489 = vrot.slane %v421, 4
    %v490 = vrot.slane %v427, 2
    %v491 = vrot.slane %v439, 6
    %v492 = vrot.slane %v445, 4
    %v493 = vrot.slane %v451, 2
    %vm494 = vcmask 1041408
    %v495 = vsel %vm494, %v313, %v476
    %vm496 = vcmask 1045508
    %v497 = vsel %vm496, %v477, %v478
    %vm498 = vcmask 1043456
    %v499 = vsel %vm498, %v495, %v497
    %v500 = vsel %vm494, %v337, %v479
    %v501 = vsel %vm496, %v480, %v481
    %v502 = vsel %vm498, %v500, %v501
    %v503 = vsel %vm494, %v361, %v482
    %v504 = vsel %vm496, %v483, %v484
    %v505 = vsel %vm498, %v503, %v504
    %v506 = vsel %vm494, %v385, %v485
    %v507 = vsel %vm496, %v486, %v487
    %v508 = vsel %vm498, %v506, %v507
    %v509 = vsel %vm494, %v409, %v488
    %v510 = vsel %vm496, %v489, %v490
    %v511 = vsel %vm498, %v509, %v510
    %v512 = vsel %vm494, %v433, %v491
    %v513 = vsel %vm496, %v492, %v493
    %v514 = vsel %vm498, %v512, %v513
    %vm515 = vcmask 1044484
    %v516 = vsel %vm515, %v499, %v499
    %vm517 = vcmask 1046534
    %v518 = vsel %vm517, %v499, %v516
    %v519 = vrot.slane %v508, 7
    %vm520 = vcmask 1041409
    %v521 = vsel %vm520, %v519, %v518
    %vm522 = vcmask 1043459
    %v523 = vsel %vm522, %v519, %v521
    %vm524 = vcmask 1045509
    %v525 = vsel %vm524, %v519, %v523
    %vm526 = vcmask 1047559
    %v527 = vsel %vm526, %v519, %v525
    %v528 = vsel %vm515, %v502, %v502
    %v529 = vsel %vm517, %v502, %v528
    %v530 = vrot.slane %v511, 7
    %v531 = vsel %vm520, %v530, %v529
    %v532 = vsel %vm522, %v530, %v531
    %v533 = vsel %vm524, %v530, %v532
    %v534 = vsel %vm526, %v530, %v533
    %v535 = vsel %vm515, %v505, %v505
    %v536 = vsel %vm517, %v505, %v535
    %v537 = vrot.slane %v514, 7
    %v538 = vsel %vm520, %v537, %v536
    %v539 = vsel %vm522, %v537, %v538
    %v540 = vsel %vm524, %v537, %v539
    %v541 = vsel %vm526, %v537, %v540
    %v545 = vadd.f32 %v281, %v527
    %v546 = vadd.f32 %v282, %v534
    %v547 = vadd.f32 %v283, %v541
    %548 = vst [vmem:[#allocation2] sm:$0xff] %v545
    %549 = vst [vmem:[#allocation2 + $0x8] sm:$0xff] %v546
    %550 = vst [vmem:[#allocation2 + $0x10] sm:$0xff] %v547
    %v551 = vld [vmem:[#allocation3] sm:$0xff]
    %v552 = vld [vmem:[#allocation3 + $0x8] sm:$0xff]
    %v553 = vld [vmem:[#allocation9] sm:$0xff]
    %v554 = vld [vmem:[#allocation9 + $0x8] sm:$0xff]
    %v555 = vld [vmem:[#allocation9 + $0x10] sm:$0xff]
    %v556 = vld [vmem:[#allocation9 + $0x18] sm:$0xff]
    %v557 = vld [vmem:[#allocation9 + $0x20] sm:$0xff]
    %v558 = vld [vmem:[#allocation9 + $0x28] sm:$0xff]
    %v559 = vld [vmem:[#allocation9 + $0x30] sm:$0xff]
    %v560 = vld [vmem:[#allocation9 + $0x38] sm:$0xff]
    %v561 = vld [vmem:[#allocation9 + $0x40] sm:$0xff]
    %v562 = vld [vmem:[#allocation9 + $0x48] sm:$0xff]
    %v563 = vld [vmem:[#allocation9 + $0x50] sm:$0xff]
    %v564 = vld [vmem:[#allocation9 + $0x58] sm:$0xff]
    %v565 = vld [vmem:[#allocation9 + $0x60] sm:$0xff]
    %v566 = vld [vmem:[#allocation9 + $0x68] sm:$0xff]
    %v567 = vld [vmem:[#allocation9 + $0x70] sm:$0xff]
    %v568 = vld [vmem:[#allocation9 + $0x78] sm:$0xff]
    %v569 = vrot.slane %v553, 4
    %v570 = vadd.f32 %v553, %v569
    %v571 = vrot.slane %v570, 2
    %v572 = vadd.f32 %v570, %v571
    %v573 = vrot.slane %v572, 1
    %v574 = vadd.f32 %v572, %v573
    %v575 = vrot.slane %v554, 4
    %v576 = vadd.f32 %v554, %v575
    %v577 = vrot.slane %v576, 2
    %v578 = vadd.f32 %v576, %v577
    %v579 = vrot.slane %v578, 1
    %v580 = vadd.f32 %v578, %v579
    %v581 = vrot.slane %v555, 4
    %v582 = vadd.f32 %v555, %v581
    %v583 = vrot.slane %v582, 2
    %v584 = vadd.f32 %v582, %v583
    %v585 = vrot.slane %v584, 1
    %v586 = vadd.f32 %v584, %v585
    %v587 = vrot.slane %v556, 4
    %v588 = vadd.f32 %v556, %v587
    %v589 = vrot.slane %v588, 2
    %v590 = vadd.f32 %v588, %v589
    %v591 = vrot.slane %v590, 1
    %v592 = vadd.f32 %v590, %v591
    %v593 = vrot.slane %v557, 4
    %v594 = vadd.f32 %v557, %v593
    %v595 = vrot.slane %v594, 2
    %v596 = vadd.f32 %v594, %v595
    %v597 = vrot.slane %v596, 1
    %v598 = vadd.f32 %v596, %v597
    %v599 = vrot.slane %v558, 4
    %v600 = vadd.f32 %v558, %v599
    %v601 = vrot.slane %v600, 2
    %v602 = vadd.f32 %v600, %v601
    %v603 = vrot.slane %v602, 1
    %v604 = vadd.f32 %v602, %v603
    %v605 = vrot.slane %v559, 4
    %v606 = vadd.f32 %v559, %v605
    %v607 = vrot.slane %v606, 2
    %v608 = vadd.f32 %v606, %v607
    %v609 = vrot.slane %v608, 1
    %v610 = vadd.f32 %v608, %v609
    %v611 = vrot.slane %v560, 4
    %v612 = vadd.f32 %v560, %v611
    %v613 = vrot.slane %v612, 2
    %v614 = vadd.f32 %v612, %v613
    %v615 = vrot.slane %v614, 1
    %v616 = vadd.f32 %v614, %v615
    %v617 = vrot.slane %v561, 4
    %v618 = vadd.f32 %v561, %v617
    %v619 = vrot.slane %v618, 2
    %v620 = vadd.f32 %v618, %v619
    %v621 = vrot.slane %v620, 1
    %v622 = vadd.f32 %v620, %v621
    %v623 = vrot.slane %v562, 4
    %v624 = vadd.f32 %v562, %v623
    %v625 = vrot.slane %v624, 2
    %v626 = vadd.f32 %v624, %v625
    %v627 = vrot.slane %v626, 1
    %v628 = vadd.f32 %v626, %v627
    %v629 = vrot.slane %v563, 4
    %v630 = vadd.f32 %v563, %v629
    %v631 = vrot.slane %v630, 2
    %v632 = vadd.f32 %v630, %v631
    %v633 = vrot.slane %v632, 1
    %v634 = vadd.f32 %v632, %v633
    %v635 = vrot.slane %v564, 4
    %v636 = vadd.f32 %v564, %v635
    %v637 = vrot.slane %v636, 2
    %v638 = vadd.f32 %v636, %v637
    %v639 = vrot.slane %v638, 1
    %v640 = vadd.f32 %v638, %v639
    %v641 = vrot.slane %v565, 4
    %v642 = vadd.f32 %v565, %v641
    %v643 = vrot.slane %v642, 2
    %v644 = vadd.f32 %v642, %v643
    %v645 = vrot.slane %v644, 1
    %v646 = vadd.f32 %v644, %v645
    %v647 = vrot.slane %v566, 4
    %v648 = vadd.f32 %v566, %v647
    %v649 = vrot.slane %v648, 2
    %v650 = vadd.f32 %v648, %v649
    %v651 = vrot.slane %v650, 1
    %v652 = vadd.f32 %v650, %v651
    %v653 = vrot.slane %v567, 4
    %v654 = vadd.f32 %v567, %v653
    %v655 = vrot.slane %v654, 2
    %v656 = vadd.f32 %v654, %v655
    %v657 = vrot.slane %v656, 1
    %v658 = vadd.f32 %v656, %v657
    %v659 = vrot.slane %v568, 4
    %v660 = vadd.f32 %v568, %v659
    %v661 = vrot.slane %v660, 2
    %v662 = vadd.f32 %v660, %v661
    %v663 = vrot.slane %v662, 1
    %v664 = vadd.f32 %v662, %v663
    %v681 = vrot.slane %v580, 6
    %v682 = vrot.slane %v586, 4
    %v683 = vrot.slane %v592, 2
    %v684 = vrot.slane %v604, 6
    %v685 = vrot.slane %v610, 4
    %v686 = vrot.slane %v616, 2
    %v687 = vrot.slane %v628, 6
    %v688 = vrot.slane %v634, 4
    %v689 = vrot.slane %v640, 2
    %v690 = vrot.slane %v652, 6
    %v691 = vrot.slane %v658, 4
    %v692 = vrot.slane %v664, 2
    %v693 = vsel %vm494, %v574, %v681
    %v694 = vsel %vm496, %v682, %v683
    %v695 = vsel %vm498, %v693, %v694
    %v696 = vsel %vm494, %v598, %v684
    %v697 = vsel %vm496, %v685, %v686
    %v698 = vsel %vm498, %v696, %v697
    %v699 = vsel %vm494, %v622, %v687
    %v700 = vsel %vm496, %v688, %v689
    %v701 = vsel %vm498, %v699, %v700
    %v702 = vsel %vm494, %v646, %v690
    %v703 = vsel %vm496, %v691, %v692
    %v704 = vsel %vm498, %v702, %v703
    %v705 = vsel %vm515, %v695, %v695
    %v706 = vsel %vm517, %v695, %v705
    %v707 = vrot.slane %v701, 7
    %v708 = vsel %vm520, %v707, %v706
    %v709 = vsel %vm522, %v707, %v708
    %v710 = vsel %vm524, %v707, %v709
    %v711 = vsel %vm526, %v707, %v710
    %v712 = vsel %vm515, %v698, %v698
    %v713 = vsel %vm517, %v698, %v712
    %v714 = vrot.slane %v704, 7
    %v715 = vsel %vm520, %v714, %v713
    %v716 = vsel %vm522, %v714, %v715
    %v717 = vsel %vm524, %v714, %v716
    %v718 = vsel %vm526, %v714, %v717
    %v721 = vadd.f32 %v551, %v711
    %v722 = vadd.f32 %v552, %v718
    %723 = vst [vmem:[#allocation3] sm:$0xff] %v721
    %724 = vst [vmem:[#allocation3 + $0x8] sm:$0xff] %v722
    // Predicated region
    $region126: #{tpu_custom_call.1} parent=1 // pred_check
      %p725 = pneg %p272
    $region127: #{tpu_custom_call.1} parent=1 // pred_check_branch
      %727 = sbr.rel (%p725) target = $region129
    $region128: #{tpu_custom_call.1} parent=1 // pred_region
      %v728 = vld [vmem:[#allocation4] sm:$0xff]
      %v729 = vld [vmem:[#allocation4 + $0x8] sm:$0xf]
      %732 = vst [vmem:[#allocation1] ss:$4 sm:$0xff] %v728
      %s733 = scalar_lea.vmem [#allocation1], 32
      %734 = vst [vmem:[%s733] ss:$4 sm:$0xff] %v729
      %v735 = vld.sshfl [vmem:[#allocation1] sm:$0xff pattern:$0x73625140]
      %v736 = vld.sshfl [vmem:[#allocation1 + $0x8] sm:$0xff pattern:$0x73625140]
      %v737 = vld.sshfl [vmem:[#allocation1 + $0x10] sm:$0xff pattern:$0x73625140]
      %v738 = vld.sshfl [vmem:[#allocation1 + $0x18] sm:$0xff pattern:$0x73625140]
      %v739 = vld.sshfl [vmem:[#allocation1 + $0x20] sm:$0xff pattern:$0x73625140]
      %v740 = vld.sshfl [vmem:[#allocation1 + $0x28] sm:$0xff pattern:$0x73625140]
      %v747 = vpack.c.bf16 %v735, %v735
      %v748 = vpack.c.bf16 %v736, %v736
      %v749 = vpack.c.bf16 %v737, %v737
      %v750 = vpack.c.bf16 %v738, %v738
      %v751 = vpack.c.bf16 %v739, %v739
      %v752 = vpack.c.bf16 %v740, %v740
      %v753 = vld [vmem:[#allocation2] sm:$0xff]
      %v754 = vld [vmem:[#allocation2 + $0x8] sm:$0xff]
      %v755 = vld [vmem:[#allocation2 + $0x10] sm:$0xff]
      %v756 = vmul.f32 %v753, 0.125
      %v757 = vmul.f32 %v754, 0.125
      %v758 = vmul.f32 %v755, 0.125
      %762 = vst [vmem:[#allocation1] ss:$4 sm:$0xff] %v756
      %s763 = scalar_lea.vmem [#allocation1], 32
      %764 = vst [vmem:[%s763] ss:$4 sm:$0xff] %v757
      %v765 = vld.sshfl [vmem:[#allocation1] sm:$0xff pattern:$0x73625140]
      %v766 = vld.sshfl [vmem:[#allocation1 + $0x8] sm:$0xff pattern:$0x73625140]
      %v767 = vld.sshfl [vmem:[#allocation1 + $0x10] sm:$0xff pattern:$0x73625140]
      %v768 = vld.sshfl [vmem:[#allocation1 + $0x18] sm:$0xff pattern:$0x73625140]
      %v769 = vld.sshfl [vmem:[#allocation1 + $0x20] sm:$0xff pattern:$0x73625140]
      %v770 = vld.sshfl [vmem:[#allocation1 + $0x28] sm:$0xff pattern:$0x73625140]
      %v771 = vld.sshfl [vmem:[#allocation1 + $0x30] sm:$0xff pattern:$0x73625140]
      %v772 = vld.sshfl [vmem:[#allocation1 + $0x38] sm:$0xff pattern:$0x73625140]
      %773 = vst [vmem:[#allocation1] ss:$4 sm:$0xff] %v758
      %v774 = vld.sshfl [vmem:[#allocation1] sm:$0xff pattern:$0x73625140]
      %v775 = vld.sshfl [vmem:[#allocation1 + $0x8] sm:$0xff pattern:$0x73625140]
      %v776 = vld.sshfl [vmem:[#allocation1 + $0x10] sm:$0xff pattern:$0x73625140]
      %v777 = vld.sshfl [vmem:[#allocation1 + $0x18] sm:$0xff pattern:$0x73625140]
      %v790 = vpack.c.bf16 %v765, %v765
      %v791 = vpack.c.bf16 %v766, %v766
      %v792 = vpack.c.bf16 %v767, %v767
      %v793 = vpack.c.bf16 %v768, %v768
      %v794 = vpack.c.bf16 %v769, %v769
      %v795 = vpack.c.bf16 %v770, %v770
      %v796 = vpack.c.bf16 %v771, %v771
      %v797 = vpack.c.bf16 %v772, %v772
      %v798 = vpack.c.bf16 %v774, %v774
      %v799 = vpack.c.bf16 %v775, %v775
      %v800 = vpack.c.bf16 %v776, %v776
      %v801 = vpack.c.bf16 %v777, %v777
      %v802 = vld [vmem:[#allocation3] sm:$0xff]
      %v803 = vld [vmem:[#allocation3 + $0x8] sm:$0xff]
      %v804 = vmul.f32 %v802, 0.125
      %v805 = vmul.f32 %v803, 0.125
      %808 = vst [vmem:[#allocation1] ss:$4 sm:$0xff] %v804
      %s809 = scalar_lea.vmem [#allocation1], 32
      %810 = vst [vmem:[%s809] ss:$4 sm:$0xff] %v805
      %v811 = vld.sshfl [vmem:[#allocation1] sm:$0xff pattern:$0x73625140]
      %v812 = vld.sshfl [vmem:[#allocation1 + $0x8] sm:$0xff pattern:$0x73625140]
      %v813 = vld.sshfl [vmem:[#allocation1 + $0x10] sm:$0xff pattern:$0x73625140]
      %v814 = vld.sshfl [vmem:[#allocation1 + $0x18] sm:$0xff pattern:$0x73625140]
      %v815 = vld.sshfl [vmem:[#allocation1 + $0x20] sm:$0xff pattern:$0x73625140]
      %v816 = vld.sshfl [vmem:[#allocation1 + $0x28] sm:$0xff pattern:$0x73625140]
      %v817 = vld.sshfl [vmem:[#allocation1 + $0x30] sm:$0xff pattern:$0x73625140]
      %v818 = vld.sshfl [vmem:[#allocation1 + $0x38] sm:$0xff pattern:$0x73625140]
      %v827 = vpack.c.bf16 %v811, %v811
      %v828 = vpack.c.bf16 %v812, %v812
      %v829 = vpack.c.bf16 %v813, %v813
      %v830 = vpack.c.bf16 %v814, %v814
      %v831 = vpack.c.bf16 %v815, %v815
      %v832 = vpack.c.bf16 %v816, %v816
      %v833 = vpack.c.bf16 %v817, %v817
      %v834 = vpack.c.bf16 %v818, %v818
      %v835 = vld [vmem:[#allocation10] sm:$0xff]
      %v836 = vld [vmem:[#allocation10 + $0x8] sm:$0xff]
      %v837 = vld [vmem:[#allocation10 + $0x10] sm:$0xff]
      %v838 = vld [vmem:[#allocation10 + $0x18] sm:$0xff]
      %v839 = vld [vmem:[#allocation10 + $0x20] sm:$0xff]
      %v840 = vld [vmem:[#allocation10 + $0x28] sm:$0xff]
      %v841 = vld [vmem:[#allocation10 + $0x30] sm:$0xff]
      %v842 = vld [vmem:[#allocation10 + $0x38] sm:$0xff]
      %v843 = vld [vmem:[#allocation10 + $0x40] sm:$0xff]
      %v844 = vld [vmem:[#allocation10 + $0x48] sm:$0xff]
      %v845 = vld [vmem:[#allocation10 + $0x50] sm:$0xff]
      %v846 = vld [vmem:[#allocation10 + $0x58] sm:$0xff]
      %v847 = vld [vmem:[#allocation10 + $0x60] sm:$0xff]
      %v848 = vld [vmem:[#allocation10 + $0x68] sm:$0xff]
      %v849 = vld [vmem:[#allocation10 + $0x70] sm:$0xff]
      %v850 = vld [vmem:[#allocation10 + $0x78] sm:$0xff]
      %v851 = vld [vmem:[#allocation10 + $0x80] sm:$0xff]
      %v852 = vld [vmem:[#allocation10 + $0x88] sm:$0xff]
      %v853 = vld [vmem:[#allocation10 + $0x90] sm:$0xff]
      %v854 = vld [vmem:[#allocation10 + $0x98] sm:$0xff]
      %v855 = vld [vmem:[#allocation10 + $0xa0] sm:$0xff]
      %v856 = vld [vmem:[#allocation10 + $0xa8] sm:$0xff]
      %v857 = vld [vmem:[#allocation10 + $0xb0] sm:$0xff]
      %v858 = vld [vmem:[#allocation10 + $0xb8] sm:$0xff]
      %v859 = vld [vmem:[#allocation10 + $0xc0] sm:$0xff]
      %v860 = vld [vmem:[#allocation10 + $0xc8] sm:$0xff]
      %v861 = vld [vmem:[#allocation10 + $0xd0] sm:$0xff]
      %v862 = vld [vmem:[#allocation10 + $0xd8] sm:$0xff]
      %v863 = vld [vmem:[#allocation10 + $0xe0] sm:$0xff]
      %v864 = vld [vmem:[#allocation10 + $0xe8] sm:$0xff]
      %v865 = vld [vmem:[#allocation10 + $0xf0] sm:$0xff]
      %v866 = vld [vmem:[#allocation10 + $0xf8] sm:$0xff]
      %v867 = vld [vmem:[#allocation10 + $0x100] sm:$0xff]
      %v868 = vld [vmem:[#allocation10 + $0x108] sm:$0xff]
      %v869 = vld [vmem:[#allocation10 + $0x110] sm:$0xff]
      %v870 = vld [vmem:[#allocation10 + $0x118] sm:$0xff]
      %v871 = vld [vmem:[#allocation10 + $0x120] sm:$0xff]
      %v872 = vld [vmem:[#allocation10 + $0x128] sm:$0xff]
      %v873 = vld [vmem:[#allocation10 + $0x130] sm:$0xff]
      %v874 = vld [vmem:[#allocation10 + $0x138] sm:$0xff]
      %v875 = vld [vmem:[#allocation10 + $0x140] sm:$0xff]
      %v876 = vld [vmem:[#allocation10 + $0x148] sm:$0xff]
      %v877 = vld [vmem:[#allocation10 + $0x150] sm:$0xff]
      %v878 = vld [vmem:[#allocation10 + $0x158] sm:$0xff]
      %v879 = vld [vmem:[#allocation10 + $0x160] sm:$0xff]
      %v880 = vld [vmem:[#allocation10 + $0x168] sm:$0xff]
      %v881 = vld [vmem:[#allocation10 + $0x170] sm:$0xff]
      %v882 = vld [vmem:[#allocation10 + $0x178] sm:$0xff]
      %v883 = vld [vmem:[#allocation10 + $0x180] sm:$0xff]
      %v884 = vld [vmem:[#allocation10 + $0x188] sm:$0xff]
      %v885 = vld [vmem:[#allocation10 + $0x190] sm:$0xff]
      %v886 = vld [vmem:[#allocation10 + $0x198] sm:$0xff]
      %v887 = vld [vmem:[#allocation10 + $0x1a0] sm:$0xff]
      %v888 = vld [vmem:[#allocation10 + $0x1a8] sm:$0xff]
      %v889 = vld [vmem:[#allocation10 + $0x1b0] sm:$0xff]
      %v890 = vld [vmem:[#allocation10 + $0x1b8] sm:$0xff]
      %v891 = vld [vmem:[#allocation10 + $0x1c0] sm:$0xff]
      %v892 = vld [vmem:[#allocation10 + $0x1c8] sm:$0xff]
      %v893 = vld [vmem:[#allocation10 + $0x1d0] sm:$0xff]
      %v894 = vld [vmem:[#allocation10 + $0x1d8] sm:$0xff]
      %v895 = vld [vmem:[#allocation10 + $0x1e0] sm:$0xff]
      %v896 = vld [vmem:[#allocation10 + $0x1e8] sm:$0xff]
      %v897 = vld [vmem:[#allocation10 + $0x1f0] sm:$0xff]
      %v898 = vld [vmem:[#allocation10 + $0x1f8] sm:$0xff]
      %v899 = vld [vmem:[#allocation10 + $0x200] sm:$0xff]
      %v900 = vld [vmem:[#allocation10 + $0x208] sm:$0xff]
      %v901 = vld [vmem:[#allocation10 + $0x210] sm:$0xff]
      %v902 = vld [vmem:[#allocation10 + $0x218] sm:$0xff]
      %v903 = vld [vmem:[#allocation10 + $0x220] sm:$0xff]
      %v904 = vld [vmem:[#allocation10 + $0x228] sm:$0xff]
      %v905 = vld [vmem:[#allocation10 + $0x230] sm:$0xff]
      %v906 = vld [vmem:[#allocation10 + $0x238] sm:$0xff]
      %v907 = vld [vmem:[#allocation10 + $0x240] sm:$0xff]
      %v908 = vld [vmem:[#allocation10 + $0x248] sm:$0xff]
      %v909 = vld [vmem:[#allocation10 + $0x250] sm:$0xff]
      %v910 = vld [vmem:[#allocation10 + $0x258] sm:$0xff]
      %v911 = vld [vmem:[#allocation10 + $0x260] sm:$0xff]
      %v912 = vld [vmem:[#allocation10 + $0x268] sm:$0xff]
      %v913 = vld [vmem:[#allocation10 + $0x270] sm:$0xff]
      %v914 = vld [vmem:[#allocation10 + $0x278] sm:$0xff]
      %v915 = vld [vmem:[#allocation10 + $0x280] sm:$0xff]
      %v916 = vld [vmem:[#allocation10 + $0x288] sm:$0xff]
      %v917 = vld [vmem:[#allocation10 + $0x290] sm:$0xff]
      %v918 = vld [vmem:[#allocation10 + $0x298] sm:$0xff]
      %v919 = vld [vmem:[#allocation10 + $0x2a0] sm:$0xff]
      %v920 = vld [vmem:[#allocation10 + $0x2a8] sm:$0xff]
      %v921 = vld [vmem:[#allocation10 + $0x2b0] sm:$0xff]
      %v922 = vld [vmem:[#allocation10 + $0x2b8] sm:$0xff]
      %v923 = vld [vmem:[#allocation10 + $0x2c0] sm:$0xff]
      %v924 = vld [vmem:[#allocation10 + $0x2c8] sm:$0xff]
      %v925 = vld [vmem:[#allocation10 + $0x2d0] sm:$0xff]
      %v926 = vld [vmem:[#allocation10 + $0x2d8] sm:$0xff]
      %v927 = vld [vmem:[#allocation10 + $0x2e0] sm:$0xff]
      %v928 = vld [vmem:[#allocation10 + $0x2e8] sm:$0xff]
      %v929 = vld [vmem:[#allocation10 + $0x2f0] sm:$0xff]
      %v930 = vld [vmem:[#allocation10 + $0x2f8] sm:$0xff]
      %v931 = vld [vmem:[#allocation10 + $0x300] sm:$0xff]
      %v932 = vld [vmem:[#allocation10 + $0x308] sm:$0xff]
      %v933 = vld [vmem:[#allocation10 + $0x310] sm:$0xff]
      %v934 = vld [vmem:[#allocation10 + $0x318] sm:$0xff]
      %v935 = vld [vmem:[#allocation10 + $0x320] sm:$0xff]
      %v936 = vld [vmem:[#allocation10 + $0x328] sm:$0xff]
      %v937 = vld [vmem:[#allocation10 + $0x330] sm:$0xff]
      %v938 = vld [vmem:[#allocation10 + $0x338] sm:$0xff]
      %v939 = vld [vmem:[#allocation10 + $0x340] sm:$0xff]
      %v940 = vld [vmem:[#allocation10 + $0x348] sm:$0xff]
      %v941 = vld [vmem:[#allocation10 + $0x350] sm:$0xff]
      %v942 = vld [vmem:[#allocation10 + $0x358] sm:$0xff]
      %v943 = vld [vmem:[#allocation10 + $0x360] sm:$0xff]
      %v944 = vld [vmem:[#allocation10 + $0x368] sm:$0xff]
      %v945 = vld [vmem:[#allocation10 + $0x370] sm:$0xff]
      %v946 = vld [vmem:[#allocation10 + $0x378] sm:$0xff]
      %v947 = vld [vmem:[#allocation10 + $0x380] sm:$0xff]
      %v948 = vld [vmem:[#allocation10 + $0x388] sm:$0xff]
      %v949 = vld [vmem:[#allocation10 + $0x390] sm:$0xff]
      %v950 = vld [vmem:[#allocation10 + $0x398] sm:$0xff]
      %v951 = vld [vmem:[#allocation10 + $0x3a0] sm:$0xff]
      %v952 = vld [vmem:[#allocation10 + $0x3a8] sm:$0xff]
      %v953 = vld [vmem:[#allocation10 + $0x3b0] sm:$0xff]
      %v954 = vld [vmem:[#allocation10 + $0x3b8] sm:$0xff]
      %v955 = vld [vmem:[#allocation10 + $0x3c0] sm:$0xff]
      %v956 = vld [vmem:[#allocation10 + $0x3c8] sm:$0xff]
      %v957 = vld [vmem:[#allocation10 + $0x3d0] sm:$0xff]
      %v958 = vld [vmem:[#allocation10 + $0x3d8] sm:$0xff]
      %v959 = vld [vmem:[#allocation10 + $0x3e0] sm:$0xff]
      %v960 = vld [vmem:[#allocation10 + $0x3e8] sm:$0xff]
      %v961 = vld [vmem:[#allocation10 + $0x3f0] sm:$0xff]
      %v962 = vld [vmem:[#allocation10 + $0x3f8] sm:$0xff]
      %v963 = vld [vmem:[#allocation10 + $0x400] sm:$0xff]
      %v964 = vld [vmem:[#allocation10 + $0x408] sm:$0xff]
      %v965 = vld [vmem:[#allocation10 + $0x410] sm:$0xff]
      %v966 = vld [vmem:[#allocation10 + $0x418] sm:$0xff]
      %v967 = vld [vmem:[#allocation10 + $0x420] sm:$0xff]
      %v968 = vld [vmem:[#allocation10 + $0x428] sm:$0xff]
      %v969 = vld [vmem:[#allocation10 + $0x430] sm:$0xff]
      %v970 = vld [vmem:[#allocation10 + $0x438] sm:$0xff]
      %v971 = vld [vmem:[#allocation10 + $0x440] sm:$0xff]
      %v972 = vld [vmem:[#allocation10 + $0x448] sm:$0xff]
      %v973 = vld [vmem:[#allocation10 + $0x450] sm:$0xff]
      %v974 = vld [vmem:[#allocation10 + $0x458] sm:$0xff]
      %v975 = vld [vmem:[#allocation10 + $0x460] sm:$0xff]
      %v976 = vld [vmem:[#allocation10 + $0x468] sm:$0xff]
      %v977 = vld [vmem:[#allocation10 + $0x470] sm:$0xff]
      %v978 = vld [vmem:[#allocation10 + $0x478] sm:$0xff]
      %v979 = vld [vmem:[#allocation10 + $0x480] sm:$0xff]
      %v980 = vld [vmem:[#allocation10 + $0x488] sm:$0xff]
      %v981 = vld [vmem:[#allocation10 + $0x490] sm:$0xff]
      %v982 = vld [vmem:[#allocation10 + $0x498] sm:$0xff]
      %v983 = vld [vmem:[#allocation10 + $0x4a0] sm:$0xff]
      %v984 = vld [vmem:[#allocation10 + $0x4a8] sm:$0xff]
      %v985 = vld [vmem:[#allocation10 + $0x4b0] sm:$0xff]
      %v986 = vld [vmem:[#allocation10 + $0x4b8] sm:$0xff]
      %v987 = vld [vmem:[#allocation10 + $0x4c0] sm:$0xff]
      %v988 = vld [vmem:[#allocation10 + $0x4c8] sm:$0xff]
      %v989 = vld [vmem:[#allocation10 + $0x4d0] sm:$0xff]
      %v990 = vld [vmem:[#allocation10 + $0x4d8] sm:$0xff]
      %v991 = vld [vmem:[#allocation10 + $0x4e0] sm:$0xff]
      %v992 = vld [vmem:[#allocation10 + $0x4e8] sm:$0xff]
      %v993 = vld [vmem:[#allocation10 + $0x4f0] sm:$0xff]
      %v994 = vld [vmem:[#allocation10 + $0x4f8] sm:$0xff]
      %v995 = vld [vmem:[#allocation10 + $0x500] sm:$0xff]
      %v996 = vld [vmem:[#allocation10 + $0x508] sm:$0xff]
      %v997 = vld [vmem:[#allocation10 + $0x510] sm:$0xff]
      %v998 = vld [vmem:[#allocation10 + $0x518] sm:$0xff]
      %v999 = vld [vmem:[#allocation10 + $0x520] sm:$0xff]
      %v1000 = vld [vmem:[#allocation10 + $0x528] sm:$0xff]
      %v1001 = vld [vmem:[#allocation10 + $0x530] sm:$0xff]
      %v1002 = vld [vmem:[#allocation10 + $0x538] sm:$0xff]
      %v1003 = vld [vmem:[#allocation10 + $0x540] sm:$0xff]
      %v1004 = vld [vmem:[#allocation10 + $0x548] sm:$0xff]
      %v1005 = vld [vmem:[#allocation10 + $0x550] sm:$0xff]
      %v1006 = vld [vmem:[#allocation10 + $0x558] sm:$0xff]
      %v1007 = vld [vmem:[#allocation10 + $0x560] sm:$0xff]
      %v1008 = vld [vmem:[#allocation10 + $0x568] sm:$0xff]
      %v1009 = vld [vmem:[#allocation10 + $0x570] sm:$0xff]
      %v1010 = vld [vmem:[#allocation10 + $0x578] sm:$0xff]
      %v1011 = vld [vmem:[#allocation10 + $0x580] sm:$0xff]
      %v1012 = vld [vmem:[#allocation10 + $0x588] sm:$0xff]
      %v1013 = vld [vmem:[#allocation10 + $0x590] sm:$0xff]
      %v1014 = vld [vmem:[#allocation10 + $0x598] sm:$0xff]
      %v1015 = vld [vmem:[#allocation10 + $0x5a0] sm:$0xff]
      %v1016 = vld [vmem:[#allocation10 + $0x5a8] sm:$0xff]
      %v1017 = vld [vmem:[#allocation10 + $0x5b0] sm:$0xff]
      %v1018 = vld [vmem:[#allocation10 + $0x5b8] sm:$0xff]
      %v1019 = vld [vmem:[#allocation10 + $0x5c0] sm:$0xff]
      %v1020 = vld [vmem:[#allocation10 + $0x5c8] sm:$0xff]
      %v1021 = vld [vmem:[#allocation10 + $0x5d0] sm:$0xff]
      %v1022 = vld [vmem:[#allocation10 + $0x5d8] sm:$0xff]
      %v1023 = vld [vmem:[#allocation10 + $0x5e0] sm:$0xff]
      %v1024 = vld [vmem:[#allocation10 + $0x5e8] sm:$0xff]
      %v1025 = vld [vmem:[#allocation10 + $0x5f0] sm:$0xff]
      %v1026 = vld [vmem:[#allocation10 + $0x5f8] sm:$0xff]
      %v1027 = vld [vmem:[#allocation12] sm:$0xf]
      %v1029 = vperm.slane %v1027, 0
      %v1030 = vperm.slane %v1027, 1
      %v1031 = vperm.slane %v1027, 2
      %v1032 = vperm.slane %v1027, 3
      %v1229 = vunpack.c.l.b16 %v835
      %v1230 = vunpack.c.h.b16 %v835
      %v1231 = vunpack.c.l.b16 %v836
      %v1232 = vunpack.c.h.b16 %v836
      %v1233 = vunpack.c.l.b16 %v837
      %v1234 = vunpack.c.h.b16 %v837
      %v1235 = vunpack.c.l.b16 %v838
      %v1236 = vunpack.c.h.b16 %v838
      %v1237 = vunpack.c.l.b16 %v839
      %v1238 = vunpack.c.h.b16 %v839
      %v1239 = vunpack.c.l.b16 %v840
      %v1240 = vunpack.c.h.b16 %v840
      %v1241 = vunpack.c.l.b16 %v841
      %v1242 = vunpack.c.h.b16 %v841
      %v1243 = vunpack.c.l.b16 %v842
      %v1244 = vunpack.c.h.b16 %v842
      %v1245 = vunpack.c.l.b16 %v843
      %v1246 = vunpack.c.h.b16 %v843
      %v1247 = vunpack.c.l.b16 %v844
      %v1248 = vunpack.c.h.b16 %v844
      %v1249 = vunpack.c.l.b16 %v845
      %v1250 = vunpack.c.h.b16 %v845
      %v1251 = vunpack.c.l.b16 %v846
      %v1252 = vunpack.c.h.b16 %v846
      %v1253 = vunpack.c.l.b16 %v847
      %v1254 = vunpack.c.h.b16 %v847
      %v1255 = vunpack.c.l.b16 %v848
      %v1256 = vunpack.c.h.b16 %v848
      %v1257 = vunpack.c.l.b16 %v849
      %v1258 = vunpack.c.h.b16 %v849
      %v1259 = vunpack.c.l.b16 %v850
      %v1260 = vunpack.c.h.b16 %v850
      %v1261 = vunpack.c.l.b16 %v851
      %v1262 = vunpack.c.h.b16 %v851
      %v1263 = vunpack.c.l.b16 %v852
      %v1264 = vunpack.c.h.b16 %v852
      %v1265 = vunpack.c.l.b16 %v853
      %v1266 = vunpack.c.h.b16 %v853
      %v1267 = vunpack.c.l.b16 %v854
      %v1268 = vunpack.c.h.b16 %v854
      %v1269 = vunpack.c.l.b16 %v855
      %v1270 = vunpack.c.h.b16 %v855
      %v1271 = vunpack.c.l.b16 %v856
      %v1272 = vunpack.c.h.b16 %v856
      %v1273 = vunpack.c.l.b16 %v857
      %v1274 = vunpack.c.h.b16 %v857
      %v1275 = vunpack.c.l.b16 %v858
      %v1276 = vunpack.c.h.b16 %v858
      %v1277 = vunpack.c.l.b16 %v859
      %v1278 = vunpack.c.h.b16 %v859
      %v1279 = vunpack.c.l.b16 %v860
      %v1280 = vunpack.c.h.b16 %v860
      %v1281 = vunpack.c.l.b16 %v861
      %v1282 = vunpack.c.h.b16 %v861
      %v1283 = vunpack.c.l.b16 %v862
      %v1284 = vunpack.c.h.b16 %v862
      %v1285 = vunpack.c.l.b16 %v863
      %v1286 = vunpack.c.h.b16 %v863
      %v1287 = vunpack.c.l.b16 %v864
      %v1288 = vunpack.c.h.b16 %v864
      %v1289 = vunpack.c.l.b16 %v865
      %v1290 = vunpack.c.h.b16 %v865
      %v1291 = vunpack.c.l.b16 %v866
      %v1292 = vunpack.c.h.b16 %v866
      %v1293 = vunpack.c.l.b16 %v867
      %v1294 = vunpack.c.h.b16 %v867
      %v1295 = vunpack.c.l.b16 %v868
      %v1296 = vunpack.c.h.b16 %v868
      %v1297 = vunpack.c.l.b16 %v869
      %v1298 = vunpack.c.h.b16 %v869
      %v1299 = vunpack.c.l.b16 %v870
      %v1300 = vunpack.c.h.b16 %v870
      %v1301 = vunpack.c.l.b16 %v871
      %v1302 = vunpack.c.h.b16 %v871
      %v1303 = vunpack.c.l.b16 %v872
      %v1304 = vunpack.c.h.b16 %v872
      %v1305 = vunpack.c.l.b16 %v873
      %v1306 = vunpack.c.h.b16 %v873
      %v1307 = vunpack.c.l.b16 %v874
      %v1308 = vunpack.c.h.b16 %v874
      %v1309 = vunpack.c.l.b16 %v875
      %v1310 = vunpack.c.h.b16 %v875
      %v1311 = vunpack.c.l.b16 %v876
      %v1312 = vunpack.c.h.b16 %v876
      %v1313 = vunpack.c.l.b16 %v877
      %v1314 = vunpack.c.h.b16 %v877
      %v1315 = vunpack.c.l.b16 %v878
      %v1316 = vunpack.c.h.b16 %v878
      %v1317 = vunpack.c.l.b16 %v879
      %v1318 = vunpack.c.h.b16 %v879
      %v1319 = vunpack.c.l.b16 %v880
      %v1320 = vunpack.c.h.b16 %v880
      %v1321 = vunpack.c.l.b16 %v881
      %v1322 = vunpack.c.h.b16 %v881
      %v1323 = vunpack.c.l.b16 %v882
      %v1324 = vunpack.c.h.b16 %v882
      %v1325 = vunpack.c.l.b16 %v883
      %v1326 = vunpack.c.h.b16 %v883
      %v1327 = vunpack.c.l.b16 %v884
      %v1328 = vunpack.c.h.b16 %v884
      %v1329 = vunpack.c.l.b16 %v885
      %v1330 = vunpack.c.h.b16 %v885
      %v1331 = vunpack.c.l.b16 %v886
      %v1332 = vunpack.c.h.b16 %v886
      %v1333 = vunpack.c.l.b16 %v887
      %v1334 = vunpack.c.h.b16 %v887
      %v1335 = vunpack.c.l.b16 %v888
      %v1336 = vunpack.c.h.b16 %v888
      %v1337 = vunpack.c.l.b16 %v889
      %v1338 = vunpack.c.h.b16 %v889
      %v1339 = vunpack.c.l.b16 %v890
      %v1340 = vunpack.c.h.b16 %v890
      %v1341 = vunpack.c.l.b16 %v891
      %v1342 = vunpack.c.h.b16 %v891
      %v1343 = vunpack.c.l.b16 %v892
      %v1344 = vunpack.c.h.b16 %v892
      %v1345 = vunpack.c.l.b16 %v893
      %v1346 = vunpack.c.h.b16 %v893
      %v1347 = vunpack.c.l.b16 %v894
      %v1348 = vunpack.c.h.b16 %v894
      %v1349 = vunpack.c.l.b16 %v895
      %v1350 = vunpack.c.h.b16 %v895
      %v1351 = vunpack.c.l.b16 %v896
      %v1352 = vunpack.c.h.b16 %v896
      %v1353 = vunpack.c.l.b16 %v897
      %v1354 = vunpack.c.h.b16 %v897
      %v1355 = vunpack.c.l.b16 %v898
      %v1356 = vunpack.c.h.b16 %v898
      %v1357 = vunpack.c.l.b16 %v899
      %v1358 = vunpack.c.h.b16 %v899
      %v1359 = vunpack.c.l.b16 %v900
      %v1360 = vunpack.c.h.b16 %v900
      %v1361 = vunpack.c.l.b16 %v901
      %v1362 = vunpack.c.h.b16 %v901
      %v1363 = vunpack.c.l.b16 %v902
      %v1364 = vunpack.c.h.b16 %v902
      %v1365 = vunpack.c.l.b16 %v903
      %v1366 = vunpack.c.h.b16 %v903
      %v1367 = vunpack.c.l.b16 %v904
      %v1368 = vunpack.c.h.b16 %v904
      %v1369 = vunpack.c.l.b16 %v905
      %v1370 = vunpack.c.h.b16 %v905
      %v1371 = vunpack.c.l.b16 %v906
      %v1372 = vunpack.c.h.b16 %v906
      %v1373 = vunpack.c.l.b16 %v907
      %v1374 = vunpack.c.h.b16 %v907
      %v1375 = vunpack.c.l.b16 %v908
      %v1376 = vunpack.c.h.b16 %v908
      %v1377 = vunpack.c.l.b16 %v909
      %v1378 = vunpack.c.h.b16 %v909
      %v1379 = vunpack.c.l.b16 %v910
      %v1380 = vunpack.c.h.b16 %v910
      %v1381 = vunpack.c.l.b16 %v911
      %v1382 = vunpack.c.h.b16 %v911
      %v1383 = vunpack.c.l.b16 %v912
      %v1384 = vunpack.c.h.b16 %v912
      %v1385 = vunpack.c.l.b16 %v913
      %v1386 = vunpack.c.h.b16 %v913
      %v1387 = vunpack.c.l.b16 %v914
      %v1388 = vunpack.c.h.b16 %v914
      %v1389 = vunpack.c.l.b16 %v915
      %v1390 = vunpack.c.h.b16 %v915
      %v1391 = vunpack.c.l.b16 %v916
      %v1392 = vunpack.c.h.b16 %v916
      %v1393 = vunpack.c.l.b16 %v917
      %v1394 = vunpack.c.h.b16 %v917
      %v1395 = vunpack.c.l.b16 %v918
      %v1396 = vunpack.c.h.b16 %v918
      %v1397 = vunpack.c.l.b16 %v919
      %v1398 = vunpack.c.h.b16 %v919
      %v1399 = vunpack.c.l.b16 %v920
      %v1400 = vunpack.c.h.b16 %v920
      %v1401 = vunpack.c.l.b16 %v921
      %v1402 = vunpack.c.h.b16 %v921
      %v1403 = vunpack.c.l.b16 %v922
      %v1404 = vunpack.c.h.b16 %v922
      %v1405 = vunpack.c.l.b16 %v923
      %v1406 = vunpack.c.h.b16 %v923
      %v1407 = vunpack.c.l.b16 %v924
      %v1408 = vunpack.c.h.b16 %v924
      %v1409 = vunpack.c.l.b16 %v925
      %v1410 = vunpack.c.h.b16 %v925
      %v1411 = vunpack.c.l.b16 %v926
      %v1412 = vunpack.c.h.b16 %v926
      %v1413 = vunpack.c.l.b16 %v927
      %v1414 = vunpack.c.h.b16 %v927
      %v1415 = vunpack.c.l.b16 %v928
      %v1416 = vunpack.c.h.b16 %v928
      %v1417 = vunpack.c.l.b16 %v929
      %v1418 = vunpack.c.h.b16 %v929
      %v1419 = vunpack.c.l.b16 %v930
      %v1420 = vunpack.c.h.b16 %v930
      %v1421 = vunpack.c.l.b16 %v931
      %v1422 = vunpack.c.h.b16 %v931
      %v1423 = vunpack.c.l.b16 %v932
      %v1424 = vunpack.c.h.b16 %v932
      %v1425 = vunpack.c.l.b16 %v933
      %v1426 = vunpack.c.h.b16 %v933
      %v1427 = vunpack.c.l.b16 %v934
      %v1428 = vunpack.c.h.b16 %v934
      %v1429 = vunpack.c.l.b16 %v935
      %v1430 = vunpack.c.h.b16 %v935
      %v1431 = vunpack.c.l.b16 %v936
      %v1432 = vunpack.c.h.b16 %v936
      %v1433 = vunpack.c.l.b16 %v937
      %v1434 = vunpack.c.h.b16 %v937
      %v1435 = vunpack.c.l.b16 %v938
      %v1436 = vunpack.c.h.b16 %v938
      %v1437 = vunpack.c.l.b16 %v939
      %v1438 = vunpack.c.h.b16 %v939
      %v1439 = vunpack.c.l.b16 %v940
      %v1440 = vunpack.c.h.b16 %v940
      %v1441 = vunpack.c.l.b16 %v941
      %v1442 = vunpack.c.h.b16 %v941
      %v1443 = vunpack.c.l.b16 %v942
      %v1444 = vunpack.c.h.b16 %v942
      %v1445 = vunpack.c.l.b16 %v943
      %v1446 = vunpack.c.h.b16 %v943
      %v1447 = vunpack.c.l.b16 %v944
      %v1448 = vunpack.c.h.b16 %v944
      %v1449 = vunpack.c.l.b16 %v945
      %v1450 = vunpack.c.h.b16 %v945
      %v1451 = vunpack.c.l.b16 %v946
      %v1452 = vunpack.c.h.b16 %v946
      %v1453 = vunpack.c.l.b16 %v947
      %v1454 = vunpack.c.h.b16 %v947
      %v1455 = vunpack.c.l.b16 %v948
      %v1456 = vunpack.c.h.b16 %v948
      %v1457 = vunpack.c.l.b16 %v949
      %v1458 = vunpack.c.h.b16 %v949
      %v1459 = vunpack.c.l.b16 %v950
      %v1460 = vunpack.c.h.b16 %v950
      %v1461 = vunpack.c.l.b16 %v951
      %v1462 = vunpack.c.h.b16 %v951
      %v1463 = vunpack.c.l.b16 %v952
      %v1464 = vunpack.c.h.b16 %v952
      %v1465 = vunpack.c.l.b16 %v953
      %v1466 = vunpack.c.h.b16 %v953
      %v1467 = vunpack.c.l.b16 %v954
      %v1468 = vunpack.c.h.b16 %v954
      %v1469 = vunpack.c.l.b16 %v955
      %v1470 = vunpack.c.h.b16 %v955
      %v1471 = vunpack.c.l.b16 %v956
      %v1472 = vunpack.c.h.b16 %v956
      %v1473 = vunpack.c.l.b16 %v957
      %v1474 = vunpack.c.h.b16 %v957
      %v1475 = vunpack.c.l.b16 %v958
      %v1476 = vunpack.c.h.b16 %v958
      %v1477 = vunpack.c.l.b16 %v959
      %v1478 = vunpack.c.h.b16 %v959
      %v1479 = vunpack.c.l.b16 %v960
      %v1480 = vunpack.c.h.b16 %v960
      %v1481 = vunpack.c.l.b16 %v961
      %v1482 = vunpack.c.h.b16 %v961
      %v1483 = vunpack.c.l.b16 %v962
      %v1484 = vunpack.c.h.b16 %v962
      %v1485 = vunpack.c.l.b16 %v963
      %v1486 = vunpack.c.h.b16 %v963
      %v1487 = vunpack.c.l.b16 %v964
      %v1488 = vunpack.c.h.b16 %v964
      %v1489 = vunpack.c.l.b16 %v965
      %v1490 = vunpack.c.h.b16 %v965
      %v1491 = vunpack.c.l.b16 %v966
      %v1492 = vunpack.c.h.b16 %v966
      %v1493 = vunpack.c.l.b16 %v967
      %v1494 = vunpack.c.h.b16 %v967
      %v1495 = vunpack.c.l.b16 %v968
      %v1496 = vunpack.c.h.b16 %v968
      %v1497 = vunpack.c.l.b16 %v969
      %v1498 = vunpack.c.h.b16 %v969
      %v1499 = vunpack.c.l.b16 %v970
      %v1500 = vunpack.c.h.b16 %v970
      %v1501 = vunpack.c.l.b16 %v971
      %v1502 = vunpack.c.h.b16 %v971
      %v1503 = vunpack.c.l.b16 %v972
      %v1504 = vunpack.c.h.b16 %v972
      %v1505 = vunpack.c.l.b16 %v973
      %v1506 = vunpack.c.h.b16 %v973
      %v1507 = vunpack.c.l.b16 %v974
      %v1508 = vunpack.c.h.b16 %v974
      %v1509 = vunpack.c.l.b16 %v975
      %v1510 = vunpack.c.h.b16 %v975
      %v1511 = vunpack.c.l.b16 %v976
      %v1512 = vunpack.c.h.b16 %v976
      %v1513 = vunpack.c.l.b16 %v977
      %v1514 = vunpack.c.h.b16 %v977
      %v1515 = vunpack.c.l.b16 %v978
      %v1516 = vunpack.c.h.b16 %v978
      %v1517 = vunpack.c.l.b16 %v979
      %v1518 = vunpack.c.h.b16 %v979
      %v1519 = vunpack.c.l.b16 %v980
      %v1520 = vunpack.c.h.b16 %v980
      %v1521 = vunpack.c.l.b16 %v981
      %v1522 = vunpack.c.h.b16 %v981
      %v1523 = vunpack.c.l.b16 %v982
      %v1524 = vunpack.c.h.b16 %v982
      %v1525 = vunpack.c.l.b16 %v983
      %v1526 = vunpack.c.h.b16 %v983
      %v1527 = vunpack.c.l.b16 %v984
      %v1528 = vunpack.c.h.b16 %v984
      %v1529 = vunpack.c.l.b16 %v985
      %v1530 = vunpack.c.h.b16 %v985
      %v1531 = vunpack.c.l.b16 %v986
      %v1532 = vunpack.c.h.b16 %v986
      %v1533 = vunpack.c.l.b16 %v987
      %v1534 = vunpack.c.h.b16 %v987
      %v1535 = vunpack.c.l.b16 %v988
      %v1536 = vunpack.c.h.b16 %v988
      %v1537 = vunpack.c.l.b16 %v989
      %v1538 = vunpack.c.h.b16 %v989
      %v1539 = vunpack.c.l.b16 %v990
      %v1540 = vunpack.c.h.b16 %v990
      %v1541 = vunpack.c.l.b16 %v991
      %v1542 = vunpack.c.h.b16 %v991
      %v1543 = vunpack.c.l.b16 %v992
      %v1544 = vunpack.c.h.b16 %v992
      %v1545 = vunpack.c.l.b16 %v993
      %v1546 = vunpack.c.h.b16 %v993
      %v1547 = vunpack.c.l.b16 %v994
      %v1548 = vunpack.c.h.b16 %v994
      %v1549 = vunpack.c.l.b16 %v995
      %v1550 = vunpack.c.h.b16 %v995
      %v1551 = vunpack.c.l.b16 %v996
      %v1552 = vunpack.c.h.b16 %v996
      %v1553 = vunpack.c.l.b16 %v997
      %v1554 = vunpack.c.h.b16 %v997
      %v1555 = vunpack.c.l.b16 %v998
      %v1556 = vunpack.c.h.b16 %v998
      %v1557 = vunpack.c.l.b16 %v999
      %v1558 = vunpack.c.h.b16 %v999
      %v1559 = vunpack.c.l.b16 %v1000
      %v1560 = vunpack.c.h.b16 %v1000
      %v1561 = vunpack.c.l.b16 %v1001
      %v1562 = vunpack.c.h.b16 %v1001
      %v1563 = vunpack.c.l.b16 %v1002
      %v1564 = vunpack.c.h.b16 %v1002
      %v1565 = vunpack.c.l.b16 %v1003
      %v1566 = vunpack.c.h.b16 %v1003
      %v1567 = vunpack.c.l.b16 %v1004
      %v1568 = vunpack.c.h.b16 %v1004
      %v1569 = vunpack.c.l.b16 %v1005
      %v1570 = vunpack.c.h.b16 %v1005
      %v1571 = vunpack.c.l.b16 %v1006
      %v1572 = vunpack.c.h.b16 %v1006
      %v1573 = vunpack.c.l.b16 %v1007
      %v1574 = vunpack.c.h.b16 %v1007
      %v1575 = vunpack.c.l.b16 %v1008
      %v1576 = vunpack.c.h.b16 %v1008
      %v1577 = vunpack.c.l.b16 %v1009
      %v1578 = vunpack.c.h.b16 %v1009
      %v1579 = vunpack.c.l.b16 %v1010
      %v1580 = vunpack.c.h.b16 %v1010
      %v1581 = vunpack.c.l.b16 %v1011
      %v1582 = vunpack.c.h.b16 %v1011
      %v1583 = vunpack.c.l.b16 %v1012
      %v1584 = vunpack.c.h.b16 %v1012
      %v1585 = vunpack.c.l.b16 %v1013
      %v1586 = vunpack.c.h.b16 %v1013
      %v1587 = vunpack.c.l.b16 %v1014
      %v1588 = vunpack.c.h.b16 %v1014
      %v1589 = vunpack.c.l.b16 %v1015
      %v1590 = vunpack.c.h.b16 %v1015
      %v1591 = vunpack.c.l.b16 %v1016
      %v1592 = vunpack.c.h.b16 %v1016
      %v1593 = vunpack.c.l.b16 %v1017
      %v1594 = vunpack.c.h.b16 %v1017
      %v1595 = vunpack.c.l.b16 %v1018
      %v1596 = vunpack.c.h.b16 %v1018
      %v1597 = vunpack.c.l.b16 %v1019
      %v1598 = vunpack.c.h.b16 %v1019
      %v1599 = vunpack.c.l.b16 %v1020
      %v1600 = vunpack.c.h.b16 %v1020
      %v1601 = vunpack.c.l.b16 %v1021
      %v1602 = vunpack.c.h.b16 %v1021
      %v1603 = vunpack.c.l.b16 %v1022
      %v1604 = vunpack.c.h.b16 %v1022
      %v1605 = vunpack.c.l.b16 %v1023
      %v1606 = vunpack.c.h.b16 %v1023
      %v1607 = vunpack.c.l.b16 %v1024
      %v1608 = vunpack.c.h.b16 %v1024
      %v1609 = vunpack.c.l.b16 %v1025
      %v1610 = vunpack.c.h.b16 %v1025
      %v1611 = vunpack.c.l.b16 %v1026
      %v1612 = vunpack.c.h.b16 %v1026
      %v1613 = vpack.c.b16 %v1233, %v1229
      %v1614 = vpack.c.b16 %v1234, %v1230
      %v1615 = vpack.c.b16 %v1235, %v1231
      %v1616 = vpack.c.b16 %v1236, %v1232
      %v1617 = vpack.c.b16 %v1241, %v1237
      %v1618 = vpack.c.b16 %v1242, %v1238
      %v1619 = vpack.c.b16 %v1243, %v1239
      %v1620 = vpack.c.b16 %v1244, %v1240
      %v1621 = vpack.c.b16 %v1249, %v1245
      %v1622 = vpack.c.b16 %v1250, %v1246
      %v1623 = vpack.c.b16 %v1251, %v1247
      %v1624 = vpack.c.b16 %v1252, %v1248
      %v1625 = vpack.c.b16 %v1257, %v1253
      %v1626 = vpack.c.b16 %v1258, %v1254
      %v1627 = vpack.c.b16 %v1259, %v1255
      %v1628 = vpack.c.b16 %v1260, %v1256
      %v1629 = vpack.c.b16 %v1265, %v1261
      %v1630 = vpack.c.b16 %v1266, %v1262
      %v1631 = vpack.c.b16 %v1267, %v1263
      %v1632 = vpack.c.b16 %v1268, %v1264
      %v1633 = vpack.c.b16 %v1273, %v1269
      %v1634 = vpack.c.b16 %v1274, %v1270
      %v1635 = vpack.c.b16 %v1275, %v1271
      %v1636 = vpack.c.b16 %v1276, %v1272
      %v1637 = vpack.c.b16 %v1281, %v1277
      %v1638 = vpack.c.b16 %v1282, %v1278
      %v1639 = vpack.c.b16 %v1283, %v1279
      %v1640 = vpack.c.b16 %v1284, %v1280
      %v1641 = vpack.c.b16 %v1289, %v1285
      %v1642 = vpack.c.b16 %v1290, %v1286
      %v1643 = vpack.c.b16 %v1291, %v1287
      %v1644 = vpack.c.b16 %v1292, %v1288
      %v1645 = vpack.c.b16 %v1297, %v1293
      %v1646 = vpack.c.b16 %v1298, %v1294
      %v1647 = vpack.c.b16 %v1299, %v1295
      %v1648 = vpack.c.b16 %v1300, %v1296
      %v1649 = vpack.c.b16 %v1305, %v1301
      %v1650 = vpack.c.b16 %v1306, %v1302
      %v1651 = vpack.c.b16 %v1307, %v1303
      %v1652 = vpack.c.b16 %v1308, %v1304
      %v1653 = vpack.c.b16 %v1313, %v1309
      %v1654 = vpack.c.b16 %v1314, %v1310
      %v1655 = vpack.c.b16 %v1315, %v1311
      %v1656 = vpack.c.b16 %v1316, %v1312
      %v1657 = vpack.c.b16 %v1321, %v1317
      %v1658 = vpack.c.b16 %v1322, %v1318
      %v1659 = vpack.c.b16 %v1323, %v1319
      %v1660 = vpack.c.b16 %v1324, %v1320
      %v1661 = vpack.c.b16 %v1329, %v1325
      %v1662 = vpack.c.b16 %v1330, %v1326
      %v1663 = vpack.c.b16 %v1331, %v1327
      %v1664 = vpack.c.b16 %v1332, %v1328
      %v1665 = vpack.c.b16 %v1337, %v1333
      %v1666 = vpack.c.b16 %v1338, %v1334
      %v1667 = vpack.c.b16 %v1339, %v1335
      %v1668 = vpack.c.b16 %v1340, %v1336
      %v1669 = vpack.c.b16 %v1345, %v1341
      %v1670 = vpack.c.b16 %v1346, %v1342
      %v1671 = vpack.c.b16 %v1347, %v1343
      %v1672 = vpack.c.b16 %v1348, %v1344
      %v1673 = vpack.c.b16 %v1353, %v1349
      %v1674 = vpack.c.b16 %v1354, %v1350
      %v1675 = vpack.c.b16 %v1355, %v1351
      %v1676 = vpack.c.b16 %v1356, %v1352
      %v1677 = vpack.c.b16 %v1361, %v1357
      %v1678 = vpack.c.b16 %v1362, %v1358
      %v1679 = vpack.c.b16 %v1363, %v1359
      %v1680 = vpack.c.b16 %v1364, %v1360
      %v1681 = vpack.c.b16 %v1369, %v1365
      %v1682 = vpack.c.b16 %v1370, %v1366
      %v1683 = vpack.c.b16 %v1371, %v1367
      %v1684 = vpack.c.b16 %v1372, %v1368
      %v1685 = vpack.c.b16 %v1377, %v1373
      %v1686 = vpack.c.b16 %v1378, %v1374
      %v1687 = vpack.c.b16 %v1379, %v1375
      %v1688 = vpack.c.b16 %v1380, %v1376
      %v1689 = vpack.c.b16 %v1385, %v1381
      %v1690 = vpack.c.b16 %v1386, %v1382
      %v1691 = vpack.c.b16 %v1387, %v1383
      %v1692 = vpack.c.b16 %v1388, %v1384
      %v1693 = vpack.c.b16 %v1393, %v1389
      %v1694 = vpack.c.b16 %v1394, %v1390
      %v1695 = vpack.c.b16 %v1395, %v1391
      %v1696 = vpack.c.b16 %v1396, %v1392
      %v1697 = vpack.c.b16 %v1401, %v1397
      %v1698 = vpack.c.b16 %v1402, %v1398
      %v1699 = vpack.c.b16 %v1403, %v1399
      %v1700 = vpack.c.b16 %v1404, %v1400
      %v1701 = vpack.c.b16 %v1409, %v1405
      %v1702 = vpack.c.b16 %v1410, %v1406
      %v1703 = vpack.c.b16 %v1411, %v1407
      %v1704 = vpack.c.b16 %v1412, %v1408
      %v1705 = vpack.c.b16 %v1417, %v1413
      %v1706 = vpack.c.b16 %v1418, %v1414
      %v1707 = vpack.c.b16 %v1419, %v1415
      %v1708 = vpack.c.b16 %v1420, %v1416
      %v1709 = vpack.c.b16 %v1425, %v1421
      %v1710 = vpack.c.b16 %v1426, %v1422
      %v1711 = vpack.c.b16 %v1427, %v1423
      %v1712 = vpack.c.b16 %v1428, %v1424
      %v1713 = vpack.c.b16 %v1433, %v1429
      %v1714 = vpack.c.b16 %v1434, %v1430
      %v1715 = vpack.c.b16 %v1435, %v1431
      %v1716 = vpack.c.b16 %v1436, %v1432
      %v1717 = vpack.c.b16 %v1441, %v1437
      %v1718 = vpack.c.b16 %v1442, %v1438
      %v1719 = vpack.c.b16 %v1443, %v1439
      %v1720 = vpack.c.b16 %v1444, %v1440
      %v1721 = vpack.c.b16 %v1449, %v1445
      %v1722 = vpack.c.b16 %v1450, %v1446
      %v1723 = vpack.c.b16 %v1451, %v1447
      %v1724 = vpack.c.b16 %v1452, %v1448
      %v1725 = vpack.c.b16 %v1457, %v1453
      %v1726 = vpack.c.b16 %v1458, %v1454
      %v1727 = vpack.c.b16 %v1459, %v1455
      %v1728 = vpack.c.b16 %v1460, %v1456
      %v1729 = vpack.c.b16 %v1465, %v1461
      %v1730 = vpack.c.b16 %v1466, %v1462
      %v1731 = vpack.c.b16 %v1467, %v1463
      %v1732 = vpack.c.b16 %v1468, %v1464
      %v1733 = vpack.c.b16 %v1473, %v1469
      %v1734 = vpack.c.b16 %v1474, %v1470
      %v1735 = vpack.c.b16 %v1475, %v1471
      %v1736 = vpack.c.b16 %v1476, %v1472
      %v1737 = vpack.c.b16 %v1481, %v1477
      %v1738 = vpack.c.b16 %v1482, %v1478
      %v1739 = vpack.c.b16 %v1483, %v1479
      %v1740 = vpack.c.b16 %v1484, %v1480
      %v1741 = vpack.c.b16 %v1489, %v1485
      %v1742 = vpack.c.b16 %v1490, %v1486
      %v1743 = vpack.c.b16 %v1491, %v1487
      %v1744 = vpack.c.b16 %v1492, %v1488
      %v1745 = vpack.c.b16 %v1497, %v1493
      %v1746 = vpack.c.b16 %v1498, %v1494
      %v1747 = vpack.c.b16 %v1499, %v1495
      %v1748 = vpack.c.b16 %v1500, %v1496
      %v1749 = vpack.c.b16 %v1505, %v1501
      %v1750 = vpack.c.b16 %v1506, %v1502
      %v1751 = vpack.c.b16 %v1507, %v1503
      %v1752 = vpack.c.b16 %v1508, %v1504
      %v1753 = vpack.c.b16 %v1513, %v1509
      %v1754 = vpack.c.b16 %v1514, %v1510
      %v1755 = vpack.c.b16 %v1515, %v1511
      %v1756 = vpack.c.b16 %v1516, %v1512
      %v1757 = vpack.c.b16 %v1521, %v1517
      %v1758 = vpack.c.b16 %v1522, %v1518
      %v1759 = vpack.c.b16 %v1523, %v1519
      %v1760 = vpack.c.b16 %v1524, %v1520
      %v1761 = vpack.c.b16 %v1529, %v1525
      %v1762 = vpack.c.b16 %v1530, %v1526
      %v1763 = vpack.c.b16 %v1531, %v1527
      %v1764 = vpack.c.b16 %v1532, %v1528
      %v1765 = vpack.c.b16 %v1537, %v1533
      %v1766 = vpack.c.b16 %v1538, %v1534
      %v1767 = vpack.c.b16 %v1539, %v1535
      %v1768 = vpack.c.b16 %v1540, %v1536
      %v1769 = vpack.c.b16 %v1545, %v1541
      %v1770 = vpack.c.b16 %v1546, %v1542
      %v1771 = vpack.c.b16 %v1547, %v1543
      %v1772 = vpack.c.b16 %v1548, %v1544
      %v1773 = vpack.c.b16 %v1553, %v1549
      %v1774 = vpack.c.b16 %v1554, %v1550
      %v1775 = vpack.c.b16 %v1555, %v1551
      %v1776 = vpack.c.b16 %v1556, %v1552
      %v1777 = vpack.c.b16 %v1561, %v1557
      %v1778 = vpack.c.b16 %v1562, %v1558
      %v1779 = vpack.c.b16 %v1563, %v1559
      %v1780 = vpack.c.b16 %v1564, %v1560
      %v1781 = vpack.c.b16 %v1569, %v1565
      %v1782 = vpack.c.b16 %v1570, %v1566
      %v1783 = vpack.c.b16 %v1571, %v1567
      %v1784 = vpack.c.b16 %v1572, %v1568
      %v1785 = vpack.c.b16 %v1577, %v1573
      %v1786 = vpack.c.b16 %v1578, %v1574
      %v1787 = vpack.c.b16 %v1579, %v1575
      %v1788 = vpack.c.b16 %v1580, %v1576
      %v1789 = vpack.c.b16 %v1585, %v1581
      %v1790 = vpack.c.b16 %v1586, %v1582
      %v1791 = vpack.c.b16 %v1587, %v1583
      %v1792 = vpack.c.b16 %v1588, %v1584
      %v1793 = vpack.c.b16 %v1593, %v1589
      %v1794 = vpack.c.b16 %v1594, %v1590
      %v1795 = vpack.c.b16 %v1595, %v1591
      %v1796 = vpack.c.b16 %v1596, %v1592
      %v1797 = vpack.c.b16 %v1601, %v1597
      %v1798 = vpack.c.b16 %v1602, %v1598
      %v1799 = vpack.c.b16 %v1603, %v1599
      %v1800 = vpack.c.b16 %v1604, %v1600
      %v1801 = vpack.c.b16 %v1609, %v1605
      %v1802 = vpack.c.b16 %v1610, %v1606
      %v1803 = vpack.c.b16 %v1611, %v1607
      %v1804 = vpack.c.b16 %v1612, %v1608
      %1997 = vmatpush.bf16.msra.mxu0 %v1641
      %1998 = vmatpush.bf16.msra.mxu0 %v1637
      %1999 = vmatpush.bf16.msra.mxu0 %v1633
      %2000 = vmatpush.bf16.msra.mxu0 %v1629
      %2001 = vmatpush.bf16.msra.mxu0 %v1625
      %2002 = vmatpush.bf16.msra.mxu0 %v1621
      %2003 = vmatpush.bf16.msra.mxu0 %v1617
      %2004 = vmatpush.bf16.msra.mxu0 %v1613
      %2005 = vmatmul.bf16.gmra.mxu0 %v747
      %v2006 = vpop.f32.mrf.mxu0
      %v2007 = vadd.f32 %v1029, %v2006
      %v2008 = vpop.f32.mrf.mxu0
      %2009 = vdwg.mxu0
      %2010 = vmatpush.bf16.msra.mxu0 %v1673
      %2011 = vmatpush.bf16.msra.mxu0 %v1669
      %2012 = vmatpush.bf16.msra.mxu0 %v1665
      %2013 = vmatpush.bf16.msra.mxu0 %v1661
      %2014 = vmatpush.bf16.msra.mxu0 %v1657
      %2015 = vmatpush.bf16.msra.mxu0 %v1653
      %2016 = vmatpush.bf16.msra.mxu0 %v1649
      %2017 = vmatpush.bf16.msra.mxu0 %v1645
      %2018 = vmatmul.bf16.gmra.mxu0 %v748
      %v2019 = vpop.f32.mrf.mxu0
      %v2020 = vadd.f32 %v2007, %v2019
      %v2021 = vpop.f32.mrf.mxu0
      %2022 = vdwg.mxu0
      %2023 = vmatpush.bf16.msra.mxu0 %v1705
      %2024 = vmatpush.bf16.msra.mxu0 %v1701
      %2025 = vmatpush.bf16.msra.mxu0 %v1697
      %2026 = vmatpush.bf16.msra.mxu0 %v1693
      %2027 = vmatpush.bf16.msra.mxu0 %v1689
      %2028 = vmatpush.bf16.msra.mxu0 %v1685
      %2029 = vmatpush.bf16.msra.mxu0 %v1681
      %2030 = vmatpush.bf16.msra.mxu0 %v1677
      %2031 = vmatmul.bf16.gmra.mxu0 %v749
      %v2032 = vpop.f32.mrf.mxu0
      %v2033 = vadd.f32 %v2020, %v2032
      %v2034 = vpop.f32.mrf.mxu0
      %2035 = vdwg.mxu0
      %2036 = vmatpush.bf16.msra.mxu0 %v1737
      %2037 = vmatpush.bf16.msra.mxu0 %v1733
      %2038 = vmatpush.bf16.msra.mxu0 %v1729
      %2039 = vmatpush.bf16.msra.mxu0 %v1725
      %2040 = vmatpush.bf16.msra.mxu0 %v1721
      %2041 = vmatpush.bf16.msra.mxu0 %v1717
      %2042 = vmatpush.bf16.msra.mxu0 %v1713
      %2043 = vmatpush.bf16.msra.mxu0 %v1709
      %2044 = vmatmul.bf16.gmra.mxu0 %v750
      %v2045 = vpop.f32.mrf.mxu0
      %v2046 = vadd.f32 %v2033, %v2045
      %v2047 = vpop.f32.mrf.mxu0
      %2048 = vdwg.mxu0
      %2049 = vmatpush.bf16.msra.mxu0 %v1769
      %2050 = vmatpush.bf16.msra.mxu0 %v1765
      %2051 = vmatpush.bf16.msra.mxu0 %v1761
      %2052 = vmatpush.bf16.msra.mxu0 %v1757
      %2053 = vmatpush.bf16.msra.mxu0 %v1753
      %2054 = vmatpush.bf16.msra.mxu0 %v1749
      %2055 = vmatpush.bf16.msra.mxu0 %v1745
      %2056 = vmatpush.bf16.msra.mxu0 %v1741
      %2057 = vmatmul.bf16.gmra.mxu0 %v751
      %v2058 = vpop.f32.mrf.mxu0
      %v2059 = vadd.f32 %v2046, %v2058
      %v2060 = vpop.f32.mrf.mxu0
      %2061 = vdwg.mxu0
      %2062 = vmatpush.bf16.msra.mxu0 %v1801
      %2063 = vmatpush.bf16.msra.mxu0 %v1797
      %2064 = vmatpush.bf16.msra.mxu0 %v1793
      %2065 = vmatpush.bf16.msra.mxu0 %v1789
      %2066 = vmatpush.bf16.msra.mxu0 %v1785
      %2067 = vmatpush.bf16.msra.mxu0 %v1781
      %2068 = vmatpush.bf16.msra.mxu0 %v1777
      %2069 = vmatpush.bf16.msra.mxu0 %v1773
      %2070 = vmatmul.bf16.gmra.mxu0 %v752
      %v2071 = vpop.f32.mrf.mxu0
      %v2072 = vadd.f32 %v2059, %v2071
      %v2073 = vpop.f32.mrf.mxu0
      %2074 = vdwg.mxu0
      %2075 = vmatpush.bf16.msra.mxu0 %v1642
      %2076 = vmatpush.bf16.msra.mxu0 %v1638
      %2077 = vmatpush.bf16.msra.mxu0 %v1634
      %2078 = vmatpush.bf16.msra.mxu0 %v1630
      %2079 = vmatpush.bf16.msra.mxu0 %v1626
      %2080 = vmatpush.bf16.msra.mxu0 %v1622
      %2081 = vmatpush.bf16.msra.mxu0 %v1618
      %2082 = vmatpush.bf16.msra.mxu0 %v1614
      %2083 = vmatmul.bf16.gmra.mxu0 %v747
      %v2084 = vpop.f32.mrf.mxu0
      %v2085 = vadd.f32 %v1030, %v2084
      %v2086 = vpop.f32.mrf.mxu0
      %2087 = vdwg.mxu0
      %2088 = vmatpush.bf16.msra.mxu0 %v1674
      %2089 = vmatpush.bf16.msra.mxu0 %v1670
      %2090 = vmatpush.bf16.msra.mxu0 %v1666
      %2091 = vmatpush.bf16.msra.mxu0 %v1662
      %2092 = vmatpush.bf16.msra.mxu0 %v1658
      %2093 = vmatpush.bf16.msra.mxu0 %v1654
      %2094 = vmatpush.bf16.msra.mxu0 %v1650
      %2095 = vmatpush.bf16.msra.mxu0 %v1646
      %2096 = vmatmul.bf16.gmra.mxu0 %v748
      %v2097 = vpop.f32.mrf.mxu0
      %v2098 = vadd.f32 %v2085, %v2097
      %v2099 = vpop.f32.mrf.mxu0
      %2100 = vdwg.mxu0
      %2101 = vmatpush.bf16.msra.mxu0 %v1706
      %2102 = vmatpush.bf16.msra.mxu0 %v1702
      %2103 = vmatpush.bf16.msra.mxu0 %v1698
      %2104 = vmatpush.bf16.msra.mxu0 %v1694
      %2105 = vmatpush.bf16.msra.mxu0 %v1690
      %2106 = vmatpush.bf16.msra.mxu0 %v1686
      %2107 = vmatpush.bf16.msra.mxu0 %v1682
      %2108 = vmatpush.bf16.msra.mxu0 %v1678
      %2109 = vmatmul.bf16.gmra.mxu0 %v749
      %v2110 = vpop.f32.mrf.mxu0
      %v2111 = vadd.f32 %v2098, %v2110
      %v2112 = vpop.f32.mrf.mxu0
      %2113 = vdwg.mxu0
      %2114 = vmatpush.bf16.msra.mxu0 %v1738
      %2115 = vmatpush.bf16.msra.mxu0 %v1734
      %2116 = vmatpush.bf16.msra.mxu0 %v1730
      %2117 = vmatpush.bf16.msra.mxu0 %v1726
      %2118 = vmatpush.bf16.msra.mxu0 %v1722
      %2119 = vmatpush.bf16.msra.mxu0 %v1718
      %2120 = vmatpush.bf16.msra.mxu0 %v1714
      %2121 = vmatpush.bf16.msra.mxu0 %v1710
      %2122 = vmatmul.bf16.gmra.mxu0 %v750
      %v2123 = vpop.f32.mrf.mxu0
      %v2124 = vadd.f32 %v2111, %v2123
      %v2125 = vpop.f32.mrf.mxu0
      %2126 = vdwg.mxu0
      %2127 = vmatpush.bf16.msra.mxu0 %v1770
      %2128 = vmatpush.bf16.msra.mxu0 %v1766
      %2129 = vmatpush.bf16.msra.mxu0 %v1762
      %2130 = vmatpush.bf16.msra.mxu0 %v1758
      %2131 = vmatpush.bf16.msra.mxu0 %v1754
      %2132 = vmatpush.bf16.msra.mxu0 %v1750
      %2133 = vmatpush.bf16.msra.mxu0 %v1746
      %2134 = vmatpush.bf16.msra.mxu0 %v1742
      %2135 = vmatmul.bf16.gmra.mxu0 %v751
      %v2136 = vpop.f32.mrf.mxu0
      %v2137 = vadd.f32 %v2124, %v2136
      %v2138 = vpop.f32.mrf.mxu0
      %2139 = vdwg.mxu0
      %2140 = vmatpush.bf16.msra.mxu0 %v1802
      %2141 = vmatpush.bf16.msra.mxu0 %v1798
      %2142 = vmatpush.bf16.msra.mxu0 %v1794
      %2143 = vmatpush.bf16.msra.mxu0 %v1790
      %2144 = vmatpush.bf16.msra.mxu0 %v1786
      %2145 = vmatpush.bf16.msra.mxu0 %v1782
      %2146 = vmatpush.bf16.msra.mxu0 %v1778
      %2147 = vmatpush.bf16.msra.mxu0 %v1774
      %2148 = vmatmul.bf16.gmra.mxu0 %v752
      %v2149 = vpop.f32.mrf.mxu0
      %v2150 = vadd.f32 %v2137, %v2149
      %v2151 = vpop.f32.mrf.mxu0
      %2152 = vdwg.mxu0
      %2153 = vmatpush.bf16.msra.mxu0 %v1643
      %2154 = vmatpush.bf16.msra.mxu0 %v1639
      %2155 = vmatpush.bf16.msra.mxu0 %v1635
      %2156 = vmatpush.bf16.msra.mxu0 %v1631
      %2157 = vmatpush.bf16.msra.mxu0 %v1627
      %2158 = vmatpush.bf16.msra.mxu0 %v1623
      %2159 = vmatpush.bf16.msra.mxu0 %v1619
      %2160 = vmatpush.bf16.msra.mxu0 %v1615
      %2161 = vmatmul.bf16.gmra.mxu0 %v747
      %v2162 = vpop.f32.mrf.mxu0
      %v2163 = vadd.f32 %v1031, %v2162
      %v2164 = vpop.f32.mrf.mxu0
      %2165 = vdwg.mxu0
      %2166 = vmatpush.bf16.msra.mxu0 %v1675
      %2167 = vmatpush.bf16.msra.mxu0 %v1671
      %2168 = vmatpush.bf16.msra.mxu0 %v1667
      %2169 = vmatpush.bf16.msra.mxu0 %v1663
      %2170 = vmatpush.bf16.msra.mxu0 %v1659
      %2171 = vmatpush.bf16.msra.mxu0 %v1655
      %2172 = vmatpush.bf16.msra.mxu0 %v1651
      %2173 = vmatpush.bf16.msra.mxu0 %v1647
      %2174 = vmatmul.bf16.gmra.mxu0 %v748
      %v2175 = vpop.f32.mrf.mxu0
      %v2176 = vadd.f32 %v2163, %v2175
      %v2177 = vpop.f32.mrf.mxu0
      %2178 = vdwg.mxu0
      %2179 = vmatpush.bf16.msra.mxu0 %v1707
      %2180 = vmatpush.bf16.msra.mxu0 %v1703
      %2181 = vmatpush.bf16.msra.mxu0 %v1699
      %2182 = vmatpush.bf16.msra.mxu0 %v1695
      %2183 = vmatpush.bf16.msra.mxu0 %v1691
      %2184 = vmatpush.bf16.msra.mxu0 %v1687
      %2185 = vmatpush.bf16.msra.mxu0 %v1683
      %2186 = vmatpush.bf16.msra.mxu0 %v1679
      %2187 = vmatmul.bf16.gmra.mxu0 %v749
      %v2188 = vpop.f32.mrf.mxu0
      %v2189 = vadd.f32 %v2176, %v2188
      %v2190 = vpop.f32.mrf.mxu0
      %2191 = vdwg.mxu0
      %2192 = vmatpush.bf16.msra.mxu0 %v1739
      %2193 = vmatpush.bf16.msra.mxu0 %v1735
      %2194 = vmatpush.bf16.msra.mxu0 %v1731
      %2195 = vmatpush.bf16.msra.mxu0 %v1727
      %2196 = vmatpush.bf16.msra.mxu0 %v1723
      %2197 = vmatpush.bf16.msra.mxu0 %v1719
      %2198 = vmatpush.bf16.msra.mxu0 %v1715
      %2199 = vmatpush.bf16.msra.mxu0 %v1711
      %2200 = vmatmul.bf16.gmra.mxu0 %v750
      %v2201 = vpop.f32.mrf.mxu0
      %v2202 = vadd.f32 %v2189, %v2201
      %v2203 = vpop.f32.mrf.mxu0
      %2204 = vdwg.mxu0
      %2205 = vmatpush.bf16.msra.mxu0 %v1771
      %2206 = vmatpush.bf16.msra.mxu0 %v1767
      %2207 = vmatpush.bf16.msra.mxu0 %v1763
      %2208 = vmatpush.bf16.msra.mxu0 %v1759
      %2209 = vmatpush.bf16.msra.mxu0 %v1755
      %2210 = vmatpush.bf16.msra.mxu0 %v1751
      %2211 = vmatpush.bf16.msra.mxu0 %v1747
      %2212 = vmatpush.bf16.msra.mxu0 %v1743
      %2213 = vmatmul.bf16.gmra.mxu0 %v751
      %v2214 = vpop.f32.mrf.mxu0
      %v2215 = vadd.f32 %v2202, %v2214
      %v2216 = vpop.f32.mrf.mxu0
      %2217 = vdwg.mxu0
      %2218 = vmatpush.bf16.msra.mxu0 %v1803
      %2219 = vmatpush.bf16.msra.mxu0 %v1799
      %2220 = vmatpush.bf16.msra.mxu0 %v1795
      %2221 = vmatpush.bf16.msra.mxu0 %v1791
      %2222 = vmatpush.bf16.msra.mxu0 %v1787
      %2223 = vmatpush.bf16.msra.mxu0 %v1783
      %2224 = vmatpush.bf16.msra.mxu0 %v1779
      %2225 = vmatpush.bf16.msra.mxu0 %v1775
      %2226 = vmatmul.bf16.gmra.mxu0 %v752
      %v2227 = vpop.f32.mrf.mxu0
      %v2228 = vadd.f32 %v2215, %v2227
      %v2229 = vpop.f32.mrf.mxu0
      %2230 = vdwg.mxu0
      %2231 = vmatpush.bf16.msra.mxu0 %v1644
      %2232 = vmatpush.bf16.msra.mxu0 %v1640
      %2233 = vmatpush.bf16.msra.mxu0 %v1636
      %2234 = vmatpush.bf16.msra.mxu0 %v1632
      %2235 = vmatpush.bf16.msra.mxu0 %v1628
      %2236 = vmatpush.bf16.msra.mxu0 %v1624
      %2237 = vmatpush.bf16.msra.mxu0 %v1620
      %2238 = vmatpush.bf16.msra.mxu0 %v1616
      %2239 = vmatmul.bf16.gmra.mxu0 %v747
      %v2240 = vpop.f32.mrf.mxu0
      %v2241 = vadd.f32 %v1032, %v2240
      %v2242 = vpop.f32.mrf.mxu0
      %2243 = vdwg.mxu0
      %2244 = vmatpush.bf16.msra.mxu0 %v1676
      %2245 = vmatpush.bf16.msra.mxu0 %v1672
      %2246 = vmatpush.bf16.msra.mxu0 %v1668
      %2247 = vmatpush.bf16.msra.mxu0 %v1664
      %2248 = vmatpush.bf16.msra.mxu0 %v1660
      %2249 = vmatpush.bf16.msra.mxu0 %v1656
      %2250 = vmatpush.bf16.msra.mxu0 %v1652
      %2251 = vmatpush.bf16.msra.mxu0 %v1648
      %2252 = vmatmul.bf16.gmra.mxu0 %v748
      %v2253 = vpop.f32.mrf.mxu0
      %v2254 = vadd.f32 %v2241, %v2253
      %v2255 = vpop.f32.mrf.mxu0
      %2256 = vdwg.mxu0
      %2257 = vmatpush.bf16.msra.mxu0 %v1708
      %2258 = vmatpush.bf16.msra.mxu0 %v1704
      %2259 = vmatpush.bf16.msra.mxu0 %v1700
      %2260 = vmatpush.bf16.msra.mxu0 %v1696
      %2261 = vmatpush.bf16.msra.mxu0 %v1692
      %2262 = vmatpush.bf16.msra.mxu0 %v1688
      %2263 = vmatpush.bf16.msra.mxu0 %v1684
      %2264 = vmatpush.bf16.msra.mxu0 %v1680
      %2265 = vmatmul.bf16.gmra.mxu0 %v749
      %v2266 = vpop.f32.mrf.mxu0
      %v2267 = vadd.f32 %v2254, %v2266
      %v2268 = vpop.f32.mrf.mxu0
      %2269 = vdwg.mxu0
      %2270 = vmatpush.bf16.msra.mxu0 %v1740
      %2271 = vmatpush.bf16.msra.mxu0 %v1736
      %2272 = vmatpush.bf16.msra.mxu0 %v1732
      %2273 = vmatpush.bf16.msra.mxu0 %v1728
      %2274 = vmatpush.bf16.msra.mxu0 %v1724
      %2275 = vmatpush.bf16.msra.mxu0 %v1720
      %2276 = vmatpush.bf16.msra.mxu0 %v1716
      %2277 = vmatpush.bf16.msra.mxu0 %v1712
      %2278 = vmatmul.bf16.gmra.mxu0 %v750
      %v2279 = vpop.f32.mrf.mxu0
      %v2280 = vadd.f32 %v2267, %v2279
      %v2281 = vpop.f32.mrf.mxu0
      %2282 = vdwg.mxu0
      %2283 = vmatpush.bf16.msra.mxu0 %v1772
      %2284 = vmatpush.bf16.msra.mxu0 %v1768
      %2285 = vmatpush.bf16.msra.mxu0 %v1764
      %2286 = vmatpush.bf16.msra.mxu0 %v1760
      %2287 = vmatpush.bf16.msra.mxu0 %v1756
      %2288 = vmatpush.bf16.msra.mxu0 %v1752
      %2289 = vmatpush.bf16.msra.mxu0 %v1748
      %2290 = vmatpush.bf16.msra.mxu0 %v1744
      %2291 = vmatmul.bf16.gmra.mxu0 %v751
      %v2292 = vpop.f32.mrf.mxu0
      %v2293 = vadd.f32 %v2280, %v2292
      %v2294 = vpop.f32.mrf.mxu0
      %2295 = vdwg.mxu0
      %2296 = vmatpush.bf16.msra.mxu0 %v1804
      %2297 = vmatpush.bf16.msra.mxu0 %v1800
      %2298 = vmatpush.bf16.msra.mxu0 %v1796
      %2299 = vmatpush.bf16.msra.mxu0 %v1792
      %2300 = vmatpush.bf16.msra.mxu0 %v1788
      %2301 = vmatpush.bf16.msra.mxu0 %v1784
      %2302 = vmatpush.bf16.msra.mxu0 %v1780
      %2303 = vmatpush.bf16.msra.mxu0 %v1776
      %2304 = vmatmul.bf16.gmra.mxu0 %v752
      %v2305 = vpop.f32.mrf.mxu0
      %v2306 = vadd.f32 %v2293, %v2305
      %v2307 = vpop.f32.mrf.mxu0
      %2308 = vdwg.mxu0
      %v2309 = vmax.f32 %v2072, 0.0
      %v2310 = vmax.f32 %v2150, 0.0
      %v2311 = vmax.f32 %v2228, 0.0
      %v2312 = vmax.f32 %v2306, 0.0
      %v2313 = vld [vmem:[#allocation13] sm:$0xff]
      %v2314 = vld [vmem:[#allocation13 + $0x8] sm:$0xff]
      %v2315 = vld [vmem:[#allocation13 + $0x10] sm:$0xff]
      %v2316 = vld [vmem:[#allocation13 + $0x18] sm:$0xff]
      %v2317 = vld [vmem:[#allocation13 + $0x20] sm:$0xff]
      %v2318 = vld [vmem:[#allocation13 + $0x28] sm:$0xff]
      %v2319 = vld [vmem:[#allocation13 + $0x30] sm:$0xff]
      %v2320 = vld [vmem:[#allocation13 + $0x38] sm:$0xff]
      %v2321 = vld [vmem:[#allocation13 + $0x40] sm:$0xff]
      %v2322 = vld [vmem:[#allocation13 + $0x48] sm:$0xff]
      %v2323 = vld [vmem:[#allocation13 + $0x50] sm:$0xff]
      %v2324 = vld [vmem:[#allocation13 + $0x58] sm:$0xff]
      %v2325 = vld [vmem:[#allocation13 + $0x60] sm:$0xff]
      %v2326 = vld [vmem:[#allocation13 + $0x68] sm:$0xff]
      %v2327 = vld [vmem:[#allocation13 + $0x70] sm:$0xff]
      %v2328 = vld [vmem:[#allocation13 + $0x78] sm:$0xff]
      %v2329 = vld [vmem:[#allocation13 + $0x80] sm:$0xff]
      %v2330 = vld [vmem:[#allocation13 + $0x88] sm:$0xff]
      %v2331 = vld [vmem:[#allocation13 + $0x90] sm:$0xff]
      %v2332 = vld [vmem:[#allocation13 + $0x98] sm:$0xff]
      %v2333 = vld [vmem:[#allocation13 + $0xa0] sm:$0xff]
      %v2334 = vld [vmem:[#allocation13 + $0xa8] sm:$0xff]
      %v2335 = vld [vmem:[#allocation13 + $0xb0] sm:$0xff]
      %v2336 = vld [vmem:[#allocation13 + $0xb8] sm:$0xff]
      %v2337 = vld [vmem:[#allocation13 + $0xc0] sm:$0xff]
      %v2338 = vld [vmem:[#allocation13 + $0xc8] sm:$0xff]
      %v2339 = vld [vmem:[#allocation13 + $0xd0] sm:$0xff]
      %v2340 = vld [vmem:[#allocation13 + $0xd8] sm:$0xff]
      %v2341 = vld [vmem:[#allocation13 + $0xe0] sm:$0xff]
      %v2342 = vld [vmem:[#allocation13 + $0xe8] sm:$0xff]
      %v2343 = vld [vmem:[#allocation13 + $0xf0] sm:$0xff]
      %v2344 = vld [vmem:[#allocation13 + $0xf8] sm:$0xff]
      %v2345 = vld [vmem:[#allocation13 + $0x100] sm:$0xff]
      %v2346 = vld [vmem:[#allocation13 + $0x108] sm:$0xff]
      %v2347 = vld [vmem:[#allocation13 + $0x110] sm:$0xff]
      %v2348 = vld [vmem:[#allocation13 + $0x118] sm:$0xff]
      %v2349 = vld [vmem:[#allocation13 + $0x120] sm:$0xff]
      %v2350 = vld [vmem:[#allocation13 + $0x128] sm:$0xff]
      %v2351 = vld [vmem:[#allocation13 + $0x130] sm:$0xff]
      %v2352 = vld [vmem:[#allocation13 + $0x138] sm:$0xff]
      %v2353 = vld [vmem:[#allocation13 + $0x140] sm:$0xff]
      %v2354 = vld [vmem:[#allocation13 + $0x148] sm:$0xff]
      %v2355 = vld [vmem:[#allocation13 + $0x150] sm:$0xff]
      %v2356 = vld [vmem:[#allocation13 + $0x158] sm:$0xff]
      %v2357 = vld [vmem:[#allocation13 + $0x160] sm:$0xff]
      %v2358 = vld [vmem:[#allocation13 + $0x168] sm:$0xff]
      %v2359 = vld [vmem:[#allocation13 + $0x170] sm:$0xff]
      %v2360 = vld [vmem:[#allocation13 + $0x178] sm:$0xff]
      %v2361 = vld [vmem:[#allocation13 + $0x180] sm:$0xff]
      %v2362 = vld [vmem:[#allocation13 + $0x188] sm:$0xff]
      %v2363 = vld [vmem:[#allocation13 + $0x190] sm:$0xff]
      %v2364 = vld [vmem:[#allocation13 + $0x198] sm:$0xff]
      %v2365 = vld [vmem:[#allocation13 + $0x1a0] sm:$0xff]
      %v2366 = vld [vmem:[#allocation13 + $0x1a8] sm:$0xff]
      %v2367 = vld [vmem:[#allocation13 + $0x1b0] sm:$0xff]
      %v2368 = vld [vmem:[#allocation13 + $0x1b8] sm:$0xff]
      %v2369 = vld [vmem:[#allocation13 + $0x1c0] sm:$0xff]
      %v2370 = vld [vmem:[#allocation13 + $0x1c8] sm:$0xff]
      %v2371 = vld [vmem:[#allocation13 + $0x1d0] sm:$0xff]
      %v2372 = vld [vmem:[#allocation13 + $0x1d8] sm:$0xff]
      %v2373 = vld [vmem:[#allocation13 + $0x1e0] sm:$0xff]
      %v2374 = vld [vmem:[#allocation13 + $0x1e8] sm:$0xff]
      %v2375 = vld [vmem:[#allocation13 + $0x1f0] sm:$0xff]
      %v2376 = vld [vmem:[#allocation13 + $0x1f8] sm:$0xff]
      %v2377 = vld [vmem:[#allocation13 + $0x200] sm:$0xff]
      %v2378 = vld [vmem:[#allocation13 + $0x208] sm:$0xff]
      %v2379 = vld [vmem:[#allocation13 + $0x210] sm:$0xff]
      %v2380 = vld [vmem:[#allocation13 + $0x218] sm:$0xff]
      %v2381 = vld [vmem:[#allocation13 + $0x220] sm:$0xff]
      %v2382 = vld [vmem:[#allocation13 + $0x228] sm:$0xff]
      %v2383 = vld [vmem:[#allocation13 + $0x230] sm:$0xff]
      %v2384 = vld [vmem:[#allocation13 + $0x238] sm:$0xff]
      %v2385 = vld [vmem:[#allocation13 + $0x240] sm:$0xff]
      %v2386 = vld [vmem:[#allocation13 + $0x248] sm:$0xff]
      %v2387 = vld [vmem:[#allocation13 + $0x250] sm:$0xff]
      %v2388 = vld [vmem:[#allocation13 + $0x258] sm:$0xff]
      %v2389 = vld [vmem:[#allocation13 + $0x260] sm:$0xff]
      %v2390 = vld [vmem:[#allocation13 + $0x268] sm:$0xff]
      %v2391 = vld [vmem:[#allocation13 + $0x270] sm:$0xff]
      %v2392 = vld [vmem:[#allocation13 + $0x278] sm:$0xff]
      %v2393 = vld [vmem:[#allocation13 + $0x280] sm:$0xff]
      %v2394 = vld [vmem:[#allocation13 + $0x288] sm:$0xff]
      %v2395 = vld [vmem:[#allocation13 + $0x290] sm:$0xff]
      %v2396 = vld [vmem:[#allocation13 + $0x298] sm:$0xff]
      %v2397 = vld [vmem:[#allocation13 + $0x2a0] sm:$0xff]
      %v2398 = vld [vmem:[#allocation13 + $0x2a8] sm:$0xff]
      %v2399 = vld [vmem:[#allocation13 + $0x2b0] sm:$0xff]
      %v2400 = vld [vmem:[#allocation13 + $0x2b8] sm:$0xff]
      %v2401 = vld [vmem:[#allocation13 + $0x2c0] sm:$0xff]
      %v2402 = vld [vmem:[#allocation13 + $0x2c8] sm:$0xff]
      %v2403 = vld [vmem:[#allocation13 + $0x2d0] sm:$0xff]
      %v2404 = vld [vmem:[#allocation13 + $0x2d8] sm:$0xff]
      %v2405 = vld [vmem:[#allocation13 + $0x2e0] sm:$0xff]
      %v2406 = vld [vmem:[#allocation13 + $0x2e8] sm:$0xff]
      %v2407 = vld [vmem:[#allocation13 + $0x2f0] sm:$0xff]
      %v2408 = vld [vmem:[#allocation13 + $0x2f8] sm:$0xff]
      %v2409 = vld [vmem:[#allocation13 + $0x300] sm:$0xff]
      %v2410 = vld [vmem:[#allocation13 + $0x308] sm:$0xff]
      %v2411 = vld [vmem:[#allocation13 + $0x310] sm:$0xff]
      %v2412 = vld [vmem:[#allocation13 + $0x318] sm:$0xff]
      %v2413 = vld [vmem:[#allocation13 + $0x320] sm:$0xff]
      %v2414 = vld [vmem:[#allocation13 + $0x328] sm:$0xff]
      %v2415 = vld [vmem:[#allocation13 + $0x330] sm:$0xff]
      %v2416 = vld [vmem:[#allocation13 + $0x338] sm:$0xff]
      %v2417 = vld [vmem:[#allocation13 + $0x340] sm:$0xff]
      %v2418 = vld [vmem:[#allocation13 + $0x348] sm:$0xff]
      %v2419 = vld [vmem:[#allocation13 + $0x350] sm:$0xff]
      %v2420 = vld [vmem:[#allocation13 + $0x358] sm:$0xff]
      %v2421 = vld [vmem:[#allocation13 + $0x360] sm:$0xff]
      %v2422 = vld [vmem:[#allocation13 + $0x368] sm:$0xff]
      %v2423 = vld [vmem:[#allocation13 + $0x370] sm:$0xff]
      %v2424 = vld [vmem:[#allocation13 + $0x378] sm:$0xff]
      %v2425 = vld [vmem:[#allocation13 + $0x380] sm:$0xff]
      %v2426 = vld [vmem:[#allocation13 + $0x388] sm:$0xff]
      %v2427 = vld [vmem:[#allocation13 + $0x390] sm:$0xff]
      %v2428 = vld [vmem:[#allocation13 + $0x398] sm:$0xff]
      %v2429 = vld [vmem:[#allocation13 + $0x3a0] sm:$0xff]
      %v2430 = vld [vmem:[#allocation13 + $0x3a8] sm:$0xff]
      %v2431 = vld [vmem:[#allocation13 + $0x3b0] sm:$0xff]
      %v2432 = vld [vmem:[#allocation13 + $0x3b8] sm:$0xff]
      %v2433 = vld [vmem:[#allocation13 + $0x3c0] sm:$0xff]
      %v2434 = vld [vmem:[#allocation13 + $0x3c8] sm:$0xff]
      %v2435 = vld [vmem:[#allocation13 + $0x3d0] sm:$0xff]
      %v2436 = vld [vmem:[#allocation13 + $0x3d8] sm:$0xff]
      %v2437 = vld [vmem:[#allocation13 + $0x3e0] sm:$0xff]
      %v2438 = vld [vmem:[#allocation13 + $0x3e8] sm:$0xff]
      %v2439 = vld [vmem:[#allocation13 + $0x3f0] sm:$0xff]
      %v2440 = vld [vmem:[#allocation13 + $0x3f8] sm:$0xff]
      %v2441 = vld [vmem:[#allocation13 + $0x400] sm:$0xff]
      %v2442 = vld [vmem:[#allocation13 + $0x408] sm:$0xff]
      %v2443 = vld [vmem:[#allocation13 + $0x410] sm:$0xff]
      %v2444 = vld [vmem:[#allocation13 + $0x418] sm:$0xff]
      %v2445 = vld [vmem:[#allocation13 + $0x420] sm:$0xff]
      %v2446 = vld [vmem:[#allocation13 + $0x428] sm:$0xff]
      %v2447 = vld [vmem:[#allocation13 + $0x430] sm:$0xff]
      %v2448 = vld [vmem:[#allocation13 + $0x438] sm:$0xff]
      %v2449 = vld [vmem:[#allocation13 + $0x440] sm:$0xff]
      %v2450 = vld [vmem:[#allocation13 + $0x448] sm:$0xff]
      %v2451 = vld [vmem:[#allocation13 + $0x450] sm:$0xff]
      %v2452 = vld [vmem:[#allocation13 + $0x458] sm:$0xff]
      %v2453 = vld [vmem:[#allocation13 + $0x460] sm:$0xff]
      %v2454 = vld [vmem:[#allocation13 + $0x468] sm:$0xff]
      %v2455 = vld [vmem:[#allocation13 + $0x470] sm:$0xff]
      %v2456 = vld [vmem:[#allocation13 + $0x478] sm:$0xff]
      %v2457 = vld [vmem:[#allocation13 + $0x480] sm:$0xff]
      %v2458 = vld [vmem:[#allocation13 + $0x488] sm:$0xff]
      %v2459 = vld [vmem:[#allocation13 + $0x490] sm:$0xff]
      %v2460 = vld [vmem:[#allocation13 + $0x498] sm:$0xff]
      %v2461 = vld [vmem:[#allocation13 + $0x4a0] sm:$0xff]
      %v2462 = vld [vmem:[#allocation13 + $0x4a8] sm:$0xff]
      %v2463 = vld [vmem:[#allocation13 + $0x4b0] sm:$0xff]
      %v2464 = vld [vmem:[#allocation13 + $0x4b8] sm:$0xff]
      %v2465 = vld [vmem:[#allocation13 + $0x4c0] sm:$0xff]
      %v2466 = vld [vmem:[#allocation13 + $0x4c8] sm:$0xff]
      %v2467 = vld [vmem:[#allocation13 + $0x4d0] sm:$0xff]
      %v2468 = vld [vmem:[#allocation13 + $0x4d8] sm:$0xff]
      %v2469 = vld [vmem:[#allocation13 + $0x4e0] sm:$0xff]
      %v2470 = vld [vmem:[#allocation13 + $0x4e8] sm:$0xff]
      %v2471 = vld [vmem:[#allocation13 + $0x4f0] sm:$0xff]
      %v2472 = vld [vmem:[#allocation13 + $0x4f8] sm:$0xff]
      %v2473 = vld [vmem:[#allocation13 + $0x500] sm:$0xff]
      %v2474 = vld [vmem:[#allocation13 + $0x508] sm:$0xff]
      %v2475 = vld [vmem:[#allocation13 + $0x510] sm:$0xff]
      %v2476 = vld [vmem:[#allocation13 + $0x518] sm:$0xff]
      %v2477 = vld [vmem:[#allocation13 + $0x520] sm:$0xff]
      %v2478 = vld [vmem:[#allocation13 + $0x528] sm:$0xff]
      %v2479 = vld [vmem:[#allocation13 + $0x530] sm:$0xff]
      %v2480 = vld [vmem:[#allocation13 + $0x538] sm:$0xff]
      %v2481 = vld [vmem:[#allocation13 + $0x540] sm:$0xff]
      %v2482 = vld [vmem:[#allocation13 + $0x548] sm:$0xff]
      %v2483 = vld [vmem:[#allocation13 + $0x550] sm:$0xff]
      %v2484 = vld [vmem:[#allocation13 + $0x558] sm:$0xff]
      %v2485 = vld [vmem:[#allocation13 + $0x560] sm:$0xff]
      %v2486 = vld [vmem:[#allocation13 + $0x568] sm:$0xff]
      %v2487 = vld [vmem:[#allocation13 + $0x570] sm:$0xff]
      %v2488 = vld [vmem:[#allocation13 + $0x578] sm:$0xff]
      %v2489 = vld [vmem:[#allocation13 + $0x580] sm:$0xff]
      %v2490 = vld [vmem:[#allocation13 + $0x588] sm:$0xff]
      %v2491 = vld [vmem:[#allocation13 + $0x590] sm:$0xff]
      %v2492 = vld [vmem:[#allocation13 + $0x598] sm:$0xff]
      %v2493 = vld [vmem:[#allocation13 + $0x5a0] sm:$0xff]
      %v2494 = vld [vmem:[#allocation13 + $0x5a8] sm:$0xff]
      %v2495 = vld [vmem:[#allocation13 + $0x5b0] sm:$0xff]
      %v2496 = vld [vmem:[#allocation13 + $0x5b8] sm:$0xff]
      %v2497 = vld [vmem:[#allocation13 + $0x5c0] sm:$0xff]
      %v2498 = vld [vmem:[#allocation13 + $0x5c8] sm:$0xff]
      %v2499 = vld [vmem:[#allocation13 + $0x5d0] sm:$0xff]
      %v2500 = vld [vmem:[#allocation13 + $0x5d8] sm:$0xff]
      %v2501 = vld [vmem:[#allocation13 + $0x5e0] sm:$0xff]
      %v2502 = vld [vmem:[#allocation13 + $0x5e8] sm:$0xff]
      %v2503 = vld [vmem:[#allocation13 + $0x5f0] sm:$0xff]
      %v2504 = vld [vmem:[#allocation13 + $0x5f8] sm:$0xff]
      %v2505 = vld [vmem:[#allocation13 + $0x600] sm:$0xff]
      %v2506 = vld [vmem:[#allocation13 + $0x608] sm:$0xff]
      %v2507 = vld [vmem:[#allocation13 + $0x610] sm:$0xff]
      %v2508 = vld [vmem:[#allocation13 + $0x618] sm:$0xff]
      %v2509 = vld [vmem:[#allocation13 + $0x620] sm:$0xff]
      %v2510 = vld [vmem:[#allocation13 + $0x628] sm:$0xff]
      %v2511 = vld [vmem:[#allocation13 + $0x630] sm:$0xff]
      %v2512 = vld [vmem:[#allocation13 + $0x638] sm:$0xff]
      %v2513 = vld [vmem:[#allocation13 + $0x640] sm:$0xff]
      %v2514 = vld [vmem:[#allocation13 + $0x648] sm:$0xff]
      %v2515 = vld [vmem:[#allocation13 + $0x650] sm:$0xff]
      %v2516 = vld [vmem:[#allocation13 + $0x658] sm:$0xff]
      %v2517 = vld [vmem:[#allocation13 + $0x660] sm:$0xff]
      %v2518 = vld [vmem:[#allocation13 + $0x668] sm:$0xff]
      %v2519 = vld [vmem:[#allocation13 + $0x670] sm:$0xff]
      %v2520 = vld [vmem:[#allocation13 + $0x678] sm:$0xff]
      %v2521 = vld [vmem:[#allocation13 + $0x680] sm:$0xff]
      %v2522 = vld [vmem:[#allocation13 + $0x688] sm:$0xff]
      %v2523 = vld [vmem:[#allocation13 + $0x690] sm:$0xff]
      %v2524 = vld [vmem:[#allocation13 + $0x698] sm:$0xff]
      %v2525 = vld [vmem:[#allocation13 + $0x6a0] sm:$0xff]
      %v2526 = vld [vmem:[#allocation13 + $0x6a8] sm:$0xff]
      %v2527 = vld [vmem:[#allocation13 + $0x6b0] sm:$0xff]
      %v2528 = vld [vmem:[#allocation13 + $0x6b8] sm:$0xff]
      %v2529 = vld [vmem:[#allocation13 + $0x6c0] sm:$0xff]
      %v2530 = vld [vmem:[#allocation13 + $0x6c8] sm:$0xff]
      %v2531 = vld [vmem:[#allocation13 + $0x6d0] sm:$0xff]
      %v2532 = vld [vmem:[#allocation13 + $0x6d8] sm:$0xff]
      %v2533 = vld [vmem:[#allocation13 + $0x6e0] sm:$0xff]
      %v2534 = vld [vmem:[#allocation13 + $0x6e8] sm:$0xff]
      %v2535 = vld [vmem:[#allocation13 + $0x6f0] sm:$0xff]
      %v2536 = vld [vmem:[#allocation13 + $0x6f8] sm:$0xff]
      %v2537 = vld [vmem:[#allocation13 + $0x700] sm:$0xff]
      %v2538 = vld [vmem:[#allocation13 + $0x708] sm:$0xff]
      %v2539 = vld [vmem:[#allocation13 + $0x710] sm:$0xff]
      %v2540 = vld [vmem:[#allocation13 + $0x718] sm:$0xff]
      %v2541 = vld [vmem:[#allocation13 + $0x720] sm:$0xff]
      %v2542 = vld [vmem:[#allocation13 + $0x728] sm:$0xff]
      %v2543 = vld [vmem:[#allocation13 + $0x730] sm:$0xff]
      %v2544 = vld [vmem:[#allocation13 + $0x738] sm:$0xff]
      %v2545 = vld [vmem:[#allocation13 + $0x740] sm:$0xff]
      %v2546 = vld [vmem:[#allocation13 + $0x748] sm:$0xff]
      %v2547 = vld [vmem:[#allocation13 + $0x750] sm:$0xff]
      %v2548 = vld [vmem:[#allocation13 + $0x758] sm:$0xff]
      %v2549 = vld [vmem:[#allocation13 + $0x760] sm:$0xff]
      %v2550 = vld [vmem:[#allocation13 + $0x768] sm:$0xff]
      %v2551 = vld [vmem:[#allocation13 + $0x770] sm:$0xff]
      %v2552 = vld [vmem:[#allocation13 + $0x778] sm:$0xff]
      %v2553 = vld [vmem:[#allocation13 + $0x780] sm:$0xff]
      %v2554 = vld [vmem:[#allocation13 + $0x788] sm:$0xff]
      %v2555 = vld [vmem:[#allocation13 + $0x790] sm:$0xff]
      %v2556 = vld [vmem:[#allocation13 + $0x798] sm:$0xff]
      %v2557 = vld [vmem:[#allocation13 + $0x7a0] sm:$0xff]
      %v2558 = vld [vmem:[#allocation13 + $0x7a8] sm:$0xff]
      %v2559 = vld [vmem:[#allocation13 + $0x7b0] sm:$0xff]
      %v2560 = vld [vmem:[#allocation13 + $0x7b8] sm:$0xff]
      %v2561 = vld [vmem:[#allocation13 + $0x7c0] sm:$0xff]
      %v2562 = vld [vmem:[#allocation13 + $0x7c8] sm:$0xff]
      %v2563 = vld [vmem:[#allocation13 + $0x7d0] sm:$0xff]
      %v2564 = vld [vmem:[#allocation13 + $0x7d8] sm:$0xff]
      %v2565 = vld [vmem:[#allocation13 + $0x7e0] sm:$0xff]
      %v2566 = vld [vmem:[#allocation13 + $0x7e8] sm:$0xff]
      %v2567 = vld [vmem:[#allocation13 + $0x7f0] sm:$0xff]
      %v2568 = vld [vmem:[#allocation13 + $0x7f8] sm:$0xff]
      %v2569 = vld [vmem:[#allocation13 + $0x800] sm:$0xff]
      %v2570 = vld [vmem:[#allocation13 + $0x808] sm:$0xff]
      %v2571 = vld [vmem:[#allocation13 + $0x810] sm:$0xff]
      %v2572 = vld [vmem:[#allocation13 + $0x818] sm:$0xff]
      %v2573 = vld [vmem:[#allocation13 + $0x820] sm:$0xff]
      %v2574 = vld [vmem:[#allocation13 + $0x828] sm:$0xff]
      %v2575 = vld [vmem:[#allocation13 + $0x830] sm:$0xff]
      %v2576 = vld [vmem:[#allocation13 + $0x838] sm:$0xff]
      %v2577 = vld [vmem:[#allocation13 + $0x840] sm:$0xff]
      %v2578 = vld [vmem:[#allocation13 + $0x848] sm:$0xff]
      %v2579 = vld [vmem:[#allocation13 + $0x850] sm:$0xff]
      %v2580 = vld [vmem:[#allocation13 + $0x858] sm:$0xff]
      %v2581 = vld [vmem:[#allocation13 + $0x860] sm:$0xff]
      %v2582 = vld [vmem:[#allocation13 + $0x868] sm:$0xff]
      %v2583 = vld [vmem:[#allocation13 + $0x870] sm:$0xff]
      %v2584 = vld [vmem:[#allocation13 + $0x878] sm:$0xff]
      %v2585 = vld [vmem:[#allocation13 + $0x880] sm:$0xff]
      %v2586 = vld [vmem:[#allocation13 + $0x888] sm:$0xff]
      %v2587 = vld [vmem:[#allocation13 + $0x890] sm:$0xff]
      %v2588 = vld [vmem:[#allocation13 + $0x898] sm:$0xff]
      %v2589 = vld [vmem:[#allocation13 + $0x8a0] sm:$0xff]
      %v2590 = vld [vmem:[#allocation13 + $0x8a8] sm:$0xff]
      %v2591 = vld [vmem:[#allocation13 + $0x8b0] sm:$0xff]
      %v2592 = vld [vmem:[#allocation13 + $0x8b8] sm:$0xff]
      %v2593 = vld [vmem:[#allocation13 + $0x8c0] sm:$0xff]
      %v2594 = vld [vmem:[#allocation13 + $0x8c8] sm:$0xff]
      %v2595 = vld [vmem:[#allocation13 + $0x8d0] sm:$0xff]
      %v2596 = vld [vmem:[#allocation13 + $0x8d8] sm:$0xff]
      %v2597 = vld [vmem:[#allocation13 + $0x8e0] sm:$0xff]
      %v2598 = vld [vmem:[#allocation13 + $0x8e8] sm:$0xff]
      %v2599 = vld [vmem:[#allocation13 + $0x8f0] sm:$0xff]
      %v2600 = vld [vmem:[#allocation13 + $0x8f8] sm:$0xff]
      %v2601 = vld [vmem:[#allocation13 + $0x900] sm:$0xff]
      %v2602 = vld [vmem:[#allocation13 + $0x908] sm:$0xff]
      %v2603 = vld [vmem:[#allocation13 + $0x910] sm:$0xff]
      %v2604 = vld [vmem:[#allocation13 + $0x918] sm:$0xff]
      %v2605 = vld [vmem:[#allocation13 + $0x920] sm:$0xff]
      %v2606 = vld [vmem:[#allocation13 + $0x928] sm:$0xff]
      %v2607 = vld [vmem:[#allocation13 + $0x930] sm:$0xff]
      %v2608 = vld [vmem:[#allocation13 + $0x938] sm:$0xff]
      %v2609 = vld [vmem:[#allocation13 + $0x940] sm:$0xff]
      %v2610 = vld [vmem:[#allocation13 + $0x948] sm:$0xff]
      %v2611 = vld [vmem:[#allocation13 + $0x950] sm:$0xff]
      %v2612 = vld [vmem:[#allocation13 + $0x958] sm:$0xff]
      %v2613 = vld [vmem:[#allocation13 + $0x960] sm:$0xff]
      %v2614 = vld [vmem:[#allocation13 + $0x968] sm:$0xff]
      %v2615 = vld [vmem:[#allocation13 + $0x970] sm:$0xff]
      %v2616 = vld [vmem:[#allocation13 + $0x978] sm:$0xff]
      %v2617 = vld [vmem:[#allocation13 + $0x980] sm:$0xff]
      %v2618 = vld [vmem:[#allocation13 + $0x988] sm:$0xff]
      %v2619 = vld [vmem:[#allocation13 + $0x990] sm:$0xff]
      %v2620 = vld [vmem:[#allocation13 + $0x998] sm:$0xff]
      %v2621 = vld [vmem:[#allocation13 + $0x9a0] sm:$0xff]
      %v2622 = vld [vmem:[#allocation13 + $0x9a8] sm:$0xff]
      %v2623 = vld [vmem:[#allocation13 + $0x9b0] sm:$0xff]
      %v2624 = vld [vmem:[#allocation13 + $0x9b8] sm:$0xff]
      %v2625 = vld [vmem:[#allocation13 + $0x9c0] sm:$0xff]
      %v2626 = vld [vmem:[#allocation13 + $0x9c8] sm:$0xff]
      %v2627 = vld [vmem:[#allocation13 + $0x9d0] sm:$0xff]
      %v2628 = vld [vmem:[#allocation13 + $0x9d8] sm:$0xff]
      %v2629 = vld [vmem:[#allocation13 + $0x9e0] sm:$0xff]
      %v2630 = vld [vmem:[#allocation13 + $0x9e8] sm:$0xff]
      %v2631 = vld [vmem:[#allocation13 + $0x9f0] sm:$0xff]
      %v2632 = vld [vmem:[#allocation13 + $0x9f8] sm:$0xff]
      %v2633 = vld [vmem:[#allocation13 + $0xa00] sm:$0xff]
      %v2634 = vld [vmem:[#allocation13 + $0xa08] sm:$0xff]
      %v2635 = vld [vmem:[#allocation13 + $0xa10] sm:$0xff]
      %v2636 = vld [vmem:[#allocation13 + $0xa18] sm:$0xff]
      %v2637 = vld [vmem:[#allocation13 + $0xa20] sm:$0xff]
      %v2638 = vld [vmem:[#allocation13 + $0xa28] sm:$0xff]
      %v2639 = vld [vmem:[#allocation13 + $0xa30] sm:$0xff]
      %v2640 = vld [vmem:[#allocation13 + $0xa38] sm:$0xff]
      %v2641 = vld [vmem:[#allocation13 + $0xa40] sm:$0xff]
      %v2642 = vld [vmem:[#allocation13 + $0xa48] sm:$0xff]
      %v2643 = vld [vmem:[#allocation13 + $0xa50] sm:$0xff]
      %v2644 = vld [vmem:[#allocation13 + $0xa58] sm:$0xff]
      %v2645 = vld [vmem:[#allocation13 + $0xa60] sm:$0xff]
      %v2646 = vld [vmem:[#allocation13 + $0xa68] sm:$0xff]
      %v2647 = vld [vmem:[#allocation13 + $0xa70] sm:$0xff]
      %v2648 = vld [vmem:[#allocation13 + $0xa78] sm:$0xff]
      %v2649 = vld [vmem:[#allocation13 + $0xa80] sm:$0xff]
      %v2650 = vld [vmem:[#allocation13 + $0xa88] sm:$0xff]
      %v2651 = vld [vmem:[#allocation13 + $0xa90] sm:$0xff]
      %v2652 = vld [vmem:[#allocation13 + $0xa98] sm:$0xff]
      %v2653 = vld [vmem:[#allocation13 + $0xaa0] sm:$0xff]
      %v2654 = vld [vmem:[#allocation13 + $0xaa8] sm:$0xff]
      %v2655 = vld [vmem:[#allocation13 + $0xab0] sm:$0xff]
      %v2656 = vld [vmem:[#allocation13 + $0xab8] sm:$0xff]
      %v2657 = vld [vmem:[#allocation13 + $0xac0] sm:$0xff]
      %v2658 = vld [vmem:[#allocation13 + $0xac8] sm:$0xff]
      %v2659 = vld [vmem:[#allocation13 + $0xad0] sm:$0xff]
      %v2660 = vld [vmem:[#allocation13 + $0xad8] sm:$0xff]
      %v2661 = vld [vmem:[#allocation13 + $0xae0] sm:$0xff]
      %v2662 = vld [vmem:[#allocation13 + $0xae8] sm:$0xff]
      %v2663 = vld [vmem:[#allocation13 + $0xaf0] sm:$0xff]
      %v2664 = vld [vmem:[#allocation13 + $0xaf8] sm:$0xff]
      %v2665 = vld [vmem:[#allocation13 + $0xb00] sm:$0xff]
      %v2666 = vld [vmem:[#allocation13 + $0xb08] sm:$0xff]
      %v2667 = vld [vmem:[#allocation13 + $0xb10] sm:$0xff]
      %v2668 = vld [vmem:[#allocation13 + $0xb18] sm:$0xff]
      %v2669 = vld [vmem:[#allocation13 + $0xb20] sm:$0xff]
      %v2670 = vld [vmem:[#allocation13 + $0xb28] sm:$0xff]
      %v2671 = vld [vmem:[#allocation13 + $0xb30] sm:$0xff]
      %v2672 = vld [vmem:[#allocation13 + $0xb38] sm:$0xff]
      %v2673 = vld [vmem:[#allocation13 + $0xb40] sm:$0xff]
      %v2674 = vld [vmem:[#allocation13 + $0xb48] sm:$0xff]
      %v2675 = vld [vmem:[#allocation13 + $0xb50] sm:$0xff]
      %v2676 = vld [vmem:[#allocation13 + $0xb58] sm:$0xff]
      %v2677 = vld [vmem:[#allocation13 + $0xb60] sm:$0xff]
      %v2678 = vld [vmem:[#allocation13 + $0xb68] sm:$0xff]
      %v2679 = vld [vmem:[#allocation13 + $0xb70] sm:$0xff]
      %v2680 = vld [vmem:[#allocation13 + $0xb78] sm:$0xff]
      %v2681 = vld [vmem:[#allocation13 + $0xb80] sm:$0xff]
      %v2682 = vld [vmem:[#allocation13 + $0xb88] sm:$0xff]
      %v2683 = vld [vmem:[#allocation13 + $0xb90] sm:$0xff]
      %v2684 = vld [vmem:[#allocation13 + $0xb98] sm:$0xff]
      %v2685 = vld [vmem:[#allocation13 + $0xba0] sm:$0xff]
      %v2686 = vld [vmem:[#allocation13 + $0xba8] sm:$0xff]
      %v2687 = vld [vmem:[#allocation13 + $0xbb0] sm:$0xff]
      %v2688 = vld [vmem:[#allocation13 + $0xbb8] sm:$0xff]
      %v2689 = vld [vmem:[#allocation13 + $0xbc0] sm:$0xff]
      %v2690 = vld [vmem:[#allocation13 + $0xbc8] sm:$0xff]
      %v2691 = vld [vmem:[#allocation13 + $0xbd0] sm:$0xff]
      %v2692 = vld [vmem:[#allocation13 + $0xbd8] sm:$0xff]
      %v2693 = vld [vmem:[#allocation13 + $0xbe0] sm:$0xff]
      %v2694 = vld [vmem:[#allocation13 + $0xbe8] sm:$0xff]
      %v2695 = vld [vmem:[#allocation13 + $0xbf0] sm:$0xff]
      %v2696 = vld [vmem:[#allocation13 + $0xbf8] sm:$0xff]
      %v2697 = vld [vmem:[#allocation15] sm:$0xf]
      %v2699 = vperm.slane %v2697, 0
      %v2700 = vperm.slane %v2697, 1
      %v2701 = vperm.slane %v2697, 2
      %v2702 = vperm.slane %v2697, 3
      %v3091 = vunpack.c.l.b16 %v2313
      %v3092 = vunpack.c.h.b16 %v2313
      %v3093 = vunpack.c.l.b16 %v2314
      %v3094 = vunpack.c.h.b16 %v2314
      %v3095 = vunpack.c.l.b16 %v2315
      %v3096 = vunpack.c.h.b16 %v2315
      %v3097 = vunpack.c.l.b16 %v2316
      %v3098 = vunpack.c.h.b16 %v2316
      %v3099 = vunpack.c.l.b16 %v2317
      %v3100 = vunpack.c.h.b16 %v2317
      %v3101 = vunpack.c.l.b16 %v2318
      %v3102 = vunpack.c.h.b16 %v2318
      %v3103 = vunpack.c.l.b16 %v2319
      %v3104 = vunpack.c.h.b16 %v2319
      %v3105 = vunpack.c.l.b16 %v2320
      %v3106 = vunpack.c.h.b16 %v2320
      %v3107 = vunpack.c.l.b16 %v2321
      %v3108 = vunpack.c.h.b16 %v2321
      %v3109 = vunpack.c.l.b16 %v2322
      %v3110 = vunpack.c.h.b16 %v2322
      %v3111 = vunpack.c.l.b16 %v2323
      %v3112 = vunpack.c.h.b16 %v2323
      %v3113 = vunpack.c.l.b16 %v2324
      %v3114 = vunpack.c.h.b16 %v2324
      %v3115 = vunpack.c.l.b16 %v2325
      %v3116 = vunpack.c.h.b16 %v2325
      %v3117 = vunpack.c.l.b16 %v2326
      %v3118 = vunpack.c.h.b16 %v2326
      %v3119 = vunpack.c.l.b16 %v2327
      %v3120 = vunpack.c.h.b16 %v2327
      %v3121 = vunpack.c.l.b16 %v2328
      %v3122 = vunpack.c.h.b16 %v2328
      %v3123 = vunpack.c.l.b16 %v2329
      %v3124 = vunpack.c.h.b16 %v2329
      %v3125 = vunpack.c.l.b16 %v2330
      %v3126 = vunpack.c.h.b16 %v2330
      %v3127 = vunpack.c.l.b16 %v2331
      %v3128 = vunpack.c.h.b16 %v2331
      %v3129 = vunpack.c.l.b16 %v2332
      %v3130 = vunpack.c.h.b16 %v2332
      %v3131 = vunpack.c.l.b16 %v2333
      %v3132 = vunpack.c.h.b16 %v2333
      %v3133 = vunpack.c.l.b16 %v2334
      %v3134 = vunpack.c.h.b16 %v2334
      %v3135 = vunpack.c.l.b16 %v2335
      %v3136 = vunpack.c.h.b16 %v2335
      %v3137 = vunpack.c.l.b16 %v2336
      %v3138 = vunpack.c.h.b16 %v2336
      %v3139 = vunpack.c.l.b16 %v2337
      %v3140 = vunpack.c.h.b16 %v2337
      %v3141 = vunpack.c.l.b16 %v2338
      %v3142 = vunpack.c.h.b16 %v2338
      %v3143 = vunpack.c.l.b16 %v2339
      %v3144 = vunpack.c.h.b16 %v2339
      %v3145 = vunpack.c.l.b16 %v2340
      %v3146 = vunpack.c.h.b16 %v2340
      %v3147 = vunpack.c.l.b16 %v2341
      %v3148 = vunpack.c.h.b16 %v2341
      %v3149 = vunpack.c.l.b16 %v2342
      %v3150 = vunpack.c.h.b16 %v2342
      %v3151 = vunpack.c.l.b16 %v2343
      %v3152 = vunpack.c.h.b16 %v2343
      %v3153 = vunpack.c.l.b16 %v2344
      %v3154 = vunpack.c.h.b16 %v2344
      %v3155 = vunpack.c.l.b16 %v2345
      %v3156 = vunpack.c.h.b16 %v2345
      %v3157 = vunpack.c.l.b16 %v2346
      %v3158 = vunpack.c.h.b16 %v2346
      %v3159 = vunpack.c.l.b16 %v2347
      %v3160 = vunpack.c.h.b16 %v2347
      %v3161 = vunpack.c.l.b16 %v2348
      %v3162 = vunpack.c.h.b16 %v2348
      %v3163 = vunpack.c.l.b16 %v2349
      %v3164 = vunpack.c.h.b16 %v2349
      %v3165 = vunpack.c.l.b16 %v2350
      %v3166 = vunpack.c.h.b16 %v2350
      %v3167 = vunpack.c.l.b16 %v2351
      %v3168 = vunpack.c.h.b16 %v2351
      %v3169 = vunpack.c.l.b16 %v2352
      %v3170 = vunpack.c.h.b16 %v2352
      %v3171 = vunpack.c.l.b16 %v2353
      %v3172 = vunpack.c.h.b16 %v2353
      %v3173 = vunpack.c.l.b16 %v2354
      %v3174 = vunpack.c.h.b16 %v2354
      %v3175 = vunpack.c.l.b16 %v2355
      %v3176 = vunpack.c.h.b16 %v2355
      %v3177 = vunpack.c.l.b16 %v2356
      %v3178 = vunpack.c.h.b16 %v2356
      %v3179 = vunpack.c.l.b16 %v2357
      %v3180 = vunpack.c.h.b16 %v2357
      %v3181 = vunpack.c.l.b16 %v2358
      %v3182 = vunpack.c.h.b16 %v2358
      %v3183 = vunpack.c.l.b16 %v2359
      %v3184 = vunpack.c.h.b16 %v2359
      %v3185 = vunpack.c.l.b16 %v2360
      %v3186 = vunpack.c.h.b16 %v2360
      %v3187 = vunpack.c.l.b16 %v2361
      %v3188 = vunpack.c.h.b16 %v2361
      %v3189 = vunpack.c.l.b16 %v2362
      %v3190 = vunpack.c.h.b16 %v2362
      %v3191 = vunpack.c.l.b16 %v2363
      %v3192 = vunpack.c.h.b16 %v2363
      %v3193 = vunpack.c.l.b16 %v2364
      %v3194 = vunpack.c.h.b16 %v2364
      %v3195 = vunpack.c.l.b16 %v2365
      %v3196 = vunpack.c.h.b16 %v2365
      %v3197 = vunpack.c.l.b16 %v2366
      %v3198 = vunpack.c.h.b16 %v2366
      %v3199 = vunpack.c.l.b16 %v2367
      %v3200 = vunpack.c.h.b16 %v2367
      %v3201 = vunpack.c.l.b16 %v2368
      %v3202 = vunpack.c.h.b16 %v2368
      %v3203 = vunpack.c.l.b16 %v2369
      %v3204 = vunpack.c.h.b16 %v2369
      %v3205 = vunpack.c.l.b16 %v2370
      %v3206 = vunpack.c.h.b16 %v2370
      %v3207 = vunpack.c.l.b16 %v2371
      %v3208 = vunpack.c.h.b16 %v2371
      %v3209 = vunpack.c.l.b16 %v2372
      %v3210 = vunpack.c.h.b16 %v2372
      %v3211 = vunpack.c.l.b16 %v2373
      %v3212 = vunpack.c.h.b16 %v2373
      %v3213 = vunpack.c.l.b16 %v2374
      %v3214 = vunpack.c.h.b16 %v2374
      %v3215 = vunpack.c.l.b16 %v2375
      %v3216 = vunpack.c.h.b16 %v2375
      %v3217 = vunpack.c.l.b16 %v2376
      %v3218 = vunpack.c.h.b16 %v2376
      %v3219 = vunpack.c.l.b16 %v2377
      %v3220 = vunpack.c.h.b16 %v2377
      %v3221 = vunpack.c.l.b16 %v2378
      %v3222 = vunpack.c.h.b16 %v2378
      %v3223 = vunpack.c.l.b16 %v2379
      %v3224 = vunpack.c.h.b16 %v2379
      %v3225 = vunpack.c.l.b16 %v2380
      %v3226 = vunpack.c.h.b16 %v2380
      %v3227 = vunpack.c.l.b16 %v2381
      %v3228 = vunpack.c.h.b16 %v2381
      %v3229 = vunpack.c.l.b16 %v2382
      %v3230 = vunpack.c.h.b16 %v2382
      %v3231 = vunpack.c.l.b16 %v2383
      %v3232 = vunpack.c.h.b16 %v2383
      %v3233 = vunpack.c.l.b16 %v2384
      %v3234 = vunpack.c.h.b16 %v2384
      %v3235 = vunpack.c.l.b16 %v2385
      %v3236 = vunpack.c.h.b16 %v2385
      %v3237 = vunpack.c.l.b16 %v2386
      %v3238 = vunpack.c.h.b16 %v2386
      %v3239 = vunpack.c.l.b16 %v2387
      %v3240 = vunpack.c.h.b16 %v2387
      %v3241 = vunpack.c.l.b16 %v2388
      %v3242 = vunpack.c.h.b16 %v2388
      %v3243 = vunpack.c.l.b16 %v2389
      %v3244 = vunpack.c.h.b16 %v2389
      %v3245 = vunpack.c.l.b16 %v2390
      %v3246 = vunpack.c.h.b16 %v2390
      %v3247 = vunpack.c.l.b16 %v2391
      %v3248 = vunpack.c.h.b16 %v2391
      %v3249 = vunpack.c.l.b16 %v2392
      %v3250 = vunpack.c.h.b16 %v2392
      %v3251 = vunpack.c.l.b16 %v2393
      %v3252 = vunpack.c.h.b16 %v2393
      %v3253 = vunpack.c.l.b16 %v2394
      %v3254 = vunpack.c.h.b16 %v2394
      %v3255 = vunpack.c.l.b16 %v2395
      %v3256 = vunpack.c.h.b16 %v2395
      %v3257 = vunpack.c.l.b16 %v2396
      %v3258 = vunpack.c.h.b16 %v2396
      %v3259 = vunpack.c.l.b16 %v2397
      %v3260 = vunpack.c.h.b16 %v2397
      %v3261 = vunpack.c.l.b16 %v2398
      %v3262 = vunpack.c.h.b16 %v2398
      %v3263 = vunpack.c.l.b16 %v2399
      %v3264 = vunpack.c.h.b16 %v2399
      %v3265 = vunpack.c.l.b16 %v2400
      %v3266 = vunpack.c.h.b16 %v2400
      %v3267 = vunpack.c.l.b16 %v2401
      %v3268 = vunpack.c.h.b16 %v2401
      %v3269 = vunpack.c.l.b16 %v2402
      %v3270 = vunpack.c.h.b16 %v2402
      %v3271 = vunpack.c.l.b16 %v2403
      %v3272 = vunpack.c.h.b16 %v2403
      %v3273 = vunpack.c.l.b16 %v2404
      %v3274 = vunpack.c.h.b16 %v2404
      %v3275 = vunpack.c.l.b16 %v2405
      %v3276 = vunpack.c.h.b16 %v2405
      %v3277 = vunpack.c.l.b16 %v2406
      %v3278 = vunpack.c.h.b16 %v2406
      %v3279 = vunpack.c.l.b16 %v2407
      %v3280 = vunpack.c.h.b16 %v2407
      %v3281 = vunpack.c.l.b16 %v2408
      %v3282 = vunpack.c.h.b16 %v2408
      %v3283 = vunpack.c.l.b16 %v2409
      %v3284 = vunpack.c.h.b16 %v2409
      %v3285 = vunpack.c.l.b16 %v2410
      %v3286 = vunpack.c.h.b16 %v2410
      %v3287 = vunpack.c.l.b16 %v2411
      %v3288 = vunpack.c.h.b16 %v2411
      %v3289 = vunpack.c.l.b16 %v2412
      %v3290 = vunpack.c.h.b16 %v2412
      %v3291 = vunpack.c.l.b16 %v2413
      %v3292 = vunpack.c.h.b16 %v2413
      %v3293 = vunpack.c.l.b16 %v2414
      %v3294 = vunpack.c.h.b16 %v2414
      %v3295 = vunpack.c.l.b16 %v2415
      %v3296 = vunpack.c.h.b16 %v2415
      %v3297 = vunpack.c.l.b16 %v2416
      %v3298 = vunpack.c.h.b16 %v2416
      %v3299 = vunpack.c.l.b16 %v2417
      %v3300 = vunpack.c.h.b16 %v2417
      %v3301 = vunpack.c.l.b16 %v2418
      %v3302 = vunpack.c.h.b16 %v2418
      %v3303 = vunpack.c.l.b16 %v2419
      %v3304 = vunpack.c.h.b16 %v2419
      %v3305 = vunpack.c.l.b16 %v2420
      %v3306 = vunpack.c.h.b16 %v2420
      %v3307 = vunpack.c.l.b16 %v2421
      %v3308 = vunpack.c.h.b16 %v2421
      %v3309 = vunpack.c.l.b16 %v2422
      %v3310 = vunpack.c.h.b16 %v2422
      %v3311 = vunpack.c.l.b16 %v2423
      %v3312 = vunpack.c.h.b16 %v2423
      %v3313 = vunpack.c.l.b16 %v2424
      %v3314 = vunpack.c.h.b16 %v2424
      %v3315 = vunpack.c.l.b16 %v2425
      %v3316 = vunpack.c.h.b16 %v2425
      %v3317 = vunpack.c.l.b16 %v2426
      %v3318 = vunpack.c.h.b16 %v2426
      %v3319 = vunpack.c.l.b16 %v2427
      %v3320 = vunpack.c.h.b16 %v2427
      %v3321 = vunpack.c.l.b16 %v2428
      %v3322 = vunpack.c.h.b16 %v2428
      %v3323 = vunpack.c.l.b16 %v2429
      %v3324 = vunpack.c.h.b16 %v2429
      %v3325 = vunpack.c.l.b16 %v2430
      %v3326 = vunpack.c.h.b16 %v2430
      %v3327 = vunpack.c.l.b16 %v2431
      %v3328 = vunpack.c.h.b16 %v2431
      %v3329 = vunpack.c.l.b16 %v2432
      %v3330 = vunpack.c.h.b16 %v2432
      %v3331 = vunpack.c.l.b16 %v2433
      %v3332 = vunpack.c.h.b16 %v2433
      %v3333 = vunpack.c.l.b16 %v2434
      %v3334 = vunpack.c.h.b16 %v2434
      %v3335 = vunpack.c.l.b16 %v2435
      %v3336 = vunpack.c.h.b16 %v2435
      %v3337 = vunpack.c.l.b16 %v2436
      %v3338 = vunpack.c.h.b16 %v2436
      %v3339 = vunpack.c.l.b16 %v2437
      %v3340 = vunpack.c.h.b16 %v2437
      %v3341 = vunpack.c.l.b16 %v2438
      %v3342 = vunpack.c.h.b16 %v2438
      %v3343 = vunpack.c.l.b16 %v2439
      %v3344 = vunpack.c.h.b16 %v2439
      %v3345 = vunpack.c.l.b16 %v2440
      %v3346 = vunpack.c.h.b16 %v2440
      %v3347 = vunpack.c.l.b16 %v2441
      %v3348 = vunpack.c.h.b16 %v2441
      %v3349 = vunpack.c.l.b16 %v2442
      %v3350 = vunpack.c.h.b16 %v2442
      %v3351 = vunpack.c.l.b16 %v2443
      %v3352 = vunpack.c.h.b16 %v2443
      %v3353 = vunpack.c.l.b16 %v2444
      %v3354 = vunpack.c.h.b16 %v2444
      %v3355 = vunpack.c.l.b16 %v2445
      %v3356 = vunpack.c.h.b16 %v2445
      %v3357 = vunpack.c.l.b16 %v2446
      %v3358 = vunpack.c.h.b16 %v2446
      %v3359 = vunpack.c.l.b16 %v2447
      %v3360 = vunpack.c.h.b16 %v2447
      %v3361 = vunpack.c.l.b16 %v2448
      %v3362 = vunpack.c.h.b16 %v2448
      %v3363 = vunpack.c.l.b16 %v2449
      %v3364 = vunpack.c.h.b16 %v2449
      %v3365 = vunpack.c.l.b16 %v2450
      %v3366 = vunpack.c.h.b16 %v2450
      %v3367 = vunpack.c.l.b16 %v2451
      %v3368 = vunpack.c.h.b16 %v2451
      %v3369 = vunpack.c.l.b16 %v2452
      %v3370 = vunpack.c.h.b16 %v2452
      %v3371 = vunpack.c.l.b16 %v2453
      %v3372 = vunpack.c.h.b16 %v2453
      %v3373 = vunpack.c.l.b16 %v2454
      %v3374 = vunpack.c.h.b16 %v2454
      %v3375 = vunpack.c.l.b16 %v2455
      %v3376 = vunpack.c.h.b16 %v2455
      %v3377 = vunpack.c.l.b16 %v2456
      %v3378 = vunpack.c.h.b16 %v2456
      %v3379 = vunpack.c.l.b16 %v2457
      %v3380 = vunpack.c.h.b16 %v2457
      %v3381 = vunpack.c.l.b16 %v2458
      %v3382 = vunpack.c.h.b16 %v2458
      %v3383 = vunpack.c.l.b16 %v2459
      %v3384 = vunpack.c.h.b16 %v2459
      %v3385 = vunpack.c.l.b16 %v2460
      %v3386 = vunpack.c.h.b16 %v2460
      %v3387 = vunpack.c.l.b16 %v2461
      %v3388 = vunpack.c.h.b16 %v2461
      %v3389 = vunpack.c.l.b16 %v2462
      %v3390 = vunpack.c.h.b16 %v2462
      %v3391 = vunpack.c.l.b16 %v2463
      %v3392 = vunpack.c.h.b16 %v2463
      %v3393 = vunpack.c.l.b16 %v2464
      %v3394 = vunpack.c.h.b16 %v2464
      %v3395 = vunpack.c.l.b16 %v2465
      %v3396 = vunpack.c.h.b16 %v2465
      %v3397 = vunpack.c.l.b16 %v2466
      %v3398 = vunpack.c.h.b16 %v2466
      %v3399 = vunpack.c.l.b16 %v2467
      %v3400 = vunpack.c.h.b16 %v2467
      %v3401 = vunpack.c.l.b16 %v2468
      %v3402 = vunpack.c.h.b16 %v2468
      %v3403 = vunpack.c.l.b16 %v2469
      %v3404 = vunpack.c.h.b16 %v2469
      %v3405 = vunpack.c.l.b16 %v2470
      %v3406 = vunpack.c.h.b16 %v2470
      %v3407 = vunpack.c.l.b16 %v2471
      %v3408 = vunpack.c.h.b16 %v2471
      %v3409 = vunpack.c.l.b16 %v2472
      %v3410 = vunpack.c.h.b16 %v2472
      %v3411 = vunpack.c.l.b16 %v2473
      %v3412 = vunpack.c.h.b16 %v2473
      %v3413 = vunpack.c.l.b16 %v2474
      %v3414 = vunpack.c.h.b16 %v2474
      %v3415 = vunpack.c.l.b16 %v2475
      %v3416 = vunpack.c.h.b16 %v2475
      %v3417 = vunpack.c.l.b16 %v2476
      %v3418 = vunpack.c.h.b16 %v2476
      %v3419 = vunpack.c.l.b16 %v2477
      %v3420 = vunpack.c.h.b16 %v2477
      %v3421 = vunpack.c.l.b16 %v2478
      %v3422 = vunpack.c.h.b16 %v2478
      %v3423 = vunpack.c.l.b16 %v2479
      %v3424 = vunpack.c.h.b16 %v2479
      %v3425 = vunpack.c.l.b16 %v2480
      %v3426 = vunpack.c.h.b16 %v2480
      %v3427 = vunpack.c.l.b16 %v2481
      %v3428 = vunpack.c.h.b16 %v2481
      %v3429 = vunpack.c.l.b16 %v2482
      %v3430 = vunpack.c.h.b16 %v2482
      %v3431 = vunpack.c.l.b16 %v2483
      %v3432 = vunpack.c.h.b16 %v2483
      %v3433 = vunpack.c.l.b16 %v2484
      %v3434 = vunpack.c.h.b16 %v2484
      %v3435 = vunpack.c.l.b16 %v2485
      %v3436 = vunpack.c.h.b16 %v2485
      %v3437 = vunpack.c.l.b16 %v2486
      %v3438 = vunpack.c.h.b16 %v2486
      %v3439 = vunpack.c.l.b16 %v2487
      %v3440 = vunpack.c.h.b16 %v2487
      %v3441 = vunpack.c.l.b16 %v2488
      %v3442 = vunpack.c.h.b16 %v2488
      %v3443 = vunpack.c.l.b16 %v2489
      %v3444 = vunpack.c.h.b16 %v2489
      %v3445 = vunpack.c.l.b16 %v2490
      %v3446 = vunpack.c.h.b16 %v2490
      %v3447 = vunpack.c.l.b16 %v2491
      %v3448 = vunpack.c.h.b16 %v2491
      %v3449 = vunpack.c.l.b16 %v2492
      %v3450 = vunpack.c.h.b16 %v2492
      %v3451 = vunpack.c.l.b16 %v2493
      %v3452 = vunpack.c.h.b16 %v2493
      %v3453 = vunpack.c.l.b16 %v2494
      %v3454 = vunpack.c.h.b16 %v2494
      %v3455 = vunpack.c.l.b16 %v2495
      %v3456 = vunpack.c.h.b16 %v2495
      %v3457 = vunpack.c.l.b16 %v2496
      %v3458 = vunpack.c.h.b16 %v2496
      %v3459 = vunpack.c.l.b16 %v2497
      %v3460 = vunpack.c.h.b16 %v2497
      %v3461 = vunpack.c.l.b16 %v2498
      %v3462 = vunpack.c.h.b16 %v2498
      %v3463 = vunpack.c.l.b16 %v2499
      %v3464 = vunpack.c.h.b16 %v2499
      %v3465 = vunpack.c.l.b16 %v2500
      %v3466 = vunpack.c.h.b16 %v2500
      %v3467 = vunpack.c.l.b16 %v2501
      %v3468 = vunpack.c.h.b16 %v2501
      %v3469 = vunpack.c.l.b16 %v2502
      %v3470 = vunpack.c.h.b16 %v2502
      %v3471 = vunpack.c.l.b16 %v2503
      %v3472 = vunpack.c.h.b16 %v2503
      %v3473 = vunpack.c.l.b16 %v2504
      %v3474 = vunpack.c.h.b16 %v2504
      %v3475 = vunpack.c.l.b16 %v2505
      %v3476 = vunpack.c.h.b16 %v2505
      %v3477 = vunpack.c.l.b16 %v2506
      %v3478 = vunpack.c.h.b16 %v2506
      %v3479 = vunpack.c.l.b16 %v2507
      %v3480 = vunpack.c.h.b16 %v2507
      %v3481 = vunpack.c.l.b16 %v2508
      %v3482 = vunpack.c.h.b16 %v2508
      %v3483 = vunpack.c.l.b16 %v2509
      %v3484 = vunpack.c.h.b16 %v2509
      %v3485 = vunpack.c.l.b16 %v2510
      %v3486 = vunpack.c.h.b16 %v2510
      %v3487 = vunpack.c.l.b16 %v2511
      %v3488 = vunpack.c.h.b16 %v2511
      %v3489 = vunpack.c.l.b16 %v2512
      %v3490 = vunpack.c.h.b16 %v2512
      %v3491 = vunpack.c.l.b16 %v2513
      %v3492 = vunpack.c.h.b16 %v2513
      %v3493 = vunpack.c.l.b16 %v2514
      %v3494 = vunpack.c.h.b16 %v2514
      %v3495 = vunpack.c.l.b16 %v2515
      %v3496 = vunpack.c.h.b16 %v2515
      %v3497 = vunpack.c.l.b16 %v2516
      %v3498 = vunpack.c.h.b16 %v2516
      %v3499 = vunpack.c.l.b16 %v2517
      %v3500 = vunpack.c.h.b16 %v2517
      %v3501 = vunpack.c.l.b16 %v2518
      %v3502 = vunpack.c.h.b16 %v2518
      %v3503 = vunpack.c.l.b16 %v2519
      %v3504 = vunpack.c.h.b16 %v2519
      %v3505 = vunpack.c.l.b16 %v2520
      %v3506 = vunpack.c.h.b16 %v2520
      %v3507 = vunpack.c.l.b16 %v2521
      %v3508 = vunpack.c.h.b16 %v2521
      %v3509 = vunpack.c.l.b16 %v2522
      %v3510 = vunpack.c.h.b16 %v2522
      %v3511 = vunpack.c.l.b16 %v2523
      %v3512 = vunpack.c.h.b16 %v2523
      %v3513 = vunpack.c.l.b16 %v2524
      %v3514 = vunpack.c.h.b16 %v2524
      %v3515 = vunpack.c.l.b16 %v2525
      %v3516 = vunpack.c.h.b16 %v2525
      %v3517 = vunpack.c.l.b16 %v2526
      %v3518 = vunpack.c.h.b16 %v2526
      %v3519 = vunpack.c.l.b16 %v2527
      %v3520 = vunpack.c.h.b16 %v2527
      %v3521 = vunpack.c.l.b16 %v2528
      %v3522 = vunpack.c.h.b16 %v2528
      %v3523 = vunpack.c.l.b16 %v2529
      %v3524 = vunpack.c.h.b16 %v2529
      %v3525 = vunpack.c.l.b16 %v2530
      %v3526 = vunpack.c.h.b16 %v2530
      %v3527 = vunpack.c.l.b16 %v2531
      %v3528 = vunpack.c.h.b16 %v2531
      %v3529 = vunpack.c.l.b16 %v2532
      %v3530 = vunpack.c.h.b16 %v2532
      %v3531 = vunpack.c.l.b16 %v2533
      %v3532 = vunpack.c.h.b16 %v2533
      %v3533 = vunpack.c.l.b16 %v2534
      %v3534 = vunpack.c.h.b16 %v2534
      %v3535 = vunpack.c.l.b16 %v2535
      %v3536 = vunpack.c.h.b16 %v2535
      %v3537 = vunpack.c.l.b16 %v2536
      %v3538 = vunpack.c.h.b16 %v2536
      %v3539 = vunpack.c.l.b16 %v2537
      %v3540 = vunpack.c.h.b16 %v2537
      %v3541 = vunpack.c.l.b16 %v2538
      %v3542 = vunpack.c.h.b16 %v2538
      %v3543 = vunpack.c.l.b16 %v2539
      %v3544 = vunpack.c.h.b16 %v2539
      %v3545 = vunpack.c.l.b16 %v2540
      %v3546 = vunpack.c.h.b16 %v2540
      %v3547 = vunpack.c.l.b16 %v2541
      %v3548 = vunpack.c.h.b16 %v2541
      %v3549 = vunpack.c.l.b16 %v2542
      %v3550 = vunpack.c.h.b16 %v2542
      %v3551 = vunpack.c.l.b16 %v2543
      %v3552 = vunpack.c.h.b16 %v2543
      %v3553 = vunpack.c.l.b16 %v2544
      %v3554 = vunpack.c.h.b16 %v2544
      %v3555 = vunpack.c.l.b16 %v2545
      %v3556 = vunpack.c.h.b16 %v2545
      %v3557 = vunpack.c.l.b16 %v2546
      %v3558 = vunpack.c.h.b16 %v2546
      %v3559 = vunpack.c.l.b16 %v2547
      %v3560 = vunpack.c.h.b16 %v2547
      %v3561 = vunpack.c.l.b16 %v2548
      %v3562 = vunpack.c.h.b16 %v2548
      %v3563 = vunpack.c.l.b16 %v2549
      %v3564 = vunpack.c.h.b16 %v2549
      %v3565 = vunpack.c.l.b16 %v2550
      %v3566 = vunpack.c.h.b16 %v2550
      %v3567 = vunpack.c.l.b16 %v2551
      %v3568 = vunpack.c.h.b16 %v2551
      %v3569 = vunpack.c.l.b16 %v2552
      %v3570 = vunpack.c.h.b16 %v2552
      %v3571 = vunpack.c.l.b16 %v2553
      %v3572 = vunpack.c.h.b16 %v2553
      %v3573 = vunpack.c.l.b16 %v2554
      %v3574 = vunpack.c.h.b16 %v2554
      %v3575 = vunpack.c.l.b16 %v2555
      %v3576 = vunpack.c.h.b16 %v2555
      %v3577 = vunpack.c.l.b16 %v2556
      %v3578 = vunpack.c.h.b16 %v2556
      %v3579 = vunpack.c.l.b16 %v2557
      %v3580 = vunpack.c.h.b16 %v2557
      %v3581 = vunpack.c.l.b16 %v2558
      %v3582 = vunpack.c.h.b16 %v2558
      %v3583 = vunpack.c.l.b16 %v2559
      %v3584 = vunpack.c.h.b16 %v2559
      %v3585 = vunpack.c.l.b16 %v2560
      %v3586 = vunpack.c.h.b16 %v2560
      %v3587 = vunpack.c.l.b16 %v2561
      %v3588 = vunpack.c.h.b16 %v2561
      %v3589 = vunpack.c.l.b16 %v2562
      %v3590 = vunpack.c.h.b16 %v2562
      %v3591 = vunpack.c.l.b16 %v2563
      %v3592 = vunpack.c.h.b16 %v2563
      %v3593 = vunpack.c.l.b16 %v2564
      %v3594 = vunpack.c.h.b16 %v2564
      %v3595 = vunpack.c.l.b16 %v2565
      %v3596 = vunpack.c.h.b16 %v2565
      %v3597 = vunpack.c.l.b16 %v2566
      %v3598 = vunpack.c.h.b16 %v2566
      %v3599 = vunpack.c.l.b16 %v2567
      %v3600 = vunpack.c.h.b16 %v2567
      %v3601 = vunpack.c.l.b16 %v2568
      %v3602 = vunpack.c.h.b16 %v2568
      %v3603 = vunpack.c.l.b16 %v2569
      %v3604 = vunpack.c.h.b16 %v2569
      %v3605 = vunpack.c.l.b16 %v2570
      %v3606 = vunpack.c.h.b16 %v2570
      %v3607 = vunpack.c.l.b16 %v2571
      %v3608 = vunpack.c.h.b16 %v2571
      %v3609 = vunpack.c.l.b16 %v2572
      %v3610 = vunpack.c.h.b16 %v2572
      %v3611 = vunpack.c.l.b16 %v2573
      %v3612 = vunpack.c.h.b16 %v2573
      %v3613 = vunpack.c.l.b16 %v2574
      %v3614 = vunpack.c.h.b16 %v2574
      %v3615 = vunpack.c.l.b16 %v2575
      %v3616 = vunpack.c.h.b16 %v2575
      %v3617 = vunpack.c.l.b16 %v2576
      %v3618 = vunpack.c.h.b16 %v2576
      %v3619 = vunpack.c.l.b16 %v2577
      %v3620 = vunpack.c.h.b16 %v2577
      %v3621 = vunpack.c.l.b16 %v2578
      %v3622 = vunpack.c.h.b16 %v2578
      %v3623 = vunpack.c.l.b16 %v2579
      %v3624 = vunpack.c.h.b16 %v2579
      %v3625 = vunpack.c.l.b16 %v2580
      %v3626 = vunpack.c.h.b16 %v2580
      %v3627 = vunpack.c.l.b16 %v2581
      %v3628 = vunpack.c.h.b16 %v2581
      %v3629 = vunpack.c.l.b16 %v2582
      %v3630 = vunpack.c.h.b16 %v2582
      %v3631 = vunpack.c.l.b16 %v2583
      %v3632 = vunpack.c.h.b16 %v2583
      %v3633 = vunpack.c.l.b16 %v2584
      %v3634 = vunpack.c.h.b16 %v2584
      %v3635 = vunpack.c.l.b16 %v2585
      %v3636 = vunpack.c.h.b16 %v2585
      %v3637 = vunpack.c.l.b16 %v2586
      %v3638 = vunpack.c.h.b16 %v2586
      %v3639 = vunpack.c.l.b16 %v2587
      %v3640 = vunpack.c.h.b16 %v2587
      %v3641 = vunpack.c.l.b16 %v2588
      %v3642 = vunpack.c.h.b16 %v2588
      %v3643 = vunpack.c.l.b16 %v2589
      %v3644 = vunpack.c.h.b16 %v2589
      %v3645 = vunpack.c.l.b16 %v2590
      %v3646 = vunpack.c.h.b16 %v2590
      %v3647 = vunpack.c.l.b16 %v2591
      %v3648 = vunpack.c.h.b16 %v2591
      %v3649 = vunpack.c.l.b16 %v2592
      %v3650 = vunpack.c.h.b16 %v2592
      %v3651 = vunpack.c.l.b16 %v2593
      %v3652 = vunpack.c.h.b16 %v2593
      %v3653 = vunpack.c.l.b16 %v2594
      %v3654 = vunpack.c.h.b16 %v2594
      %v3655 = vunpack.c.l.b16 %v2595
      %v3656 = vunpack.c.h.b16 %v2595
      %v3657 = vunpack.c.l.b16 %v2596
      %v3658 = vunpack.c.h.b16 %v2596
      %v3659 = vunpack.c.l.b16 %v2597
      %v3660 = vunpack.c.h.b16 %v2597
      %v3661 = vunpack.c.l.b16 %v2598
      %v3662 = vunpack.c.h.b16 %v2598
      %v3663 = vunpack.c.l.b16 %v2599
      %v3664 = vunpack.c.h.b16 %v2599
      %v3665 = vunpack.c.l.b16 %v2600
      %v3666 = vunpack.c.h.b16 %v2600
      %v3667 = vunpack.c.l.b16 %v2601
      %v3668 = vunpack.c.h.b16 %v2601
      %v3669 = vunpack.c.l.b16 %v2602
      %v3670 = vunpack.c.h.b16 %v2602
      %v3671 = vunpack.c.l.b16 %v2603
      %v3672 = vunpack.c.h.b16 %v2603
      %v3673 = vunpack.c.l.b16 %v2604
      %v3674 = vunpack.c.h.b16 %v2604
      %v3675 = vunpack.c.l.b16 %v2605
      %v3676 = vunpack.c.h.b16 %v2605
      %v3677 = vunpack.c.l.b16 %v2606
      %v3678 = vunpack.c.h.b16 %v2606
      %v3679 = vunpack.c.l.b16 %v2607
      %v3680 = vunpack.c.h.b16 %v2607
      %v3681 = vunpack.c.l.b16 %v2608
      %v3682 = vunpack.c.h.b16 %v2608
      %v3683 = vunpack.c.l.b16 %v2609
      %v3684 = vunpack.c.h.b16 %v2609
      %v3685 = vunpack.c.l.b16 %v2610
      %v3686 = vunpack.c.h.b16 %v2610
      %v3687 = vunpack.c.l.b16 %v2611
      %v3688 = vunpack.c.h.b16 %v2611
      %v3689 = vunpack.c.l.b16 %v2612
      %v3690 = vunpack.c.h.b16 %v2612
      %v3691 = vunpack.c.l.b16 %v2613
      %v3692 = vunpack.c.h.b16 %v2613
      %v3693 = vunpack.c.l.b16 %v2614
      %v3694 = vunpack.c.h.b16 %v2614
      %v3695 = vunpack.c.l.b16 %v2615
      %v3696 = vunpack.c.h.b16 %v2615
      %v3697 = vunpack.c.l.b16 %v2616
      %v3698 = vunpack.c.h.b16 %v2616
      %v3699 = vunpack.c.l.b16 %v2617
      %v3700 = vunpack.c.h.b16 %v2617
      %v3701 = vunpack.c.l.b16 %v2618
      %v3702 = vunpack.c.h.b16 %v2618
      %v3703 = vunpack.c.l.b16 %v2619
      %v3704 = vunpack.c.h.b16 %v2619
      %v3705 = vunpack.c.l.b16 %v2620
      %v3706 = vunpack.c.h.b16 %v2620
      %v3707 = vunpack.c.l.b16 %v2621
      %v3708 = vunpack.c.h.b16 %v2621
      %v3709 = vunpack.c.l.b16 %v2622
      %v3710 = vunpack.c.h.b16 %v2622
      %v3711 = vunpack.c.l.b16 %v2623
      %v3712 = vunpack.c.h.b16 %v2623
      %v3713 = vunpack.c.l.b16 %v2624
      %v3714 = vunpack.c.h.b16 %v2624
      %v3715 = vunpack.c.l.b16 %v2625
      %v3716 = vunpack.c.h.b16 %v2625
      %v3717 = vunpack.c.l.b16 %v2626
      %v3718 = vunpack.c.h.b16 %v2626
      %v3719 = vunpack.c.l.b16 %v2627
      %v3720 = vunpack.c.h.b16 %v2627
      %v3721 = vunpack.c.l.b16 %v2628
      %v3722 = vunpack.c.h.b16 %v2628
      %v3723 = vunpack.c.l.b16 %v2629
      %v3724 = vunpack.c.h.b16 %v2629
      %v3725 = vunpack.c.l.b16 %v2630
      %v3726 = vunpack.c.h.b16 %v2630
      %v3727 = vunpack.c.l.b16 %v2631
      %v3728 = vunpack.c.h.b16 %v2631
      %v3729 = vunpack.c.l.b16 %v2632
      %v3730 = vunpack.c.h.b16 %v2632
      %v3731 = vunpack.c.l.b16 %v2633
      %v3732 = vunpack.c.h.b16 %v2633
      %v3733 = vunpack.c.l.b16 %v2634
      %v3734 = vunpack.c.h.b16 %v2634
      %v3735 = vunpack.c.l.b16 %v2635
      %v3736 = vunpack.c.h.b16 %v2635
      %v3737 = vunpack.c.l.b16 %v2636
      %v3738 = vunpack.c.h.b16 %v2636
      %v3739 = vunpack.c.l.b16 %v2637
      %v3740 = vunpack.c.h.b16 %v2637
      %v3741 = vunpack.c.l.b16 %v2638
      %v3742 = vunpack.c.h.b16 %v2638
      %v3743 = vunpack.c.l.b16 %v2639
      %v3744 = vunpack.c.h.b16 %v2639
      %v3745 = vunpack.c.l.b16 %v2640
      %v3746 = vunpack.c.h.b16 %v2640
      %v3747 = vunpack.c.l.b16 %v2641
      %v3748 = vunpack.c.h.b16 %v2641
      %v3749 = vunpack.c.l.b16 %v2642
      %v3750 = vunpack.c.h.b16 %v2642
      %v3751 = vunpack.c.l.b16 %v2643
      %v3752 = vunpack.c.h.b16 %v2643
      %v3753 = vunpack.c.l.b16 %v2644
      %v3754 = vunpack.c.h.b16 %v2644
      %v3755 = vunpack.c.l.b16 %v2645
      %v3756 = vunpack.c.h.b16 %v2645
      %v3757 = vunpack.c.l.b16 %v2646
      %v3758 = vunpack.c.h.b16 %v2646
      %v3759 = vunpack.c.l.b16 %v2647
      %v3760 = vunpack.c.h.b16 %v2647
      %v3761 = vunpack.c.l.b16 %v2648
      %v3762 = vunpack.c.h.b16 %v2648
      %v3763 = vunpack.c.l.b16 %v2649
      %v3764 = vunpack.c.h.b16 %v2649
      %v3765 = vunpack.c.l.b16 %v2650
      %v3766 = vunpack.c.h.b16 %v2650
      %v3767 = vunpack.c.l.b16 %v2651
      %v3768 = vunpack.c.h.b16 %v2651
      %v3769 = vunpack.c.l.b16 %v2652
      %v3770 = vunpack.c.h.b16 %v2652
      %v3771 = vunpack.c.l.b16 %v2653
      %v3772 = vunpack.c.h.b16 %v2653
      %v3773 = vunpack.c.l.b16 %v2654
      %v3774 = vunpack.c.h.b16 %v2654
      %v3775 = vunpack.c.l.b16 %v2655
      %v3776 = vunpack.c.h.b16 %v2655
      %v3777 = vunpack.c.l.b16 %v2656
      %v3778 = vunpack.c.h.b16 %v2656
      %v3779 = vunpack.c.l.b16 %v2657
      %v3780 = vunpack.c.h.b16 %v2657
      %v3781 = vunpack.c.l.b16 %v2658
      %v3782 = vunpack.c.h.b16 %v2658
      %v3783 = vunpack.c.l.b16 %v2659
      %v3784 = vunpack.c.h.b16 %v2659
      %v3785 = vunpack.c.l.b16 %v2660
      %v3786 = vunpack.c.h.b16 %v2660
      %v3787 = vunpack.c.l.b16 %v2661
      %v3788 = vunpack.c.h.b16 %v2661
      %v3789 = vunpack.c.l.b16 %v2662
      %v3790 = vunpack.c.h.b16 %v2662
      %v3791 = vunpack.c.l.b16 %v2663
      %v3792 = vunpack.c.h.b16 %v2663
      %v3793 = vunpack.c.l.b16 %v2664
      %v3794 = vunpack.c.h.b16 %v2664
      %v3795 = vunpack.c.l.b16 %v2665
      %v3796 = vunpack.c.h.b16 %v2665
      %v3797 = vunpack.c.l.b16 %v2666
      %v3798 = vunpack.c.h.b16 %v2666
      %v3799 = vunpack.c.l.b16 %v2667
      %v3800 = vunpack.c.h.b16 %v2667
      %v3801 = vunpack.c.l.b16 %v2668
      %v3802 = vunpack.c.h.b16 %v2668
      %v3803 = vunpack.c.l.b16 %v2669
      %v3804 = vunpack.c.h.b16 %v2669
      %v3805 = vunpack.c.l.b16 %v2670
      %v3806 = vunpack.c.h.b16 %v2670
      %v3807 = vunpack.c.l.b16 %v2671
      %v3808 = vunpack.c.h.b16 %v2671
      %v3809 = vunpack.c.l.b16 %v2672
      %v3810 = vunpack.c.h.b16 %v2672
      %v3811 = vunpack.c.l.b16 %v2673
      %v3812 = vunpack.c.h.b16 %v2673
      %v3813 = vunpack.c.l.b16 %v2674
      %v3814 = vunpack.c.h.b16 %v2674
      %v3815 = vunpack.c.l.b16 %v2675
      %v3816 = vunpack.c.h.b16 %v2675
      %v3817 = vunpack.c.l.b16 %v2676
      %v3818 = vunpack.c.h.b16 %v2676
      %v3819 = vunpack.c.l.b16 %v2677
      %v3820 = vunpack.c.h.b16 %v2677
      %v3821 = vunpack.c.l.b16 %v2678
      %v3822 = vunpack.c.h.b16 %v2678
      %v3823 = vunpack.c.l.b16 %v2679
      %v3824 = vunpack.c.h.b16 %v2679
      %v3825 = vunpack.c.l.b16 %v2680
      %v3826 = vunpack.c.h.b16 %v2680
      %v3827 = vunpack.c.l.b16 %v2681
      %v3828 = vunpack.c.h.b16 %v2681
      %v3829 = vunpack.c.l.b16 %v2682
      %v3830 = vunpack.c.h.b16 %v2682
      %v3831 = vunpack.c.l.b16 %v2683
      %v3832 = vunpack.c.h.b16 %v2683
      %v3833 = vunpack.c.l.b16 %v2684
      %v3834 = vunpack.c.h.b16 %v2684
      %v3835 = vunpack.c.l.b16 %v2685
      %v3836 = vunpack.c.h.b16 %v2685
      %v3837 = vunpack.c.l.b16 %v2686
      %v3838 = vunpack.c.h.b16 %v2686
      %v3839 = vunpack.c.l.b16 %v2687
      %v3840 = vunpack.c.h.b16 %v2687
      %v3841 = vunpack.c.l.b16 %v2688
      %v3842 = vunpack.c.h.b16 %v2688
      %v3843 = vunpack.c.l.b16 %v2689
      %v3844 = vunpack.c.h.b16 %v2689
      %v3845 = vunpack.c.l.b16 %v2690
      %v3846 = vunpack.c.h.b16 %v2690
      %v3847 = vunpack.c.l.b16 %v2691
      %v3848 = vunpack.c.h.b16 %v2691
      %v3849 = vunpack.c.l.b16 %v2692
      %v3850 = vunpack.c.h.b16 %v2692
      %v3851 = vunpack.c.l.b16 %v2693
      %v3852 = vunpack.c.h.b16 %v2693
      %v3853 = vunpack.c.l.b16 %v2694
      %v3854 = vunpack.c.h.b16 %v2694
      %v3855 = vunpack.c.l.b16 %v2695
      %v3856 = vunpack.c.h.b16 %v2695
      %v3857 = vunpack.c.l.b16 %v2696
      %v3858 = vunpack.c.h.b16 %v2696
      %v3859 = vpack.c.b16 %v3095, %v3091
      %v3860 = vpack.c.b16 %v3096, %v3092
      %v3861 = vpack.c.b16 %v3097, %v3093
      %v3862 = vpack.c.b16 %v3098, %v3094
      %v3863 = vpack.c.b16 %v3103, %v3099
      %v3864 = vpack.c.b16 %v3104, %v3100
      %v3865 = vpack.c.b16 %v3105, %v3101
      %v3866 = vpack.c.b16 %v3106, %v3102
      %v3867 = vpack.c.b16 %v3111, %v3107
      %v3868 = vpack.c.b16 %v3112, %v3108
      %v3869 = vpack.c.b16 %v3113, %v3109
      %v3870 = vpack.c.b16 %v3114, %v3110
      %v3871 = vpack.c.b16 %v3119, %v3115
      %v3872 = vpack.c.b16 %v3120, %v3116
      %v3873 = vpack.c.b16 %v3121, %v3117
      %v3874 = vpack.c.b16 %v3122, %v3118
      %v3875 = vpack.c.b16 %v3127, %v3123
      %v3876 = vpack.c.b16 %v3128, %v3124
      %v3877 = vpack.c.b16 %v3129, %v3125
      %v3878 = vpack.c.b16 %v3130, %v3126
      %v3879 = vpack.c.b16 %v3135, %v3131
      %v3880 = vpack.c.b16 %v3136, %v3132
      %v3881 = vpack.c.b16 %v3137, %v3133
      %v3882 = vpack.c.b16 %v3138, %v3134
      %v3883 = vpack.c.b16 %v3143, %v3139
      %v3884 = vpack.c.b16 %v3144, %v3140
      %v3885 = vpack.c.b16 %v3145, %v3141
      %v3886 = vpack.c.b16 %v3146, %v3142
      %v3887 = vpack.c.b16 %v3151, %v3147
      %v3888 = vpack.c.b16 %v3152, %v3148
      %v3889 = vpack.c.b16 %v3153, %v3149
      %v3890 = vpack.c.b16 %v3154, %v3150
      %v3891 = vpack.c.b16 %v3159, %v3155
      %v3892 = vpack.c.b16 %v3160, %v3156
      %v3893 = vpack.c.b16 %v3161, %v3157
      %v3894 = vpack.c.b16 %v3162, %v3158
      %v3895 = vpack.c.b16 %v3167, %v3163
      %v3896 = vpack.c.b16 %v3168, %v3164
      %v3897 = vpack.c.b16 %v3169, %v3165
      %v3898 = vpack.c.b16 %v3170, %v3166
      %v3899 = vpack.c.b16 %v3175, %v3171
      %v3900 = vpack.c.b16 %v3176, %v3172
      %v3901 = vpack.c.b16 %v3177, %v3173
      %v3902 = vpack.c.b16 %v3178, %v3174
      %v3903 = vpack.c.b16 %v3183, %v3179
      %v3904 = vpack.c.b16 %v3184, %v3180
      %v3905 = vpack.c.b16 %v3185, %v3181
      %v3906 = vpack.c.b16 %v3186, %v3182
      %v3907 = vpack.c.b16 %v3191, %v3187
      %v3908 = vpack.c.b16 %v3192, %v3188
      %v3909 = vpack.c.b16 %v3193, %v3189
      %v3910 = vpack.c.b16 %v3194, %v3190
      %v3911 = vpack.c.b16 %v3199, %v3195
      %v3912 = vpack.c.b16 %v3200, %v3196
      %v3913 = vpack.c.b16 %v3201, %v3197
      %v3914 = vpack.c.b16 %v3202, %v3198
      %v3915 = vpack.c.b16 %v3207, %v3203
      %v3916 = vpack.c.b16 %v3208, %v3204
      %v3917 = vpack.c.b16 %v3209, %v3205
      %v3918 = vpack.c.b16 %v3210, %v3206
      %v3919 = vpack.c.b16 %v3215, %v3211
      %v3920 = vpack.c.b16 %v3216, %v3212
      %v3921 = vpack.c.b16 %v3217, %v3213
      %v3922 = vpack.c.b16 %v3218, %v3214
      %v3923 = vpack.c.b16 %v3223, %v3219
      %v3924 = vpack.c.b16 %v3224, %v3220
      %v3925 = vpack.c.b16 %v3225, %v3221
      %v3926 = vpack.c.b16 %v3226, %v3222
      %v3927 = vpack.c.b16 %v3231, %v3227
      %v3928 = vpack.c.b16 %v3232, %v3228
      %v3929 = vpack.c.b16 %v3233, %v3229
      %v3930 = vpack.c.b16 %v3234, %v3230
      %v3931 = vpack.c.b16 %v3239, %v3235
      %v3932 = vpack.c.b16 %v3240, %v3236
      %v3933 = vpack.c.b16 %v3241, %v3237
      %v3934 = vpack.c.b16 %v3242, %v3238
      %v3935 = vpack.c.b16 %v3247, %v3243
      %v3936 = vpack.c.b16 %v3248, %v3244
      %v3937 = vpack.c.b16 %v3249, %v3245
      %v3938 = vpack.c.b16 %v3250, %v3246
      %v3939 = vpack.c.b16 %v3255, %v3251
      %v3940 = vpack.c.b16 %v3256, %v3252
      %v3941 = vpack.c.b16 %v3257, %v3253
      %v3942 = vpack.c.b16 %v3258, %v3254
      %v3943 = vpack.c.b16 %v3263, %v3259
      %v3944 = vpack.c.b16 %v3264, %v3260
      %v3945 = vpack.c.b16 %v3265, %v3261
      %v3946 = vpack.c.b16 %v3266, %v3262
      %v3947 = vpack.c.b16 %v3271, %v3267
      %v3948 = vpack.c.b16 %v3272, %v3268
      %v3949 = vpack.c.b16 %v3273, %v3269
      %v3950 = vpack.c.b16 %v3274, %v3270
      %v3951 = vpack.c.b16 %v3279, %v3275
      %v3952 = vpack.c.b16 %v3280, %v3276
      %v3953 = vpack.c.b16 %v3281, %v3277
      %v3954 = vpack.c.b16 %v3282, %v3278
      %v3955 = vpack.c.b16 %v3287, %v3283
      %v3956 = vpack.c.b16 %v3288, %v3284
      %v3957 = vpack.c.b16 %v3289, %v3285
      %v3958 = vpack.c.b16 %v3290, %v3286
      %v3959 = vpack.c.b16 %v3295, %v3291
      %v3960 = vpack.c.b16 %v3296, %v3292
      %v3961 = vpack.c.b16 %v3297, %v3293
      %v3962 = vpack.c.b16 %v3298, %v3294
      %v3963 = vpack.c.b16 %v3303, %v3299
      %v3964 = vpack.c.b16 %v3304, %v3300
      %v3965 = vpack.c.b16 %v3305, %v3301
      %v3966 = vpack.c.b16 %v3306, %v3302
      %v3967 = vpack.c.b16 %v3311, %v3307
      %v3968 = vpack.c.b16 %v3312, %v3308
      %v3969 = vpack.c.b16 %v3313, %v3309
      %v3970 = vpack.c.b16 %v3314, %v3310
      %v3971 = vpack.c.b16 %v3319, %v3315
      %v3972 = vpack.c.b16 %v3320, %v3316
      %v3973 = vpack.c.b16 %v3321, %v3317
      %v3974 = vpack.c.b16 %v3322, %v3318
      %v3975 = vpack.c.b16 %v3327, %v3323
      %v3976 = vpack.c.b16 %v3328, %v3324
      %v3977 = vpack.c.b16 %v3329, %v3325
      %v3978 = vpack.c.b16 %v3330, %v3326
      %v3979 = vpack.c.b16 %v3335, %v3331
      %v3980 = vpack.c.b16 %v3336, %v3332
      %v3981 = vpack.c.b16 %v3337, %v3333
      %v3982 = vpack.c.b16 %v3338, %v3334
      %v3983 = vpack.c.b16 %v3343, %v3339
      %v3984 = vpack.c.b16 %v3344, %v3340
      %v3985 = vpack.c.b16 %v3345, %v3341
      %v3986 = vpack.c.b16 %v3346, %v3342
      %v3987 = vpack.c.b16 %v3351, %v3347
      %v3988 = vpack.c.b16 %v3352, %v3348
      %v3989 = vpack.c.b16 %v3353, %v3349
      %v3990 = vpack.c.b16 %v3354, %v3350
      %v3991 = vpack.c.b16 %v3359, %v3355
      %v3992 = vpack.c.b16 %v3360, %v3356
      %v3993 = vpack.c.b16 %v3361, %v3357
      %v3994 = vpack.c.b16 %v3362, %v3358
      %v3995 = vpack.c.b16 %v3367, %v3363
      %v3996 = vpack.c.b16 %v3368, %v3364
      %v3997 = vpack.c.b16 %v3369, %v3365
      %v3998 = vpack.c.b16 %v3370, %v3366
      %v3999 = vpack.c.b16 %v3375, %v3371
      %v4000 = vpack.c.b16 %v3376, %v3372
      %v4001 = vpack.c.b16 %v3377, %v3373
      %v4002 = vpack.c.b16 %v3378, %v3374
      %v4003 = vpack.c.b16 %v3383, %v3379
      %v4004 = vpack.c.b16 %v3384, %v3380
      %v4005 = vpack.c.b16 %v3385, %v3381
      %v4006 = vpack.c.b16 %v3386, %v3382
      %v4007 = vpack.c.b16 %v3391, %v3387
      %v4008 = vpack.c.b16 %v3392, %v3388
      %v4009 = vpack.c.b16 %v3393, %v3389
      %v4010 = vpack.c.b16 %v3394, %v3390
      %v4011 = vpack.c.b16 %v3399, %v3395
      %v4012 = vpack.c.b16 %v3400, %v3396
      %v4013 = vpack.c.b16 %v3401, %v3397
      %v4014 = vpack.c.b16 %v3402, %v3398
      %v4015 = vpack.c.b16 %v3407, %v3403
      %v4016 = vpack.c.b16 %v3408, %v3404
      %v4017 = vpack.c.b16 %v3409, %v3405
      %v4018 = vpack.c.b16 %v3410, %v3406
      %v4019 = vpack.c.b16 %v3415, %v3411
      %v4020 = vpack.c.b16 %v3416, %v3412
      %v4021 = vpack.c.b16 %v3417, %v3413
      %v4022 = vpack.c.b16 %v3418, %v3414
      %v4023 = vpack.c.b16 %v3423, %v3419
      %v4024 = vpack.c.b16 %v3424, %v3420
      %v4025 = vpack.c.b16 %v3425, %v3421
      %v4026 = vpack.c.b16 %v3426, %v3422
      %v4027 = vpack.c.b16 %v3431, %v3427
      %v4028 = vpack.c.b16 %v3432, %v3428
      %v4029 = vpack.c.b16 %v3433, %v3429
      %v4030 = vpack.c.b16 %v3434, %v3430
      %v4031 = vpack.c.b16 %v3439, %v3435
      %v4032 = vpack.c.b16 %v3440, %v3436
      %v4033 = vpack.c.b16 %v3441, %v3437
      %v4034 = vpack.c.b16 %v3442, %v3438
      %v4035 = vpack.c.b16 %v3447, %v3443
      %v4036 = vpack.c.b16 %v3448, %v3444
      %v4037 = vpack.c.b16 %v3449, %v3445
      %v4038 = vpack.c.b16 %v3450, %v3446
      %v4039 = vpack.c.b16 %v3455, %v3451
      %v4040 = vpack.c.b16 %v3456, %v3452
      %v4041 = vpack.c.b16 %v3457, %v3453
      %v4042 = vpack.c.b16 %v3458, %v3454
      %v4043 = vpack.c.b16 %v3463, %v3459
      %v4044 = vpack.c.b16 %v3464, %v3460
      %v4045 = vpack.c.b16 %v3465, %v3461
      %v4046 = vpack.c.b16 %v3466, %v3462
      %v4047 = vpack.c.b16 %v3471, %v3467
      %v4048 = vpack.c.b16 %v3472, %v3468
      %v4049 = vpack.c.b16 %v3473, %v3469
      %v4050 = vpack.c.b16 %v3474, %v3470
      %v4051 = vpack.c.b16 %v3479, %v3475
      %v4052 = vpack.c.b16 %v3480, %v3476
      %v4053 = vpack.c.b16 %v3481, %v3477
      %v4054 = vpack.c.b16 %v3482, %v3478
      %v4055 = vpack.c.b16 %v3487, %v3483
      %v4056 = vpack.c.b16 %v3488, %v3484
      %v4057 = vpack.c.b16 %v3489, %v3485
      %v4058 = vpack.c.b16 %v3490, %v3486
      %v4059 = vpack.c.b16 %v3495, %v3491
      %v4060 = vpack.c.b16 %v3496, %v3492
      %v4061 = vpack.c.b16 %v3497, %v3493
      %v4062 = vpack.c.b16 %v3498, %v3494
      %v4063 = vpack.c.b16 %v3503, %v3499
      %v4064 = vpack.c.b16 %v3504, %v3500
      %v4065 = vpack.c.b16 %v3505, %v3501
      %v4066 = vpack.c.b16 %v3506, %v3502
      %v4067 = vpack.c.b16 %v3511, %v3507
      %v4068 = vpack.c.b16 %v3512, %v3508
      %v4069 = vpack.c.b16 %v3513, %v3509
      %v4070 = vpack.c.b16 %v3514, %v3510
      %v4071 = vpack.c.b16 %v3519, %v3515
      %v4072 = vpack.c.b16 %v3520, %v3516
      %v4073 = vpack.c.b16 %v3521, %v3517
      %v4074 = vpack.c.b16 %v3522, %v3518
      %v4075 = vpack.c.b16 %v3527, %v3523
      %v4076 = vpack.c.b16 %v3528, %v3524
      %v4077 = vpack.c.b16 %v3529, %v3525
      %v4078 = vpack.c.b16 %v3530, %v3526
      %v4079 = vpack.c.b16 %v3535, %v3531
      %v4080 = vpack.c.b16 %v3536, %v3532
      %v4081 = vpack.c.b16 %v3537, %v3533
      %v4082 = vpack.c.b16 %v3538, %v3534
      %v4083 = vpack.c.b16 %v3543, %v3539
      %v4084 = vpack.c.b16 %v3544, %v3540
      %v4085 = vpack.c.b16 %v3545, %v3541
      %v4086 = vpack.c.b16 %v3546, %v3542
      %v4087 = vpack.c.b16 %v3551, %v3547
      %v4088 = vpack.c.b16 %v3552, %v3548
      %v4089 = vpack.c.b16 %v3553, %v3549
      %v4090 = vpack.c.b16 %v3554, %v3550
      %v4091 = vpack.c.b16 %v3559, %v3555
      %v4092 = vpack.c.b16 %v3560, %v3556
      %v4093 = vpack.c.b16 %v3561, %v3557
      %v4094 = vpack.c.b16 %v3562, %v3558
      %v4095 = vpack.c.b16 %v3567, %v3563
      %v4096 = vpack.c.b16 %v3568, %v3564
      %v4097 = vpack.c.b16 %v3569, %v3565
      %v4098 = vpack.c.b16 %v3570, %v3566
      %v4099 = vpack.c.b16 %v3575, %v3571
      %v4100 = vpack.c.b16 %v3576, %v3572
      %v4101 = vpack.c.b16 %v3577, %v3573
      %v4102 = vpack.c.b16 %v3578, %v3574
      %v4103 = vpack.c.b16 %v3583, %v3579
      %v4104 = vpack.c.b16 %v3584, %v3580
      %v4105 = vpack.c.b16 %v3585, %v3581
      %v4106 = vpack.c.b16 %v3586, %v3582
      %v4107 = vpack.c.b16 %v3591, %v3587
      %v4108 = vpack.c.b16 %v3592, %v3588
      %v4109 = vpack.c.b16 %v3593, %v3589
      %v4110 = vpack.c.b16 %v3594, %v3590
      %v4111 = vpack.c.b16 %v3599, %v3595
      %v4112 = vpack.c.b16 %v3600, %v3596
      %v4113 = vpack.c.b16 %v3601, %v3597
      %v4114 = vpack.c.b16 %v3602, %v3598
      %v4115 = vpack.c.b16 %v3607, %v3603
      %v4116 = vpack.c.b16 %v3608, %v3604
      %v4117 = vpack.c.b16 %v3609, %v3605
      %v4118 = vpack.c.b16 %v3610, %v3606
      %v4119 = vpack.c.b16 %v3615, %v3611
      %v4120 = vpack.c.b16 %v3616, %v3612
      %v4121 = vpack.c.b16 %v3617, %v3613
      %v4122 = vpack.c.b16 %v3618, %v3614
      %v4123 = vpack.c.b16 %v3623, %v3619
      %v4124 = vpack.c.b16 %v3624, %v3620
      %v4125 = vpack.c.b16 %v3625, %v3621
      %v4126 = vpack.c.b16 %v3626, %v3622
      %v4127 = vpack.c.b16 %v3631, %v3627
      %v4128 = vpack.c.b16 %v3632, %v3628
      %v4129 = vpack.c.b16 %v3633, %v3629
      %v4130 = vpack.c.b16 %v3634, %v3630
      %v4131 = vpack.c.b16 %v3639, %v3635
      %v4132 = vpack.c.b16 %v3640, %v3636
      %v4133 = vpack.c.b16 %v3641, %v3637
      %v4134 = vpack.c.b16 %v3642, %v3638
      %v4135 = vpack.c.b16 %v3647, %v3643
      %v4136 = vpack.c.b16 %v3648, %v3644
      %v4137 = vpack.c.b16 %v3649, %v3645
      %v4138 = vpack.c.b16 %v3650, %v3646
      %v4139 = vpack.c.b16 %v3655, %v3651
      %v4140 = vpack.c.b16 %v3656, %v3652
      %v4141 = vpack.c.b16 %v3657, %v3653
      %v4142 = vpack.c.b16 %v3658, %v3654
      %v4143 = vpack.c.b16 %v3663, %v3659
      %v4144 = vpack.c.b16 %v3664, %v3660
      %v4145 = vpack.c.b16 %v3665, %v3661
      %v4146 = vpack.c.b16 %v3666, %v3662
      %v4147 = vpack.c.b16 %v3671, %v3667
      %v4148 = vpack.c.b16 %v3672, %v3668
      %v4149 = vpack.c.b16 %v3673, %v3669
      %v4150 = vpack.c.b16 %v3674, %v3670
      %v4151 = vpack.c.b16 %v3679, %v3675
      %v4152 = vpack.c.b16 %v3680, %v3676
      %v4153 = vpack.c.b16 %v3681, %v3677
      %v4154 = vpack.c.b16 %v3682, %v3678
      %v4155 = vpack.c.b16 %v3687, %v3683
      %v4156 = vpack.c.b16 %v3688, %v3684
      %v4157 = vpack.c.b16 %v3689, %v3685
      %v4158 = vpack.c.b16 %v3690, %v3686
      %v4159 = vpack.c.b16 %v3695, %v3691
      %v4160 = vpack.c.b16 %v3696, %v3692
      %v4161 = vpack.c.b16 %v3697, %v3693
      %v4162 = vpack.c.b16 %v3698, %v3694
      %v4163 = vpack.c.b16 %v3703, %v3699
      %v4164 = vpack.c.b16 %v3704, %v3700
      %v4165 = vpack.c.b16 %v3705, %v3701
      %v4166 = vpack.c.b16 %v3706, %v3702
      %v4167 = vpack.c.b16 %v3711, %v3707
      %v4168 = vpack.c.b16 %v3712, %v3708
      %v4169 = vpack.c.b16 %v3713, %v3709
      %v4170 = vpack.c.b16 %v3714, %v3710
      %v4171 = vpack.c.b16 %v3719, %v3715
      %v4172 = vpack.c.b16 %v3720, %v3716
      %v4173 = vpack.c.b16 %v3721, %v3717
      %v4174 = vpack.c.b16 %v3722, %v3718
      %v4175 = vpack.c.b16 %v3727, %v3723
      %v4176 = vpack.c.b16 %v3728, %v3724
      %v4177 = vpack.c.b16 %v3729, %v3725
      %v4178 = vpack.c.b16 %v3730, %v3726
      %v4179 = vpack.c.b16 %v3735, %v3731
      %v4180 = vpack.c.b16 %v3736, %v3732
      %v4181 = vpack.c.b16 %v3737, %v3733
      %v4182 = vpack.c.b16 %v3738, %v3734
      %v4183 = vpack.c.b16 %v3743, %v3739
      %v4184 = vpack.c.b16 %v3744, %v3740
      %v4185 = vpack.c.b16 %v3745, %v3741
      %v4186 = vpack.c.b16 %v3746, %v3742
      %v4187 = vpack.c.b16 %v3751, %v3747
      %v4188 = vpack.c.b16 %v3752, %v3748
      %v4189 = vpack.c.b16 %v3753, %v3749
      %v4190 = vpack.c.b16 %v3754, %v3750
      %v4191 = vpack.c.b16 %v3759, %v3755
      %v4192 = vpack.c.b16 %v3760, %v3756
      %v4193 = vpack.c.b16 %v3761, %v3757
      %v4194 = vpack.c.b16 %v3762, %v3758
      %v4195 = vpack.c.b16 %v3767, %v3763
      %v4196 = vpack.c.b16 %v3768, %v3764
      %v4197 = vpack.c.b16 %v3769, %v3765
      %v4198 = vpack.c.b16 %v3770, %v3766
      %v4199 = vpack.c.b16 %v3775, %v3771
      %v4200 = vpack.c.b16 %v3776, %v3772
      %v4201 = vpack.c.b16 %v3777, %v3773
      %v4202 = vpack.c.b16 %v3778, %v3774
      %v4203 = vpack.c.b16 %v3783, %v3779
      %v4204 = vpack.c.b16 %v3784, %v3780
      %v4205 = vpack.c.b16 %v3785, %v3781
      %v4206 = vpack.c.b16 %v3786, %v3782
      %v4207 = vpack.c.b16 %v3791, %v3787
      %v4208 = vpack.c.b16 %v3792, %v3788
      %v4209 = vpack.c.b16 %v3793, %v3789
      %v4210 = vpack.c.b16 %v3794, %v3790
      %v4211 = vpack.c.b16 %v3799, %v3795
      %v4212 = vpack.c.b16 %v3800, %v3796
      %v4213 = vpack.c.b16 %v3801, %v3797
      %v4214 = vpack.c.b16 %v3802, %v3798
      %v4215 = vpack.c.b16 %v3807, %v3803
      %v4216 = vpack.c.b16 %v3808, %v3804
      %v4217 = vpack.c.b16 %v3809, %v3805
      %v4218 = vpack.c.b16 %v3810, %v3806
      %v4219 = vpack.c.b16 %v3815, %v3811
      %v4220 = vpack.c.b16 %v3816, %v3812
      %v4221 = vpack.c.b16 %v3817, %v3813
      %v4222 = vpack.c.b16 %v3818, %v3814
      %v4223 = vpack.c.b16 %v3823, %v3819
      %v4224 = vpack.c.b16 %v3824, %v3820
      %v4225 = vpack.c.b16 %v3825, %v3821
      %v4226 = vpack.c.b16 %v3826, %v3822
      %v4227 = vpack.c.b16 %v3831, %v3827
      %v4228 = vpack.c.b16 %v3832, %v3828
      %v4229 = vpack.c.b16 %v3833, %v3829
      %v4230 = vpack.c.b16 %v3834, %v3830
      %v4231 = vpack.c.b16 %v3839, %v3835
      %v4232 = vpack.c.b16 %v3840, %v3836
      %v4233 = vpack.c.b16 %v3841, %v3837
      %v4234 = vpack.c.b16 %v3842, %v3838
      %v4235 = vpack.c.b16 %v3847, %v3843
      %v4236 = vpack.c.b16 %v3848, %v3844
      %v4237 = vpack.c.b16 %v3849, %v3845
      %v4238 = vpack.c.b16 %v3850, %v3846
      %v4239 = vpack.c.b16 %v3855, %v3851
      %v4240 = vpack.c.b16 %v3856, %v3852
      %v4241 = vpack.c.b16 %v3857, %v3853
      %v4242 = vpack.c.b16 %v3858, %v3854
      %4627 = vmatpush.bf16.msra.mxu0 %v3887
      %4628 = vmatpush.bf16.msra.mxu0 %v3883
      %4629 = vmatpush.bf16.msra.mxu0 %v3879
      %4630 = vmatpush.bf16.msra.mxu0 %v3875
      %4631 = vmatpush.bf16.msra.mxu0 %v3871
      %4632 = vmatpush.bf16.msra.mxu0 %v3867
      %4633 = vmatpush.bf16.msra.mxu0 %v3863
      %4634 = vmatpush.bf16.msra.mxu0 %v3859
      %4635 = vmatmul.bf16.gmra.mxu0 %v790
      %v4636 = vpop.f32.mrf.mxu0
      %v4637 = vadd.f32 %v2699, %v4636
      %v4638 = vpop.f32.mrf.mxu0
      %4639 = vdwg.mxu0
      %4640 = vmatpush.bf16.msra.mxu0 %v3919
      %4641 = vmatpush.bf16.msra.mxu0 %v3915
      %4642 = vmatpush.bf16.msra.mxu0 %v3911
      %4643 = vmatpush.bf16.msra.mxu0 %v3907
      %4644 = vmatpush.bf16.msra.mxu0 %v3903
      %4645 = vmatpush.bf16.msra.mxu0 %v3899
      %4646 = vmatpush.bf16.msra.mxu0 %v3895
      %4647 = vmatpush.bf16.msra.mxu0 %v3891
      %4648 = vmatmul.bf16.gmra.mxu0 %v791
      %v4649 = vpop.f32.mrf.mxu0
      %v4650 = vadd.f32 %v4637, %v4649
      %v4651 = vpop.f32.mrf.mxu0
      %4652 = vdwg.mxu0
      %4653 = vmatpush.bf16.msra.mxu0 %v3951
      %4654 = vmatpush.bf16.msra.mxu0 %v3947
      %4655 = vmatpush.bf16.msra.mxu0 %v3943
      %4656 = vmatpush.bf16.msra.mxu0 %v3939
      %4657 = vmatpush.bf16.msra.mxu0 %v3935
      %4658 = vmatpush.bf16.msra.mxu0 %v3931
      %4659 = vmatpush.bf16.msra.mxu0 %v3927
      %4660 = vmatpush.bf16.msra.mxu0 %v3923
      %4661 = vmatmul.bf16.gmra.mxu0 %v792
      %v4662 = vpop.f32.mrf.mxu0
      %v4663 = vadd.f32 %v4650, %v4662
      %v4664 = vpop.f32.mrf.mxu0
      %4665 = vdwg.mxu0
      %4666 = vmatpush.bf16.msra.mxu0 %v3983
      %4667 = vmatpush.bf16.msra.mxu0 %v3979
      %4668 = vmatpush.bf16.msra.mxu0 %v3975
      %4669 = vmatpush.bf16.msra.mxu0 %v3971
      %4670 = vmatpush.bf16.msra.mxu0 %v3967
      %4671 = vmatpush.bf16.msra.mxu0 %v3963
      %4672 = vmatpush.bf16.msra.mxu0 %v3959
      %4673 = vmatpush.bf16.msra.mxu0 %v3955
      %4674 = vmatmul.bf16.gmra.mxu0 %v793
      %v4675 = vpop.f32.mrf.mxu0
      %v4676 = vadd.f32 %v4663, %v4675
      %v4677 = vpop.f32.mrf.mxu0
      %4678 = vdwg.mxu0
      %4679 = vmatpush.bf16.msra.mxu0 %v4015
      %4680 = vmatpush.bf16.msra.mxu0 %v4011
      %4681 = vmatpush.bf16.msra.mxu0 %v4007
      %4682 = vmatpush.bf16.msra.mxu0 %v4003
      %4683 = vmatpush.bf16.msra.mxu0 %v3999
      %4684 = vmatpush.bf16.msra.mxu0 %v3995
      %4685 = vmatpush.bf16.msra.mxu0 %v3991
      %4686 = vmatpush.bf16.msra.mxu0 %v3987
      %4687 = vmatmul.bf16.gmra.mxu0 %v794
      %v4688 = vpop.f32.mrf.mxu0
      %v4689 = vadd.f32 %v4676, %v4688
      %v4690 = vpop.f32.mrf.mxu0
      %4691 = vdwg.mxu0
      %4692 = vmatpush.bf16.msra.mxu0 %v4047
      %4693 = vmatpush.bf16.msra.mxu0 %v4043
      %4694 = vmatpush.bf16.msra.mxu0 %v4039
      %4695 = vmatpush.bf16.msra.mxu0 %v4035
      %4696 = vmatpush.bf16.msra.mxu0 %v4031
      %4697 = vmatpush.bf16.msra.mxu0 %v4027
      %4698 = vmatpush.bf16.msra.mxu0 %v4023
      %4699 = vmatpush.bf16.msra.mxu0 %v4019
      %4700 = vmatmul.bf16.gmra.mxu0 %v795
      %v4701 = vpop.f32.mrf.mxu0
      %v4702 = vadd.f32 %v4689, %v4701
      %v4703 = vpop.f32.mrf.mxu0
      %4704 = vdwg.mxu0
      %4705 = vmatpush.bf16.msra.mxu0 %v4079
      %4706 = vmatpush.bf16.msra.mxu0 %v4075
      %4707 = vmatpush.bf16.msra.mxu0 %v4071
      %4708 = vmatpush.bf16.msra.mxu0 %v4067
      %4709 = vmatpush.bf16.msra.mxu0 %v4063
      %4710 = vmatpush.bf16.msra.mxu0 %v4059
      %4711 = vmatpush.bf16.msra.mxu0 %v4055
      %4712 = vmatpush.bf16.msra.mxu0 %v4051
      %4713 = vmatmul.bf16.gmra.mxu0 %v796
      %v4714 = vpop.f32.mrf.mxu0
      %v4715 = vadd.f32 %v4702, %v4714
      %v4716 = vpop.f32.mrf.mxu0
      %4717 = vdwg.mxu0
      %4718 = vmatpush.bf16.msra.mxu0 %v4111
      %4719 = vmatpush.bf16.msra.mxu0 %v4107
      %4720 = vmatpush.bf16.msra.mxu0 %v4103
      %4721 = vmatpush.bf16.msra.mxu0 %v4099
      %4722 = vmatpush.bf16.msra.mxu0 %v4095
      %4723 = vmatpush.bf16.msra.mxu0 %v4091
      %4724 = vmatpush.bf16.msra.mxu0 %v4087
      %4725 = vmatpush.bf16.msra.mxu0 %v4083
      %4726 = vmatmul.bf16.gmra.mxu0 %v797
      %v4727 = vpop.f32.mrf.mxu0
      %v4728 = vadd.f32 %v4715, %v4727
      %v4729 = vpop.f32.mrf.mxu0
      %4730 = vdwg.mxu0
      %4731 = vmatpush.bf16.msra.mxu0 %v4143
      %4732 = vmatpush.bf16.msra.mxu0 %v4139
      %4733 = vmatpush.bf16.msra.mxu0 %v4135
      %4734 = vmatpush.bf16.msra.mxu0 %v4131
      %4735 = vmatpush.bf16.msra.mxu0 %v4127
      %4736 = vmatpush.bf16.msra.mxu0 %v4123
      %4737 = vmatpush.bf16.msra.mxu0 %v4119
      %4738 = vmatpush.bf16.msra.mxu0 %v4115
      %4739 = vmatmul.bf16.gmra.mxu0 %v798
      %v4740 = vpop.f32.mrf.mxu0
      %v4741 = vadd.f32 %v4728, %v4740
      %v4742 = vpop.f32.mrf.mxu0
      %4743 = vdwg.mxu0
      %4744 = vmatpush.bf16.msra.mxu0 %v4175
      %4745 = vmatpush.bf16.msra.mxu0 %v4171
      %4746 = vmatpush.bf16.msra.mxu0 %v4167
      %4747 = vmatpush.bf16.msra.mxu0 %v4163
      %4748 = vmatpush.bf16.msra.mxu0 %v4159
      %4749 = vmatpush.bf16.msra.mxu0 %v4155
      %4750 = vmatpush.bf16.msra.mxu0 %v4151
      %4751 = vmatpush.bf16.msra.mxu0 %v4147
      %4752 = vmatmul.bf16.gmra.mxu0 %v799
      %v4753 = vpop.f32.mrf.mxu0
      %v4754 = vadd.f32 %v4741, %v4753
      %v4755 = vpop.f32.mrf.mxu0
      %4756 = vdwg.mxu0
      %4757 = vmatpush.bf16.msra.mxu0 %v4207
      %4758 = vmatpush.bf16.msra.mxu0 %v4203
      %4759 = vmatpush.bf16.msra.mxu0 %v4199
      %4760 = vmatpush.bf16.msra.mxu0 %v4195
      %4761 = vmatpush.bf16.msra.mxu0 %v4191
      %4762 = vmatpush.bf16.msra.mxu0 %v4187
      %4763 = vmatpush.bf16.msra.mxu0 %v4183
      %4764 = vmatpush.bf16.msra.mxu0 %v4179
      %4765 = vmatmul.bf16.gmra.mxu0 %v800
      %v4766 = vpop.f32.mrf.mxu0
      %v4767 = vadd.f32 %v4754, %v4766
      %v4768 = vpop.f32.mrf.mxu0
      %4769 = vdwg.mxu0
      %4770 = vmatpush.bf16.msra.mxu0 %v4239
      %4771 = vmatpush.bf16.msra.mxu0 %v4235
      %4772 = vmatpush.bf16.msra.mxu0 %v4231
      %4773 = vmatpush.bf16.msra.mxu0 %v4227
      %4774 = vmatpush.bf16.msra.mxu0 %v4223
      %4775 = vmatpush.bf16.msra.mxu0 %v4219
      %4776 = vmatpush.bf16.msra.mxu0 %v4215
      %4777 = vmatpush.bf16.msra.mxu0 %v4211
      %4778 = vmatmul.bf16.gmra.mxu0 %v801
      %v4779 = vpop.f32.mrf.mxu0
      %v4780 = vadd.f32 %v4767, %v4779
      %v4781 = vpop.f32.mrf.mxu0
      %4782 = vdwg.mxu0
      %4783 = vmatpush.bf16.msra.mxu0 %v3888
      %4784 = vmatpush.bf16.msra.mxu0 %v3884
      %4785 = vmatpush.bf16.msra.mxu0 %v3880
      %4786 = vmatpush.bf16.msra.mxu0 %v3876
      %4787 = vmatpush.bf16.msra.mxu0 %v3872
      %4788 = vmatpush.bf16.msra.mxu0 %v3868
      %4789 = vmatpush.bf16.msra.mxu0 %v3864
      %4790 = vmatpush.bf16.msra.mxu0 %v3860
      %4791 = vmatmul.bf16.gmra.mxu0 %v790
      %v4792 = vpop.f32.mrf.mxu0
      %v4793 = vadd.f32 %v2700, %v4792
      %v4794 = vpop.f32.mrf.mxu0
      %4795 = vdwg.mxu0
      %4796 = vmatpush.bf16.msra.mxu0 %v3920
      %4797 = vmatpush.bf16.msra.mxu0 %v3916
      %4798 = vmatpush.bf16.msra.mxu0 %v3912
      %4799 = vmatpush.bf16.msra.mxu0 %v3908
      %4800 = vmatpush.bf16.msra.mxu0 %v3904
      %4801 = vmatpush.bf16.msra.mxu0 %v3900
      %4802 = vmatpush.bf16.msra.mxu0 %v3896
      %4803 = vmatpush.bf16.msra.mxu0 %v3892
      %4804 = vmatmul.bf16.gmra.mxu0 %v791
      %v4805 = vpop.f32.mrf.mxu0
      %v4806 = vadd.f32 %v4793, %v4805
      %v4807 = vpop.f32.mrf.mxu0
      %4808 = vdwg.mxu0
      %4809 = vmatpush.bf16.msra.mxu0 %v3952
      %4810 = vmatpush.bf16.msra.mxu0 %v3948
      %4811 = vmatpush.bf16.msra.mxu0 %v3944
      %4812 = vmatpush.bf16.msra.mxu0 %v3940
      %4813 = vmatpush.bf16.msra.mxu0 %v3936
      %4814 = vmatpush.bf16.msra.mxu0 %v3932
      %4815 = vmatpush.bf16.msra.mxu0 %v3928
      %4816 = vmatpush.bf16.msra.mxu0 %v3924
      %4817 = vmatmul.bf16.gmra.mxu0 %v792
      %v4818 = vpop.f32.mrf.mxu0
      %v4819 = vadd.f32 %v4806, %v4818
      %v4820 = vpop.f32.mrf.mxu0
      %4821 = vdwg.mxu0
      %4822 = vmatpush.bf16.msra.mxu0 %v3984
      %4823 = vmatpush.bf16.msra.mxu0 %v3980
      %4824 = vmatpush.bf16.msra.mxu0 %v3976
      %4825 = vmatpush.bf16.msra.mxu0 %v3972
      %4826 = vmatpush.bf16.msra.mxu0 %v3968
      %4827 = vmatpush.bf16.msra.mxu0 %v3964
      %4828 = vmatpush.bf16.msra.mxu0 %v3960
      %4829 = vmatpush.bf16.msra.mxu0 %v3956
      %4830 = vmatmul.bf16.gmra.mxu0 %v793
      %v4831 = vpop.f32.mrf.mxu0
      %v4832 = vadd.f32 %v4819, %v4831
      %v4833 = vpop.f32.mrf.mxu0
      %4834 = vdwg.mxu0
      %4835 = vmatpush.bf16.msra.mxu0 %v4016
      %4836 = vmatpush.bf16.msra.mxu0 %v4012
      %4837 = vmatpush.bf16.msra.mxu0 %v4008
      %4838 = vmatpush.bf16.msra.mxu0 %v4004
      %4839 = vmatpush.bf16.msra.mxu0 %v4000
      %4840 = vmatpush.bf16.msra.mxu0 %v3996
      %4841 = vmatpush.bf16.msra.mxu0 %v3992
      %4842 = vmatpush.bf16.msra.mxu0 %v3988
      %4843 = vmatmul.bf16.gmra.mxu0 %v794
      %v4844 = vpop.f32.mrf.mxu0
      %v4845 = vadd.f32 %v4832, %v4844
      %v4846 = vpop.f32.mrf.mxu0
      %4847 = vdwg.mxu0
      %4848 = vmatpush.bf16.msra.mxu0 %v4048
      %4849 = vmatpush.bf16.msra.mxu0 %v4044
      %4850 = vmatpush.bf16.msra.mxu0 %v4040
      %4851 = vmatpush.bf16.msra.mxu0 %v4036
      %4852 = vmatpush.bf16.msra.mxu0 %v4032
      %4853 = vmatpush.bf16.msra.mxu0 %v4028
      %4854 = vmatpush.bf16.msra.mxu0 %v4024
      %4855 = vmatpush.bf16.msra.mxu0 %v4020
      %4856 = vmatmul.bf16.gmra.mxu0 %v795
      %v4857 = vpop.f32.mrf.mxu0
      %v4858 = vadd.f32 %v4845, %v4857
      %v4859 = vpop.f32.mrf.mxu0
      %4860 = vdwg.mxu0
      %4861 = vmatpush.bf16.msra.mxu0 %v4080
      %4862 = vmatpush.bf16.msra.mxu0 %v4076
      %4863 = vmatpush.bf16.msra.mxu0 %v4072
      %4864 = vmatpush.bf16.msra.mxu0 %v4068
      %4865 = vmatpush.bf16.msra.mxu0 %v4064
      %4866 = vmatpush.bf16.msra.mxu0 %v4060
      %4867 = vmatpush.bf16.msra.mxu0 %v4056
      %4868 = vmatpush.bf16.msra.mxu0 %v4052
      %4869 = vmatmul.bf16.gmra.mxu0 %v796
      %v4870 = vpop.f32.mrf.mxu0
      %v4871 = vadd.f32 %v4858, %v4870
      %v4872 = vpop.f32.mrf.mxu0
      %4873 = vdwg.mxu0
      %4874 = vmatpush.bf16.msra.mxu0 %v4112
      %4875 = vmatpush.bf16.msra.mxu0 %v4108
      %4876 = vmatpush.bf16.msra.mxu0 %v4104
      %4877 = vmatpush.bf16.msra.mxu0 %v4100
      %4878 = vmatpush.bf16.msra.mxu0 %v4096
      %4879 = vmatpush.bf16.msra.mxu0 %v4092
      %4880 = vmatpush.bf16.msra.mxu0 %v4088
      %4881 = vmatpush.bf16.msra.mxu0 %v4084
      %4882 = vmatmul.bf16.gmra.mxu0 %v797
      %v4883 = vpop.f32.mrf.mxu0
      %v4884 = vadd.f32 %v4871, %v4883
      %v4885 = vpop.f32.mrf.mxu0
      %4886 = vdwg.mxu0
      %4887 = vmatpush.bf16.msra.mxu0 %v4144
      %4888 = vmatpush.bf16.msra.mxu0 %v4140
      %4889 = vmatpush.bf16.msra.mxu0 %v4136
      %4890 = vmatpush.bf16.msra.mxu0 %v4132
      %4891 = vmatpush.bf16.msra.mxu0 %v4128
      %4892 = vmatpush.bf16.msra.mxu0 %v4124
      %4893 = vmatpush.bf16.msra.mxu0 %v4120
      %4894 = vmatpush.bf16.msra.mxu0 %v4116
      %4895 = vmatmul.bf16.gmra.mxu0 %v798
      %v4896 = vpop.f32.mrf.mxu0
      %v4897 = vadd.f32 %v4884, %v4896
      %v4898 = vpop.f32.mrf.mxu0
      %4899 = vdwg.mxu0
      %4900 = vmatpush.bf16.msra.mxu0 %v4176
      %4901 = vmatpush.bf16.msra.mxu0 %v4172
      %4902 = vmatpush.bf16.msra.mxu0 %v4168
      %4903 = vmatpush.bf16.msra.mxu0 %v4164
      %4904 = vmatpush.bf16.msra.mxu0 %v4160
      %4905 = vmatpush.bf16.msra.mxu0 %v4156
      %4906 = vmatpush.bf16.msra.mxu0 %v4152
      %4907 = vmatpush.bf16.msra.mxu0 %v4148
      %4908 = vmatmul.bf16.gmra.mxu0 %v799
      %v4909 = vpop.f32.mrf.mxu0
      %v4910 = vadd.f32 %v4897, %v4909
      %v4911 = vpop.f32.mrf.mxu0
      %4912 = vdwg.mxu0
      %4913 = vmatpush.bf16.msra.mxu0 %v4208
      %4914 = vmatpush.bf16.msra.mxu0 %v4204
      %4915 = vmatpush.bf16.msra.mxu0 %v4200
      %4916 = vmatpush.bf16.msra.mxu0 %v4196
      %4917 = vmatpush.bf16.msra.mxu0 %v4192
      %4918 = vmatpush.bf16.msra.mxu0 %v4188
      %4919 = vmatpush.bf16.msra.mxu0 %v4184
      %4920 = vmatpush.bf16.msra.mxu0 %v4180
      %4921 = vmatmul.bf16.gmra.mxu0 %v800
      %v4922 = vpop.f32.mrf.mxu0
      %v4923 = vadd.f32 %v4910, %v4922
      %v4924 = vpop.f32.mrf.mxu0
      %4925 = vdwg.mxu0
      %4926 = vmatpush.bf16.msra.mxu0 %v4240
      %4927 = vmatpush.bf16.msra.mxu0 %v4236
      %4928 = vmatpush.bf16.msra.mxu0 %v4232
      %4929 = vmatpush.bf16.msra.mxu0 %v4228
      %4930 = vmatpush.bf16.msra.mxu0 %v4224
      %4931 = vmatpush.bf16.msra.mxu0 %v4220
      %4932 = vmatpush.bf16.msra.mxu0 %v4216
      %4933 = vmatpush.bf16.msra.mxu0 %v4212
      %4934 = vmatmul.bf16.gmra.mxu0 %v801
      %v4935 = vpop.f32.mrf.mxu0
      %v4936 = vadd.f32 %v4923, %v4935
      %v4937 = vpop.f32.mrf.mxu0
      %4938 = vdwg.mxu0
      %4939 = vmatpush.bf16.msra.mxu0 %v3889
      %4940 = vmatpush.bf16.msra.mxu0 %v3885
      %4941 = vmatpush.bf16.msra.mxu0 %v3881
      %4942 = vmatpush.bf16.msra.mxu0 %v3877
      %4943 = vmatpush.bf16.msra.mxu0 %v3873
      %4944 = vmatpush.bf16.msra.mxu0 %v3869
      %4945 = vmatpush.bf16.msra.mxu0 %v3865
      %4946 = vmatpush.bf16.msra.mxu0 %v3861
      %4947 = vmatmul.bf16.gmra.mxu0 %v790
      %v4948 = vpop.f32.mrf.mxu0
      %v4949 = vadd.f32 %v2701, %v4948
      %v4950 = vpop.f32.mrf.mxu0
      %4951 = vdwg.mxu0
      %4952 = vmatpush.bf16.msra.mxu0 %v3921
      %4953 = vmatpush.bf16.msra.mxu0 %v3917
      %4954 = vmatpush.bf16.msra.mxu0 %v3913
      %4955 = vmatpush.bf16.msra.mxu0 %v3909
      %4956 = vmatpush.bf16.msra.mxu0 %v3905
      %4957 = vmatpush.bf16.msra.mxu0 %v3901
      %4958 = vmatpush.bf16.msra.mxu0 %v3897
      %4959 = vmatpush.bf16.msra.mxu0 %v3893
      %4960 = vmatmul.bf16.gmra.mxu0 %v791
      %v4961 = vpop.f32.mrf.mxu0
      %v4962 = vadd.f32 %v4949, %v4961
      %v4963 = vpop.f32.mrf.mxu0
      %4964 = vdwg.mxu0
      %4965 = vmatpush.bf16.msra.mxu0 %v3953
      %4966 = vmatpush.bf16.msra.mxu0 %v3949
      %4967 = vmatpush.bf16.msra.mxu0 %v3945
      %4968 = vmatpush.bf16.msra.mxu0 %v3941
      %4969 = vmatpush.bf16.msra.mxu0 %v3937
      %4970 = vmatpush.bf16.msra.mxu0 %v3933
      %4971 = vmatpush.bf16.msra.mxu0 %v3929
      %4972 = vmatpush.bf16.msra.mxu0 %v3925
      %4973 = vmatmul.bf16.gmra.mxu0 %v792
      %v4974 = vpop.f32.mrf.mxu0
      %v4975 = vadd.f32 %v4962, %v4974
      %v4976 = vpop.f32.mrf.mxu0
      %4977 = vdwg.mxu0
      %4978 = vmatpush.bf16.msra.mxu0 %v3985
      %4979 = vmatpush.bf16.msra.mxu0 %v3981
      %4980 = vmatpush.bf16.msra.mxu0 %v3977
      %4981 = vmatpush.bf16.msra.mxu0 %v3973
      %4982 = vmatpush.bf16.msra.mxu0 %v3969
      %4983 = vmatpush.bf16.msra.mxu0 %v3965
      %4984 = vmatpush.bf16.msra.mxu0 %v3961
      %4985 = vmatpush.bf16.msra.mxu0 %v3957
      %4986 = vmatmul.bf16.gmra.mxu0 %v793
      %v4987 = vpop.f32.mrf.mxu0
      %v4988 = vadd.f32 %v4975, %v4987
      %v4989 = vpop.f32.mrf.mxu0
      %4990 = vdwg.mxu0
      %4991 = vmatpush.bf16.msra.mxu0 %v4017
      %4992 = vmatpush.bf16.msra.mxu0 %v4013
      %4993 = vmatpush.bf16.msra.mxu0 %v4009
      %4994 = vmatpush.bf16.msra.mxu0 %v4005
      %4995 = vmatpush.bf16.msra.mxu0 %v4001
      %4996 = vmatpush.bf16.msra.mxu0 %v3997
      %4997 = vmatpush.bf16.msra.mxu0 %v3993
      %4998 = vmatpush.bf16.msra.mxu0 %v3989
      %4999 = vmatmul.bf16.gmra.mxu0 %v794
      %v5000 = vpop.f32.mrf.mxu0
      %v5001 = vadd.f32 %v4988, %v5000
      %v5002 = vpop.f32.mrf.mxu0
      %5003 = vdwg.mxu0
      %5004 = vmatpush.bf16.msra.mxu0 %v4049
      %5005 = vmatpush.bf16.msra.mxu0 %v4045
      %5006 = vmatpush.bf16.msra.mxu0 %v4041
      %5007 = vmatpush.bf16.msra.mxu0 %v4037
      %5008 = vmatpush.bf16.msra.mxu0 %v4033
      %5009 = vmatpush.bf16.msra.mxu0 %v4029
      %5010 = vmatpush.bf16.msra.mxu0 %v4025
      %5011 = vmatpush.bf16.msra.mxu0 %v4021
      %5012 = vmatmul.bf16.gmra.mxu0 %v795
      %v5013 = vpop.f32.mrf.mxu0
      %v5014 = vadd.f32 %v5001, %v5013
      %v5015 = vpop.f32.mrf.mxu0
      %5016 = vdwg.mxu0
      %5017 = vmatpush.bf16.msra.mxu0 %v4081
      %5018 = vmatpush.bf16.msra.mxu0 %v4077
      %5019 = vmatpush.bf16.msra.mxu0 %v4073
      %5020 = vmatpush.bf16.msra.mxu0 %v4069
      %5021 = vmatpush.bf16.msra.mxu0 %v4065
      %5022 = vmatpush.bf16.msra.mxu0 %v4061
      %5023 = vmatpush.bf16.msra.mxu0 %v4057
      %5024 = vmatpush.bf16.msra.mxu0 %v4053
      %5025 = vmatmul.bf16.gmra.mxu0 %v796
      %v5026 = vpop.f32.mrf.mxu0
      %v5027 = vadd.f32 %v5014, %v5026
      %v5028 = vpop.f32.mrf.mxu0
      %5029 = vdwg.mxu0
      %5030 = vmatpush.bf16.msra.mxu0 %v4113
      %5031 = vmatpush.bf16.msra.mxu0 %v4109
      %5032 = vmatpush.bf16.msra.mxu0 %v4105
      %5033 = vmatpush.bf16.msra.mxu0 %v4101
      %5034 = vmatpush.bf16.msra.mxu0 %v4097
      %5035 = vmatpush.bf16.msra.mxu0 %v4093
      %5036 = vmatpush.bf16.msra.mxu0 %v4089
      %5037 = vmatpush.bf16.msra.mxu0 %v4085
      %5038 = vmatmul.bf16.gmra.mxu0 %v797
      %v5039 = vpop.f32.mrf.mxu0
      %v5040 = vadd.f32 %v5027, %v5039
      %v5041 = vpop.f32.mrf.mxu0
      %5042 = vdwg.mxu0
      %5043 = vmatpush.bf16.msra.mxu0 %v4145
      %5044 = vmatpush.bf16.msra.mxu0 %v4141
      %5045 = vmatpush.bf16.msra.mxu0 %v4137
      %5046 = vmatpush.bf16.msra.mxu0 %v4133
      %5047 = vmatpush.bf16.msra.mxu0 %v4129
      %5048 = vmatpush.bf16.msra.mxu0 %v4125
      %5049 = vmatpush.bf16.msra.mxu0 %v4121
      %5050 = vmatpush.bf16.msra.mxu0 %v4117
      %5051 = vmatmul.bf16.gmra.mxu0 %v798
      %v5052 = vpop.f32.mrf.mxu0
      %v5053 = vadd.f32 %v5040, %v5052
      %v5054 = vpop.f32.mrf.mxu0
      %5055 = vdwg.mxu0
      %5056 = vmatpush.bf16.msra.mxu0 %v4177
      %5057 = vmatpush.bf16.msra.mxu0 %v4173
      %5058 = vmatpush.bf16.msra.mxu0 %v4169
      %5059 = vmatpush.bf16.msra.mxu0 %v4165
      %5060 = vmatpush.bf16.msra.mxu0 %v4161
      %5061 = vmatpush.bf16.msra.mxu0 %v4157
      %5062 = vmatpush.bf16.msra.mxu0 %v4153
      %5063 = vmatpush.bf16.msra.mxu0 %v4149
      %5064 = vmatmul.bf16.gmra.mxu0 %v799
      %v5065 = vpop.f32.mrf.mxu0
      %v5066 = vadd.f32 %v5053, %v5065
      %v5067 = vpop.f32.mrf.mxu0
      %5068 = vdwg.mxu0
      %5069 = vmatpush.bf16.msra.mxu0 %v4209
      %5070 = vmatpush.bf16.msra.mxu0 %v4205
      %5071 = vmatpush.bf16.msra.mxu0 %v4201
      %5072 = vmatpush.bf16.msra.mxu0 %v4197
      %5073 = vmatpush.bf16.msra.mxu0 %v4193
      %5074 = vmatpush.bf16.msra.mxu0 %v4189
      %5075 = vmatpush.bf16.msra.mxu0 %v4185
      %5076 = vmatpush.bf16.msra.mxu0 %v4181
      %5077 = vmatmul.bf16.gmra.mxu0 %v800
      %v5078 = vpop.f32.mrf.mxu0
      %v5079 = vadd.f32 %v5066, %v5078
      %v5080 = vpop.f32.mrf.mxu0
      %5081 = vdwg.mxu0
      %5082 = vmatpush.bf16.msra.mxu0 %v4241
      %5083 = vmatpush.bf16.msra.mxu0 %v4237
      %5084 = vmatpush.bf16.msra.mxu0 %v4233
      %5085 = vmatpush.bf16.msra.mxu0 %v4229
      %5086 = vmatpush.bf16.msra.mxu0 %v4225
      %5087 = vmatpush.bf16.msra.mxu0 %v4221
      %5088 = vmatpush.bf16.msra.mxu0 %v4217
      %5089 = vmatpush.bf16.msra.mxu0 %v4213
      %5090 = vmatmul.bf16.gmra.mxu0 %v801
      %v5091 = vpop.f32.mrf.mxu0
      %v5092 = vadd.f32 %v5079, %v5091
      %v5093 = vpop.f32.mrf.mxu0
      %5094 = vdwg.mxu0
      %5095 = vmatpush.bf16.msra.mxu0 %v3890
      %5096 = vmatpush.bf16.msra.mxu0 %v3886
      %5097 = vmatpush.bf16.msra.mxu0 %v3882
      %5098 = vmatpush.bf16.msra.mxu0 %v3878
      %5099 = vmatpush.bf16.msra.mxu0 %v3874
      %5100 = vmatpush.bf16.msra.mxu0 %v3870
      %5101 = vmatpush.bf16.msra.mxu0 %v3866
      %5102 = vmatpush.bf16.msra.mxu0 %v3862
      %5103 = vmatmul.bf16.gmra.mxu0 %v790
      %v5104 = vpop.f32.mrf.mxu0
      %v5105 = vadd.f32 %v2702, %v5104
      %v5106 = vpop.f32.mrf.mxu0
      %5107 = vdwg.mxu0
      %5108 = vmatpush.bf16.msra.mxu0 %v3922
      %5109 = vmatpush.bf16.msra.mxu0 %v3918
      %5110 = vmatpush.bf16.msra.mxu0 %v3914
      %5111 = vmatpush.bf16.msra.mxu0 %v3910
      %5112 = vmatpush.bf16.msra.mxu0 %v3906
      %5113 = vmatpush.bf16.msra.mxu0 %v3902
      %5114 = vmatpush.bf16.msra.mxu0 %v3898
      %5115 = vmatpush.bf16.msra.mxu0 %v3894
      %5116 = vmatmul.bf16.gmra.mxu0 %v791
      %v5117 = vpop.f32.mrf.mxu0
      %v5118 = vadd.f32 %v5105, %v5117
      %v5119 = vpop.f32.mrf.mxu0
      %5120 = vdwg.mxu0
      %5121 = vmatpush.bf16.msra.mxu0 %v3954
      %5122 = vmatpush.bf16.msra.mxu0 %v3950
      %5123 = vmatpush.bf16.msra.mxu0 %v3946
      %5124 = vmatpush.bf16.msra.mxu0 %v3942
      %5125 = vmatpush.bf16.msra.mxu0 %v3938
      %5126 = vmatpush.bf16.msra.mxu0 %v3934
      %5127 = vmatpush.bf16.msra.mxu0 %v3930
      %5128 = vmatpush.bf16.msra.mxu0 %v3926
      %5129 = vmatmul.bf16.gmra.mxu0 %v792
      %v5130 = vpop.f32.mrf.mxu0
      %v5131 = vadd.f32 %v5118, %v5130
      %v5132 = vpop.f32.mrf.mxu0
      %5133 = vdwg.mxu0
      %5134 = vmatpush.bf16.msra.mxu0 %v3986
      %5135 = vmatpush.bf16.msra.mxu0 %v3982
      %5136 = vmatpush.bf16.msra.mxu0 %v3978
      %5137 = vmatpush.bf16.msra.mxu0 %v3974
      %5138 = vmatpush.bf16.msra.mxu0 %v3970
      %5139 = vmatpush.bf16.msra.mxu0 %v3966
      %5140 = vmatpush.bf16.msra.mxu0 %v3962
      %5141 = vmatpush.bf16.msra.mxu0 %v3958
      %5142 = vmatmul.bf16.gmra.mxu0 %v793
      %v5143 = vpop.f32.mrf.mxu0
      %v5144 = vadd.f32 %v5131, %v5143
      %v5145 = vpop.f32.mrf.mxu0
      %5146 = vdwg.mxu0
      %5147 = vmatpush.bf16.msra.mxu0 %v4018
      %5148 = vmatpush.bf16.msra.mxu0 %v4014
      %5149 = vmatpush.bf16.msra.mxu0 %v4010
      %5150 = vmatpush.bf16.msra.mxu0 %v4006
      %5151 = vmatpush.bf16.msra.mxu0 %v4002
      %5152 = vmatpush.bf16.msra.mxu0 %v3998
      %5153 = vmatpush.bf16.msra.mxu0 %v3994
      %5154 = vmatpush.bf16.msra.mxu0 %v3990
      %5155 = vmatmul.bf16.gmra.mxu0 %v794
      %v5156 = vpop.f32.mrf.mxu0
      %v5157 = vadd.f32 %v5144, %v5156
      %v5158 = vpop.f32.mrf.mxu0
      %5159 = vdwg.mxu0
      %5160 = vmatpush.bf16.msra.mxu0 %v4050
      %5161 = vmatpush.bf16.msra.mxu0 %v4046
      %5162 = vmatpush.bf16.msra.mxu0 %v4042
      %5163 = vmatpush.bf16.msra.mxu0 %v4038
      %5164 = vmatpush.bf16.msra.mxu0 %v4034
      %5165 = vmatpush.bf16.msra.mxu0 %v4030
      %5166 = vmatpush.bf16.msra.mxu0 %v4026
      %5167 = vmatpush.bf16.msra.mxu0 %v4022
      %5168 = vmatmul.bf16.gmra.mxu0 %v795
      %v5169 = vpop.f32.mrf.mxu0
      %v5170 = vadd.f32 %v5157, %v5169
      %v5171 = vpop.f32.mrf.mxu0
      %5172 = vdwg.mxu0
      %5173 = vmatpush.bf16.msra.mxu0 %v4082
      %5174 = vmatpush.bf16.msra.mxu0 %v4078
      %5175 = vmatpush.bf16.msra.mxu0 %v4074
      %5176 = vmatpush.bf16.msra.mxu0 %v4070
      %5177 = vmatpush.bf16.msra.mxu0 %v4066
      %5178 = vmatpush.bf16.msra.mxu0 %v4062
      %5179 = vmatpush.bf16.msra.mxu0 %v4058
      %5180 = vmatpush.bf16.msra.mxu0 %v4054
      %5181 = vmatmul.bf16.gmra.mxu0 %v796
      %v5182 = vpop.f32.mrf.mxu0
      %v5183 = vadd.f32 %v5170, %v5182
      %v5184 = vpop.f32.mrf.mxu0
      %5185 = vdwg.mxu0
      %5186 = vmatpush.bf16.msra.mxu0 %v4114
      %5187 = vmatpush.bf16.msra.mxu0 %v4110
      %5188 = vmatpush.bf16.msra.mxu0 %v4106
      %5189 = vmatpush.bf16.msra.mxu0 %v4102
      %5190 = vmatpush.bf16.msra.mxu0 %v4098
      %5191 = vmatpush.bf16.msra.mxu0 %v4094
      %5192 = vmatpush.bf16.msra.mxu0 %v4090
      %5193 = vmatpush.bf16.msra.mxu0 %v4086
      %5194 = vmatmul.bf16.gmra.mxu0 %v797
      %v5195 = vpop.f32.mrf.mxu0
      %v5196 = vadd.f32 %v5183, %v5195
      %v5197 = vpop.f32.mrf.mxu0
      %5198 = vdwg.mxu0
      %5199 = vmatpush.bf16.msra.mxu0 %v4146
      %5200 = vmatpush.bf16.msra.mxu0 %v4142
      %5201 = vmatpush.bf16.msra.mxu0 %v4138
      %5202 = vmatpush.bf16.msra.mxu0 %v4134
      %5203 = vmatpush.bf16.msra.mxu0 %v4130
      %5204 = vmatpush.bf16.msra.mxu0 %v4126
      %5205 = vmatpush.bf16.msra.mxu0 %v4122
      %5206 = vmatpush.bf16.msra.mxu0 %v4118
      %5207 = vmatmul.bf16.gmra.mxu0 %v798
      %v5208 = vpop.f32.mrf.mxu0
      %v5209 = vadd.f32 %v5196, %v5208
      %v5210 = vpop.f32.mrf.mxu0
      %5211 = vdwg.mxu0
      %5212 = vmatpush.bf16.msra.mxu0 %v4178
      %5213 = vmatpush.bf16.msra.mxu0 %v4174
      %5214 = vmatpush.bf16.msra.mxu0 %v4170
      %5215 = vmatpush.bf16.msra.mxu0 %v4166
      %5216 = vmatpush.bf16.msra.mxu0 %v4162
      %5217 = vmatpush.bf16.msra.mxu0 %v4158
      %5218 = vmatpush.bf16.msra.mxu0 %v4154
      %5219 = vmatpush.bf16.msra.mxu0 %v4150
      %5220 = vmatmul.bf16.gmra.mxu0 %v799
      %v5221 = vpop.f32.mrf.mxu0
      %v5222 = vadd.f32 %v5209, %v5221
      %v5223 = vpop.f32.mrf.mxu0
      %5224 = vdwg.mxu0
      %5225 = vmatpush.bf16.msra.mxu0 %v4210
      %5226 = vmatpush.bf16.msra.mxu0 %v4206
      %5227 = vmatpush.bf16.msra.mxu0 %v4202
      %5228 = vmatpush.bf16.msra.mxu0 %v4198
      %5229 = vmatpush.bf16.msra.mxu0 %v4194
      %5230 = vmatpush.bf16.msra.mxu0 %v4190
      %5231 = vmatpush.bf16.msra.mxu0 %v4186
      %5232 = vmatpush.bf16.msra.mxu0 %v4182
      %5233 = vmatmul.bf16.gmra.mxu0 %v800
      %v5234 = vpop.f32.mrf.mxu0
      %v5235 = vadd.f32 %v5222, %v5234
      %v5236 = vpop.f32.mrf.mxu0
      %5237 = vdwg.mxu0
      %5238 = vmatpush.bf16.msra.mxu0 %v4242
      %5239 = vmatpush.bf16.msra.mxu0 %v4238
      %5240 = vmatpush.bf16.msra.mxu0 %v4234
      %5241 = vmatpush.bf16.msra.mxu0 %v4230
      %5242 = vmatpush.bf16.msra.mxu0 %v4226
      %5243 = vmatpush.bf16.msra.mxu0 %v4222
      %5244 = vmatpush.bf16.msra.mxu0 %v4218
      %5245 = vmatpush.bf16.msra.mxu0 %v4214
      %5246 = vmatmul.bf16.gmra.mxu0 %v801
      %v5247 = vpop.f32.mrf.mxu0
      %v5248 = vadd.f32 %v5235, %v5247
      %v5249 = vpop.f32.mrf.mxu0
      %5250 = vdwg.mxu0
      %v5251 = vmax.f32 %v4780, 0.0
      %v5252 = vmax.f32 %v4936, 0.0
      %v5253 = vmax.f32 %v5092, 0.0
      %v5254 = vmax.f32 %v5248, 0.0
      %v5255 = vld [vmem:[#allocation16] sm:$0xff]
      %v5256 = vld [vmem:[#allocation16 + $0x8] sm:$0xff]
      %v5257 = vld [vmem:[#allocation16 + $0x10] sm:$0xff]
      %v5258 = vld [vmem:[#allocation16 + $0x18] sm:$0xff]
      %v5259 = vld [vmem:[#allocation16 + $0x20] sm:$0xff]
      %v5260 = vld [vmem:[#allocation16 + $0x28] sm:$0xff]
      %v5261 = vld [vmem:[#allocation16 + $0x30] sm:$0xff]
      %v5262 = vld [vmem:[#allocation16 + $0x38] sm:$0xff]
      %v5263 = vld [vmem:[#allocation16 + $0x40] sm:$0xff]
      %v5264 = vld [vmem:[#allocation16 + $0x48] sm:$0xff]
      %v5265 = vld [vmem:[#allocation16 + $0x50] sm:$0xff]
      %v5266 = vld [vmem:[#allocation16 + $0x58] sm:$0xff]
      %v5267 = vld [vmem:[#allocation16 + $0x60] sm:$0xff]
      %v5268 = vld [vmem:[#allocation16 + $0x68] sm:$0xff]
      %v5269 = vld [vmem:[#allocation16 + $0x70] sm:$0xff]
      %v5270 = vld [vmem:[#allocation16 + $0x78] sm:$0xff]
      %v5271 = vld [vmem:[#allocation16 + $0x80] sm:$0xff]
      %v5272 = vld [vmem:[#allocation16 + $0x88] sm:$0xff]
      %v5273 = vld [vmem:[#allocation16 + $0x90] sm:$0xff]
      %v5274 = vld [vmem:[#allocation16 + $0x98] sm:$0xff]
      %v5275 = vld [vmem:[#allocation16 + $0xa0] sm:$0xff]
      %v5276 = vld [vmem:[#allocation16 + $0xa8] sm:$0xff]
      %v5277 = vld [vmem:[#allocation16 + $0xb0] sm:$0xff]
      %v5278 = vld [vmem:[#allocation16 + $0xb8] sm:$0xff]
      %v5279 = vld [vmem:[#allocation16 + $0xc0] sm:$0xff]
      %v5280 = vld [vmem:[#allocation16 + $0xc8] sm:$0xff]
      %v5281 = vld [vmem:[#allocation16 + $0xd0] sm:$0xff]
      %v5282 = vld [vmem:[#allocation16 + $0xd8] sm:$0xff]
      %v5283 = vld [vmem:[#allocation16 + $0xe0] sm:$0xff]
      %v5284 = vld [vmem:[#allocation16 + $0xe8] sm:$0xff]
      %v5285 = vld [vmem:[#allocation16 + $0xf0] sm:$0xff]
      %v5286 = vld [vmem:[#allocation16 + $0xf8] sm:$0xff]
      %v5287 = vld [vmem:[#allocation16 + $0x100] sm:$0xff]
      %v5288 = vld [vmem:[#allocation16 + $0x108] sm:$0xff]
      %v5289 = vld [vmem:[#allocation16 + $0x110] sm:$0xff]
      %v5290 = vld [vmem:[#allocation16 + $0x118] sm:$0xff]
      %v5291 = vld [vmem:[#allocation16 + $0x120] sm:$0xff]
      %v5292 = vld [vmem:[#allocation16 + $0x128] sm:$0xff]
      %v5293 = vld [vmem:[#allocation16 + $0x130] sm:$0xff]
      %v5294 = vld [vmem:[#allocation16 + $0x138] sm:$0xff]
      %v5295 = vld [vmem:[#allocation16 + $0x140] sm:$0xff]
      %v5296 = vld [vmem:[#allocation16 + $0x148] sm:$0xff]
      %v5297 = vld [vmem:[#allocation16 + $0x150] sm:$0xff]
      %v5298 = vld [vmem:[#allocation16 + $0x158] sm:$0xff]
      %v5299 = vld [vmem:[#allocation16 + $0x160] sm:$0xff]
      %v5300 = vld [vmem:[#allocation16 + $0x168] sm:$0xff]
      %v5301 = vld [vmem:[#allocation16 + $0x170] sm:$0xff]
      %v5302 = vld [vmem:[#allocation16 + $0x178] sm:$0xff]
      %v5303 = vld [vmem:[#allocation16 + $0x180] sm:$0xff]
      %v5304 = vld [vmem:[#allocation16 + $0x188] sm:$0xff]
      %v5305 = vld [vmem:[#allocation16 + $0x190] sm:$0xff]
      %v5306 = vld [vmem:[#allocation16 + $0x198] sm:$0xff]
      %v5307 = vld [vmem:[#allocation16 + $0x1a0] sm:$0xff]
      %v5308 = vld [vmem:[#allocation16 + $0x1a8] sm:$0xff]
      %v5309 = vld [vmem:[#allocation16 + $0x1b0] sm:$0xff]
      %v5310 = vld [vmem:[#allocation16 + $0x1b8] sm:$0xff]
      %v5311 = vld [vmem:[#allocation16 + $0x1c0] sm:$0xff]
      %v5312 = vld [vmem:[#allocation16 + $0x1c8] sm:$0xff]
      %v5313 = vld [vmem:[#allocation16 + $0x1d0] sm:$0xff]
      %v5314 = vld [vmem:[#allocation16 + $0x1d8] sm:$0xff]
      %v5315 = vld [vmem:[#allocation16 + $0x1e0] sm:$0xff]
      %v5316 = vld [vmem:[#allocation16 + $0x1e8] sm:$0xff]
      %v5317 = vld [vmem:[#allocation16 + $0x1f0] sm:$0xff]
      %v5318 = vld [vmem:[#allocation16 + $0x1f8] sm:$0xff]
      %v5319 = vld [vmem:[#allocation16 + $0x200] sm:$0xff]
      %v5320 = vld [vmem:[#allocation16 + $0x208] sm:$0xff]
      %v5321 = vld [vmem:[#allocation16 + $0x210] sm:$0xff]
      %v5322 = vld [vmem:[#allocation16 + $0x218] sm:$0xff]
      %v5323 = vld [vmem:[#allocation16 + $0x220] sm:$0xff]
      %v5324 = vld [vmem:[#allocation16 + $0x228] sm:$0xff]
      %v5325 = vld [vmem:[#allocation16 + $0x230] sm:$0xff]
      %v5326 = vld [vmem:[#allocation16 + $0x238] sm:$0xff]
      %v5327 = vld [vmem:[#allocation16 + $0x240] sm:$0xff]
      %v5328 = vld [vmem:[#allocation16 + $0x248] sm:$0xff]
      %v5329 = vld [vmem:[#allocation16 + $0x250] sm:$0xff]
      %v5330 = vld [vmem:[#allocation16 + $0x258] sm:$0xff]
      %v5331 = vld [vmem:[#allocation16 + $0x260] sm:$0xff]
      %v5332 = vld [vmem:[#allocation16 + $0x268] sm:$0xff]
      %v5333 = vld [vmem:[#allocation16 + $0x270] sm:$0xff]
      %v5334 = vld [vmem:[#allocation16 + $0x278] sm:$0xff]
      %v5335 = vld [vmem:[#allocation16 + $0x280] sm:$0xff]
      %v5336 = vld [vmem:[#allocation16 + $0x288] sm:$0xff]
      %v5337 = vld [vmem:[#allocation16 + $0x290] sm:$0xff]
      %v5338 = vld [vmem:[#allocation16 + $0x298] sm:$0xff]
      %v5339 = vld [vmem:[#allocation16 + $0x2a0] sm:$0xff]
      %v5340 = vld [vmem:[#allocation16 + $0x2a8] sm:$0xff]
      %v5341 = vld [vmem:[#allocation16 + $0x2b0] sm:$0xff]
      %v5342 = vld [vmem:[#allocation16 + $0x2b8] sm:$0xff]
      %v5343 = vld [vmem:[#allocation16 + $0x2c0] sm:$0xff]
      %v5344 = vld [vmem:[#allocation16 + $0x2c8] sm:$0xff]
      %v5345 = vld [vmem:[#allocation16 + $0x2d0] sm:$0xff]
      %v5346 = vld [vmem:[#allocation16 + $0x2d8] sm:$0xff]
      %v5347 = vld [vmem:[#allocation16 + $0x2e0] sm:$0xff]
      %v5348 = vld [vmem:[#allocation16 + $0x2e8] sm:$0xff]
      %v5349 = vld [vmem:[#allocation16 + $0x2f0] sm:$0xff]
      %v5350 = vld [vmem:[#allocation16 + $0x2f8] sm:$0xff]
      %v5351 = vld [vmem:[#allocation16 + $0x300] sm:$0xff]
      %v5352 = vld [vmem:[#allocation16 + $0x308] sm:$0xff]
      %v5353 = vld [vmem:[#allocation16 + $0x310] sm:$0xff]
      %v5354 = vld [vmem:[#allocation16 + $0x318] sm:$0xff]
      %v5355 = vld [vmem:[#allocation16 + $0x320] sm:$0xff]
      %v5356 = vld [vmem:[#allocation16 + $0x328] sm:$0xff]
      %v5357 = vld [vmem:[#allocation16 + $0x330] sm:$0xff]
      %v5358 = vld [vmem:[#allocation16 + $0x338] sm:$0xff]
      %v5359 = vld [vmem:[#allocation16 + $0x340] sm:$0xff]
      %v5360 = vld [vmem:[#allocation16 + $0x348] sm:$0xff]
      %v5361 = vld [vmem:[#allocation16 + $0x350] sm:$0xff]
      %v5362 = vld [vmem:[#allocation16 + $0x358] sm:$0xff]
      %v5363 = vld [vmem:[#allocation16 + $0x360] sm:$0xff]
      %v5364 = vld [vmem:[#allocation16 + $0x368] sm:$0xff]
      %v5365 = vld [vmem:[#allocation16 + $0x370] sm:$0xff]
      %v5366 = vld [vmem:[#allocation16 + $0x378] sm:$0xff]
      %v5367 = vld [vmem:[#allocation16 + $0x380] sm:$0xff]
      %v5368 = vld [vmem:[#allocation16 + $0x388] sm:$0xff]
      %v5369 = vld [vmem:[#allocation16 + $0x390] sm:$0xff]
      %v5370 = vld [vmem:[#allocation16 + $0x398] sm:$0xff]
      %v5371 = vld [vmem:[#allocation16 + $0x3a0] sm:$0xff]
      %v5372 = vld [vmem:[#allocation16 + $0x3a8] sm:$0xff]
      %v5373 = vld [vmem:[#allocation16 + $0x3b0] sm:$0xff]
      %v5374 = vld [vmem:[#allocation16 + $0x3b8] sm:$0xff]
      %v5375 = vld [vmem:[#allocation16 + $0x3c0] sm:$0xff]
      %v5376 = vld [vmem:[#allocation16 + $0x3c8] sm:$0xff]
      %v5377 = vld [vmem:[#allocation16 + $0x3d0] sm:$0xff]
      %v5378 = vld [vmem:[#allocation16 + $0x3d8] sm:$0xff]
      %v5379 = vld [vmem:[#allocation16 + $0x3e0] sm:$0xff]
      %v5380 = vld [vmem:[#allocation16 + $0x3e8] sm:$0xff]
      %v5381 = vld [vmem:[#allocation16 + $0x3f0] sm:$0xff]
      %v5382 = vld [vmem:[#allocation16 + $0x3f8] sm:$0xff]
      %v5383 = vld [vmem:[#allocation16 + $0x400] sm:$0xff]
      %v5384 = vld [vmem:[#allocation16 + $0x408] sm:$0xff]
      %v5385 = vld [vmem:[#allocation16 + $0x410] sm:$0xff]
      %v5386 = vld [vmem:[#allocation16 + $0x418] sm:$0xff]
      %v5387 = vld [vmem:[#allocation16 + $0x420] sm:$0xff]
      %v5388 = vld [vmem:[#allocation16 + $0x428] sm:$0xff]
      %v5389 = vld [vmem:[#allocation16 + $0x430] sm:$0xff]
      %v5390 = vld [vmem:[#allocation16 + $0x438] sm:$0xff]
      %v5391 = vld [vmem:[#allocation16 + $0x440] sm:$0xff]
      %v5392 = vld [vmem:[#allocation16 + $0x448] sm:$0xff]
      %v5393 = vld [vmem:[#allocation16 + $0x450] sm:$0xff]
      %v5394 = vld [vmem:[#allocation16 + $0x458] sm:$0xff]
      %v5395 = vld [vmem:[#allocation16 + $0x460] sm:$0xff]
      %v5396 = vld [vmem:[#allocation16 + $0x468] sm:$0xff]
      %v5397 = vld [vmem:[#allocation16 + $0x470] sm:$0xff]
      %v5398 = vld [vmem:[#allocation16 + $0x478] sm:$0xff]
      %v5399 = vld [vmem:[#allocation16 + $0x480] sm:$0xff]
      %v5400 = vld [vmem:[#allocation16 + $0x488] sm:$0xff]
      %v5401 = vld [vmem:[#allocation16 + $0x490] sm:$0xff]
      %v5402 = vld [vmem:[#allocation16 + $0x498] sm:$0xff]
      %v5403 = vld [vmem:[#allocation16 + $0x4a0] sm:$0xff]
      %v5404 = vld [vmem:[#allocation16 + $0x4a8] sm:$0xff]
      %v5405 = vld [vmem:[#allocation16 + $0x4b0] sm:$0xff]
      %v5406 = vld [vmem:[#allocation16 + $0x4b8] sm:$0xff]
      %v5407 = vld [vmem:[#allocation16 + $0x4c0] sm:$0xff]
      %v5408 = vld [vmem:[#allocation16 + $0x4c8] sm:$0xff]
      %v5409 = vld [vmem:[#allocation16 + $0x4d0] sm:$0xff]
      %v5410 = vld [vmem:[#allocation16 + $0x4d8] sm:$0xff]
      %v5411 = vld [vmem:[#allocation16 + $0x4e0] sm:$0xff]
      %v5412 = vld [vmem:[#allocation16 + $0x4e8] sm:$0xff]
      %v5413 = vld [vmem:[#allocation16 + $0x4f0] sm:$0xff]
      %v5414 = vld [vmem:[#allocation16 + $0x4f8] sm:$0xff]
      %v5415 = vld [vmem:[#allocation16 + $0x500] sm:$0xff]
      %v5416 = vld [vmem:[#allocation16 + $0x508] sm:$0xff]
      %v5417 = vld [vmem:[#allocation16 + $0x510] sm:$0xff]
      %v5418 = vld [vmem:[#allocation16 + $0x518] sm:$0xff]
      %v5419 = vld [vmem:[#allocation16 + $0x520] sm:$0xff]
      %v5420 = vld [vmem:[#allocation16 + $0x528] sm:$0xff]
      %v5421 = vld [vmem:[#allocation16 + $0x530] sm:$0xff]
      %v5422 = vld [vmem:[#allocation16 + $0x538] sm:$0xff]
      %v5423 = vld [vmem:[#allocation16 + $0x540] sm:$0xff]
      %v5424 = vld [vmem:[#allocation16 + $0x548] sm:$0xff]
      %v5425 = vld [vmem:[#allocation16 + $0x550] sm:$0xff]
      %v5426 = vld [vmem:[#allocation16 + $0x558] sm:$0xff]
      %v5427 = vld [vmem:[#allocation16 + $0x560] sm:$0xff]
      %v5428 = vld [vmem:[#allocation16 + $0x568] sm:$0xff]
      %v5429 = vld [vmem:[#allocation16 + $0x570] sm:$0xff]
      %v5430 = vld [vmem:[#allocation16 + $0x578] sm:$0xff]
      %v5431 = vld [vmem:[#allocation16 + $0x580] sm:$0xff]
      %v5432 = vld [vmem:[#allocation16 + $0x588] sm:$0xff]
      %v5433 = vld [vmem:[#allocation16 + $0x590] sm:$0xff]
      %v5434 = vld [vmem:[#allocation16 + $0x598] sm:$0xff]
      %v5435 = vld [vmem:[#allocation16 + $0x5a0] sm:$0xff]
      %v5436 = vld [vmem:[#allocation16 + $0x5a8] sm:$0xff]
      %v5437 = vld [vmem:[#allocation16 + $0x5b0] sm:$0xff]
      %v5438 = vld [vmem:[#allocation16 + $0x5b8] sm:$0xff]
      %v5439 = vld [vmem:[#allocation16 + $0x5c0] sm:$0xff]
      %v5440 = vld [vmem:[#allocation16 + $0x5c8] sm:$0xff]
      %v5441 = vld [vmem:[#allocation16 + $0x5d0] sm:$0xff]
      %v5442 = vld [vmem:[#allocation16 + $0x5d8] sm:$0xff]
      %v5443 = vld [vmem:[#allocation16 + $0x5e0] sm:$0xff]
      %v5444 = vld [vmem:[#allocation16 + $0x5e8] sm:$0xff]
      %v5445 = vld [vmem:[#allocation16 + $0x5f0] sm:$0xff]
      %v5446 = vld [vmem:[#allocation16 + $0x5f8] sm:$0xff]
      %v5447 = vld [vmem:[#allocation16 + $0x600] sm:$0xff]
      %v5448 = vld [vmem:[#allocation16 + $0x608] sm:$0xff]
      %v5449 = vld [vmem:[#allocation16 + $0x610] sm:$0xff]
      %v5450 = vld [vmem:[#allocation16 + $0x618] sm:$0xff]
      %v5451 = vld [vmem:[#allocation16 + $0x620] sm:$0xff]
      %v5452 = vld [vmem:[#allocation16 + $0x628] sm:$0xff]
      %v5453 = vld [vmem:[#allocation16 + $0x630] sm:$0xff]
      %v5454 = vld [vmem:[#allocation16 + $0x638] sm:$0xff]
      %v5455 = vld [vmem:[#allocation16 + $0x640] sm:$0xff]
      %v5456 = vld [vmem:[#allocation16 + $0x648] sm:$0xff]
      %v5457 = vld [vmem:[#allocation16 + $0x650] sm:$0xff]
      %v5458 = vld [vmem:[#allocation16 + $0x658] sm:$0xff]
      %v5459 = vld [vmem:[#allocation16 + $0x660] sm:$0xff]
      %v5460 = vld [vmem:[#allocation16 + $0x668] sm:$0xff]
      %v5461 = vld [vmem:[#allocation16 + $0x670] sm:$0xff]
      %v5462 = vld [vmem:[#allocation16 + $0x678] sm:$0xff]
      %v5463 = vld [vmem:[#allocation16 + $0x680] sm:$0xff]
      %v5464 = vld [vmem:[#allocation16 + $0x688] sm:$0xff]
      %v5465 = vld [vmem:[#allocation16 + $0x690] sm:$0xff]
      %v5466 = vld [vmem:[#allocation16 + $0x698] sm:$0xff]
      %v5467 = vld [vmem:[#allocation16 + $0x6a0] sm:$0xff]
      %v5468 = vld [vmem:[#allocation16 + $0x6a8] sm:$0xff]
      %v5469 = vld [vmem:[#allocation16 + $0x6b0] sm:$0xff]
      %v5470 = vld [vmem:[#allocation16 + $0x6b8] sm:$0xff]
      %v5471 = vld [vmem:[#allocation16 + $0x6c0] sm:$0xff]
      %v5472 = vld [vmem:[#allocation16 + $0x6c8] sm:$0xff]
      %v5473 = vld [vmem:[#allocation16 + $0x6d0] sm:$0xff]
      %v5474 = vld [vmem:[#allocation16 + $0x6d8] sm:$0xff]
      %v5475 = vld [vmem:[#allocation16 + $0x6e0] sm:$0xff]
      %v5476 = vld [vmem:[#allocation16 + $0x6e8] sm:$0xff]
      %v5477 = vld [vmem:[#allocation16 + $0x6f0] sm:$0xff]
      %v5478 = vld [vmem:[#allocation16 + $0x6f8] sm:$0xff]
      %v5479 = vld [vmem:[#allocation16 + $0x700] sm:$0xff]
      %v5480 = vld [vmem:[#allocation16 + $0x708] sm:$0xff]
      %v5481 = vld [vmem:[#allocation16 + $0x710] sm:$0xff]
      %v5482 = vld [vmem:[#allocation16 + $0x718] sm:$0xff]
      %v5483 = vld [vmem:[#allocation16 + $0x720] sm:$0xff]
      %v5484 = vld [vmem:[#allocation16 + $0x728] sm:$0xff]
      %v5485 = vld [vmem:[#allocation16 + $0x730] sm:$0xff]
      %v5486 = vld [vmem:[#allocation16 + $0x738] sm:$0xff]
      %v5487 = vld [vmem:[#allocation16 + $0x740] sm:$0xff]
      %v5488 = vld [vmem:[#allocation16 + $0x748] sm:$0xff]
      %v5489 = vld [vmem:[#allocation16 + $0x750] sm:$0xff]
      %v5490 = vld [vmem:[#allocation16 + $0x758] sm:$0xff]
      %v5491 = vld [vmem:[#allocation16 + $0x760] sm:$0xff]
      %v5492 = vld [vmem:[#allocation16 + $0x768] sm:$0xff]
      %v5493 = vld [vmem:[#allocation16 + $0x770] sm:$0xff]
      %v5494 = vld [vmem:[#allocation16 + $0x778] sm:$0xff]
      %v5495 = vld [vmem:[#allocation16 + $0x780] sm:$0xff]
      %v5496 = vld [vmem:[#allocation16 + $0x788] sm:$0xff]
      %v5497 = vld [vmem:[#allocation16 + $0x790] sm:$0xff]
      %v5498 = vld [vmem:[#allocation16 + $0x798] sm:$0xff]
      %v5499 = vld [vmem:[#allocation16 + $0x7a0] sm:$0xff]
      %v5500 = vld [vmem:[#allocation16 + $0x7a8] sm:$0xff]
      %v5501 = vld [vmem:[#allocation16 + $0x7b0] sm:$0xff]
      %v5502 = vld [vmem:[#allocation16 + $0x7b8] sm:$0xff]
      %v5503 = vld [vmem:[#allocation16 + $0x7c0] sm:$0xff]
      %v5504 = vld [vmem:[#allocation16 + $0x7c8] sm:$0xff]
      %v5505 = vld [vmem:[#allocation16 + $0x7d0] sm:$0xff]
      %v5506 = vld [vmem:[#allocation16 + $0x7d8] sm:$0xff]
      %v5507 = vld [vmem:[#allocation16 + $0x7e0] sm:$0xff]
      %v5508 = vld [vmem:[#allocation16 + $0x7e8] sm:$0xff]
      %v5509 = vld [vmem:[#allocation16 + $0x7f0] sm:$0xff]
      %v5510 = vld [vmem:[#allocation16 + $0x7f8] sm:$0xff]
      %v5511 = vld [vmem:[#allocation18] sm:$0xf]
      %v5513 = vperm.slane %v5511, 0
      %v5514 = vperm.slane %v5511, 1
      %v5515 = vperm.slane %v5511, 2
      %v5516 = vperm.slane %v5511, 3
      %v5777 = vunpack.c.l.b16 %v5255
      %v5778 = vunpack.c.h.b16 %v5255
      %v5779 = vunpack.c.l.b16 %v5256
      %v5780 = vunpack.c.h.b16 %v5256
      %v5781 = vunpack.c.l.b16 %v5257
      %v5782 = vunpack.c.h.b16 %v5257
      %v5783 = vunpack.c.l.b16 %v5258
      %v5784 = vunpack.c.h.b16 %v5258
      %v5785 = vunpack.c.l.b16 %v5259
      %v5786 = vunpack.c.h.b16 %v5259
      %v5787 = vunpack.c.l.b16 %v5260
      %v5788 = vunpack.c.h.b16 %v5260
      %v5789 = vunpack.c.l.b16 %v5261
      %v5790 = vunpack.c.h.b16 %v5261
      %v5791 = vunpack.c.l.b16 %v5262
      %v5792 = vunpack.c.h.b16 %v5262
      %v5793 = vunpack.c.l.b16 %v5263
      %v5794 = vunpack.c.h.b16 %v5263
      %v5795 = vunpack.c.l.b16 %v5264
      %v5796 = vunpack.c.h.b16 %v5264
      %v5797 = vunpack.c.l.b16 %v5265
      %v5798 = vunpack.c.h.b16 %v5265
      %v5799 = vunpack.c.l.b16 %v5266
      %v5800 = vunpack.c.h.b16 %v5266
      %v5801 = vunpack.c.l.b16 %v5267
      %v5802 = vunpack.c.h.b16 %v5267
      %v5803 = vunpack.c.l.b16 %v5268
      %v5804 = vunpack.c.h.b16 %v5268
      %v5805 = vunpack.c.l.b16 %v5269
      %v5806 = vunpack.c.h.b16 %v5269
      %v5807 = vunpack.c.l.b16 %v5270
      %v5808 = vunpack.c.h.b16 %v5270
      %v5809 = vunpack.c.l.b16 %v5271
      %v5810 = vunpack.c.h.b16 %v5271
      %v5811 = vunpack.c.l.b16 %v5272
      %v5812 = vunpack.c.h.b16 %v5272
      %v5813 = vunpack.c.l.b16 %v5273
      %v5814 = vunpack.c.h.b16 %v5273
      %v5815 = vunpack.c.l.b16 %v5274
      %v5816 = vunpack.c.h.b16 %v5274
      %v5817 = vunpack.c.l.b16 %v5275
      %v5818 = vunpack.c.h.b16 %v5275
      %v5819 = vunpack.c.l.b16 %v5276
      %v5820 = vunpack.c.h.b16 %v5276
      %v5821 = vunpack.c.l.b16 %v5277
      %v5822 = vunpack.c.h.b16 %v5277
      %v5823 = vunpack.c.l.b16 %v5278
      %v5824 = vunpack.c.h.b16 %v5278
      %v5825 = vunpack.c.l.b16 %v5279
      %v5826 = vunpack.c.h.b16 %v5279
      %v5827 = vunpack.c.l.b16 %v5280
      %v5828 = vunpack.c.h.b16 %v5280
      %v5829 = vunpack.c.l.b16 %v5281
      %v5830 = vunpack.c.h.b16 %v5281
      %v5831 = vunpack.c.l.b16 %v5282
      %v5832 = vunpack.c.h.b16 %v5282
      %v5833 = vunpack.c.l.b16 %v5283
      %v5834 = vunpack.c.h.b16 %v5283
      %v5835 = vunpack.c.l.b16 %v5284
      %v5836 = vunpack.c.h.b16 %v5284
      %v5837 = vunpack.c.l.b16 %v5285
      %v5838 = vunpack.c.h.b16 %v5285
      %v5839 = vunpack.c.l.b16 %v5286
      %v5840 = vunpack.c.h.b16 %v5286
      %v5841 = vunpack.c.l.b16 %v5287
      %v5842 = vunpack.c.h.b16 %v5287
      %v5843 = vunpack.c.l.b16 %v5288
      %v5844 = vunpack.c.h.b16 %v5288
      %v5845 = vunpack.c.l.b16 %v5289
      %v5846 = vunpack.c.h.b16 %v5289
      %v5847 = vunpack.c.l.b16 %v5290
      %v5848 = vunpack.c.h.b16 %v5290
      %v5849 = vunpack.c.l.b16 %v5291
      %v5850 = vunpack.c.h.b16 %v5291
      %v5851 = vunpack.c.l.b16 %v5292
      %v5852 = vunpack.c.h.b16 %v5292
      %v5853 = vunpack.c.l.b16 %v5293
      %v5854 = vunpack.c.h.b16 %v5293
      %v5855 = vunpack.c.l.b16 %v5294
      %v5856 = vunpack.c.h.b16 %v5294
      %v5857 = vunpack.c.l.b16 %v5295
      %v5858 = vunpack.c.h.b16 %v5295
      %v5859 = vunpack.c.l.b16 %v5296
      %v5860 = vunpack.c.h.b16 %v5296
      %v5861 = vunpack.c.l.b16 %v5297
      %v5862 = vunpack.c.h.b16 %v5297
      %v5863 = vunpack.c.l.b16 %v5298
      %v5864 = vunpack.c.h.b16 %v5298
      %v5865 = vunpack.c.l.b16 %v5299
      %v5866 = vunpack.c.h.b16 %v5299
      %v5867 = vunpack.c.l.b16 %v5300
      %v5868 = vunpack.c.h.b16 %v5300
      %v5869 = vunpack.c.l.b16 %v5301
      %v5870 = vunpack.c.h.b16 %v5301
      %v5871 = vunpack.c.l.b16 %v5302
      %v5872 = vunpack.c.h.b16 %v5302
      %v5873 = vunpack.c.l.b16 %v5303
      %v5874 = vunpack.c.h.b16 %v5303
      %v5875 = vunpack.c.l.b16 %v5304
      %v5876 = vunpack.c.h.b16 %v5304
      %v5877 = vunpack.c.l.b16 %v5305
      %v5878 = vunpack.c.h.b16 %v5305
      %v5879 = vunpack.c.l.b16 %v5306
      %v5880 = vunpack.c.h.b16 %v5306
      %v5881 = vunpack.c.l.b16 %v5307
      %v5882 = vunpack.c.h.b16 %v5307
      %v5883 = vunpack.c.l.b16 %v5308
      %v5884 = vunpack.c.h.b16 %v5308
      %v5885 = vunpack.c.l.b16 %v5309
      %v5886 = vunpack.c.h.b16 %v5309
      %v5887 = vunpack.c.l.b16 %v5310
      %v5888 = vunpack.c.h.b16 %v5310
      %v5889 = vunpack.c.l.b16 %v5311
      %v5890 = vunpack.c.h.b16 %v5311
      %v5891 = vunpack.c.l.b16 %v5312
      %v5892 = vunpack.c.h.b16 %v5312
      %v5893 = vunpack.c.l.b16 %v5313
      %v5894 = vunpack.c.h.b16 %v5313
      %v5895 = vunpack.c.l.b16 %v5314
      %v5896 = vunpack.c.h.b16 %v5314
      %v5897 = vunpack.c.l.b16 %v5315
      %v5898 = vunpack.c.h.b16 %v5315
      %v5899 = vunpack.c.l.b16 %v5316
      %v5900 = vunpack.c.h.b16 %v5316
      %v5901 = vunpack.c.l.b16 %v5317
      %v5902 = vunpack.c.h.b16 %v5317
      %v5903 = vunpack.c.l.b16 %v5318
      %v5904 = vunpack.c.h.b16 %v5318
      %v5905 = vunpack.c.l.b16 %v5319
      %v5906 = vunpack.c.h.b16 %v5319
      %v5907 = vunpack.c.l.b16 %v5320
      %v5908 = vunpack.c.h.b16 %v5320
      %v5909 = vunpack.c.l.b16 %v5321
      %v5910 = vunpack.c.h.b16 %v5321
      %v5911 = vunpack.c.l.b16 %v5322
      %v5912 = vunpack.c.h.b16 %v5322
      %v5913 = vunpack.c.l.b16 %v5323
      %v5914 = vunpack.c.h.b16 %v5323
      %v5915 = vunpack.c.l.b16 %v5324
      %v5916 = vunpack.c.h.b16 %v5324
      %v5917 = vunpack.c.l.b16 %v5325
      %v5918 = vunpack.c.h.b16 %v5325
      %v5919 = vunpack.c.l.b16 %v5326
      %v5920 = vunpack.c.h.b16 %v5326
      %v5921 = vunpack.c.l.b16 %v5327
      %v5922 = vunpack.c.h.b16 %v5327
      %v5923 = vunpack.c.l.b16 %v5328
      %v5924 = vunpack.c.h.b16 %v5328
      %v5925 = vunpack.c.l.b16 %v5329
      %v5926 = vunpack.c.h.b16 %v5329
      %v5927 = vunpack.c.l.b16 %v5330
      %v5928 = vunpack.c.h.b16 %v5330
      %v5929 = vunpack.c.l.b16 %v5331
      %v5930 = vunpack.c.h.b16 %v5331
      %v5931 = vunpack.c.l.b16 %v5332
      %v5932 = vunpack.c.h.b16 %v5332
      %v5933 = vunpack.c.l.b16 %v5333
      %v5934 = vunpack.c.h.b16 %v5333
      %v5935 = vunpack.c.l.b16 %v5334
      %v5936 = vunpack.c.h.b16 %v5334
      %v5937 = vunpack.c.l.b16 %v5335
      %v5938 = vunpack.c.h.b16 %v5335
      %v5939 = vunpack.c.l.b16 %v5336
      %v5940 = vunpack.c.h.b16 %v5336
      %v5941 = vunpack.c.l.b16 %v5337
      %v5942 = vunpack.c.h.b16 %v5337
      %v5943 = vunpack.c.l.b16 %v5338
      %v5944 = vunpack.c.h.b16 %v5338
      %v5945 = vunpack.c.l.b16 %v5339
      %v5946 = vunpack.c.h.b16 %v5339
      %v5947 = vunpack.c.l.b16 %v5340
      %v5948 = vunpack.c.h.b16 %v5340
      %v5949 = vunpack.c.l.b16 %v5341
      %v5950 = vunpack.c.h.b16 %v5341
      %v5951 = vunpack.c.l.b16 %v5342
      %v5952 = vunpack.c.h.b16 %v5342
      %v5953 = vunpack.c.l.b16 %v5343
      %v5954 = vunpack.c.h.b16 %v5343
      %v5955 = vunpack.c.l.b16 %v5344
      %v5956 = vunpack.c.h.b16 %v5344
      %v5957 = vunpack.c.l.b16 %v5345
      %v5958 = vunpack.c.h.b16 %v5345
      %v5959 = vunpack.c.l.b16 %v5346
      %v5960 = vunpack.c.h.b16 %v5346
      %v5961 = vunpack.c.l.b16 %v5347
      %v5962 = vunpack.c.h.b16 %v5347
      %v5963 = vunpack.c.l.b16 %v5348
      %v5964 = vunpack.c.h.b16 %v5348
      %v5965 = vunpack.c.l.b16 %v5349
      %v5966 = vunpack.c.h.b16 %v5349
      %v5967 = vunpack.c.l.b16 %v5350
      %v5968 = vunpack.c.h.b16 %v5350
      %v5969 = vunpack.c.l.b16 %v5351
      %v5970 = vunpack.c.h.b16 %v5351
      %v5971 = vunpack.c.l.b16 %v5352
      %v5972 = vunpack.c.h.b16 %v5352
      %v5973 = vunpack.c.l.b16 %v5353
      %v5974 = vunpack.c.h.b16 %v5353
      %v5975 = vunpack.c.l.b16 %v5354
      %v5976 = vunpack.c.h.b16 %v5354
      %v5977 = vunpack.c.l.b16 %v5355
      %v5978 = vunpack.c.h.b16 %v5355
      %v5979 = vunpack.c.l.b16 %v5356
      %v5980 = vunpack.c.h.b16 %v5356
      %v5981 = vunpack.c.l.b16 %v5357
      %v5982 = vunpack.c.h.b16 %v5357
      %v5983 = vunpack.c.l.b16 %v5358
      %v5984 = vunpack.c.h.b16 %v5358
      %v5985 = vunpack.c.l.b16 %v5359
      %v5986 = vunpack.c.h.b16 %v5359
      %v5987 = vunpack.c.l.b16 %v5360
      %v5988 = vunpack.c.h.b16 %v5360
      %v5989 = vunpack.c.l.b16 %v5361
      %v5990 = vunpack.c.h.b16 %v5361
      %v5991 = vunpack.c.l.b16 %v5362
      %v5992 = vunpack.c.h.b16 %v5362
      %v5993 = vunpack.c.l.b16 %v5363
      %v5994 = vunpack.c.h.b16 %v5363
      %v5995 = vunpack.c.l.b16 %v5364
      %v5996 = vunpack.c.h.b16 %v5364
      %v5997 = vunpack.c.l.b16 %v5365
      %v5998 = vunpack.c.h.b16 %v5365
      %v5999 = vunpack.c.l.b16 %v5366
      %v6000 = vunpack.c.h.b16 %v5366
      %v6001 = vunpack.c.l.b16 %v5367
      %v6002 = vunpack.c.h.b16 %v5367
      %v6003 = vunpack.c.l.b16 %v5368
      %v6004 = vunpack.c.h.b16 %v5368
      %v6005 = vunpack.c.l.b16 %v5369
      %v6006 = vunpack.c.h.b16 %v5369
      %v6007 = vunpack.c.l.b16 %v5370
      %v6008 = vunpack.c.h.b16 %v5370
      %v6009 = vunpack.c.l.b16 %v5371
      %v6010 = vunpack.c.h.b16 %v5371
      %v6011 = vunpack.c.l.b16 %v5372
      %v6012 = vunpack.c.h.b16 %v5372
      %v6013 = vunpack.c.l.b16 %v5373
      %v6014 = vunpack.c.h.b16 %v5373
      %v6015 = vunpack.c.l.b16 %v5374
      %v6016 = vunpack.c.h.b16 %v5374
      %v6017 = vunpack.c.l.b16 %v5375
      %v6018 = vunpack.c.h.b16 %v5375
      %v6019 = vunpack.c.l.b16 %v5376
      %v6020 = vunpack.c.h.b16 %v5376
      %v6021 = vunpack.c.l.b16 %v5377
      %v6022 = vunpack.c.h.b16 %v5377
      %v6023 = vunpack.c.l.b16 %v5378
      %v6024 = vunpack.c.h.b16 %v5378
      %v6025 = vunpack.c.l.b16 %v5379
      %v6026 = vunpack.c.h.b16 %v5379
      %v6027 = vunpack.c.l.b16 %v5380
      %v6028 = vunpack.c.h.b16 %v5380
      %v6029 = vunpack.c.l.b16 %v5381
      %v6030 = vunpack.c.h.b16 %v5381
      %v6031 = vunpack.c.l.b16 %v5382
      %v6032 = vunpack.c.h.b16 %v5382
      %v6033 = vunpack.c.l.b16 %v5383
      %v6034 = vunpack.c.h.b16 %v5383
      %v6035 = vunpack.c.l.b16 %v5384
      %v6036 = vunpack.c.h.b16 %v5384
      %v6037 = vunpack.c.l.b16 %v5385
      %v6038 = vunpack.c.h.b16 %v5385
      %v6039 = vunpack.c.l.b16 %v5386
      %v6040 = vunpack.c.h.b16 %v5386
      %v6041 = vunpack.c.l.b16 %v5387
      %v6042 = vunpack.c.h.b16 %v5387
      %v6043 = vunpack.c.l.b16 %v5388
      %v6044 = vunpack.c.h.b16 %v5388
      %v6045 = vunpack.c.l.b16 %v5389
      %v6046 = vunpack.c.h.b16 %v5389
      %v6047 = vunpack.c.l.b16 %v5390
      %v6048 = vunpack.c.h.b16 %v5390
      %v6049 = vunpack.c.l.b16 %v5391
      %v6050 = vunpack.c.h.b16 %v5391
      %v6051 = vunpack.c.l.b16 %v5392
      %v6052 = vunpack.c.h.b16 %v5392
      %v6053 = vunpack.c.l.b16 %v5393
      %v6054 = vunpack.c.h.b16 %v5393
      %v6055 = vunpack.c.l.b16 %v5394
      %v6056 = vunpack.c.h.b16 %v5394
      %v6057 = vunpack.c.l.b16 %v5395
      %v6058 = vunpack.c.h.b16 %v5395
      %v6059 = vunpack.c.l.b16 %v5396
      %v6060 = vunpack.c.h.b16 %v5396
      %v6061 = vunpack.c.l.b16 %v5397
      %v6062 = vunpack.c.h.b16 %v5397
      %v6063 = vunpack.c.l.b16 %v5398
      %v6064 = vunpack.c.h.b16 %v5398
      %v6065 = vunpack.c.l.b16 %v5399
      %v6066 = vunpack.c.h.b16 %v5399
      %v6067 = vunpack.c.l.b16 %v5400
      %v6068 = vunpack.c.h.b16 %v5400
      %v6069 = vunpack.c.l.b16 %v5401
      %v6070 = vunpack.c.h.b16 %v5401
      %v6071 = vunpack.c.l.b16 %v5402
      %v6072 = vunpack.c.h.b16 %v5402
      %v6073 = vunpack.c.l.b16 %v5403
      %v6074 = vunpack.c.h.b16 %v5403
      %v6075 = vunpack.c.l.b16 %v5404
      %v6076 = vunpack.c.h.b16 %v5404
      %v6077 = vunpack.c.l.b16 %v5405
      %v6078 = vunpack.c.h.b16 %v5405
      %v6079 = vunpack.c.l.b16 %v5406
      %v6080 = vunpack.c.h.b16 %v5406
      %v6081 = vunpack.c.l.b16 %v5407
      %v6082 = vunpack.c.h.b16 %v5407
      %v6083 = vunpack.c.l.b16 %v5408
      %v6084 = vunpack.c.h.b16 %v5408
      %v6085 = vunpack.c.l.b16 %v5409
      %v6086 = vunpack.c.h.b16 %v5409
      %v6087 = vunpack.c.l.b16 %v5410
      %v6088 = vunpack.c.h.b16 %v5410
      %v6089 = vunpack.c.l.b16 %v5411
      %v6090 = vunpack.c.h.b16 %v5411
      %v6091 = vunpack.c.l.b16 %v5412
      %v6092 = vunpack.c.h.b16 %v5412
      %v6093 = vunpack.c.l.b16 %v5413
      %v6094 = vunpack.c.h.b16 %v5413
      %v6095 = vunpack.c.l.b16 %v5414
      %v6096 = vunpack.c.h.b16 %v5414
      %v6097 = vunpack.c.l.b16 %v5415
      %v6098 = vunpack.c.h.b16 %v5415
      %v6099 = vunpack.c.l.b16 %v5416
      %v6100 = vunpack.c.h.b16 %v5416
      %v6101 = vunpack.c.l.b16 %v5417
      %v6102 = vunpack.c.h.b16 %v5417
      %v6103 = vunpack.c.l.b16 %v5418
      %v6104 = vunpack.c.h.b16 %v5418
      %v6105 = vunpack.c.l.b16 %v5419
      %v6106 = vunpack.c.h.b16 %v5419
      %v6107 = vunpack.c.l.b16 %v5420
      %v6108 = vunpack.c.h.b16 %v5420
      %v6109 = vunpack.c.l.b16 %v5421
      %v6110 = vunpack.c.h.b16 %v5421
      %v6111 = vunpack.c.l.b16 %v5422
      %v6112 = vunpack.c.h.b16 %v5422
      %v6113 = vunpack.c.l.b16 %v5423
      %v6114 = vunpack.c.h.b16 %v5423
      %v6115 = vunpack.c.l.b16 %v5424
      %v6116 = vunpack.c.h.b16 %v5424
      %v6117 = vunpack.c.l.b16 %v5425
      %v6118 = vunpack.c.h.b16 %v5425
      %v6119 = vunpack.c.l.b16 %v5426
      %v6120 = vunpack.c.h.b16 %v5426
      %v6121 = vunpack.c.l.b16 %v5427
      %v6122 = vunpack.c.h.b16 %v5427
      %v6123 = vunpack.c.l.b16 %v5428
      %v6124 = vunpack.c.h.b16 %v5428
      %v6125 = vunpack.c.l.b16 %v5429
      %v6126 = vunpack.c.h.b16 %v5429
      %v6127 = vunpack.c.l.b16 %v5430
      %v6128 = vunpack.c.h.b16 %v5430
      %v6129 = vunpack.c.l.b16 %v5431
      %v6130 = vunpack.c.h.b16 %v5431
      %v6131 = vunpack.c.l.b16 %v5432
      %v6132 = vunpack.c.h.b16 %v5432
      %v6133 = vunpack.c.l.b16 %v5433
      %v6134 = vunpack.c.h.b16 %v5433
      %v6135 = vunpack.c.l.b16 %v5434
      %v6136 = vunpack.c.h.b16 %v5434
      %v6137 = vunpack.c.l.b16 %v5435
      %v6138 = vunpack.c.h.b16 %v5435
      %v6139 = vunpack.c.l.b16 %v5436
      %v6140 = vunpack.c.h.b16 %v5436
      %v6141 = vunpack.c.l.b16 %v5437
      %v6142 = vunpack.c.h.b16 %v5437
      %v6143 = vunpack.c.l.b16 %v5438
      %v6144 = vunpack.c.h.b16 %v5438
      %v6145 = vunpack.c.l.b16 %v5439
      %v6146 = vunpack.c.h.b16 %v5439
      %v6147 = vunpack.c.l.b16 %v5440
      %v6148 = vunpack.c.h.b16 %v5440
      %v6149 = vunpack.c.l.b16 %v5441
      %v6150 = vunpack.c.h.b16 %v5441
      %v6151 = vunpack.c.l.b16 %v5442
      %v6152 = vunpack.c.h.b16 %v5442
      %v6153 = vunpack.c.l.b16 %v5443
      %v6154 = vunpack.c.h.b16 %v5443
      %v6155 = vunpack.c.l.b16 %v5444
      %v6156 = vunpack.c.h.b16 %v5444
      %v6157 = vunpack.c.l.b16 %v5445
      %v6158 = vunpack.c.h.b16 %v5445
      %v6159 = vunpack.c.l.b16 %v5446
      %v6160 = vunpack.c.h.b16 %v5446
      %v6161 = vunpack.c.l.b16 %v5447
      %v6162 = vunpack.c.h.b16 %v5447
      %v6163 = vunpack.c.l.b16 %v5448
      %v6164 = vunpack.c.h.b16 %v5448
      %v6165 = vunpack.c.l.b16 %v5449
      %v6166 = vunpack.c.h.b16 %v5449
      %v6167 = vunpack.c.l.b16 %v5450
      %v6168 = vunpack.c.h.b16 %v5450
      %v6169 = vunpack.c.l.b16 %v5451
      %v6170 = vunpack.c.h.b16 %v5451
      %v6171 = vunpack.c.l.b16 %v5452
      %v6172 = vunpack.c.h.b16 %v5452
      %v6173 = vunpack.c.l.b16 %v5453
      %v6174 = vunpack.c.h.b16 %v5453
      %v6175 = vunpack.c.l.b16 %v5454
      %v6176 = vunpack.c.h.b16 %v5454
      %v6177 = vunpack.c.l.b16 %v5455
      %v6178 = vunpack.c.h.b16 %v5455
      %v6179 = vunpack.c.l.b16 %v5456
      %v6180 = vunpack.c.h.b16 %v5456
      %v6181 = vunpack.c.l.b16 %v5457
      %v6182 = vunpack.c.h.b16 %v5457
      %v6183 = vunpack.c.l.b16 %v5458
      %v6184 = vunpack.c.h.b16 %v5458
      %v6185 = vunpack.c.l.b16 %v5459
      %v6186 = vunpack.c.h.b16 %v5459
      %v6187 = vunpack.c.l.b16 %v5460
      %v6188 = vunpack.c.h.b16 %v5460
      %v6189 = vunpack.c.l.b16 %v5461
      %v6190 = vunpack.c.h.b16 %v5461
      %v6191 = vunpack.c.l.b16 %v5462
      %v6192 = vunpack.c.h.b16 %v5462
      %v6193 = vunpack.c.l.b16 %v5463
      %v6194 = vunpack.c.h.b16 %v5463
      %v6195 = vunpack.c.l.b16 %v5464
      %v6196 = vunpack.c.h.b16 %v5464
      %v6197 = vunpack.c.l.b16 %v5465
      %v6198 = vunpack.c.h.b16 %v5465
      %v6199 = vunpack.c.l.b16 %v5466
      %v6200 = vunpack.c.h.b16 %v5466
      %v6201 = vunpack.c.l.b16 %v5467
      %v6202 = vunpack.c.h.b16 %v5467
      %v6203 = vunpack.c.l.b16 %v5468
      %v6204 = vunpack.c.h.b16 %v5468
      %v6205 = vunpack.c.l.b16 %v5469
      %v6206 = vunpack.c.h.b16 %v5469
      %v6207 = vunpack.c.l.b16 %v5470
      %v6208 = vunpack.c.h.b16 %v5470
      %v6209 = vunpack.c.l.b16 %v5471
      %v6210 = vunpack.c.h.b16 %v5471
      %v6211 = vunpack.c.l.b16 %v5472
      %v6212 = vunpack.c.h.b16 %v5472
      %v6213 = vunpack.c.l.b16 %v5473
      %v6214 = vunpack.c.h.b16 %v5473
      %v6215 = vunpack.c.l.b16 %v5474
      %v6216 = vunpack.c.h.b16 %v5474
      %v6217 = vunpack.c.l.b16 %v5475
      %v6218 = vunpack.c.h.b16 %v5475
      %v6219 = vunpack.c.l.b16 %v5476
      %v6220 = vunpack.c.h.b16 %v5476
      %v6221 = vunpack.c.l.b16 %v5477
      %v6222 = vunpack.c.h.b16 %v5477
      %v6223 = vunpack.c.l.b16 %v5478
      %v6224 = vunpack.c.h.b16 %v5478
      %v6225 = vunpack.c.l.b16 %v5479
      %v6226 = vunpack.c.h.b16 %v5479
      %v6227 = vunpack.c.l.b16 %v5480
      %v6228 = vunpack.c.h.b16 %v5480
      %v6229 = vunpack.c.l.b16 %v5481
      %v6230 = vunpack.c.h.b16 %v5481
      %v6231 = vunpack.c.l.b16 %v5482
      %v6232 = vunpack.c.h.b16 %v5482
      %v6233 = vunpack.c.l.b16 %v5483
      %v6234 = vunpack.c.h.b16 %v5483
      %v6235 = vunpack.c.l.b16 %v5484
      %v6236 = vunpack.c.h.b16 %v5484
      %v6237 = vunpack.c.l.b16 %v5485
      %v6238 = vunpack.c.h.b16 %v5485
      %v6239 = vunpack.c.l.b16 %v5486
      %v6240 = vunpack.c.h.b16 %v5486
      %v6241 = vunpack.c.l.b16 %v5487
      %v6242 = vunpack.c.h.b16 %v5487
      %v6243 = vunpack.c.l.b16 %v5488
      %v6244 = vunpack.c.h.b16 %v5488
      %v6245 = vunpack.c.l.b16 %v5489
      %v6246 = vunpack.c.h.b16 %v5489
      %v6247 = vunpack.c.l.b16 %v5490
      %v6248 = vunpack.c.h.b16 %v5490
      %v6249 = vunpack.c.l.b16 %v5491
      %v6250 = vunpack.c.h.b16 %v5491
      %v6251 = vunpack.c.l.b16 %v5492
      %v6252 = vunpack.c.h.b16 %v5492
      %v6253 = vunpack.c.l.b16 %v5493
      %v6254 = vunpack.c.h.b16 %v5493
      %v6255 = vunpack.c.l.b16 %v5494
      %v6256 = vunpack.c.h.b16 %v5494
      %v6257 = vunpack.c.l.b16 %v5495
      %v6258 = vunpack.c.h.b16 %v5495
      %v6259 = vunpack.c.l.b16 %v5496
      %v6260 = vunpack.c.h.b16 %v5496
      %v6261 = vunpack.c.l.b16 %v5497
      %v6262 = vunpack.c.h.b16 %v5497
      %v6263 = vunpack.c.l.b16 %v5498
      %v6264 = vunpack.c.h.b16 %v5498
      %v6265 = vunpack.c.l.b16 %v5499
      %v6266 = vunpack.c.h.b16 %v5499
      %v6267 = vunpack.c.l.b16 %v5500
      %v6268 = vunpack.c.h.b16 %v5500
      %v6269 = vunpack.c.l.b16 %v5501
      %v6270 = vunpack.c.h.b16 %v5501
      %v6271 = vunpack.c.l.b16 %v5502
      %v6272 = vunpack.c.h.b16 %v5502
      %v6273 = vunpack.c.l.b16 %v5503
      %v6274 = vunpack.c.h.b16 %v5503
      %v6275 = vunpack.c.l.b16 %v5504
      %v6276 = vunpack.c.h.b16 %v5504
      %v6277 = vunpack.c.l.b16 %v5505
      %v6278 = vunpack.c.h.b16 %v5505
      %v6279 = vunpack.c.l.b16 %v5506
      %v6280 = vunpack.c.h.b16 %v5506
      %v6281 = vunpack.c.l.b16 %v5507
      %v6282 = vunpack.c.h.b16 %v5507
      %v6283 = vunpack.c.l.b16 %v5508
      %v6284 = vunpack.c.h.b16 %v5508
      %v6285 = vunpack.c.l.b16 %v5509
      %v6286 = vunpack.c.h.b16 %v5509
      %v6287 = vunpack.c.l.b16 %v5510
      %v6288 = vunpack.c.h.b16 %v5510
      %v6289 = vpack.c.b16 %v5781, %v5777
      %v6290 = vpack.c.b16 %v5782, %v5778
      %v6291 = vpack.c.b16 %v5783, %v5779
      %v6292 = vpack.c.b16 %v5784, %v5780
      %v6293 = vpack.c.b16 %v5789, %v5785
      %v6294 = vpack.c.b16 %v5790, %v5786
      %v6295 = vpack.c.b16 %v5791, %v5787
      %v6296 = vpack.c.b16 %v5792, %v5788
      %v6297 = vpack.c.b16 %v5797, %v5793
      %v6298 = vpack.c.b16 %v5798, %v5794
      %v6299 = vpack.c.b16 %v5799, %v5795
      %v6300 = vpack.c.b16 %v5800, %v5796
      %v6301 = vpack.c.b16 %v5805, %v5801
      %v6302 = vpack.c.b16 %v5806, %v5802
      %v6303 = vpack.c.b16 %v5807, %v5803
      %v6304 = vpack.c.b16 %v5808, %v5804
      %v6305 = vpack.c.b16 %v5813, %v5809
      %v6306 = vpack.c.b16 %v5814, %v5810
      %v6307 = vpack.c.b16 %v5815, %v5811
      %v6308 = vpack.c.b16 %v5816, %v5812
      %v6309 = vpack.c.b16 %v5821, %v5817
      %v6310 = vpack.c.b16 %v5822, %v5818
      %v6311 = vpack.c.b16 %v5823, %v5819
      %v6312 = vpack.c.b16 %v5824, %v5820
      %v6313 = vpack.c.b16 %v5829, %v5825
      %v6314 = vpack.c.b16 %v5830, %v5826
      %v6315 = vpack.c.b16 %v5831, %v5827
      %v6316 = vpack.c.b16 %v5832, %v5828
      %v6317 = vpack.c.b16 %v5837, %v5833
      %v6318 = vpack.c.b16 %v5838, %v5834
      %v6319 = vpack.c.b16 %v5839, %v5835
      %v6320 = vpack.c.b16 %v5840, %v5836
      %v6321 = vpack.c.b16 %v5845, %v5841
      %v6322 = vpack.c.b16 %v5846, %v5842
      %v6323 = vpack.c.b16 %v5847, %v5843
      %v6324 = vpack.c.b16 %v5848, %v5844
      %v6325 = vpack.c.b16 %v5853, %v5849
      %v6326 = vpack.c.b16 %v5854, %v5850
      %v6327 = vpack.c.b16 %v5855, %v5851
      %v6328 = vpack.c.b16 %v5856, %v5852
      %v6329 = vpack.c.b16 %v5861, %v5857
      %v6330 = vpack.c.b16 %v5862, %v5858
      %v6331 = vpack.c.b16 %v5863, %v5859
      %v6332 = vpack.c.b16 %v5864, %v5860
      %v6333 = vpack.c.b16 %v5869, %v5865
      %v6334 = vpack.c.b16 %v5870, %v5866
      %v6335 = vpack.c.b16 %v5871, %v5867
      %v6336 = vpack.c.b16 %v5872, %v5868
      %v6337 = vpack.c.b16 %v5877, %v5873
      %v6338 = vpack.c.b16 %v5878, %v5874
      %v6339 = vpack.c.b16 %v5879, %v5875
      %v6340 = vpack.c.b16 %v5880, %v5876
      %v6341 = vpack.c.b16 %v5885, %v5881
      %v6342 = vpack.c.b16 %v5886, %v5882
      %v6343 = vpack.c.b16 %v5887, %v5883
      %v6344 = vpack.c.b16 %v5888, %v5884
      %v6345 = vpack.c.b16 %v5893, %v5889
      %v6346 = vpack.c.b16 %v5894, %v5890
      %v6347 = vpack.c.b16 %v5895, %v5891
      %v6348 = vpack.c.b16 %v5896, %v5892
      %v6349 = vpack.c.b16 %v5901, %v5897
      %v6350 = vpack.c.b16 %v5902, %v5898
      %v6351 = vpack.c.b16 %v5903, %v5899
      %v6352 = vpack.c.b16 %v5904, %v5900
      %v6353 = vpack.c.b16 %v5909, %v5905
      %v6354 = vpack.c.b16 %v5910, %v5906
      %v6355 = vpack.c.b16 %v5911, %v5907
      %v6356 = vpack.c.b16 %v5912, %v5908
      %v6357 = vpack.c.b16 %v5917, %v5913
      %v6358 = vpack.c.b16 %v5918, %v5914
      %v6359 = vpack.c.b16 %v5919, %v5915
      %v6360 = vpack.c.b16 %v5920, %v5916
      %v6361 = vpack.c.b16 %v5925, %v5921
      %v6362 = vpack.c.b16 %v5926, %v5922
      %v6363 = vpack.c.b16 %v5927, %v5923
      %v6364 = vpack.c.b16 %v5928, %v5924
      %v6365 = vpack.c.b16 %v5933, %v5929
      %v6366 = vpack.c.b16 %v5934, %v5930
      %v6367 = vpack.c.b16 %v5935, %v5931
      %v6368 = vpack.c.b16 %v5936, %v5932
      %v6369 = vpack.c.b16 %v5941, %v5937
      %v6370 = vpack.c.b16 %v5942, %v5938
      %v6371 = vpack.c.b16 %v5943, %v5939
      %v6372 = vpack.c.b16 %v5944, %v5940
      %v6373 = vpack.c.b16 %v5949, %v5945
      %v6374 = vpack.c.b16 %v5950, %v5946
      %v6375 = vpack.c.b16 %v5951, %v5947
      %v6376 = vpack.c.b16 %v5952, %v5948
      %v6377 = vpack.c.b16 %v5957, %v5953
      %v6378 = vpack.c.b16 %v5958, %v5954
      %v6379 = vpack.c.b16 %v5959, %v5955
      %v6380 = vpack.c.b16 %v5960, %v5956
      %v6381 = vpack.c.b16 %v5965, %v5961
      %v6382 = vpack.c.b16 %v5966, %v5962
      %v6383 = vpack.c.b16 %v5967, %v5963
      %v6384 = vpack.c.b16 %v5968, %v5964
      %v6385 = vpack.c.b16 %v5973, %v5969
      %v6386 = vpack.c.b16 %v5974, %v5970
      %v6387 = vpack.c.b16 %v5975, %v5971
      %v6388 = vpack.c.b16 %v5976, %v5972
      %v6389 = vpack.c.b16 %v5981, %v5977
      %v6390 = vpack.c.b16 %v5982, %v5978
      %v6391 = vpack.c.b16 %v5983, %v5979
      %v6392 = vpack.c.b16 %v5984, %v5980
      %v6393 = vpack.c.b16 %v5989, %v5985
      %v6394 = vpack.c.b16 %v5990, %v5986
      %v6395 = vpack.c.b16 %v5991, %v5987
      %v6396 = vpack.c.b16 %v5992, %v5988
      %v6397 = vpack.c.b16 %v5997, %v5993
      %v6398 = vpack.c.b16 %v5998, %v5994
      %v6399 = vpack.c.b16 %v5999, %v5995
      %v6400 = vpack.c.b16 %v6000, %v5996
      %v6401 = vpack.c.b16 %v6005, %v6001
      %v6402 = vpack.c.b16 %v6006, %v6002
      %v6403 = vpack.c.b16 %v6007, %v6003
      %v6404 = vpack.c.b16 %v6008, %v6004
      %v6405 = vpack.c.b16 %v6013, %v6009
      %v6406 = vpack.c.b16 %v6014, %v6010
      %v6407 = vpack.c.b16 %v6015, %v6011
      %v6408 = vpack.c.b16 %v6016, %v6012
      %v6409 = vpack.c.b16 %v6021, %v6017
      %v6410 = vpack.c.b16 %v6022, %v6018
      %v6411 = vpack.c.b16 %v6023, %v6019
      %v6412 = vpack.c.b16 %v6024, %v6020
      %v6413 = vpack.c.b16 %v6029, %v6025
      %v6414 = vpack.c.b16 %v6030, %v6026
      %v6415 = vpack.c.b16 %v6031, %v6027
      %v6416 = vpack.c.b16 %v6032, %v6028
      %v6417 = vpack.c.b16 %v6037, %v6033
      %v6418 = vpack.c.b16 %v6038, %v6034
      %v6419 = vpack.c.b16 %v6039, %v6035
      %v6420 = vpack.c.b16 %v6040, %v6036
      %v6421 = vpack.c.b16 %v6045, %v6041
      %v6422 = vpack.c.b16 %v6046, %v6042
      %v6423 = vpack.c.b16 %v6047, %v6043
      %v6424 = vpack.c.b16 %v6048, %v6044
      %v6425 = vpack.c.b16 %v6053, %v6049
      %v6426 = vpack.c.b16 %v6054, %v6050
      %v6427 = vpack.c.b16 %v6055, %v6051
      %v6428 = vpack.c.b16 %v6056, %v6052
      %v6429 = vpack.c.b16 %v6061, %v6057
      %v6430 = vpack.c.b16 %v6062, %v6058
      %v6431 = vpack.c.b16 %v6063, %v6059
      %v6432 = vpack.c.b16 %v6064, %v6060
      %v6433 = vpack.c.b16 %v6069, %v6065
      %v6434 = vpack.c.b16 %v6070, %v6066
      %v6435 = vpack.c.b16 %v6071, %v6067
      %v6436 = vpack.c.b16 %v6072, %v6068
      %v6437 = vpack.c.b16 %v6077, %v6073
      %v6438 = vpack.c.b16 %v6078, %v6074
      %v6439 = vpack.c.b16 %v6079, %v6075
      %v6440 = vpack.c.b16 %v6080, %v6076
      %v6441 = vpack.c.b16 %v6085, %v6081
      %v6442 = vpack.c.b16 %v6086, %v6082
      %v6443 = vpack.c.b16 %v6087, %v6083
      %v6444 = vpack.c.b16 %v6088, %v6084
      %v6445 = vpack.c.b16 %v6093, %v6089
      %v6446 = vpack.c.b16 %v6094, %v6090
      %v6447 = vpack.c.b16 %v6095, %v6091
      %v6448 = vpack.c.b16 %v6096, %v6092
      %v6449 = vpack.c.b16 %v6101, %v6097
      %v6450 = vpack.c.b16 %v6102, %v6098
      %v6451 = vpack.c.b16 %v6103, %v6099
      %v6452 = vpack.c.b16 %v6104, %v6100
      %v6453 = vpack.c.b16 %v6109, %v6105
      %v6454 = vpack.c.b16 %v6110, %v6106
      %v6455 = vpack.c.b16 %v6111, %v6107
      %v6456 = vpack.c.b16 %v6112, %v6108
      %v6457 = vpack.c.b16 %v6117, %v6113
      %v6458 = vpack.c.b16 %v6118, %v6114
      %v6459 = vpack.c.b16 %v6119, %v6115
      %v6460 = vpack.c.b16 %v6120, %v6116
      %v6461 = vpack.c.b16 %v6125, %v6121
      %v6462 = vpack.c.b16 %v6126, %v6122
      %v6463 = vpack.c.b16 %v6127, %v6123
      %v6464 = vpack.c.b16 %v6128, %v6124
      %v6465 = vpack.c.b16 %v6133, %v6129
      %v6466 = vpack.c.b16 %v6134, %v6130
      %v6467 = vpack.c.b16 %v6135, %v6131
      %v6468 = vpack.c.b16 %v6136, %v6132
      %v6469 = vpack.c.b16 %v6141, %v6137
      %v6470 = vpack.c.b16 %v6142, %v6138
      %v6471 = vpack.c.b16 %v6143, %v6139
      %v6472 = vpack.c.b16 %v6144, %v6140
      %v6473 = vpack.c.b16 %v6149, %v6145
      %v6474 = vpack.c.b16 %v6150, %v6146
      %v6475 = vpack.c.b16 %v6151, %v6147
      %v6476 = vpack.c.b16 %v6152, %v6148
      %v6477 = vpack.c.b16 %v6157, %v6153
      %v6478 = vpack.c.b16 %v6158, %v6154
      %v6479 = vpack.c.b16 %v6159, %v6155
      %v6480 = vpack.c.b16 %v6160, %v6156
      %v6481 = vpack.c.b16 %v6165, %v6161
      %v6482 = vpack.c.b16 %v6166, %v6162
      %v6483 = vpack.c.b16 %v6167, %v6163
      %v6484 = vpack.c.b16 %v6168, %v6164
      %v6485 = vpack.c.b16 %v6173, %v6169
      %v6486 = vpack.c.b16 %v6174, %v6170
      %v6487 = vpack.c.b16 %v6175, %v6171
      %v6488 = vpack.c.b16 %v6176, %v6172
      %v6489 = vpack.c.b16 %v6181, %v6177
      %v6490 = vpack.c.b16 %v6182, %v6178
      %v6491 = vpack.c.b16 %v6183, %v6179
      %v6492 = vpack.c.b16 %v6184, %v6180
      %v6493 = vpack.c.b16 %v6189, %v6185
      %v6494 = vpack.c.b16 %v6190, %v6186
      %v6495 = vpack.c.b16 %v6191, %v6187
      %v6496 = vpack.c.b16 %v6192, %v6188
      %v6497 = vpack.c.b16 %v6197, %v6193
      %v6498 = vpack.c.b16 %v6198, %v6194
      %v6499 = vpack.c.b16 %v6199, %v6195
      %v6500 = vpack.c.b16 %v6200, %v6196
      %v6501 = vpack.c.b16 %v6205, %v6201
      %v6502 = vpack.c.b16 %v6206, %v6202
      %v6503 = vpack.c.b16 %v6207, %v6203
      %v6504 = vpack.c.b16 %v6208, %v6204
      %v6505 = vpack.c.b16 %v6213, %v6209
      %v6506 = vpack.c.b16 %v6214, %v6210
      %v6507 = vpack.c.b16 %v6215, %v6211
      %v6508 = vpack.c.b16 %v6216, %v6212
      %v6509 = vpack.c.b16 %v6221, %v6217
      %v6510 = vpack.c.b16 %v6222, %v6218
      %v6511 = vpack.c.b16 %v6223, %v6219
      %v6512 = vpack.c.b16 %v6224, %v6220
      %v6513 = vpack.c.b16 %v6229, %v6225
      %v6514 = vpack.c.b16 %v6230, %v6226
      %v6515 = vpack.c.b16 %v6231, %v6227
      %v6516 = vpack.c.b16 %v6232, %v6228
      %v6517 = vpack.c.b16 %v6237, %v6233
      %v6518 = vpack.c.b16 %v6238, %v6234
      %v6519 = vpack.c.b16 %v6239, %v6235
      %v6520 = vpack.c.b16 %v6240, %v6236
      %v6521 = vpack.c.b16 %v6245, %v6241
      %v6522 = vpack.c.b16 %v6246, %v6242
      %v6523 = vpack.c.b16 %v6247, %v6243
      %v6524 = vpack.c.b16 %v6248, %v6244
      %v6525 = vpack.c.b16 %v6253, %v6249
      %v6526 = vpack.c.b16 %v6254, %v6250
      %v6527 = vpack.c.b16 %v6255, %v6251
      %v6528 = vpack.c.b16 %v6256, %v6252
      %v6529 = vpack.c.b16 %v6261, %v6257
      %v6530 = vpack.c.b16 %v6262, %v6258
      %v6531 = vpack.c.b16 %v6263, %v6259
      %v6532 = vpack.c.b16 %v6264, %v6260
      %v6533 = vpack.c.b16 %v6269, %v6265
      %v6534 = vpack.c.b16 %v6270, %v6266
      %v6535 = vpack.c.b16 %v6271, %v6267
      %v6536 = vpack.c.b16 %v6272, %v6268
      %v6537 = vpack.c.b16 %v6277, %v6273
      %v6538 = vpack.c.b16 %v6278, %v6274
      %v6539 = vpack.c.b16 %v6279, %v6275
      %v6540 = vpack.c.b16 %v6280, %v6276
      %v6541 = vpack.c.b16 %v6285, %v6281
      %v6542 = vpack.c.b16 %v6286, %v6282
      %v6543 = vpack.c.b16 %v6287, %v6283
      %v6544 = vpack.c.b16 %v6288, %v6284
      %6801 = vmatpush.bf16.msra.mxu0 %v6317
      %6802 = vmatpush.bf16.msra.mxu0 %v6313
      %6803 = vmatpush.bf16.msra.mxu0 %v6309
      %6804 = vmatpush.bf16.msra.mxu0 %v6305
      %6805 = vmatpush.bf16.msra.mxu0 %v6301
      %6806 = vmatpush.bf16.msra.mxu0 %v6297
      %6807 = vmatpush.bf16.msra.mxu0 %v6293
      %6808 = vmatpush.bf16.msra.mxu0 %v6289
      %6809 = vmatmul.bf16.gmra.mxu0 %v827
      %v6810 = vpop.f32.mrf.mxu0
      %v6811 = vadd.f32 %v5513, %v6810
      %v6812 = vpop.f32.mrf.mxu0
      %6813 = vdwg.mxu0
      %6814 = vmatpush.bf16.msra.mxu0 %v6349
      %6815 = vmatpush.bf16.msra.mxu0 %v6345
      %6816 = vmatpush.bf16.msra.mxu0 %v6341
      %6817 = vmatpush.bf16.msra.mxu0 %v6337
      %6818 = vmatpush.bf16.msra.mxu0 %v6333
      %6819 = vmatpush.bf16.msra.mxu0 %v6329
      %6820 = vmatpush.bf16.msra.mxu0 %v6325
      %6821 = vmatpush.bf16.msra.mxu0 %v6321
      %6822 = vmatmul.bf16.gmra.mxu0 %v828
      %v6823 = vpop.f32.mrf.mxu0
      %v6824 = vadd.f32 %v6811, %v6823
      %v6825 = vpop.f32.mrf.mxu0
      %6826 = vdwg.mxu0
      %6827 = vmatpush.bf16.msra.mxu0 %v6381
      %6828 = vmatpush.bf16.msra.mxu0 %v6377
      %6829 = vmatpush.bf16.msra.mxu0 %v6373
      %6830 = vmatpush.bf16.msra.mxu0 %v6369
      %6831 = vmatpush.bf16.msra.mxu0 %v6365
      %6832 = vmatpush.bf16.msra.mxu0 %v6361
      %6833 = vmatpush.bf16.msra.mxu0 %v6357
      %6834 = vmatpush.bf16.msra.mxu0 %v6353
      %6835 = vmatmul.bf16.gmra.mxu0 %v829
      %v6836 = vpop.f32.mrf.mxu0
      %v6837 = vadd.f32 %v6824, %v6836
      %v6838 = vpop.f32.mrf.mxu0
      %6839 = vdwg.mxu0
      %6840 = vmatpush.bf16.msra.mxu0 %v6413
      %6841 = vmatpush.bf16.msra.mxu0 %v6409
      %6842 = vmatpush.bf16.msra.mxu0 %v6405
      %6843 = vmatpush.bf16.msra.mxu0 %v6401
      %6844 = vmatpush.bf16.msra.mxu0 %v6397
      %6845 = vmatpush.bf16.msra.mxu0 %v6393
      %6846 = vmatpush.bf16.msra.mxu0 %v6389
      %6847 = vmatpush.bf16.msra.mxu0 %v6385
      %6848 = vmatmul.bf16.gmra.mxu0 %v830
      %v6849 = vpop.f32.mrf.mxu0
      %v6850 = vadd.f32 %v6837, %v6849
      %v6851 = vpop.f32.mrf.mxu0
      %6852 = vdwg.mxu0
      %6853 = vmatpush.bf16.msra.mxu0 %v6445
      %6854 = vmatpush.bf16.msra.mxu0 %v6441
      %6855 = vmatpush.bf16.msra.mxu0 %v6437
      %6856 = vmatpush.bf16.msra.mxu0 %v6433
      %6857 = vmatpush.bf16.msra.mxu0 %v6429
      %6858 = vmatpush.bf16.msra.mxu0 %v6425
      %6859 = vmatpush.bf16.msra.mxu0 %v6421
      %6860 = vmatpush.bf16.msra.mxu0 %v6417
      %6861 = vmatmul.bf16.gmra.mxu0 %v831
      %v6862 = vpop.f32.mrf.mxu0
      %v6863 = vadd.f32 %v6850, %v6862
      %v6864 = vpop.f32.mrf.mxu0
      %6865 = vdwg.mxu0
      %6866 = vmatpush.bf16.msra.mxu0 %v6477
      %6867 = vmatpush.bf16.msra.mxu0 %v6473
      %6868 = vmatpush.bf16.msra.mxu0 %v6469
      %6869 = vmatpush.bf16.msra.mxu0 %v6465
      %6870 = vmatpush.bf16.msra.mxu0 %v6461
      %6871 = vmatpush.bf16.msra.mxu0 %v6457
      %6872 = vmatpush.bf16.msra.mxu0 %v6453
      %6873 = vmatpush.bf16.msra.mxu0 %v6449
      %6874 = vmatmul.bf16.gmra.mxu0 %v832
      %v6875 = vpop.f32.mrf.mxu0
      %v6876 = vadd.f32 %v6863, %v6875
      %v6877 = vpop.f32.mrf.mxu0
      %6878 = vdwg.mxu0
      %6879 = vmatpush.bf16.msra.mxu0 %v6509
      %6880 = vmatpush.bf16.msra.mxu0 %v6505
      %6881 = vmatpush.bf16.msra.mxu0 %v6501
      %6882 = vmatpush.bf16.msra.mxu0 %v6497
      %6883 = vmatpush.bf16.msra.mxu0 %v6493
      %6884 = vmatpush.bf16.msra.mxu0 %v6489
      %6885 = vmatpush.bf16.msra.mxu0 %v6485
      %6886 = vmatpush.bf16.msra.mxu0 %v6481
      %6887 = vmatmul.bf16.gmra.mxu0 %v833
      %v6888 = vpop.f32.mrf.mxu0
      %v6889 = vadd.f32 %v6876, %v6888
      %v6890 = vpop.f32.mrf.mxu0
      %6891 = vdwg.mxu0
      %6892 = vmatpush.bf16.msra.mxu0 %v6541
      %6893 = vmatpush.bf16.msra.mxu0 %v6537
      %6894 = vmatpush.bf16.msra.mxu0 %v6533
      %6895 = vmatpush.bf16.msra.mxu0 %v6529
      %6896 = vmatpush.bf16.msra.mxu0 %v6525
      %6897 = vmatpush.bf16.msra.mxu0 %v6521
      %6898 = vmatpush.bf16.msra.mxu0 %v6517
      %6899 = vmatpush.bf16.msra.mxu0 %v6513
      %6900 = vmatmul.bf16.gmra.mxu0 %v834
      %v6901 = vpop.f32.mrf.mxu0
      %v6902 = vadd.f32 %v6889, %v6901
      %v6903 = vpop.f32.mrf.mxu0
      %6904 = vdwg.mxu0
      %6905 = vmatpush.bf16.msra.mxu0 %v6318
      %6906 = vmatpush.bf16.msra.mxu0 %v6314
      %6907 = vmatpush.bf16.msra.mxu0 %v6310
      %6908 = vmatpush.bf16.msra.mxu0 %v6306
      %6909 = vmatpush.bf16.msra.mxu0 %v6302
      %6910 = vmatpush.bf16.msra.mxu0 %v6298
      %6911 = vmatpush.bf16.msra.mxu0 %v6294
      %6912 = vmatpush.bf16.msra.mxu0 %v6290
      %6913 = vmatmul.bf16.gmra.mxu0 %v827
      %v6914 = vpop.f32.mrf.mxu0
      %v6915 = vadd.f32 %v5514, %v6914
      %v6916 = vpop.f32.mrf.mxu0
      %6917 = vdwg.mxu0
      %6918 = vmatpush.bf16.msra.mxu0 %v6350
      %6919 = vmatpush.bf16.msra.mxu0 %v6346
      %6920 = vmatpush.bf16.msra.mxu0 %v6342
      %6921 = vmatpush.bf16.msra.mxu0 %v6338
      %6922 = vmatpush.bf16.msra.mxu0 %v6334
      %6923 = vmatpush.bf16.msra.mxu0 %v6330
      %6924 = vmatpush.bf16.msra.mxu0 %v6326
      %6925 = vmatpush.bf16.msra.mxu0 %v6322
      %6926 = vmatmul.bf16.gmra.mxu0 %v828
      %v6927 = vpop.f32.mrf.mxu0
      %v6928 = vadd.f32 %v6915, %v6927
      %v6929 = vpop.f32.mrf.mxu0
      %6930 = vdwg.mxu0
      %6931 = vmatpush.bf16.msra.mxu0 %v6382
      %6932 = vmatpush.bf16.msra.mxu0 %v6378
      %6933 = vmatpush.bf16.msra.mxu0 %v6374
      %6934 = vmatpush.bf16.msra.mxu0 %v6370
      %6935 = vmatpush.bf16.msra.mxu0 %v6366
      %6936 = vmatpush.bf16.msra.mxu0 %v6362
      %6937 = vmatpush.bf16.msra.mxu0 %v6358
      %6938 = vmatpush.bf16.msra.mxu0 %v6354
      %6939 = vmatmul.bf16.gmra.mxu0 %v829
      %v6940 = vpop.f32.mrf.mxu0
      %v6941 = vadd.f32 %v6928, %v6940
      %v6942 = vpop.f32.mrf.mxu0
      %6943 = vdwg.mxu0
      %6944 = vmatpush.bf16.msra.mxu0 %v6414
      %6945 = vmatpush.bf16.msra.mxu0 %v6410
      %6946 = vmatpush.bf16.msra.mxu0 %v6406
      %6947 = vmatpush.bf16.msra.mxu0 %v6402
      %6948 = vmatpush.bf16.msra.mxu0 %v6398
      %6949 = vmatpush.bf16.msra.mxu0 %v6394
      %6950 = vmatpush.bf16.msra.mxu0 %v6390
      %6951 = vmatpush.bf16.msra.mxu0 %v6386
      %6952 = vmatmul.bf16.gmra.mxu0 %v830
      %v6953 = vpop.f32.mrf.mxu0
      %v6954 = vadd.f32 %v6941, %v6953
      %v6955 = vpop.f32.mrf.mxu0
      %6956 = vdwg.mxu0
      %6957 = vmatpush.bf16.msra.mxu0 %v6446
      %6958 = vmatpush.bf16.msra.mxu0 %v6442
      %6959 = vmatpush.bf16.msra.mxu0 %v6438
      %6960 = vmatpush.bf16.msra.mxu0 %v6434
      %6961 = vmatpush.bf16.msra.mxu0 %v6430
      %6962 = vmatpush.bf16.msra.mxu0 %v6426
      %6963 = vmatpush.bf16.msra.mxu0 %v6422
      %6964 = vmatpush.bf16.msra.mxu0 %v6418
      %6965 = vmatmul.bf16.gmra.mxu0 %v831
      %v6966 = vpop.f32.mrf.mxu0
      %v6967 = vadd.f32 %v6954, %v6966
      %v6968 = vpop.f32.mrf.mxu0
      %6969 = vdwg.mxu0
      %6970 = vmatpush.bf16.msra.mxu0 %v6478
      %6971 = vmatpush.bf16.msra.mxu0 %v6474
      %6972 = vmatpush.bf16.msra.mxu0 %v6470
      %6973 = vmatpush.bf16.msra.mxu0 %v6466
      %6974 = vmatpush.bf16.msra.mxu0 %v6462
      %6975 = vmatpush.bf16.msra.mxu0 %v6458
      %6976 = vmatpush.bf16.msra.mxu0 %v6454
      %6977 = vmatpush.bf16.msra.mxu0 %v6450
      %6978 = vmatmul.bf16.gmra.mxu0 %v832
      %v6979 = vpop.f32.mrf.mxu0
      %v6980 = vadd.f32 %v6967, %v6979
      %v6981 = vpop.f32.mrf.mxu0
      %6982 = vdwg.mxu0
      %6983 = vmatpush.bf16.msra.mxu0 %v6510
      %6984 = vmatpush.bf16.msra.mxu0 %v6506
      %6985 = vmatpush.bf16.msra.mxu0 %v6502
      %6986 = vmatpush.bf16.msra.mxu0 %v6498
      %6987 = vmatpush.bf16.msra.mxu0 %v6494
      %6988 = vmatpush.bf16.msra.mxu0 %v6490
      %6989 = vmatpush.bf16.msra.mxu0 %v6486
      %6990 = vmatpush.bf16.msra.mxu0 %v6482
      %6991 = vmatmul.bf16.gmra.mxu0 %v833
      %v6992 = vpop.f32.mrf.mxu0
      %v6993 = vadd.f32 %v6980, %v6992
      %v6994 = vpop.f32.mrf.mxu0
      %6995 = vdwg.mxu0
      %6996 = vmatpush.bf16.msra.mxu0 %v6542
      %6997 = vmatpush.bf16.msra.mxu0 %v6538
      %6998 = vmatpush.bf16.msra.mxu0 %v6534
      %6999 = vmatpush.bf16.msra.mxu0 %v6530
      %7000 = vmatpush.bf16.msra.mxu0 %v6526
      %7001 = vmatpush.bf16.msra.mxu0 %v6522
      %7002 = vmatpush.bf16.msra.mxu0 %v6518
      %7003 = vmatpush.bf16.msra.mxu0 %v6514
      %7004 = vmatmul.bf16.gmra.mxu0 %v834
      %v7005 = vpop.f32.mrf.mxu0
      %v7006 = vadd.f32 %v6993, %v7005
      %v7007 = vpop.f32.mrf.mxu0
      %7008 = vdwg.mxu0
      %7009 = vmatpush.bf16.msra.mxu0 %v6319
      %7010 = vmatpush.bf16.msra.mxu0 %v6315
      %7011 = vmatpush.bf16.msra.mxu0 %v6311
      %7012 = vmatpush.bf16.msra.mxu0 %v6307
      %7013 = vmatpush.bf16.msra.mxu0 %v6303
      %7014 = vmatpush.bf16.msra.mxu0 %v6299
      %7015 = vmatpush.bf16.msra.mxu0 %v6295
      %7016 = vmatpush.bf16.msra.mxu0 %v6291
      %7017 = vmatmul.bf16.gmra.mxu0 %v827
      %v7018 = vpop.f32.mrf.mxu0
      %v7019 = vadd.f32 %v5515, %v7018
      %v7020 = vpop.f32.mrf.mxu0
      %7021 = vdwg.mxu0
      %7022 = vmatpush.bf16.msra.mxu0 %v6351
      %7023 = vmatpush.bf16.msra.mxu0 %v6347
      %7024 = vmatpush.bf16.msra.mxu0 %v6343
      %7025 = vmatpush.bf16.msra.mxu0 %v6339
      %7026 = vmatpush.bf16.msra.mxu0 %v6335
      %7027 = vmatpush.bf16.msra.mxu0 %v6331
      %7028 = vmatpush.bf16.msra.mxu0 %v6327
      %7029 = vmatpush.bf16.msra.mxu0 %v6323
      %7030 = vmatmul.bf16.gmra.mxu0 %v828
      %v7031 = vpop.f32.mrf.mxu0
      %v7032 = vadd.f32 %v7019, %v7031
      %v7033 = vpop.f32.mrf.mxu0
      %7034 = vdwg.mxu0
      %7035 = vmatpush.bf16.msra.mxu0 %v6383
      %7036 = vmatpush.bf16.msra.mxu0 %v6379
      %7037 = vmatpush.bf16.msra.mxu0 %v6375
      %7038 = vmatpush.bf16.msra.mxu0 %v6371
      %7039 = vmatpush.bf16.msra.mxu0 %v6367
      %7040 = vmatpush.bf16.msra.mxu0 %v6363
      %7041 = vmatpush.bf16.msra.mxu0 %v6359
      %7042 = vmatpush.bf16.msra.mxu0 %v6355
      %7043 = vmatmul.bf16.gmra.mxu0 %v829
      %v7044 = vpop.f32.mrf.mxu0
      %v7045 = vadd.f32 %v7032, %v7044
      %v7046 = vpop.f32.mrf.mxu0
      %7047 = vdwg.mxu0
      %7048 = vmatpush.bf16.msra.mxu0 %v6415
      %7049 = vmatpush.bf16.msra.mxu0 %v6411
      %7050 = vmatpush.bf16.msra.mxu0 %v6407
      %7051 = vmatpush.bf16.msra.mxu0 %v6403
      %7052 = vmatpush.bf16.msra.mxu0 %v6399
      %7053 = vmatpush.bf16.msra.mxu0 %v6395
      %7054 = vmatpush.bf16.msra.mxu0 %v6391
      %7055 = vmatpush.bf16.msra.mxu0 %v6387
      %7056 = vmatmul.bf16.gmra.mxu0 %v830
      %v7057 = vpop.f32.mrf.mxu0
      %v7058 = vadd.f32 %v7045, %v7057
      %v7059 = vpop.f32.mrf.mxu0
      %7060 = vdwg.mxu0
      %7061 = vmatpush.bf16.msra.mxu0 %v6447
      %7062 = vmatpush.bf16.msra.mxu0 %v6443
      %7063 = vmatpush.bf16.msra.mxu0 %v6439
      %7064 = vmatpush.bf16.msra.mxu0 %v6435
      %7065 = vmatpush.bf16.msra.mxu0 %v6431
      %7066 = vmatpush.bf16.msra.mxu0 %v6427
      %7067 = vmatpush.bf16.msra.mxu0 %v6423
      %7068 = vmatpush.bf16.msra.mxu0 %v6419
      %7069 = vmatmul.bf16.gmra.mxu0 %v831
      %v7070 = vpop.f32.mrf.mxu0
      %v7071 = vadd.f32 %v7058, %v7070
      %v7072 = vpop.f32.mrf.mxu0
      %7073 = vdwg.mxu0
      %7074 = vmatpush.bf16.msra.mxu0 %v6479
      %7075 = vmatpush.bf16.msra.mxu0 %v6475
      %7076 = vmatpush.bf16.msra.mxu0 %v6471
      %7077 = vmatpush.bf16.msra.mxu0 %v6467
      %7078 = vmatpush.bf16.msra.mxu0 %v6463
      %7079 = vmatpush.bf16.msra.mxu0 %v6459
      %7080 = vmatpush.bf16.msra.mxu0 %v6455
      %7081 = vmatpush.bf16.msra.mxu0 %v6451
      %7082 = vmatmul.bf16.gmra.mxu0 %v832
      %v7083 = vpop.f32.mrf.mxu0
      %v7084 = vadd.f32 %v7071, %v7083
      %v7085 = vpop.f32.mrf.mxu0
      %7086 = vdwg.mxu0
      %7087 = vmatpush.bf16.msra.mxu0 %v6511
      %7088 = vmatpush.bf16.msra.mxu0 %v6507
      %7089 = vmatpush.bf16.msra.mxu0 %v6503
      %7090 = vmatpush.bf16.msra.mxu0 %v6499
      %7091 = vmatpush.bf16.msra.mxu0 %v6495
      %7092 = vmatpush.bf16.msra.mxu0 %v6491
      %7093 = vmatpush.bf16.msra.mxu0 %v6487
      %7094 = vmatpush.bf16.msra.mxu0 %v6483
      %7095 = vmatmul.bf16.gmra.mxu0 %v833
      %v7096 = vpop.f32.mrf.mxu0
      %v7097 = vadd.f32 %v7084, %v7096
      %v7098 = vpop.f32.mrf.mxu0
      %7099 = vdwg.mxu0
      %7100 = vmatpush.bf16.msra.mxu0 %v6543
      %7101 = vmatpush.bf16.msra.mxu0 %v6539
      %7102 = vmatpush.bf16.msra.mxu0 %v6535
      %7103 = vmatpush.bf16.msra.mxu0 %v6531
      %7104 = vmatpush.bf16.msra.mxu0 %v6527
      %7105 = vmatpush.bf16.msra.mxu0 %v6523
      %7106 = vmatpush.bf16.msra.mxu0 %v6519
      %7107 = vmatpush.bf16.msra.mxu0 %v6515
      %7108 = vmatmul.bf16.gmra.mxu0 %v834
      %v7109 = vpop.f32.mrf.mxu0
      %v7110 = vadd.f32 %v7097, %v7109
      %v7111 = vpop.f32.mrf.mxu0
      %7112 = vdwg.mxu0
      %7113 = vmatpush.bf16.msra.mxu0 %v6320
      %7114 = vmatpush.bf16.msra.mxu0 %v6316
      %7115 = vmatpush.bf16.msra.mxu0 %v6312
      %7116 = vmatpush.bf16.msra.mxu0 %v6308
      %7117 = vmatpush.bf16.msra.mxu0 %v6304
      %7118 = vmatpush.bf16.msra.mxu0 %v6300
      %7119 = vmatpush.bf16.msra.mxu0 %v6296
      %7120 = vmatpush.bf16.msra.mxu0 %v6292
      %7121 = vmatmul.bf16.gmra.mxu0 %v827
      %v7122 = vpop.f32.mrf.mxu0
      %v7123 = vadd.f32 %v5516, %v7122
      %v7124 = vpop.f32.mrf.mxu0
      %7125 = vdwg.mxu0
      %7126 = vmatpush.bf16.msra.mxu0 %v6352
      %7127 = vmatpush.bf16.msra.mxu0 %v6348
      %7128 = vmatpush.bf16.msra.mxu0 %v6344
      %7129 = vmatpush.bf16.msra.mxu0 %v6340
      %7130 = vmatpush.bf16.msra.mxu0 %v6336
      %7131 = vmatpush.bf16.msra.mxu0 %v6332
      %7132 = vmatpush.bf16.msra.mxu0 %v6328
      %7133 = vmatpush.bf16.msra.mxu0 %v6324
      %7134 = vmatmul.bf16.gmra.mxu0 %v828
      %v7135 = vpop.f32.mrf.mxu0
      %v7136 = vadd.f32 %v7123, %v7135
      %v7137 = vpop.f32.mrf.mxu0
      %7138 = vdwg.mxu0
      %7139 = vmatpush.bf16.msra.mxu0 %v6384
      %7140 = vmatpush.bf16.msra.mxu0 %v6380
      %7141 = vmatpush.bf16.msra.mxu0 %v6376
      %7142 = vmatpush.bf16.msra.mxu0 %v6372
      %7143 = vmatpush.bf16.msra.mxu0 %v6368
      %7144 = vmatpush.bf16.msra.mxu0 %v6364
      %7145 = vmatpush.bf16.msra.mxu0 %v6360
      %7146 = vmatpush.bf16.msra.mxu0 %v6356
      %7147 = vmatmul.bf16.gmra.mxu0 %v829
      %v7148 = vpop.f32.mrf.mxu0
      %v7149 = vadd.f32 %v7136, %v7148
      %v7150 = vpop.f32.mrf.mxu0
      %7151 = vdwg.mxu0
      %7152 = vmatpush.bf16.msra.mxu0 %v6416
      %7153 = vmatpush.bf16.msra.mxu0 %v6412
      %7154 = vmatpush.bf16.msra.mxu0 %v6408
      %7155 = vmatpush.bf16.msra.mxu0 %v6404
      %7156 = vmatpush.bf16.msra.mxu0 %v6400
      %7157 = vmatpush.bf16.msra.mxu0 %v6396
      %7158 = vmatpush.bf16.msra.mxu0 %v6392
      %7159 = vmatpush.bf16.msra.mxu0 %v6388
      %7160 = vmatmul.bf16.gmra.mxu0 %v830
      %v7161 = vpop.f32.mrf.mxu0
      %v7162 = vadd.f32 %v7149, %v7161
      %v7163 = vpop.f32.mrf.mxu0
      %7164 = vdwg.mxu0
      %7165 = vmatpush.bf16.msra.mxu0 %v6448
      %7166 = vmatpush.bf16.msra.mxu0 %v6444
      %7167 = vmatpush.bf16.msra.mxu0 %v6440
      %7168 = vmatpush.bf16.msra.mxu0 %v6436
      %7169 = vmatpush.bf16.msra.mxu0 %v6432
      %7170 = vmatpush.bf16.msra.mxu0 %v6428
      %7171 = vmatpush.bf16.msra.mxu0 %v6424
      %7172 = vmatpush.bf16.msra.mxu0 %v6420
      %7173 = vmatmul.bf16.gmra.mxu0 %v831
      %v7174 = vpop.f32.mrf.mxu0
      %v7175 = vadd.f32 %v7162, %v7174
      %v7176 = vpop.f32.mrf.mxu0
      %7177 = vdwg.mxu0
      %7178 = vmatpush.bf16.msra.mxu0 %v6480
      %7179 = vmatpush.bf16.msra.mxu0 %v6476
      %7180 = vmatpush.bf16.msra.mxu0 %v6472
      %7181 = vmatpush.bf16.msra.mxu0 %v6468
      %7182 = vmatpush.bf16.msra.mxu0 %v6464
      %7183 = vmatpush.bf16.msra.mxu0 %v6460
      %7184 = vmatpush.bf16.msra.mxu0 %v6456
      %7185 = vmatpush.bf16.msra.mxu0 %v6452
      %7186 = vmatmul.bf16.gmra.mxu0 %v832
      %v7187 = vpop.f32.mrf.mxu0
      %v7188 = vadd.f32 %v7175, %v7187
      %v7189 = vpop.f32.mrf.mxu0
      %7190 = vdwg.mxu0
      %7191 = vmatpush.bf16.msra.mxu0 %v6512
      %7192 = vmatpush.bf16.msra.mxu0 %v6508
      %7193 = vmatpush.bf16.msra.mxu0 %v6504
      %7194 = vmatpush.bf16.msra.mxu0 %v6500
      %7195 = vmatpush.bf16.msra.mxu0 %v6496
      %7196 = vmatpush.bf16.msra.mxu0 %v6492
      %7197 = vmatpush.bf16.msra.mxu0 %v6488
      %7198 = vmatpush.bf16.msra.mxu0 %v6484
      %7199 = vmatmul.bf16.gmra.mxu0 %v833
      %v7200 = vpop.f32.mrf.mxu0
      %v7201 = vadd.f32 %v7188, %v7200
      %v7202 = vpop.f32.mrf.mxu0
      %7203 = vdwg.mxu0
      %7204 = vmatpush.bf16.msra.mxu0 %v6544
      %7205 = vmatpush.bf16.msra.mxu0 %v6540
      %7206 = vmatpush.bf16.msra.mxu0 %v6536
      %7207 = vmatpush.bf16.msra.mxu0 %v6532
      %7208 = vmatpush.bf16.msra.mxu0 %v6528
      %7209 = vmatpush.bf16.msra.mxu0 %v6524
      %7210 = vmatpush.bf16.msra.mxu0 %v6520
      %7211 = vmatpush.bf16.msra.mxu0 %v6516
      %7212 = vmatmul.bf16.gmra.mxu0 %v834
      %v7213 = vpop.f32.mrf.mxu0
      %v7214 = vadd.f32 %v7201, %v7213
      %v7215 = vpop.f32.mrf.mxu0
      %7216 = vdwg.mxu0
      %v7217 = vmax.f32 %v6902, 0.0
      %v7218 = vmax.f32 %v7006, 0.0
      %v7219 = vmax.f32 %v7110, 0.0
      %v7220 = vmax.f32 %v7214, 0.0
      %v7221 = vpack.c.bf16 %v2309, %v2309
      %v7222 = vpack.c.bf16 %v2310, %v2310
      %v7223 = vpack.c.bf16 %v2311, %v2311
      %v7224 = vpack.c.bf16 %v2312, %v2312
      %v7225 = vld [vmem:[#allocation19] sm:$0xff]
      %v7226 = vld [vmem:[#allocation19 + $0x8] sm:$0xff]
      %v7227 = vld [vmem:[#allocation19 + $0x10] sm:$0xff]
      %v7228 = vld [vmem:[#allocation19 + $0x18] sm:$0xff]
      %v7229 = vld [vmem:[#allocation19 + $0x20] sm:$0xff]
      %v7230 = vld [vmem:[#allocation19 + $0x28] sm:$0xff]
      %v7231 = vld [vmem:[#allocation19 + $0x30] sm:$0xff]
      %v7232 = vld [vmem:[#allocation19 + $0x38] sm:$0xff]
      %v7233 = vld [vmem:[#allocation19 + $0x40] sm:$0xff]
      %v7234 = vld [vmem:[#allocation19 + $0x48] sm:$0xff]
      %v7235 = vld [vmem:[#allocation19 + $0x50] sm:$0xff]
      %v7236 = vld [vmem:[#allocation19 + $0x58] sm:$0xff]
      %v7237 = vld [vmem:[#allocation19 + $0x60] sm:$0xff]
      %v7238 = vld [vmem:[#allocation19 + $0x68] sm:$0xff]
      %v7239 = vld [vmem:[#allocation19 + $0x70] sm:$0xff]
      %v7240 = vld [vmem:[#allocation19 + $0x78] sm:$0xff]
      %v7241 = vld [vmem:[#allocation19 + $0x80] sm:$0xff]
      %v7242 = vld [vmem:[#allocation19 + $0x88] sm:$0xff]
      %v7243 = vld [vmem:[#allocation19 + $0x90] sm:$0xff]
      %v7244 = vld [vmem:[#allocation19 + $0x98] sm:$0xff]
      %v7245 = vld [vmem:[#allocation19 + $0xa0] sm:$0xff]
      %v7246 = vld [vmem:[#allocation19 + $0xa8] sm:$0xff]
      %v7247 = vld [vmem:[#allocation19 + $0xb0] sm:$0xff]
      %v7248 = vld [vmem:[#allocation19 + $0xb8] sm:$0xff]
      %v7249 = vld [vmem:[#allocation19 + $0xc0] sm:$0xff]
      %v7250 = vld [vmem:[#allocation19 + $0xc8] sm:$0xff]
      %v7251 = vld [vmem:[#allocation19 + $0xd0] sm:$0xff]
      %v7252 = vld [vmem:[#allocation19 + $0xd8] sm:$0xff]
      %v7253 = vld [vmem:[#allocation19 + $0xe0] sm:$0xff]
      %v7254 = vld [vmem:[#allocation19 + $0xe8] sm:$0xff]
      %v7255 = vld [vmem:[#allocation19 + $0xf0] sm:$0xff]
      %v7256 = vld [vmem:[#allocation19 + $0xf8] sm:$0xff]
      %v7257 = vld [vmem:[#allocation19 + $0x100] sm:$0xff]
      %v7258 = vld [vmem:[#allocation19 + $0x108] sm:$0xff]
      %v7259 = vld [vmem:[#allocation19 + $0x110] sm:$0xff]
      %v7260 = vld [vmem:[#allocation19 + $0x118] sm:$0xff]
      %v7261 = vld [vmem:[#allocation19 + $0x120] sm:$0xff]
      %v7262 = vld [vmem:[#allocation19 + $0x128] sm:$0xff]
      %v7263 = vld [vmem:[#allocation19 + $0x130] sm:$0xff]
      %v7264 = vld [vmem:[#allocation19 + $0x138] sm:$0xff]
      %v7265 = vld [vmem:[#allocation19 + $0x140] sm:$0xff]
      %v7266 = vld [vmem:[#allocation19 + $0x148] sm:$0xff]
      %v7267 = vld [vmem:[#allocation19 + $0x150] sm:$0xff]
      %v7268 = vld [vmem:[#allocation19 + $0x158] sm:$0xff]
      %v7269 = vld [vmem:[#allocation19 + $0x160] sm:$0xff]
      %v7270 = vld [vmem:[#allocation19 + $0x168] sm:$0xff]
      %v7271 = vld [vmem:[#allocation19 + $0x170] sm:$0xff]
      %v7272 = vld [vmem:[#allocation19 + $0x178] sm:$0xff]
      %v7273 = vld [vmem:[#allocation19 + $0x180] sm:$0xff]
      %v7274 = vld [vmem:[#allocation19 + $0x188] sm:$0xff]
      %v7275 = vld [vmem:[#allocation19 + $0x190] sm:$0xff]
      %v7276 = vld [vmem:[#allocation19 + $0x198] sm:$0xff]
      %v7277 = vld [vmem:[#allocation19 + $0x1a0] sm:$0xff]
      %v7278 = vld [vmem:[#allocation19 + $0x1a8] sm:$0xff]
      %v7279 = vld [vmem:[#allocation19 + $0x1b0] sm:$0xff]
      %v7280 = vld [vmem:[#allocation19 + $0x1b8] sm:$0xff]
      %v7281 = vld [vmem:[#allocation19 + $0x1c0] sm:$0xff]
      %v7282 = vld [vmem:[#allocation19 + $0x1c8] sm:$0xff]
      %v7283 = vld [vmem:[#allocation19 + $0x1d0] sm:$0xff]
      %v7284 = vld [vmem:[#allocation19 + $0x1d8] sm:$0xff]
      %v7285 = vld [vmem:[#allocation19 + $0x1e0] sm:$0xff]
      %v7286 = vld [vmem:[#allocation19 + $0x1e8] sm:$0xff]
      %v7287 = vld [vmem:[#allocation19 + $0x1f0] sm:$0xff]
      %v7288 = vld [vmem:[#allocation19 + $0x1f8] sm:$0xff]
      %v7289 = vld [vmem:[#allocation19 + $0x200] sm:$0xff]
      %v7290 = vld [vmem:[#allocation19 + $0x208] sm:$0xff]
      %v7291 = vld [vmem:[#allocation19 + $0x210] sm:$0xff]
      %v7292 = vld [vmem:[#allocation19 + $0x218] sm:$0xff]
      %v7293 = vld [vmem:[#allocation19 + $0x220] sm:$0xff]
      %v7294 = vld [vmem:[#allocation19 + $0x228] sm:$0xff]
      %v7295 = vld [vmem:[#allocation19 + $0x230] sm:$0xff]
      %v7296 = vld [vmem:[#allocation19 + $0x238] sm:$0xff]
      %v7297 = vld [vmem:[#allocation19 + $0x240] sm:$0xff]
      %v7298 = vld [vmem:[#allocation19 + $0x248] sm:$0xff]
      %v7299 = vld [vmem:[#allocation19 + $0x250] sm:$0xff]
      %v7300 = vld [vmem:[#allocation19 + $0x258] sm:$0xff]
      %v7301 = vld [vmem:[#allocation19 + $0x260] sm:$0xff]
      %v7302 = vld [vmem:[#allocation19 + $0x268] sm:$0xff]
      %v7303 = vld [vmem:[#allocation19 + $0x270] sm:$0xff]
      %v7304 = vld [vmem:[#allocation19 + $0x278] sm:$0xff]
      %v7305 = vld [vmem:[#allocation19 + $0x280] sm:$0xff]
      %v7306 = vld [vmem:[#allocation19 + $0x288] sm:$0xff]
      %v7307 = vld [vmem:[#allocation19 + $0x290] sm:$0xff]
      %v7308 = vld [vmem:[#allocation19 + $0x298] sm:$0xff]
      %v7309 = vld [vmem:[#allocation19 + $0x2a0] sm:$0xff]
      %v7310 = vld [vmem:[#allocation19 + $0x2a8] sm:$0xff]
      %v7311 = vld [vmem:[#allocation19 + $0x2b0] sm:$0xff]
      %v7312 = vld [vmem:[#allocation19 + $0x2b8] sm:$0xff]
      %v7313 = vld [vmem:[#allocation19 + $0x2c0] sm:$0xff]
      %v7314 = vld [vmem:[#allocation19 + $0x2c8] sm:$0xff]
      %v7315 = vld [vmem:[#allocation19 + $0x2d0] sm:$0xff]
      %v7316 = vld [vmem:[#allocation19 + $0x2d8] sm:$0xff]
      %v7317 = vld [vmem:[#allocation19 + $0x2e0] sm:$0xff]
      %v7318 = vld [vmem:[#allocation19 + $0x2e8] sm:$0xff]
      %v7319 = vld [vmem:[#allocation19 + $0x2f0] sm:$0xff]
      %v7320 = vld [vmem:[#allocation19 + $0x2f8] sm:$0xff]
      %v7321 = vld [vmem:[#allocation19 + $0x300] sm:$0xff]
      %v7322 = vld [vmem:[#allocation19 + $0x308] sm:$0xff]
      %v7323 = vld [vmem:[#allocation19 + $0x310] sm:$0xff]
      %v7324 = vld [vmem:[#allocation19 + $0x318] sm:$0xff]
      %v7325 = vld [vmem:[#allocation19 + $0x320] sm:$0xff]
      %v7326 = vld [vmem:[#allocation19 + $0x328] sm:$0xff]
      %v7327 = vld [vmem:[#allocation19 + $0x330] sm:$0xff]
      %v7328 = vld [vmem:[#allocation19 + $0x338] sm:$0xff]
      %v7329 = vld [vmem:[#allocation19 + $0x340] sm:$0xff]
      %v7330 = vld [vmem:[#allocation19 + $0x348] sm:$0xff]
      %v7331 = vld [vmem:[#allocation19 + $0x350] sm:$0xff]
      %v7332 = vld [vmem:[#allocation19 + $0x358] sm:$0xff]
      %v7333 = vld [vmem:[#allocation19 + $0x360] sm:$0xff]
      %v7334 = vld [vmem:[#allocation19 + $0x368] sm:$0xff]
      %v7335 = vld [vmem:[#allocation19 + $0x370] sm:$0xff]
      %v7336 = vld [vmem:[#allocation19 + $0x378] sm:$0xff]
      %v7337 = vld [vmem:[#allocation19 + $0x380] sm:$0xff]
      %v7338 = vld [vmem:[#allocation19 + $0x388] sm:$0xff]
      %v7339 = vld [vmem:[#allocation19 + $0x390] sm:$0xff]
      %v7340 = vld [vmem:[#allocation19 + $0x398] sm:$0xff]
      %v7341 = vld [vmem:[#allocation19 + $0x3a0] sm:$0xff]
      %v7342 = vld [vmem:[#allocation19 + $0x3a8] sm:$0xff]
      %v7343 = vld [vmem:[#allocation19 + $0x3b0] sm:$0xff]
      %v7344 = vld [vmem:[#allocation19 + $0x3b8] sm:$0xff]
      %v7345 = vld [vmem:[#allocation19 + $0x3c0] sm:$0xff]
      %v7346 = vld [vmem:[#allocation19 + $0x3c8] sm:$0xff]
      %v7347 = vld [vmem:[#allocation19 + $0x3d0] sm:$0xff]
      %v7348 = vld [vmem:[#allocation19 + $0x3d8] sm:$0xff]
      %v7349 = vld [vmem:[#allocation19 + $0x3e0] sm:$0xff]
      %v7350 = vld [vmem:[#allocation19 + $0x3e8] sm:$0xff]
      %v7351 = vld [vmem:[#allocation19 + $0x3f0] sm:$0xff]
      %v7352 = vld [vmem:[#allocation19 + $0x3f8] sm:$0xff]
      %v7353 = vpack.c.bf16 %v5251, %v5251
      %v7354 = vpack.c.bf16 %v5252, %v5252
      %v7355 = vpack.c.bf16 %v5253, %v5253
      %v7356 = vpack.c.bf16 %v5254, %v5254
      %v7357 = vld [vmem:[#allocation21] sm:$0xff]
      %v7358 = vld [vmem:[#allocation21 + $0x8] sm:$0xff]
      %v7359 = vld [vmem:[#allocation21 + $0x10] sm:$0xff]
      %v7360 = vld [vmem:[#allocation21 + $0x18] sm:$0xff]
      %v7361 = vld [vmem:[#allocation21 + $0x20] sm:$0xff]
      %v7362 = vld [vmem:[#allocation21 + $0x28] sm:$0xff]
      %v7363 = vld [vmem:[#allocation21 + $0x30] sm:$0xff]
      %v7364 = vld [vmem:[#allocation21 + $0x38] sm:$0xff]
      %v7365 = vld [vmem:[#allocation21 + $0x40] sm:$0xff]
      %v7366 = vld [vmem:[#allocation21 + $0x48] sm:$0xff]
      %v7367 = vld [vmem:[#allocation21 + $0x50] sm:$0xff]
      %v7368 = vld [vmem:[#allocation21 + $0x58] sm:$0xff]
      %v7369 = vld [vmem:[#allocation21 + $0x60] sm:$0xff]
      %v7370 = vld [vmem:[#allocation21 + $0x68] sm:$0xff]
      %v7371 = vld [vmem:[#allocation21 + $0x70] sm:$0xff]
      %v7372 = vld [vmem:[#allocation21 + $0x78] sm:$0xff]
      %v7373 = vld [vmem:[#allocation21 + $0x80] sm:$0xff]
      %v7374 = vld [vmem:[#allocation21 + $0x88] sm:$0xff]
      %v7375 = vld [vmem:[#allocation21 + $0x90] sm:$0xff]
      %v7376 = vld [vmem:[#allocation21 + $0x98] sm:$0xff]
      %v7377 = vld [vmem:[#allocation21 + $0xa0] sm:$0xff]
      %v7378 = vld [vmem:[#allocation21 + $0xa8] sm:$0xff]
      %v7379 = vld [vmem:[#allocation21 + $0xb0] sm:$0xff]
      %v7380 = vld [vmem:[#allocation21 + $0xb8] sm:$0xff]
      %v7381 = vld [vmem:[#allocation21 + $0xc0] sm:$0xff]
      %v7382 = vld [vmem:[#allocation21 + $0xc8] sm:$0xff]
      %v7383 = vld [vmem:[#allocation21 + $0xd0] sm:$0xff]
      %v7384 = vld [vmem:[#allocation21 + $0xd8] sm:$0xff]
      %v7385 = vld [vmem:[#allocation21 + $0xe0] sm:$0xff]
      %v7386 = vld [vmem:[#allocation21 + $0xe8] sm:$0xff]
      %v7387 = vld [vmem:[#allocation21 + $0xf0] sm:$0xff]
      %v7388 = vld [vmem:[#allocation21 + $0xf8] sm:$0xff]
      %v7389 = vld [vmem:[#allocation21 + $0x100] sm:$0xff]
      %v7390 = vld [vmem:[#allocation21 + $0x108] sm:$0xff]
      %v7391 = vld [vmem:[#allocation21 + $0x110] sm:$0xff]
      %v7392 = vld [vmem:[#allocation21 + $0x118] sm:$0xff]
      %v7393 = vld [vmem:[#allocation21 + $0x120] sm:$0xff]
      %v7394 = vld [vmem:[#allocation21 + $0x128] sm:$0xff]
      %v7395 = vld [vmem:[#allocation21 + $0x130] sm:$0xff]
      %v7396 = vld [vmem:[#allocation21 + $0x138] sm:$0xff]
      %v7397 = vld [vmem:[#allocation21 + $0x140] sm:$0xff]
      %v7398 = vld [vmem:[#allocation21 + $0x148] sm:$0xff]
      %v7399 = vld [vmem:[#allocation21 + $0x150] sm:$0xff]
      %v7400 = vld [vmem:[#allocation21 + $0x158] sm:$0xff]
      %v7401 = vld [vmem:[#allocation21 + $0x160] sm:$0xff]
      %v7402 = vld [vmem:[#allocation21 + $0x168] sm:$0xff]
      %v7403 = vld [vmem:[#allocation21 + $0x170] sm:$0xff]
      %v7404 = vld [vmem:[#allocation21 + $0x178] sm:$0xff]
      %v7405 = vld [vmem:[#allocation21 + $0x180] sm:$0xff]
      %v7406 = vld [vmem:[#allocation21 + $0x188] sm:$0xff]
      %v7407 = vld [vmem:[#allocation21 + $0x190] sm:$0xff]
      %v7408 = vld [vmem:[#allocation21 + $0x198] sm:$0xff]
      %v7409 = vld [vmem:[#allocation21 + $0x1a0] sm:$0xff]
      %v7410 = vld [vmem:[#allocation21 + $0x1a8] sm:$0xff]
      %v7411 = vld [vmem:[#allocation21 + $0x1b0] sm:$0xff]
      %v7412 = vld [vmem:[#allocation21 + $0x1b8] sm:$0xff]
      %v7413 = vld [vmem:[#allocation21 + $0x1c0] sm:$0xff]
      %v7414 = vld [vmem:[#allocation21 + $0x1c8] sm:$0xff]
      %v7415 = vld [vmem:[#allocation21 + $0x1d0] sm:$0xff]
      %v7416 = vld [vmem:[#allocation21 + $0x1d8] sm:$0xff]
      %v7417 = vld [vmem:[#allocation21 + $0x1e0] sm:$0xff]
      %v7418 = vld [vmem:[#allocation21 + $0x1e8] sm:$0xff]
      %v7419 = vld [vmem:[#allocation21 + $0x1f0] sm:$0xff]
      %v7420 = vld [vmem:[#allocation21 + $0x1f8] sm:$0xff]
      %v7421 = vld [vmem:[#allocation21 + $0x200] sm:$0xff]
      %v7422 = vld [vmem:[#allocation21 + $0x208] sm:$0xff]
      %v7423 = vld [vmem:[#allocation21 + $0x210] sm:$0xff]
      %v7424 = vld [vmem:[#allocation21 + $0x218] sm:$0xff]
      %v7425 = vld [vmem:[#allocation21 + $0x220] sm:$0xff]
      %v7426 = vld [vmem:[#allocation21 + $0x228] sm:$0xff]
      %v7427 = vld [vmem:[#allocation21 + $0x230] sm:$0xff]
      %v7428 = vld [vmem:[#allocation21 + $0x238] sm:$0xff]
      %v7429 = vld [vmem:[#allocation21 + $0x240] sm:$0xff]
      %v7430 = vld [vmem:[#allocation21 + $0x248] sm:$0xff]
      %v7431 = vld [vmem:[#allocation21 + $0x250] sm:$0xff]
      %v7432 = vld [vmem:[#allocation21 + $0x258] sm:$0xff]
      %v7433 = vld [vmem:[#allocation21 + $0x260] sm:$0xff]
      %v7434 = vld [vmem:[#allocation21 + $0x268] sm:$0xff]
      %v7435 = vld [vmem:[#allocation21 + $0x270] sm:$0xff]
      %v7436 = vld [vmem:[#allocation21 + $0x278] sm:$0xff]
      %v7437 = vld [vmem:[#allocation21 + $0x280] sm:$0xff]
      %v7438 = vld [vmem:[#allocation21 + $0x288] sm:$0xff]
      %v7439 = vld [vmem:[#allocation21 + $0x290] sm:$0xff]
      %v7440 = vld [vmem:[#allocation21 + $0x298] sm:$0xff]
      %v7441 = vld [vmem:[#allocation21 + $0x2a0] sm:$0xff]
      %v7442 = vld [vmem:[#allocation21 + $0x2a8] sm:$0xff]
      %v7443 = vld [vmem:[#allocation21 + $0x2b0] sm:$0xff]
      %v7444 = vld [vmem:[#allocation21 + $0x2b8] sm:$0xff]
      %v7445 = vld [vmem:[#allocation21 + $0x2c0] sm:$0xff]
      %v7446 = vld [vmem:[#allocation21 + $0x2c8] sm:$0xff]
      %v7447 = vld [vmem:[#allocation21 + $0x2d0] sm:$0xff]
      %v7448 = vld [vmem:[#allocation21 + $0x2d8] sm:$0xff]
      %v7449 = vld [vmem:[#allocation21 + $0x2e0] sm:$0xff]
      %v7450 = vld [vmem:[#allocation21 + $0x2e8] sm:$0xff]
      %v7451 = vld [vmem:[#allocation21 + $0x2f0] sm:$0xff]
      %v7452 = vld [vmem:[#allocation21 + $0x2f8] sm:$0xff]
      %v7453 = vld [vmem:[#allocation21 + $0x300] sm:$0xff]
      %v7454 = vld [vmem:[#allocation21 + $0x308] sm:$0xff]
      %v7455 = vld [vmem:[#allocation21 + $0x310] sm:$0xff]
      %v7456 = vld [vmem:[#allocation21 + $0x318] sm:$0xff]
      %v7457 = vld [vmem:[#allocation21 + $0x320] sm:$0xff]
      %v7458 = vld [vmem:[#allocation21 + $0x328] sm:$0xff]
      %v7459 = vld [vmem:[#allocation21 + $0x330] sm:$0xff]
      %v7460 = vld [vmem:[#allocation21 + $0x338] sm:$0xff]
      %v7461 = vld [vmem:[#allocation21 + $0x340] sm:$0xff]
      %v7462 = vld [vmem:[#allocation21 + $0x348] sm:$0xff]
      %v7463 = vld [vmem:[#allocation21 + $0x350] sm:$0xff]
      %v7464 = vld [vmem:[#allocation21 + $0x358] sm:$0xff]
      %v7465 = vld [vmem:[#allocation21 + $0x360] sm:$0xff]
      %v7466 = vld [vmem:[#allocation21 + $0x368] sm:$0xff]
      %v7467 = vld [vmem:[#allocation21 + $0x370] sm:$0xff]
      %v7468 = vld [vmem:[#allocation21 + $0x378] sm:$0xff]
      %v7469 = vld [vmem:[#allocation21 + $0x380] sm:$0xff]
      %v7470 = vld [vmem:[#allocation21 + $0x388] sm:$0xff]
      %v7471 = vld [vmem:[#allocation21 + $0x390] sm:$0xff]
      %v7472 = vld [vmem:[#allocation21 + $0x398] sm:$0xff]
      %v7473 = vld [vmem:[#allocation21 + $0x3a0] sm:$0xff]
      %v7474 = vld [vmem:[#allocation21 + $0x3a8] sm:$0xff]
      %v7475 = vld [vmem:[#allocation21 + $0x3b0] sm:$0xff]
      %v7476 = vld [vmem:[#allocation21 + $0x3b8] sm:$0xff]
      %v7477 = vld [vmem:[#allocation21 + $0x3c0] sm:$0xff]
      %v7478 = vld [vmem:[#allocation21 + $0x3c8] sm:$0xff]
      %v7479 = vld [vmem:[#allocation21 + $0x3d0] sm:$0xff]
      %v7480 = vld [vmem:[#allocation21 + $0x3d8] sm:$0xff]
      %v7481 = vld [vmem:[#allocation21 + $0x3e0] sm:$0xff]
      %v7482 = vld [vmem:[#allocation21 + $0x3e8] sm:$0xff]
      %v7483 = vld [vmem:[#allocation21 + $0x3f0] sm:$0xff]
      %v7484 = vld [vmem:[#allocation21 + $0x3f8] sm:$0xff]
      %v7613 = vunpack.c.l.b16 %v7357
      %v7614 = vunpack.c.h.b16 %v7357
      %v7615 = vunpack.c.l.b16 %v7358
      %v7616 = vunpack.c.h.b16 %v7358
      %v7617 = vunpack.c.l.b16 %v7359
      %v7618 = vunpack.c.h.b16 %v7359
      %v7619 = vunpack.c.l.b16 %v7360
      %v7620 = vunpack.c.h.b16 %v7360
      %v7621 = vunpack.c.l.b16 %v7361
      %v7622 = vunpack.c.h.b16 %v7361
      %v7623 = vunpack.c.l.b16 %v7362
      %v7624 = vunpack.c.h.b16 %v7362
      %v7625 = vunpack.c.l.b16 %v7363
      %v7626 = vunpack.c.h.b16 %v7363
      %v7627 = vunpack.c.l.b16 %v7364
      %v7628 = vunpack.c.h.b16 %v7364
      %v7629 = vunpack.c.l.b16 %v7365
      %v7630 = vunpack.c.h.b16 %v7365
      %v7631 = vunpack.c.l.b16 %v7366
      %v7632 = vunpack.c.h.b16 %v7366
      %v7633 = vunpack.c.l.b16 %v7367
      %v7634 = vunpack.c.h.b16 %v7367
      %v7635 = vunpack.c.l.b16 %v7368
      %v7636 = vunpack.c.h.b16 %v7368
      %v7637 = vunpack.c.l.b16 %v7369
      %v7638 = vunpack.c.h.b16 %v7369
      %v7639 = vunpack.c.l.b16 %v7370
      %v7640 = vunpack.c.h.b16 %v7370
      %v7641 = vunpack.c.l.b16 %v7371
      %v7642 = vunpack.c.h.b16 %v7371
      %v7643 = vunpack.c.l.b16 %v7372
      %v7644 = vunpack.c.h.b16 %v7372
      %v7645 = vunpack.c.l.b16 %v7373
      %v7646 = vunpack.c.h.b16 %v7373
      %v7647 = vunpack.c.l.b16 %v7374
      %v7648 = vunpack.c.h.b16 %v7374
      %v7649 = vunpack.c.l.b16 %v7375
      %v7650 = vunpack.c.h.b16 %v7375
      %v7651 = vunpack.c.l.b16 %v7376
      %v7652 = vunpack.c.h.b16 %v7376
      %v7653 = vunpack.c.l.b16 %v7377
      %v7654 = vunpack.c.h.b16 %v7377
      %v7655 = vunpack.c.l.b16 %v7378
      %v7656 = vunpack.c.h.b16 %v7378
      %v7657 = vunpack.c.l.b16 %v7379
      %v7658 = vunpack.c.h.b16 %v7379
      %v7659 = vunpack.c.l.b16 %v7380
      %v7660 = vunpack.c.h.b16 %v7380
      %v7661 = vunpack.c.l.b16 %v7381
      %v7662 = vunpack.c.h.b16 %v7381
      %v7663 = vunpack.c.l.b16 %v7382
      %v7664 = vunpack.c.h.b16 %v7382
      %v7665 = vunpack.c.l.b16 %v7383
      %v7666 = vunpack.c.h.b16 %v7383
      %v7667 = vunpack.c.l.b16 %v7384
      %v7668 = vunpack.c.h.b16 %v7384
      %v7669 = vunpack.c.l.b16 %v7385
      %v7670 = vunpack.c.h.b16 %v7385
      %v7671 = vunpack.c.l.b16 %v7386
      %v7672 = vunpack.c.h.b16 %v7386
      %v7673 = vunpack.c.l.b16 %v7387
      %v7674 = vunpack.c.h.b16 %v7387
      %v7675 = vunpack.c.l.b16 %v7388
      %v7676 = vunpack.c.h.b16 %v7388
      %v7677 = vunpack.c.l.b16 %v7389
      %v7678 = vunpack.c.h.b16 %v7389
      %v7679 = vunpack.c.l.b16 %v7390
      %v7680 = vunpack.c.h.b16 %v7390
      %v7681 = vunpack.c.l.b16 %v7391
      %v7682 = vunpack.c.h.b16 %v7391
      %v7683 = vunpack.c.l.b16 %v7392
      %v7684 = vunpack.c.h.b16 %v7392
      %v7685 = vunpack.c.l.b16 %v7393
      %v7686 = vunpack.c.h.b16 %v7393
      %v7687 = vunpack.c.l.b16 %v7394
      %v7688 = vunpack.c.h.b16 %v7394
      %v7689 = vunpack.c.l.b16 %v7395
      %v7690 = vunpack.c.h.b16 %v7395
      %v7691 = vunpack.c.l.b16 %v7396
      %v7692 = vunpack.c.h.b16 %v7396
      %v7693 = vunpack.c.l.b16 %v7397
      %v7694 = vunpack.c.h.b16 %v7397
      %v7695 = vunpack.c.l.b16 %v7398
      %v7696 = vunpack.c.h.b16 %v7398
      %v7697 = vunpack.c.l.b16 %v7399
      %v7698 = vunpack.c.h.b16 %v7399
      %v7699 = vunpack.c.l.b16 %v7400
      %v7700 = vunpack.c.h.b16 %v7400
      %v7701 = vunpack.c.l.b16 %v7401
      %v7702 = vunpack.c.h.b16 %v7401
      %v7703 = vunpack.c.l.b16 %v7402
      %v7704 = vunpack.c.h.b16 %v7402
      %v7705 = vunpack.c.l.b16 %v7403
      %v7706 = vunpack.c.h.b16 %v7403
      %v7707 = vunpack.c.l.b16 %v7404
      %v7708 = vunpack.c.h.b16 %v7404
      %v7709 = vunpack.c.l.b16 %v7405
      %v7710 = vunpack.c.h.b16 %v7405
      %v7711 = vunpack.c.l.b16 %v7406
      %v7712 = vunpack.c.h.b16 %v7406
      %v7713 = vunpack.c.l.b16 %v7407
      %v7714 = vunpack.c.h.b16 %v7407
      %v7715 = vunpack.c.l.b16 %v7408
      %v7716 = vunpack.c.h.b16 %v7408
      %v7717 = vunpack.c.l.b16 %v7409
      %v7718 = vunpack.c.h.b16 %v7409
      %v7719 = vunpack.c.l.b16 %v7410
      %v7720 = vunpack.c.h.b16 %v7410
      %v7721 = vunpack.c.l.b16 %v7411
      %v7722 = vunpack.c.h.b16 %v7411
      %v7723 = vunpack.c.l.b16 %v7412
      %v7724 = vunpack.c.h.b16 %v7412
      %v7725 = vunpack.c.l.b16 %v7413
      %v7726 = vunpack.c.h.b16 %v7413
      %v7727 = vunpack.c.l.b16 %v7414
      %v7728 = vunpack.c.h.b16 %v7414
      %v7729 = vunpack.c.l.b16 %v7415
      %v7730 = vunpack.c.h.b16 %v7415
      %v7731 = vunpack.c.l.b16 %v7416
      %v7732 = vunpack.c.h.b16 %v7416
      %v7733 = vunpack.c.l.b16 %v7417
      %v7734 = vunpack.c.h.b16 %v7417
      %v7735 = vunpack.c.l.b16 %v7418
      %v7736 = vunpack.c.h.b16 %v7418
      %v7737 = vunpack.c.l.b16 %v7419
      %v7738 = vunpack.c.h.b16 %v7419
      %v7739 = vunpack.c.l.b16 %v7420
      %v7740 = vunpack.c.h.b16 %v7420
      %v7741 = vunpack.c.l.b16 %v7421
      %v7742 = vunpack.c.h.b16 %v7421
      %v7743 = vunpack.c.l.b16 %v7422
      %v7744 = vunpack.c.h.b16 %v7422
      %v7745 = vunpack.c.l.b16 %v7423
      %v7746 = vunpack.c.h.b16 %v7423
      %v7747 = vunpack.c.l.b16 %v7424
      %v7748 = vunpack.c.h.b16 %v7424
      %v7749 = vunpack.c.l.b16 %v7425
      %v7750 = vunpack.c.h.b16 %v7425
      %v7751 = vunpack.c.l.b16 %v7426
      %v7752 = vunpack.c.h.b16 %v7426
      %v7753 = vunpack.c.l.b16 %v7427
      %v7754 = vunpack.c.h.b16 %v7427
      %v7755 = vunpack.c.l.b16 %v7428
      %v7756 = vunpack.c.h.b16 %v7428
      %v7757 = vunpack.c.l.b16 %v7429
      %v7758 = vunpack.c.h.b16 %v7429
      %v7759 = vunpack.c.l.b16 %v7430
      %v7760 = vunpack.c.h.b16 %v7430
      %v7761 = vunpack.c.l.b16 %v7431
      %v7762 = vunpack.c.h.b16 %v7431
      %v7763 = vunpack.c.l.b16 %v7432
      %v7764 = vunpack.c.h.b16 %v7432
      %v7765 = vunpack.c.l.b16 %v7433
      %v7766 = vunpack.c.h.b16 %v7433
      %v7767 = vunpack.c.l.b16 %v7434
      %v7768 = vunpack.c.h.b16 %v7434
      %v7769 = vunpack.c.l.b16 %v7435
      %v7770 = vunpack.c.h.b16 %v7435
      %v7771 = vunpack.c.l.b16 %v7436
      %v7772 = vunpack.c.h.b16 %v7436
      %v7773 = vunpack.c.l.b16 %v7437
      %v7774 = vunpack.c.h.b16 %v7437
      %v7775 = vunpack.c.l.b16 %v7438
      %v7776 = vunpack.c.h.b16 %v7438
      %v7777 = vunpack.c.l.b16 %v7439
      %v7778 = vunpack.c.h.b16 %v7439
      %v7779 = vunpack.c.l.b16 %v7440
      %v7780 = vunpack.c.h.b16 %v7440
      %v7781 = vunpack.c.l.b16 %v7441
      %v7782 = vunpack.c.h.b16 %v7441
      %v7783 = vunpack.c.l.b16 %v7442
      %v7784 = vunpack.c.h.b16 %v7442
      %v7785 = vunpack.c.l.b16 %v7443
      %v7786 = vunpack.c.h.b16 %v7443
      %v7787 = vunpack.c.l.b16 %v7444
      %v7788 = vunpack.c.h.b16 %v7444
      %v7789 = vunpack.c.l.b16 %v7445
      %v7790 = vunpack.c.h.b16 %v7445
      %v7791 = vunpack.c.l.b16 %v7446
      %v7792 = vunpack.c.h.b16 %v7446
      %v7793 = vunpack.c.l.b16 %v7447
      %v7794 = vunpack.c.h.b16 %v7447
      %v7795 = vunpack.c.l.b16 %v7448
      %v7796 = vunpack.c.h.b16 %v7448
      %v7797 = vunpack.c.l.b16 %v7449
      %v7798 = vunpack.c.h.b16 %v7449
      %v7799 = vunpack.c.l.b16 %v7450
      %v7800 = vunpack.c.h.b16 %v7450
      %v7801 = vunpack.c.l.b16 %v7451
      %v7802 = vunpack.c.h.b16 %v7451
      %v7803 = vunpack.c.l.b16 %v7452
      %v7804 = vunpack.c.h.b16 %v7452
      %v7805 = vunpack.c.l.b16 %v7453
      %v7806 = vunpack.c.h.b16 %v7453
      %v7807 = vunpack.c.l.b16 %v7454
      %v7808 = vunpack.c.h.b16 %v7454
      %v7809 = vunpack.c.l.b16 %v7455
      %v7810 = vunpack.c.h.b16 %v7455
      %v7811 = vunpack.c.l.b16 %v7456
      %v7812 = vunpack.c.h.b16 %v7456
      %v7813 = vunpack.c.l.b16 %v7457
      %v7814 = vunpack.c.h.b16 %v7457
      %v7815 = vunpack.c.l.b16 %v7458
      %v7816 = vunpack.c.h.b16 %v7458
      %v7817 = vunpack.c.l.b16 %v7459
      %v7818 = vunpack.c.h.b16 %v7459
      %v7819 = vunpack.c.l.b16 %v7460
      %v7820 = vunpack.c.h.b16 %v7460
      %v7821 = vunpack.c.l.b16 %v7461
      %v7822 = vunpack.c.h.b16 %v7461
      %v7823 = vunpack.c.l.b16 %v7462
      %v7824 = vunpack.c.h.b16 %v7462
      %v7825 = vunpack.c.l.b16 %v7463
      %v7826 = vunpack.c.h.b16 %v7463
      %v7827 = vunpack.c.l.b16 %v7464
      %v7828 = vunpack.c.h.b16 %v7464
      %v7829 = vunpack.c.l.b16 %v7465
      %v7830 = vunpack.c.h.b16 %v7465
      %v7831 = vunpack.c.l.b16 %v7466
      %v7832 = vunpack.c.h.b16 %v7466
      %v7833 = vunpack.c.l.b16 %v7467
      %v7834 = vunpack.c.h.b16 %v7467
      %v7835 = vunpack.c.l.b16 %v7468
      %v7836 = vunpack.c.h.b16 %v7468
      %v7837 = vunpack.c.l.b16 %v7469
      %v7838 = vunpack.c.h.b16 %v7469
      %v7839 = vunpack.c.l.b16 %v7470
      %v7840 = vunpack.c.h.b16 %v7470
      %v7841 = vunpack.c.l.b16 %v7471
      %v7842 = vunpack.c.h.b16 %v7471
      %v7843 = vunpack.c.l.b16 %v7472
      %v7844 = vunpack.c.h.b16 %v7472
      %v7845 = vunpack.c.l.b16 %v7473
      %v7846 = vunpack.c.h.b16 %v7473
      %v7847 = vunpack.c.l.b16 %v7474
      %v7848 = vunpack.c.h.b16 %v7474
      %v7849 = vunpack.c.l.b16 %v7475
      %v7850 = vunpack.c.h.b16 %v7475
      %v7851 = vunpack.c.l.b16 %v7476
      %v7852 = vunpack.c.h.b16 %v7476
      %v7853 = vunpack.c.l.b16 %v7477
      %v7854 = vunpack.c.h.b16 %v7477
      %v7855 = vunpack.c.l.b16 %v7478
      %v7856 = vunpack.c.h.b16 %v7478
      %v7857 = vunpack.c.l.b16 %v7479
      %v7858 = vunpack.c.h.b16 %v7479
      %v7859 = vunpack.c.l.b16 %v7480
      %v7860 = vunpack.c.h.b16 %v7480
      %v7861 = vunpack.c.l.b16 %v7481
      %v7862 = vunpack.c.h.b16 %v7481
      %v7863 = vunpack.c.l.b16 %v7482
      %v7864 = vunpack.c.h.b16 %v7482
      %v7865 = vunpack.c.l.b16 %v7483
      %v7866 = vunpack.c.h.b16 %v7483
      %v7867 = vunpack.c.l.b16 %v7484
      %v7868 = vunpack.c.h.b16 %v7484
      %v7869 = vpack.c.b16 %v7617, %v7613
      %v7870 = vpack.c.b16 %v7618, %v7614
      %v7871 = vpack.c.b16 %v7619, %v7615
      %v7872 = vpack.c.b16 %v7620, %v7616
      %v7873 = vpack.c.b16 %v7625, %v7621
      %v7874 = vpack.c.b16 %v7626, %v7622
      %v7875 = vpack.c.b16 %v7627, %v7623
      %v7876 = vpack.c.b16 %v7628, %v7624
      %v7877 = vpack.c.b16 %v7633, %v7629
      %v7878 = vpack.c.b16 %v7634, %v7630
      %v7879 = vpack.c.b16 %v7635, %v7631
      %v7880 = vpack.c.b16 %v7636, %v7632
      %v7881 = vpack.c.b16 %v7641, %v7637
      %v7882 = vpack.c.b16 %v7642, %v7638
      %v7883 = vpack.c.b16 %v7643, %v7639
      %v7884 = vpack.c.b16 %v7644, %v7640
      %v7885 = vpack.c.b16 %v7649, %v7645
      %v7886 = vpack.c.b16 %v7650, %v7646
      %v7887 = vpack.c.b16 %v7651, %v7647
      %v7888 = vpack.c.b16 %v7652, %v7648
      %v7889 = vpack.c.b16 %v7657, %v7653
      %v7890 = vpack.c.b16 %v7658, %v7654
      %v7891 = vpack.c.b16 %v7659, %v7655
      %v7892 = vpack.c.b16 %v7660, %v7656
      %v7893 = vpack.c.b16 %v7665, %v7661
      %v7894 = vpack.c.b16 %v7666, %v7662
      %v7895 = vpack.c.b16 %v7667, %v7663
      %v7896 = vpack.c.b16 %v7668, %v7664
      %v7897 = vpack.c.b16 %v7673, %v7669
      %v7898 = vpack.c.b16 %v7674, %v7670
      %v7899 = vpack.c.b16 %v7675, %v7671
      %v7900 = vpack.c.b16 %v7676, %v7672
      %v7901 = vpack.c.b16 %v7681, %v7677
      %v7902 = vpack.c.b16 %v7682, %v7678
      %v7903 = vpack.c.b16 %v7683, %v7679
      %v7904 = vpack.c.b16 %v7684, %v7680
      %v7905 = vpack.c.b16 %v7689, %v7685
      %v7906 = vpack.c.b16 %v7690, %v7686
      %v7907 = vpack.c.b16 %v7691, %v7687
      %v7908 = vpack.c.b16 %v7692, %v7688
      %v7909 = vpack.c.b16 %v7697, %v7693
      %v7910 = vpack.c.b16 %v7698, %v7694
      %v7911 = vpack.c.b16 %v7699, %v7695
      %v7912 = vpack.c.b16 %v7700, %v7696
      %v7913 = vpack.c.b16 %v7705, %v7701
      %v7914 = vpack.c.b16 %v7706, %v7702
      %v7915 = vpack.c.b16 %v7707, %v7703
      %v7916 = vpack.c.b16 %v7708, %v7704
      %v7917 = vpack.c.b16 %v7713, %v7709
      %v7918 = vpack.c.b16 %v7714, %v7710
      %v7919 = vpack.c.b16 %v7715, %v7711
      %v7920 = vpack.c.b16 %v7716, %v7712
      %v7921 = vpack.c.b16 %v7721, %v7717
      %v7922 = vpack.c.b16 %v7722, %v7718
      %v7923 = vpack.c.b16 %v7723, %v7719
      %v7924 = vpack.c.b16 %v7724, %v7720
      %v7925 = vpack.c.b16 %v7729, %v7725
      %v7926 = vpack.c.b16 %v7730, %v7726
      %v7927 = vpack.c.b16 %v7731, %v7727
      %v7928 = vpack.c.b16 %v7732, %v7728
      %v7929 = vpack.c.b16 %v7737, %v7733
      %v7930 = vpack.c.b16 %v7738, %v7734
      %v7931 = vpack.c.b16 %v7739, %v7735
      %v7932 = vpack.c.b16 %v7740, %v7736
      %v7933 = vpack.c.b16 %v7745, %v7741
      %v7934 = vpack.c.b16 %v7746, %v7742
      %v7935 = vpack.c.b16 %v7747, %v7743
      %v7936 = vpack.c.b16 %v7748, %v7744
      %v7937 = vpack.c.b16 %v7753, %v7749
      %v7938 = vpack.c.b16 %v7754, %v7750
      %v7939 = vpack.c.b16 %v7755, %v7751
      %v7940 = vpack.c.b16 %v7756, %v7752
      %v7941 = vpack.c.b16 %v7761, %v7757
      %v7942 = vpack.c.b16 %v7762, %v7758
      %v7943 = vpack.c.b16 %v7763, %v7759
      %v7944 = vpack.c.b16 %v7764, %v7760
      %v7945 = vpack.c.b16 %v7769, %v7765
      %v7946 = vpack.c.b16 %v7770, %v7766
      %v7947 = vpack.c.b16 %v7771, %v7767
      %v7948 = vpack.c.b16 %v7772, %v7768
      %v7949 = vpack.c.b16 %v7777, %v7773
      %v7950 = vpack.c.b16 %v7778, %v7774
      %v7951 = vpack.c.b16 %v7779, %v7775
      %v7952 = vpack.c.b16 %v7780, %v7776
      %v7953 = vpack.c.b16 %v7785, %v7781
      %v7954 = vpack.c.b16 %v7786, %v7782
      %v7955 = vpack.c.b16 %v7787, %v7783
      %v7956 = vpack.c.b16 %v7788, %v7784
      %v7957 = vpack.c.b16 %v7793, %v7789
      %v7958 = vpack.c.b16 %v7794, %v7790
      %v7959 = vpack.c.b16 %v7795, %v7791
      %v7960 = vpack.c.b16 %v7796, %v7792
      %v7961 = vpack.c.b16 %v7801, %v7797
      %v7962 = vpack.c.b16 %v7802, %v7798
      %v7963 = vpack.c.b16 %v7803, %v7799
      %v7964 = vpack.c.b16 %v7804, %v7800
      %v7965 = vpack.c.b16 %v7809, %v7805
      %v7966 = vpack.c.b16 %v7810, %v7806
      %v7967 = vpack.c.b16 %v7811, %v7807
      %v7968 = vpack.c.b16 %v7812, %v7808
      %v7969 = vpack.c.b16 %v7817, %v7813
      %v7970 = vpack.c.b16 %v7818, %v7814
      %v7971 = vpack.c.b16 %v7819, %v7815
      %v7972 = vpack.c.b16 %v7820, %v7816
      %v7973 = vpack.c.b16 %v7825, %v7821
      %v7974 = vpack.c.b16 %v7826, %v7822
      %v7975 = vpack.c.b16 %v7827, %v7823
      %v7976 = vpack.c.b16 %v7828, %v7824
      %v7977 = vpack.c.b16 %v7833, %v7829
      %v7978 = vpack.c.b16 %v7834, %v7830
      %v7979 = vpack.c.b16 %v7835, %v7831
      %v7980 = vpack.c.b16 %v7836, %v7832
      %v7981 = vpack.c.b16 %v7841, %v7837
      %v7982 = vpack.c.b16 %v7842, %v7838
      %v7983 = vpack.c.b16 %v7843, %v7839
      %v7984 = vpack.c.b16 %v7844, %v7840
      %v7985 = vpack.c.b16 %v7849, %v7845
      %v7986 = vpack.c.b16 %v7850, %v7846
      %v7987 = vpack.c.b16 %v7851, %v7847
      %v7988 = vpack.c.b16 %v7852, %v7848
      %v7989 = vpack.c.b16 %v7857, %v7853
      %v7990 = vpack.c.b16 %v7858, %v7854
      %v7991 = vpack.c.b16 %v7859, %v7855
      %v7992 = vpack.c.b16 %v7860, %v7856
      %v7993 = vpack.c.b16 %v7865, %v7861
      %v7994 = vpack.c.b16 %v7866, %v7862
      %v7995 = vpack.c.b16 %v7867, %v7863
      %v7996 = vpack.c.b16 %v7868, %v7864
      %8125 = vmatpush.bf16.msra.mxu0 %v7897
      %8126 = vmatpush.bf16.msra.mxu0 %v7893
      %8127 = vmatpush.bf16.msra.mxu0 %v7889
      %8128 = vmatpush.bf16.msra.mxu0 %v7885
      %8129 = vmatpush.bf16.msra.mxu0 %v7881
      %8130 = vmatpush.bf16.msra.mxu0 %v7877
      %8131 = vmatpush.bf16.msra.mxu0 %v7873
      %8132 = vmatpush.bf16.msra.mxu0 %v7869
      %8133 = vmatmul.bf16.gmra.mxu0 %v7353
      %v8134 = vpop.f32.mrf.mxu0
      %v8135 = vadd.f32 0.0, %v8134
      %v8136 = vpop.f32.mrf.mxu0
      %8137 = vdwg.mxu0
      %8138 = vmatpush.bf16.msra.mxu0 %v7929
      %8139 = vmatpush.bf16.msra.mxu0 %v7925
      %8140 = vmatpush.bf16.msra.mxu0 %v7921
      %8141 = vmatpush.bf16.msra.mxu0 %v7917
      %8142 = vmatpush.bf16.msra.mxu0 %v7913
      %8143 = vmatpush.bf16.msra.mxu0 %v7909
      %8144 = vmatpush.bf16.msra.mxu0 %v7905
      %8145 = vmatpush.bf16.msra.mxu0 %v7901
      %8146 = vmatmul.bf16.gmra.mxu0 %v7354
      %v8147 = vpop.f32.mrf.mxu0
      %v8148 = vadd.f32 %v8135, %v8147
      %v8149 = vpop.f32.mrf.mxu0
      %8150 = vdwg.mxu0
      %8151 = vmatpush.bf16.msra.mxu0 %v7961
      %8152 = vmatpush.bf16.msra.mxu0 %v7957
      %8153 = vmatpush.bf16.msra.mxu0 %v7953
      %8154 = vmatpush.bf16.msra.mxu0 %v7949
      %8155 = vmatpush.bf16.msra.mxu0 %v7945
      %8156 = vmatpush.bf16.msra.mxu0 %v7941
      %8157 = vmatpush.bf16.msra.mxu0 %v7937
      %8158 = vmatpush.bf16.msra.mxu0 %v7933
      %8159 = vmatmul.bf16.gmra.mxu0 %v7355
      %v8160 = vpop.f32.mrf.mxu0
      %v8161 = vadd.f32 %v8148, %v8160
      %v8162 = vpop.f32.mrf.mxu0
      %8163 = vdwg.mxu0
      %8164 = vmatpush.bf16.msra.mxu0 %v7993
      %8165 = vmatpush.bf16.msra.mxu0 %v7989
      %8166 = vmatpush.bf16.msra.mxu0 %v7985
      %8167 = vmatpush.bf16.msra.mxu0 %v7981
      %8168 = vmatpush.bf16.msra.mxu0 %v7977
      %8169 = vmatpush.bf16.msra.mxu0 %v7973
      %8170 = vmatpush.bf16.msra.mxu0 %v7969
      %8171 = vmatpush.bf16.msra.mxu0 %v7965
      %8172 = vmatmul.bf16.gmra.mxu0 %v7356
      %v8173 = vpop.f32.mrf.mxu0
      %v8174 = vadd.f32 %v8161, %v8173
      %v8175 = vpop.f32.mrf.mxu0
      %8176 = vdwg.mxu0
      %8177 = vmatpush.bf16.msra.mxu0 %v7898
      %8178 = vmatpush.bf16.msra.mxu0 %v7894
      %8179 = vmatpush.bf16.msra.mxu0 %v7890
      %8180 = vmatpush.bf16.msra.mxu0 %v7886
      %8181 = vmatpush.bf16.msra.mxu0 %v7882
      %8182 = vmatpush.bf16.msra.mxu0 %v7878
      %8183 = vmatpush.bf16.msra.mxu0 %v7874
      %8184 = vmatpush.bf16.msra.mxu0 %v7870
      %8185 = vmatmul.bf16.gmra.mxu0 %v7353
      %v8186 = vpop.f32.mrf.mxu0
      %v8187 = vadd.f32 0.0, %v8186
      %v8188 = vpop.f32.mrf.mxu0
      %8189 = vdwg.mxu0
      %8190 = vmatpush.bf16.msra.mxu0 %v7930
      %8191 = vmatpush.bf16.msra.mxu0 %v7926
      %8192 = vmatpush.bf16.msra.mxu0 %v7922
      %8193 = vmatpush.bf16.msra.mxu0 %v7918
      %8194 = vmatpush.bf16.msra.mxu0 %v7914
      %8195 = vmatpush.bf16.msra.mxu0 %v7910
      %8196 = vmatpush.bf16.msra.mxu0 %v7906
      %8197 = vmatpush.bf16.msra.mxu0 %v7902
      %8198 = vmatmul.bf16.gmra.mxu0 %v7354
      %v8199 = vpop.f32.mrf.mxu0
      %v8200 = vadd.f32 %v8187, %v8199
      %v8201 = vpop.f32.mrf.mxu0
      %8202 = vdwg.mxu0
      %8203 = vmatpush.bf16.msra.mxu0 %v7962
      %8204 = vmatpush.bf16.msra.mxu0 %v7958
      %8205 = vmatpush.bf16.msra.mxu0 %v7954
      %8206 = vmatpush.bf16.msra.mxu0 %v7950
      %8207 = vmatpush.bf16.msra.mxu0 %v7946
      %8208 = vmatpush.bf16.msra.mxu0 %v7942
      %8209 = vmatpush.bf16.msra.mxu0 %v7938
      %8210 = vmatpush.bf16.msra.mxu0 %v7934
      %8211 = vmatmul.bf16.gmra.mxu0 %v7355
      %v8212 = vpop.f32.mrf.mxu0
      %v8213 = vadd.f32 %v8200, %v8212
      %v8214 = vpop.f32.mrf.mxu0
      %8215 = vdwg.mxu0
      %8216 = vmatpush.bf16.msra.mxu0 %v7994
      %8217 = vmatpush.bf16.msra.mxu0 %v7990
      %8218 = vmatpush.bf16.msra.mxu0 %v7986
      %8219 = vmatpush.bf16.msra.mxu0 %v7982
      %8220 = vmatpush.bf16.msra.mxu0 %v7978
      %8221 = vmatpush.bf16.msra.mxu0 %v7974
      %8222 = vmatpush.bf16.msra.mxu0 %v7970
      %8223 = vmatpush.bf16.msra.mxu0 %v7966
      %8224 = vmatmul.bf16.gmra.mxu0 %v7356
      %v8225 = vpop.f32.mrf.mxu0
      %v8226 = vadd.f32 %v8213, %v8225
      %v8227 = vpop.f32.mrf.mxu0
      %8228 = vdwg.mxu0
      %8229 = vmatpush.bf16.msra.mxu0 %v7899
      %8230 = vmatpush.bf16.msra.mxu0 %v7895
      %8231 = vmatpush.bf16.msra.mxu0 %v7891
      %8232 = vmatpush.bf16.msra.mxu0 %v7887
      %8233 = vmatpush.bf16.msra.mxu0 %v7883
      %8234 = vmatpush.bf16.msra.mxu0 %v7879
      %8235 = vmatpush.bf16.msra.mxu0 %v7875
      %8236 = vmatpush.bf16.msra.mxu0 %v7871
      %8237 = vmatmul.bf16.gmra.mxu0 %v7353
      %v8238 = vpop.f32.mrf.mxu0
      %v8239 = vadd.f32 0.0, %v8238
      %v8240 = vpop.f32.mrf.mxu0
      %8241 = vdwg.mxu0
      %8242 = vmatpush.bf16.msra.mxu0 %v7931
      %8243 = vmatpush.bf16.msra.mxu0 %v7927
      %8244 = vmatpush.bf16.msra.mxu0 %v7923
      %8245 = vmatpush.bf16.msra.mxu0 %v7919
      %8246 = vmatpush.bf16.msra.mxu0 %v7915
      %8247 = vmatpush.bf16.msra.mxu0 %v7911
      %8248 = vmatpush.bf16.msra.mxu0 %v7907
      %8249 = vmatpush.bf16.msra.mxu0 %v7903
      %8250 = vmatmul.bf16.gmra.mxu0 %v7354
      %v8251 = vpop.f32.mrf.mxu0
      %v8252 = vadd.f32 %v8239, %v8251
      %v8253 = vpop.f32.mrf.mxu0
      %8254 = vdwg.mxu0
      %8255 = vmatpush.bf16.msra.mxu0 %v7963
      %8256 = vmatpush.bf16.msra.mxu0 %v7959
      %8257 = vmatpush.bf16.msra.mxu0 %v7955
      %8258 = vmatpush.bf16.msra.mxu0 %v7951
      %8259 = vmatpush.bf16.msra.mxu0 %v7947
      %8260 = vmatpush.bf16.msra.mxu0 %v7943
      %8261 = vmatpush.bf16.msra.mxu0 %v7939
      %8262 = vmatpush.bf16.msra.mxu0 %v7935
      %8263 = vmatmul.bf16.gmra.mxu0 %v7355
      %v8264 = vpop.f32.mrf.mxu0
      %v8265 = vadd.f32 %v8252, %v8264
      %v8266 = vpop.f32.mrf.mxu0
      %8267 = vdwg.mxu0
      %8268 = vmatpush.bf16.msra.mxu0 %v7995
      %8269 = vmatpush.bf16.msra.mxu0 %v7991
      %8270 = vmatpush.bf16.msra.mxu0 %v7987
      %8271 = vmatpush.bf16.msra.mxu0 %v7983
      %8272 = vmatpush.bf16.msra.mxu0 %v7979
      %8273 = vmatpush.bf16.msra.mxu0 %v7975
      %8274 = vmatpush.bf16.msra.mxu0 %v7971
      %8275 = vmatpush.bf16.msra.mxu0 %v7967
      %8276 = vmatmul.bf16.gmra.mxu0 %v7356
      %v8277 = vpop.f32.mrf.mxu0
      %v8278 = vadd.f32 %v8265, %v8277
      %v8279 = vpop.f32.mrf.mxu0
      %8280 = vdwg.mxu0
      %8281 = vmatpush.bf16.msra.mxu0 %v7900
      %8282 = vmatpush.bf16.msra.mxu0 %v7896
      %8283 = vmatpush.bf16.msra.mxu0 %v7892
      %8284 = vmatpush.bf16.msra.mxu0 %v7888
      %8285 = vmatpush.bf16.msra.mxu0 %v7884
      %8286 = vmatpush.bf16.msra.mxu0 %v7880
      %8287 = vmatpush.bf16.msra.mxu0 %v7876
      %8288 = vmatpush.bf16.msra.mxu0 %v7872
      %8289 = vmatmul.bf16.gmra.mxu0 %v7353
      %v8290 = vpop.f32.mrf.mxu0
      %v8291 = vadd.f32 0.0, %v8290
      %v8292 = vpop.f32.mrf.mxu0
      %8293 = vdwg.mxu0
      %8294 = vmatpush.bf16.msra.mxu0 %v7932
      %8295 = vmatpush.bf16.msra.mxu0 %v7928
      %8296 = vmatpush.bf16.msra.mxu0 %v7924
      %8297 = vmatpush.bf16.msra.mxu0 %v7920
      %8298 = vmatpush.bf16.msra.mxu0 %v7916
      %8299 = vmatpush.bf16.msra.mxu0 %v7912
      %8300 = vmatpush.bf16.msra.mxu0 %v7908
      %8301 = vmatpush.bf16.msra.mxu0 %v7904
      %8302 = vmatmul.bf16.gmra.mxu0 %v7354
      %v8303 = vpop.f32.mrf.mxu0
      %v8304 = vadd.f32 %v8291, %v8303
      %v8305 = vpop.f32.mrf.mxu0
      %8306 = vdwg.mxu0
      %8307 = vmatpush.bf16.msra.mxu0 %v7964
      %8308 = vmatpush.bf16.msra.mxu0 %v7960
      %8309 = vmatpush.bf16.msra.mxu0 %v7956
      %8310 = vmatpush.bf16.msra.mxu0 %v7952
      %8311 = vmatpush.bf16.msra.mxu0 %v7948
      %8312 = vmatpush.bf16.msra.mxu0 %v7944
      %8313 = vmatpush.bf16.msra.mxu0 %v7940
      %8314 = vmatpush.bf16.msra.mxu0 %v7936
      %8315 = vmatmul.bf16.gmra.mxu0 %v7355
      %v8316 = vpop.f32.mrf.mxu0
      %v8317 = vadd.f32 %v8304, %v8316
      %v8318 = vpop.f32.mrf.mxu0
      %8319 = vdwg.mxu0
      %8320 = vmatpush.bf16.msra.mxu0 %v7996
      %8321 = vmatpush.bf16.msra.mxu0 %v7992
      %8322 = vmatpush.bf16.msra.mxu0 %v7988
      %8323 = vmatpush.bf16.msra.mxu0 %v7984
      %8324 = vmatpush.bf16.msra.mxu0 %v7980
      %8325 = vmatpush.bf16.msra.mxu0 %v7976
      %8326 = vmatpush.bf16.msra.mxu0 %v7972
      %8327 = vmatpush.bf16.msra.mxu0 %v7968
      %8328 = vmatmul.bf16.gmra.mxu0 %v7356
      %v8329 = vpop.f32.mrf.mxu0
      %v8330 = vadd.f32 %v8317, %v8329
      %v8331 = vpop.f32.mrf.mxu0
      %8332 = vdwg.mxu0
      %v8461 = vunpack.c.l.b16 %v7225
      %v8462 = vunpack.c.h.b16 %v7225
      %v8463 = vunpack.c.l.b16 %v7226
      %v8464 = vunpack.c.h.b16 %v7226
      %v8465 = vunpack.c.l.b16 %v7227
      %v8466 = vunpack.c.h.b16 %v7227
      %v8467 = vunpack.c.l.b16 %v7228
      %v8468 = vunpack.c.h.b16 %v7228
      %v8469 = vunpack.c.l.b16 %v7229
      %v8470 = vunpack.c.h.b16 %v7229
      %v8471 = vunpack.c.l.b16 %v7230
      %v8472 = vunpack.c.h.b16 %v7230
      %v8473 = vunpack.c.l.b16 %v7231
      %v8474 = vunpack.c.h.b16 %v7231
      %v8475 = vunpack.c.l.b16 %v7232
      %v8476 = vunpack.c.h.b16 %v7232
      %v8477 = vunpack.c.l.b16 %v7233
      %v8478 = vunpack.c.h.b16 %v7233
      %v8479 = vunpack.c.l.b16 %v7234
      %v8480 = vunpack.c.h.b16 %v7234
      %v8481 = vunpack.c.l.b16 %v7235
      %v8482 = vunpack.c.h.b16 %v7235
      %v8483 = vunpack.c.l.b16 %v7236
      %v8484 = vunpack.c.h.b16 %v7236
      %v8485 = vunpack.c.l.b16 %v7237
      %v8486 = vunpack.c.h.b16 %v7237
      %v8487 = vunpack.c.l.b16 %v7238
      %v8488 = vunpack.c.h.b16 %v7238
      %v8489 = vunpack.c.l.b16 %v7239
      %v8490 = vunpack.c.h.b16 %v7239
      %v8491 = vunpack.c.l.b16 %v7240
      %v8492 = vunpack.c.h.b16 %v7240
      %v8493 = vunpack.c.l.b16 %v7241
      %v8494 = vunpack.c.h.b16 %v7241
      %v8495 = vunpack.c.l.b16 %v7242
      %v8496 = vunpack.c.h.b16 %v7242
      %v8497 = vunpack.c.l.b16 %v7243
      %v8498 = vunpack.c.h.b16 %v7243
      %v8499 = vunpack.c.l.b16 %v7244
      %v8500 = vunpack.c.h.b16 %v7244
      %v8501 = vunpack.c.l.b16 %v7245
      %v8502 = vunpack.c.h.b16 %v7245
      %v8503 = vunpack.c.l.b16 %v7246
      %v8504 = vunpack.c.h.b16 %v7246
      %v8505 = vunpack.c.l.b16 %v7247
      %v8506 = vunpack.c.h.b16 %v7247
      %v8507 = vunpack.c.l.b16 %v7248
      %v8508 = vunpack.c.h.b16 %v7248
      %v8509 = vunpack.c.l.b16 %v7249
      %v8510 = vunpack.c.h.b16 %v7249
      %v8511 = vunpack.c.l.b16 %v7250
      %v8512 = vunpack.c.h.b16 %v7250
      %v8513 = vunpack.c.l.b16 %v7251
      %v8514 = vunpack.c.h.b16 %v7251
      %v8515 = vunpack.c.l.b16 %v7252
      %v8516 = vunpack.c.h.b16 %v7252
      %v8517 = vunpack.c.l.b16 %v7253
      %v8518 = vunpack.c.h.b16 %v7253
      %v8519 = vunpack.c.l.b16 %v7254
      %v8520 = vunpack.c.h.b16 %v7254
      %v8521 = vunpack.c.l.b16 %v7255
      %v8522 = vunpack.c.h.b16 %v7255
      %v8523 = vunpack.c.l.b16 %v7256
      %v8524 = vunpack.c.h.b16 %v7256
      %v8525 = vunpack.c.l.b16 %v7257
      %v8526 = vunpack.c.h.b16 %v7257
      %v8527 = vunpack.c.l.b16 %v7258
      %v8528 = vunpack.c.h.b16 %v7258
      %v8529 = vunpack.c.l.b16 %v7259
      %v8530 = vunpack.c.h.b16 %v7259
      %v8531 = vunpack.c.l.b16 %v7260
      %v8532 = vunpack.c.h.b16 %v7260
      %v8533 = vunpack.c.l.b16 %v7261
      %v8534 = vunpack.c.h.b16 %v7261
      %v8535 = vunpack.c.l.b16 %v7262
      %v8536 = vunpack.c.h.b16 %v7262
      %v8537 = vunpack.c.l.b16 %v7263
      %v8538 = vunpack.c.h.b16 %v7263
      %v8539 = vunpack.c.l.b16 %v7264
      %v8540 = vunpack.c.h.b16 %v7264
      %v8541 = vunpack.c.l.b16 %v7265
      %v8542 = vunpack.c.h.b16 %v7265
      %v8543 = vunpack.c.l.b16 %v7266
      %v8544 = vunpack.c.h.b16 %v7266
      %v8545 = vunpack.c.l.b16 %v7267
      %v8546 = vunpack.c.h.b16 %v7267
      %v8547 = vunpack.c.l.b16 %v7268
      %v8548 = vunpack.c.h.b16 %v7268
      %v8549 = vunpack.c.l.b16 %v7269
      %v8550 = vunpack.c.h.b16 %v7269
      %v8551 = vunpack.c.l.b16 %v7270
      %v8552 = vunpack.c.h.b16 %v7270
      %v8553 = vunpack.c.l.b16 %v7271
      %v8554 = vunpack.c.h.b16 %v7271
      %v8555 = vunpack.c.l.b16 %v7272
      %v8556 = vunpack.c.h.b16 %v7272
      %v8557 = vunpack.c.l.b16 %v7273
      %v8558 = vunpack.c.h.b16 %v7273
      %v8559 = vunpack.c.l.b16 %v7274
      %v8560 = vunpack.c.h.b16 %v7274
      %v8561 = vunpack.c.l.b16 %v7275
      %v8562 = vunpack.c.h.b16 %v7275
      %v8563 = vunpack.c.l.b16 %v7276
      %v8564 = vunpack.c.h.b16 %v7276
      %v8565 = vunpack.c.l.b16 %v7277
      %v8566 = vunpack.c.h.b16 %v7277
      %v8567 = vunpack.c.l.b16 %v7278
      %v8568 = vunpack.c.h.b16 %v7278
      %v8569 = vunpack.c.l.b16 %v7279
      %v8570 = vunpack.c.h.b16 %v7279
      %v8571 = vunpack.c.l.b16 %v7280
      %v8572 = vunpack.c.h.b16 %v7280
      %v8573 = vunpack.c.l.b16 %v7281
      %v8574 = vunpack.c.h.b16 %v7281
      %v8575 = vunpack.c.l.b16 %v7282
      %v8576 = vunpack.c.h.b16 %v7282
      %v8577 = vunpack.c.l.b16 %v7283
      %v8578 = vunpack.c.h.b16 %v7283
      %v8579 = vunpack.c.l.b16 %v7284
      %v8580 = vunpack.c.h.b16 %v7284
      %v8581 = vunpack.c.l.b16 %v7285
      %v8582 = vunpack.c.h.b16 %v7285
      %v8583 = vunpack.c.l.b16 %v7286
      %v8584 = vunpack.c.h.b16 %v7286
      %v8585 = vunpack.c.l.b16 %v7287
      %v8586 = vunpack.c.h.b16 %v7287
      %v8587 = vunpack.c.l.b16 %v7288
      %v8588 = vunpack.c.h.b16 %v7288
      %v8589 = vunpack.c.l.b16 %v7289
      %v8590 = vunpack.c.h.b16 %v7289
      %v8591 = vunpack.c.l.b16 %v7290
      %v8592 = vunpack.c.h.b16 %v7290
      %v8593 = vunpack.c.l.b16 %v7291
      %v8594 = vunpack.c.h.b16 %v7291
      %v8595 = vunpack.c.l.b16 %v7292
      %v8596 = vunpack.c.h.b16 %v7292
      %v8597 = vunpack.c.l.b16 %v7293
      %v8598 = vunpack.c.h.b16 %v7293
      %v8599 = vunpack.c.l.b16 %v7294
      %v8600 = vunpack.c.h.b16 %v7294
      %v8601 = vunpack.c.l.b16 %v7295
      %v8602 = vunpack.c.h.b16 %v7295
      %v8603 = vunpack.c.l.b16 %v7296
      %v8604 = vunpack.c.h.b16 %v7296
      %v8605 = vunpack.c.l.b16 %v7297
      %v8606 = vunpack.c.h.b16 %v7297
      %v8607 = vunpack.c.l.b16 %v7298
      %v8608 = vunpack.c.h.b16 %v7298
      %v8609 = vunpack.c.l.b16 %v7299
      %v8610 = vunpack.c.h.b16 %v7299
      %v8611 = vunpack.c.l.b16 %v7300
      %v8612 = vunpack.c.h.b16 %v7300
      %v8613 = vunpack.c.l.b16 %v7301
      %v8614 = vunpack.c.h.b16 %v7301
      %v8615 = vunpack.c.l.b16 %v7302
      %v8616 = vunpack.c.h.b16 %v7302
      %v8617 = vunpack.c.l.b16 %v7303
      %v8618 = vunpack.c.h.b16 %v7303
      %v8619 = vunpack.c.l.b16 %v7304
      %v8620 = vunpack.c.h.b16 %v7304
      %v8621 = vunpack.c.l.b16 %v7305
      %v8622 = vunpack.c.h.b16 %v7305
      %v8623 = vunpack.c.l.b16 %v7306
      %v8624 = vunpack.c.h.b16 %v7306
      %v8625 = vunpack.c.l.b16 %v7307
      %v8626 = vunpack.c.h.b16 %v7307
      %v8627 = vunpack.c.l.b16 %v7308
      %v8628 = vunpack.c.h.b16 %v7308
      %v8629 = vunpack.c.l.b16 %v7309
      %v8630 = vunpack.c.h.b16 %v7309
      %v8631 = vunpack.c.l.b16 %v7310
      %v8632 = vunpack.c.h.b16 %v7310
      %v8633 = vunpack.c.l.b16 %v7311
      %v8634 = vunpack.c.h.b16 %v7311
      %v8635 = vunpack.c.l.b16 %v7312
      %v8636 = vunpack.c.h.b16 %v7312
      %v8637 = vunpack.c.l.b16 %v7313
      %v8638 = vunpack.c.h.b16 %v7313
      %v8639 = vunpack.c.l.b16 %v7314
      %v8640 = vunpack.c.h.b16 %v7314
      %v8641 = vunpack.c.l.b16 %v7315
      %v8642 = vunpack.c.h.b16 %v7315
      %v8643 = vunpack.c.l.b16 %v7316
      %v8644 = vunpack.c.h.b16 %v7316
      %v8645 = vunpack.c.l.b16 %v7317
      %v8646 = vunpack.c.h.b16 %v7317
      %v8647 = vunpack.c.l.b16 %v7318
      %v8648 = vunpack.c.h.b16 %v7318
      %v8649 = vunpack.c.l.b16 %v7319
      %v8650 = vunpack.c.h.b16 %v7319
      %v8651 = vunpack.c.l.b16 %v7320
      %v8652 = vunpack.c.h.b16 %v7320
      %v8653 = vunpack.c.l.b16 %v7321
      %v8654 = vunpack.c.h.b16 %v7321
      %v8655 = vunpack.c.l.b16 %v7322
      %v8656 = vunpack.c.h.b16 %v7322
      %v8657 = vunpack.c.l.b16 %v7323
      %v8658 = vunpack.c.h.b16 %v7323
      %v8659 = vunpack.c.l.b16 %v7324
      %v8660 = vunpack.c.h.b16 %v7324
      %v8661 = vunpack.c.l.b16 %v7325
      %v8662 = vunpack.c.h.b16 %v7325
      %v8663 = vunpack.c.l.b16 %v7326
      %v8664 = vunpack.c.h.b16 %v7326
      %v8665 = vunpack.c.l.b16 %v7327
      %v8666 = vunpack.c.h.b16 %v7327
      %v8667 = vunpack.c.l.b16 %v7328
      %v8668 = vunpack.c.h.b16 %v7328
      %v8669 = vunpack.c.l.b16 %v7329
      %v8670 = vunpack.c.h.b16 %v7329
      %v8671 = vunpack.c.l.b16 %v7330
      %v8672 = vunpack.c.h.b16 %v7330
      %v8673 = vunpack.c.l.b16 %v7331
      %v8674 = vunpack.c.h.b16 %v7331
      %v8675 = vunpack.c.l.b16 %v7332
      %v8676 = vunpack.c.h.b16 %v7332
      %v8677 = vunpack.c.l.b16 %v7333
      %v8678 = vunpack.c.h.b16 %v7333
      %v8679 = vunpack.c.l.b16 %v7334
      %v8680 = vunpack.c.h.b16 %v7334
      %v8681 = vunpack.c.l.b16 %v7335
      %v8682 = vunpack.c.h.b16 %v7335
      %v8683 = vunpack.c.l.b16 %v7336
      %v8684 = vunpack.c.h.b16 %v7336
      %v8685 = vunpack.c.l.b16 %v7337
      %v8686 = vunpack.c.h.b16 %v7337
      %v8687 = vunpack.c.l.b16 %v7338
      %v8688 = vunpack.c.h.b16 %v7338
      %v8689 = vunpack.c.l.b16 %v7339
      %v8690 = vunpack.c.h.b16 %v7339
      %v8691 = vunpack.c.l.b16 %v7340
      %v8692 = vunpack.c.h.b16 %v7340
      %v8693 = vunpack.c.l.b16 %v7341
      %v8694 = vunpack.c.h.b16 %v7341
      %v8695 = vunpack.c.l.b16 %v7342
      %v8696 = vunpack.c.h.b16 %v7342
      %v8697 = vunpack.c.l.b16 %v7343
      %v8698 = vunpack.c.h.b16 %v7343
      %v8699 = vunpack.c.l.b16 %v7344
      %v8700 = vunpack.c.h.b16 %v7344
      %v8701 = vunpack.c.l.b16 %v7345
      %v8702 = vunpack.c.h.b16 %v7345
      %v8703 = vunpack.c.l.b16 %v7346
      %v8704 = vunpack.c.h.b16 %v7346
      %v8705 = vunpack.c.l.b16 %v7347
      %v8706 = vunpack.c.h.b16 %v7347
      %v8707 = vunpack.c.l.b16 %v7348
      %v8708 = vunpack.c.h.b16 %v7348
      %v8709 = vunpack.c.l.b16 %v7349
      %v8710 = vunpack.c.h.b16 %v7349
      %v8711 = vunpack.c.l.b16 %v7350
      %v8712 = vunpack.c.h.b16 %v7350
      %v8713 = vunpack.c.l.b16 %v7351
      %v8714 = vunpack.c.h.b16 %v7351
      %v8715 = vunpack.c.l.b16 %v7352
      %v8716 = vunpack.c.h.b16 %v7352
      %v8717 = vpack.c.b16 %v8465, %v8461
      %v8718 = vpack.c.b16 %v8466, %v8462
      %v8719 = vpack.c.b16 %v8467, %v8463
      %v8720 = vpack.c.b16 %v8468, %v8464
      %v8721 = vpack.c.b16 %v8473, %v8469
      %v8722 = vpack.c.b16 %v8474, %v8470
      %v8723 = vpack.c.b16 %v8475, %v8471
      %v8724 = vpack.c.b16 %v8476, %v8472
      %v8725 = vpack.c.b16 %v8481, %v8477
      %v8726 = vpack.c.b16 %v8482, %v8478
      %v8727 = vpack.c.b16 %v8483, %v8479
      %v8728 = vpack.c.b16 %v8484, %v8480
      %v8729 = vpack.c.b16 %v8489, %v8485
      %v8730 = vpack.c.b16 %v8490, %v8486
      %v8731 = vpack.c.b16 %v8491, %v8487
      %v8732 = vpack.c.b16 %v8492, %v8488
      %v8733 = vpack.c.b16 %v8497, %v8493
      %v8734 = vpack.c.b16 %v8498, %v8494
      %v8735 = vpack.c.b16 %v8499, %v8495
      %v8736 = vpack.c.b16 %v8500, %v8496
      %v8737 = vpack.c.b16 %v8505, %v8501
      %v8738 = vpack.c.b16 %v8506, %v8502
      %v8739 = vpack.c.b16 %v8507, %v8503
      %v8740 = vpack.c.b16 %v8508, %v8504
      %v8741 = vpack.c.b16 %v8513, %v8509
      %v8742 = vpack.c.b16 %v8514, %v8510
      %v8743 = vpack.c.b16 %v8515, %v8511
      %v8744 = vpack.c.b16 %v8516, %v8512
      %v8745 = vpack.c.b16 %v8521, %v8517
      %v8746 = vpack.c.b16 %v8522, %v8518
      %v8747 = vpack.c.b16 %v8523, %v8519
      %v8748 = vpack.c.b16 %v8524, %v8520
      %v8749 = vpack.c.b16 %v8529, %v8525
      %v8750 = vpack.c.b16 %v8530, %v8526
      %v8751 = vpack.c.b16 %v8531, %v8527
      %v8752 = vpack.c.b16 %v8532, %v8528
      %v8753 = vpack.c.b16 %v8537, %v8533
      %v8754 = vpack.c.b16 %v8538, %v8534
      %v8755 = vpack.c.b16 %v8539, %v8535
      %v8756 = vpack.c.b16 %v8540, %v8536
      %v8757 = vpack.c.b16 %v8545, %v8541
      %v8758 = vpack.c.b16 %v8546, %v8542
      %v8759 = vpack.c.b16 %v8547, %v8543
      %v8760 = vpack.c.b16 %v8548, %v8544
      %v8761 = vpack.c.b16 %v8553, %v8549
      %v8762 = vpack.c.b16 %v8554, %v8550
      %v8763 = vpack.c.b16 %v8555, %v8551
      %v8764 = vpack.c.b16 %v8556, %v8552
      %v8765 = vpack.c.b16 %v8561, %v8557
      %v8766 = vpack.c.b16 %v8562, %v8558
      %v8767 = vpack.c.b16 %v8563, %v8559
      %v8768 = vpack.c.b16 %v8564, %v8560
      %v8769 = vpack.c.b16 %v8569, %v8565
      %v8770 = vpack.c.b16 %v8570, %v8566
      %v8771 = vpack.c.b16 %v8571, %v8567
      %v8772 = vpack.c.b16 %v8572, %v8568
      %v8773 = vpack.c.b16 %v8577, %v8573
      %v8774 = vpack.c.b16 %v8578, %v8574
      %v8775 = vpack.c.b16 %v8579, %v8575
      %v8776 = vpack.c.b16 %v8580, %v8576
      %v8777 = vpack.c.b16 %v8585, %v8581
      %v8778 = vpack.c.b16 %v8586, %v8582
      %v8779 = vpack.c.b16 %v8587, %v8583
      %v8780 = vpack.c.b16 %v8588, %v8584
      %v8781 = vpack.c.b16 %v8593, %v8589
      %v8782 = vpack.c.b16 %v8594, %v8590
      %v8783 = vpack.c.b16 %v8595, %v8591
      %v8784 = vpack.c.b16 %v8596, %v8592
      %v8785 = vpack.c.b16 %v8601, %v8597
      %v8786 = vpack.c.b16 %v8602, %v8598
      %v8787 = vpack.c.b16 %v8603, %v8599
      %v8788 = vpack.c.b16 %v8604, %v8600
      %v8789 = vpack.c.b16 %v8609, %v8605
      %v8790 = vpack.c.b16 %v8610, %v8606
      %v8791 = vpack.c.b16 %v8611, %v8607
      %v8792 = vpack.c.b16 %v8612, %v8608
      %v8793 = vpack.c.b16 %v8617, %v8613
      %v8794 = vpack.c.b16 %v8618, %v8614
      %v8795 = vpack.c.b16 %v8619, %v8615
      %v8796 = vpack.c.b16 %v8620, %v8616
      %v8797 = vpack.c.b16 %v8625, %v8621
      %v8798 = vpack.c.b16 %v8626, %v8622
      %v8799 = vpack.c.b16 %v8627, %v8623
      %v8800 = vpack.c.b16 %v8628, %v8624
      %v8801 = vpack.c.b16 %v8633, %v8629
      %v8802 = vpack.c.b16 %v8634, %v8630
      %v8803 = vpack.c.b16 %v8635, %v8631
      %v8804 = vpack.c.b16 %v8636, %v8632
      %v8805 = vpack.c.b16 %v8641, %v8637
      %v8806 = vpack.c.b16 %v8642, %v8638
      %v8807 = vpack.c.b16 %v8643, %v8639
      %v8808 = vpack.c.b16 %v8644, %v8640
      %v8809 = vpack.c.b16 %v8649, %v8645
      %v8810 = vpack.c.b16 %v8650, %v8646
      %v8811 = vpack.c.b16 %v8651, %v8647
      %v8812 = vpack.c.b16 %v8652, %v8648
      %v8813 = vpack.c.b16 %v8657, %v8653
      %v8814 = vpack.c.b16 %v8658, %v8654
      %v8815 = vpack.c.b16 %v8659, %v8655
      %v8816 = vpack.c.b16 %v8660, %v8656
      %v8817 = vpack.c.b16 %v8665, %v8661
      %v8818 = vpack.c.b16 %v8666, %v8662
      %v8819 = vpack.c.b16 %v8667, %v8663
      %v8820 = vpack.c.b16 %v8668, %v8664
      %v8821 = vpack.c.b16 %v8673, %v8669
      %v8822 = vpack.c.b16 %v8674, %v8670
      %v8823 = vpack.c.b16 %v8675, %v8671
      %v8824 = vpack.c.b16 %v8676, %v8672
      %v8825 = vpack.c.b16 %v8681, %v8677
      %v8826 = vpack.c.b16 %v8682, %v8678
      %v8827 = vpack.c.b16 %v8683, %v8679
      %v8828 = vpack.c.b16 %v8684, %v8680
      %v8829 = vpack.c.b16 %v8689, %v8685
      %v8830 = vpack.c.b16 %v8690, %v8686
      %v8831 = vpack.c.b16 %v8691, %v8687
      %v8832 = vpack.c.b16 %v8692, %v8688
      %v8833 = vpack.c.b16 %v8697, %v8693
      %v8834 = vpack.c.b16 %v8698, %v8694
      %v8835 = vpack.c.b16 %v8699, %v8695
      %v8836 = vpack.c.b16 %v8700, %v8696
      %v8837 = vpack.c.b16 %v8705, %v8701
      %v8838 = vpack.c.b16 %v8706, %v8702
      %v8839 = vpack.c.b16 %v8707, %v8703
      %v8840 = vpack.c.b16 %v8708, %v8704
      %v8841 = vpack.c.b16 %v8713, %v8709
      %v8842 = vpack.c.b16 %v8714, %v8710
      %v8843 = vpack.c.b16 %v8715, %v8711
      %v8844 = vpack.c.b16 %v8716, %v8712
      %8973 = vmatpush.bf16.msra.mxu0 %v8745
      %8974 = vmatpush.bf16.msra.mxu0 %v8741
      %8975 = vmatpush.bf16.msra.mxu0 %v8737
      %8976 = vmatpush.bf16.msra.mxu0 %v8733
      %8977 = vmatpush.bf16.msra.mxu0 %v8729
      %8978 = vmatpush.bf16.msra.mxu0 %v8725
      %8979 = vmatpush.bf16.msra.mxu0 %v8721
      %8980 = vmatpush.bf16.msra.mxu0 %v8717
      %8981 = vmatmul.bf16.gmra.mxu0 %v7221
      %v8982 = vpop.f32.mrf.mxu0
      %v8983 = vadd.f32 %v8174, %v8982
      %v8984 = vpop.f32.mrf.mxu0
      %8985 = vdwg.mxu0
      %8986 = vmatpush.bf16.msra.mxu0 %v8777
      %8987 = vmatpush.bf16.msra.mxu0 %v8773
      %8988 = vmatpush.bf16.msra.mxu0 %v8769
      %8989 = vmatpush.bf16.msra.mxu0 %v8765
      %8990 = vmatpush.bf16.msra.mxu0 %v8761
      %8991 = vmatpush.bf16.msra.mxu0 %v8757
      %8992 = vmatpush.bf16.msra.mxu0 %v8753
      %8993 = vmatpush.bf16.msra.mxu0 %v8749
      %8994 = vmatmul.bf16.gmra.mxu0 %v7222
      %v8995 = vpop.f32.mrf.mxu0
      %v8996 = vadd.f32 %v8983, %v8995
      %v8997 = vpop.f32.mrf.mxu0
      %8998 = vdwg.mxu0
      %8999 = vmatpush.bf16.msra.mxu0 %v8809
      %9000 = vmatpush.bf16.msra.mxu0 %v8805
      %9001 = vmatpush.bf16.msra.mxu0 %v8801
      %9002 = vmatpush.bf16.msra.mxu0 %v8797
      %9003 = vmatpush.bf16.msra.mxu0 %v8793
      %9004 = vmatpush.bf16.msra.mxu0 %v8789
      %9005 = vmatpush.bf16.msra.mxu0 %v8785
      %9006 = vmatpush.bf16.msra.mxu0 %v8781
      %9007 = vmatmul.bf16.gmra.mxu0 %v7223
      %v9008 = vpop.f32.mrf.mxu0
      %v9009 = vadd.f32 %v8996, %v9008
      %v9010 = vpop.f32.mrf.mxu0
      %9011 = vdwg.mxu0
      %9012 = vmatpush.bf16.msra.mxu0 %v8841
      %9013 = vmatpush.bf16.msra.mxu0 %v8837
      %9014 = vmatpush.bf16.msra.mxu0 %v8833
      %9015 = vmatpush.bf16.msra.mxu0 %v8829
      %9016 = vmatpush.bf16.msra.mxu0 %v8825
      %9017 = vmatpush.bf16.msra.mxu0 %v8821
      %9018 = vmatpush.bf16.msra.mxu0 %v8817
      %9019 = vmatpush.bf16.msra.mxu0 %v8813
      %9020 = vmatmul.bf16.gmra.mxu0 %v7224
      %v9021 = vpop.f32.mrf.mxu0
      %v9022 = vadd.f32 %v9009, %v9021
      %v9023 = vpop.f32.mrf.mxu0
      %9024 = vdwg.mxu0
      %9025 = vmatpush.bf16.msra.mxu0 %v8746
      %9026 = vmatpush.bf16.msra.mxu0 %v8742
      %9027 = vmatpush.bf16.msra.mxu0 %v8738
      %9028 = vmatpush.bf16.msra.mxu0 %v8734
      %9029 = vmatpush.bf16.msra.mxu0 %v8730
      %9030 = vmatpush.bf16.msra.mxu0 %v8726
      %9031 = vmatpush.bf16.msra.mxu0 %v8722
      %9032 = vmatpush.bf16.msra.mxu0 %v8718
      %9033 = vmatmul.bf16.gmra.mxu0 %v7221
      %v9034 = vpop.f32.mrf.mxu0
      %v9035 = vadd.f32 %v8226, %v9034
      %v9036 = vpop.f32.mrf.mxu0
      %9037 = vdwg.mxu0
      %9038 = vmatpush.bf16.msra.mxu0 %v8778
      %9039 = vmatpush.bf16.msra.mxu0 %v8774
      %9040 = vmatpush.bf16.msra.mxu0 %v8770
      %9041 = vmatpush.bf16.msra.mxu0 %v8766
      %9042 = vmatpush.bf16.msra.mxu0 %v8762
      %9043 = vmatpush.bf16.msra.mxu0 %v8758
      %9044 = vmatpush.bf16.msra.mxu0 %v8754
      %9045 = vmatpush.bf16.msra.mxu0 %v8750
      %9046 = vmatmul.bf16.gmra.mxu0 %v7222
      %v9047 = vpop.f32.mrf.mxu0
      %v9048 = vadd.f32 %v9035, %v9047
      %v9049 = vpop.f32.mrf.mxu0
      %9050 = vdwg.mxu0
      %9051 = vmatpush.bf16.msra.mxu0 %v8810
      %9052 = vmatpush.bf16.msra.mxu0 %v8806
      %9053 = vmatpush.bf16.msra.mxu0 %v8802
      %9054 = vmatpush.bf16.msra.mxu0 %v8798
      %9055 = vmatpush.bf16.msra.mxu0 %v8794
      %9056 = vmatpush.bf16.msra.mxu0 %v8790
      %9057 = vmatpush.bf16.msra.mxu0 %v8786
      %9058 = vmatpush.bf16.msra.mxu0 %v8782
      %9059 = vmatmul.bf16.gmra.mxu0 %v7223
      %v9060 = vpop.f32.mrf.mxu0
      %v9061 = vadd.f32 %v9048, %v9060
      %v9062 = vpop.f32.mrf.mxu0
      %9063 = vdwg.mxu0
      %9064 = vmatpush.bf16.msra.mxu0 %v8842
      %9065 = vmatpush.bf16.msra.mxu0 %v8838
      %9066 = vmatpush.bf16.msra.mxu0 %v8834
      %9067 = vmatpush.bf16.msra.mxu0 %v8830
      %9068 = vmatpush.bf16.msra.mxu0 %v8826
      %9069 = vmatpush.bf16.msra.mxu0 %v8822
      %9070 = vmatpush.bf16.msra.mxu0 %v8818
      %9071 = vmatpush.bf16.msra.mxu0 %v8814
      %9072 = vmatmul.bf16.gmra.mxu0 %v7224
      %v9073 = vpop.f32.mrf.mxu0
      %v9074 = vadd.f32 %v9061, %v9073
      %v9075 = vpop.f32.mrf.mxu0
      %9076 = vdwg.mxu0
      %9077 = vmatpush.bf16.msra.mxu0 %v8747
      %9078 = vmatpush.bf16.msra.mxu0 %v8743
      %9079 = vmatpush.bf16.msra.mxu0 %v8739
      %9080 = vmatpush.bf16.msra.mxu0 %v8735
      %9081 = vmatpush.bf16.msra.mxu0 %v8731
      %9082 = vmatpush.bf16.msra.mxu0 %v8727
      %9083 = vmatpush.bf16.msra.mxu0 %v8723
      %9084 = vmatpush.bf16.msra.mxu0 %v8719
      %9085 = vmatmul.bf16.gmra.mxu0 %v7221
      %v9086 = vpop.f32.mrf.mxu0
      %v9087 = vadd.f32 %v8278, %v9086
      %v9088 = vpop.f32.mrf.mxu0
      %9089 = vdwg.mxu0
      %9090 = vmatpush.bf16.msra.mxu0 %v8779
      %9091 = vmatpush.bf16.msra.mxu0 %v8775
      %9092 = vmatpush.bf16.msra.mxu0 %v8771
      %9093 = vmatpush.bf16.msra.mxu0 %v8767
      %9094 = vmatpush.bf16.msra.mxu0 %v8763
      %9095 = vmatpush.bf16.msra.mxu0 %v8759
      %9096 = vmatpush.bf16.msra.mxu0 %v8755
      %9097 = vmatpush.bf16.msra.mxu0 %v8751
      %9098 = vmatmul.bf16.gmra.mxu0 %v7222
      %v9099 = vpop.f32.mrf.mxu0
      %v9100 = vadd.f32 %v9087, %v9099
      %v9101 = vpop.f32.mrf.mxu0
      %9102 = vdwg.mxu0
      %9103 = vmatpush.bf16.msra.mxu0 %v8811
      %9104 = vmatpush.bf16.msra.mxu0 %v8807
      %9105 = vmatpush.bf16.msra.mxu0 %v8803
      %9106 = vmatpush.bf16.msra.mxu0 %v8799
      %9107 = vmatpush.bf16.msra.mxu0 %v8795
      %9108 = vmatpush.bf16.msra.mxu0 %v8791
      %9109 = vmatpush.bf16.msra.mxu0 %v8787
      %9110 = vmatpush.bf16.msra.mxu0 %v8783
      %9111 = vmatmul.bf16.gmra.mxu0 %v7223
      %v9112 = vpop.f32.mrf.mxu0
      %v9113 = vadd.f32 %v9100, %v9112
      %v9114 = vpop.f32.mrf.mxu0
      %9115 = vdwg.mxu0
      %9116 = vmatpush.bf16.msra.mxu0 %v8843
      %9117 = vmatpush.bf16.msra.mxu0 %v8839
      %9118 = vmatpush.bf16.msra.mxu0 %v8835
      %9119 = vmatpush.bf16.msra.mxu0 %v8831
      %9120 = vmatpush.bf16.msra.mxu0 %v8827
      %9121 = vmatpush.bf16.msra.mxu0 %v8823
      %9122 = vmatpush.bf16.msra.mxu0 %v8819
      %9123 = vmatpush.bf16.msra.mxu0 %v8815
      %9124 = vmatmul.bf16.gmra.mxu0 %v7224
      %v9125 = vpop.f32.mrf.mxu0
      %v9126 = vadd.f32 %v9113, %v9125
      %v9127 = vpop.f32.mrf.mxu0
      %9128 = vdwg.mxu0
      %9129 = vmatpush.bf16.msra.mxu0 %v8748
      %9130 = vmatpush.bf16.msra.mxu0 %v8744
      %9131 = vmatpush.bf16.msra.mxu0 %v8740
      %9132 = vmatpush.bf16.msra.mxu0 %v8736
      %9133 = vmatpush.bf16.msra.mxu0 %v8732
      %9134 = vmatpush.bf16.msra.mxu0 %v8728
      %9135 = vmatpush.bf16.msra.mxu0 %v8724
      %9136 = vmatpush.bf16.msra.mxu0 %v8720
      %9137 = vmatmul.bf16.gmra.mxu0 %v7221
      %v9138 = vpop.f32.mrf.mxu0
      %v9139 = vadd.f32 %v8330, %v9138
      %v9140 = vpop.f32.mrf.mxu0
      %9141 = vdwg.mxu0
      %9142 = vmatpush.bf16.msra.mxu0 %v8780
      %9143 = vmatpush.bf16.msra.mxu0 %v8776
      %9144 = vmatpush.bf16.msra.mxu0 %v8772
      %9145 = vmatpush.bf16.msra.mxu0 %v8768
      %9146 = vmatpush.bf16.msra.mxu0 %v8764
      %9147 = vmatpush.bf16.msra.mxu0 %v8760
      %9148 = vmatpush.bf16.msra.mxu0 %v8756
      %9149 = vmatpush.bf16.msra.mxu0 %v8752
      %9150 = vmatmul.bf16.gmra.mxu0 %v7222
      %v9151 = vpop.f32.mrf.mxu0
      %v9152 = vadd.f32 %v9139, %v9151
      %v9153 = vpop.f32.mrf.mxu0
      %9154 = vdwg.mxu0
      %9155 = vmatpush.bf16.msra.mxu0 %v8812
      %9156 = vmatpush.bf16.msra.mxu0 %v8808
      %9157 = vmatpush.bf16.msra.mxu0 %v8804
      %9158 = vmatpush.bf16.msra.mxu0 %v8800
      %9159 = vmatpush.bf16.msra.mxu0 %v8796
      %9160 = vmatpush.bf16.msra.mxu0 %v8792
      %9161 = vmatpush.bf16.msra.mxu0 %v8788
      %9162 = vmatpush.bf16.msra.mxu0 %v8784
      %9163 = vmatmul.bf16.gmra.mxu0 %v7223
      %v9164 = vpop.f32.mrf.mxu0
      %v9165 = vadd.f32 %v9152, %v9164
      %v9166 = vpop.f32.mrf.mxu0
      %9167 = vdwg.mxu0
      %9168 = vmatpush.bf16.msra.mxu0 %v8844
      %9169 = vmatpush.bf16.msra.mxu0 %v8840
      %9170 = vmatpush.bf16.msra.mxu0 %v8836
      %9171 = vmatpush.bf16.msra.mxu0 %v8832
      %9172 = vmatpush.bf16.msra.mxu0 %v8828
      %9173 = vmatpush.bf16.msra.mxu0 %v8824
      %9174 = vmatpush.bf16.msra.mxu0 %v8820
      %9175 = vmatpush.bf16.msra.mxu0 %v8816
      %9176 = vmatmul.bf16.gmra.mxu0 %v7224
      %v9177 = vpop.f32.mrf.mxu0
      %v9178 = vadd.f32 %v9165, %v9177
      %v9179 = vpop.f32.mrf.mxu0
      %9180 = vdwg.mxu0
      %v9181 = vpack.c.bf16 %v7217, %v7217
      %v9182 = vpack.c.bf16 %v7218, %v7218
      %v9183 = vpack.c.bf16 %v7219, %v7219
      %v9184 = vpack.c.bf16 %v7220, %v7220
      %v9185 = vld [vmem:[#allocation22] sm:$0xff]
      %v9186 = vld [vmem:[#allocation22 + $0x8] sm:$0xff]
      %v9187 = vld [vmem:[#allocation22 + $0x10] sm:$0xff]
      %v9188 = vld [vmem:[#allocation22 + $0x18] sm:$0xff]
      %v9189 = vld [vmem:[#allocation22 + $0x20] sm:$0xff]
      %v9190 = vld [vmem:[#allocation22 + $0x28] sm:$0xff]
      %v9191 = vld [vmem:[#allocation22 + $0x30] sm:$0xff]
      %v9192 = vld [vmem:[#allocation22 + $0x38] sm:$0xff]
      %v9193 = vld [vmem:[#allocation22 + $0x40] sm:$0xff]
      %v9194 = vld [vmem:[#allocation22 + $0x48] sm:$0xff]
      %v9195 = vld [vmem:[#allocation22 + $0x50] sm:$0xff]
      %v9196 = vld [vmem:[#allocation22 + $0x58] sm:$0xff]
      %v9197 = vld [vmem:[#allocation22 + $0x60] sm:$0xff]
      %v9198 = vld [vmem:[#allocation22 + $0x68] sm:$0xff]
      %v9199 = vld [vmem:[#allocation22 + $0x70] sm:$0xff]
      %v9200 = vld [vmem:[#allocation22 + $0x78] sm:$0xff]
      %v9201 = vld [vmem:[#allocation22 + $0x80] sm:$0xff]
      %v9202 = vld [vmem:[#allocation22 + $0x88] sm:$0xff]
      %v9203 = vld [vmem:[#allocation22 + $0x90] sm:$0xff]
      %v9204 = vld [vmem:[#allocation22 + $0x98] sm:$0xff]
      %v9205 = vld [vmem:[#allocation22 + $0xa0] sm:$0xff]
      %v9206 = vld [vmem:[#allocation22 + $0xa8] sm:$0xff]
      %v9207 = vld [vmem:[#allocation22 + $0xb0] sm:$0xff]
      %v9208 = vld [vmem:[#allocation22 + $0xb8] sm:$0xff]
      %v9209 = vld [vmem:[#allocation22 + $0xc0] sm:$0xff]
      %v9210 = vld [vmem:[#allocation22 + $0xc8] sm:$0xff]
      %v9211 = vld [vmem:[#allocation22 + $0xd0] sm:$0xff]
      %v9212 = vld [vmem:[#allocation22 + $0xd8] sm:$0xff]
      %v9213 = vld [vmem:[#allocation22 + $0xe0] sm:$0xff]
      %v9214 = vld [vmem:[#allocation22 + $0xe8] sm:$0xff]
      %v9215 = vld [vmem:[#allocation22 + $0xf0] sm:$0xff]
      %v9216 = vld [vmem:[#allocation22 + $0xf8] sm:$0xff]
      %v9217 = vld [vmem:[#allocation22 + $0x100] sm:$0xff]
      %v9218 = vld [vmem:[#allocation22 + $0x108] sm:$0xff]
      %v9219 = vld [vmem:[#allocation22 + $0x110] sm:$0xff]
      %v9220 = vld [vmem:[#allocation22 + $0x118] sm:$0xff]
      %v9221 = vld [vmem:[#allocation22 + $0x120] sm:$0xff]
      %v9222 = vld [vmem:[#allocation22 + $0x128] sm:$0xff]
      %v9223 = vld [vmem:[#allocation22 + $0x130] sm:$0xff]
      %v9224 = vld [vmem:[#allocation22 + $0x138] sm:$0xff]
      %v9225 = vld [vmem:[#allocation22 + $0x140] sm:$0xff]
      %v9226 = vld [vmem:[#allocation22 + $0x148] sm:$0xff]
      %v9227 = vld [vmem:[#allocation22 + $0x150] sm:$0xff]
      %v9228 = vld [vmem:[#allocation22 + $0x158] sm:$0xff]
      %v9229 = vld [vmem:[#allocation22 + $0x160] sm:$0xff]
      %v9230 = vld [vmem:[#allocation22 + $0x168] sm:$0xff]
      %v9231 = vld [vmem:[#allocation22 + $0x170] sm:$0xff]
      %v9232 = vld [vmem:[#allocation22 + $0x178] sm:$0xff]
      %v9233 = vld [vmem:[#allocation22 + $0x180] sm:$0xff]
      %v9234 = vld [vmem:[#allocation22 + $0x188] sm:$0xff]
      %v9235 = vld [vmem:[#allocation22 + $0x190] sm:$0xff]
      %v9236 = vld [vmem:[#allocation22 + $0x198] sm:$0xff]
      %v9237 = vld [vmem:[#allocation22 + $0x1a0] sm:$0xff]
      %v9238 = vld [vmem:[#allocation22 + $0x1a8] sm:$0xff]
      %v9239 = vld [vmem:[#allocation22 + $0x1b0] sm:$0xff]
      %v9240 = vld [vmem:[#allocation22 + $0x1b8] sm:$0xff]
      %v9241 = vld [vmem:[#allocation22 + $0x1c0] sm:$0xff]
      %v9242 = vld [vmem:[#allocation22 + $0x1c8] sm:$0xff]
      %v9243 = vld [vmem:[#allocation22 + $0x1d0] sm:$0xff]
      %v9244 = vld [vmem:[#allocation22 + $0x1d8] sm:$0xff]
      %v9245 = vld [vmem:[#allocation22 + $0x1e0] sm:$0xff]
      %v9246 = vld [vmem:[#allocation22 + $0x1e8] sm:$0xff]
      %v9247 = vld [vmem:[#allocation22 + $0x1f0] sm:$0xff]
      %v9248 = vld [vmem:[#allocation22 + $0x1f8] sm:$0xff]
      %v9249 = vld [vmem:[#allocation22 + $0x200] sm:$0xff]
      %v9250 = vld [vmem:[#allocation22 + $0x208] sm:$0xff]
      %v9251 = vld [vmem:[#allocation22 + $0x210] sm:$0xff]
      %v9252 = vld [vmem:[#allocation22 + $0x218] sm:$0xff]
      %v9253 = vld [vmem:[#allocation22 + $0x220] sm:$0xff]
      %v9254 = vld [vmem:[#allocation22 + $0x228] sm:$0xff]
      %v9255 = vld [vmem:[#allocation22 + $0x230] sm:$0xff]
      %v9256 = vld [vmem:[#allocation22 + $0x238] sm:$0xff]
      %v9257 = vld [vmem:[#allocation22 + $0x240] sm:$0xff]
      %v9258 = vld [vmem:[#allocation22 + $0x248] sm:$0xff]
      %v9259 = vld [vmem:[#allocation22 + $0x250] sm:$0xff]
      %v9260 = vld [vmem:[#allocation22 + $0x258] sm:$0xff]
      %v9261 = vld [vmem:[#allocation22 + $0x260] sm:$0xff]
      %v9262 = vld [vmem:[#allocation22 + $0x268] sm:$0xff]
      %v9263 = vld [vmem:[#allocation22 + $0x270] sm:$0xff]
      %v9264 = vld [vmem:[#allocation22 + $0x278] sm:$0xff]
      %v9265 = vld [vmem:[#allocation22 + $0x280] sm:$0xff]
      %v9266 = vld [vmem:[#allocation22 + $0x288] sm:$0xff]
      %v9267 = vld [vmem:[#allocation22 + $0x290] sm:$0xff]
      %v9268 = vld [vmem:[#allocation22 + $0x298] sm:$0xff]
      %v9269 = vld [vmem:[#allocation22 + $0x2a0] sm:$0xff]
      %v9270 = vld [vmem:[#allocation22 + $0x2a8] sm:$0xff]
      %v9271 = vld [vmem:[#allocation22 + $0x2b0] sm:$0xff]
      %v9272 = vld [vmem:[#allocation22 + $0x2b8] sm:$0xff]
      %v9273 = vld [vmem:[#allocation22 + $0x2c0] sm:$0xff]
      %v9274 = vld [vmem:[#allocation22 + $0x2c8] sm:$0xff]
      %v9275 = vld [vmem:[#allocation22 + $0x2d0] sm:$0xff]
      %v9276 = vld [vmem:[#allocation22 + $0x2d8] sm:$0xff]
      %v9277 = vld [vmem:[#allocation22 + $0x2e0] sm:$0xff]
      %v9278 = vld [vmem:[#allocation22 + $0x2e8] sm:$0xff]
      %v9279 = vld [vmem:[#allocation22 + $0x2f0] sm:$0xff]
      %v9280 = vld [vmem:[#allocation22 + $0x2f8] sm:$0xff]
      %v9281 = vld [vmem:[#allocation22 + $0x300] sm:$0xff]
      %v9282 = vld [vmem:[#allocation22 + $0x308] sm:$0xff]
      %v9283 = vld [vmem:[#allocation22 + $0x310] sm:$0xff]
      %v9284 = vld [vmem:[#allocation22 + $0x318] sm:$0xff]
      %v9285 = vld [vmem:[#allocation22 + $0x320] sm:$0xff]
      %v9286 = vld [vmem:[#allocation22 + $0x328] sm:$0xff]
      %v9287 = vld [vmem:[#allocation22 + $0x330] sm:$0xff]
      %v9288 = vld [vmem:[#allocation22 + $0x338] sm:$0xff]
      %v9289 = vld [vmem:[#allocation22 + $0x340] sm:$0xff]
      %v9290 = vld [vmem:[#allocation22 + $0x348] sm:$0xff]
      %v9291 = vld [vmem:[#allocation22 + $0x350] sm:$0xff]
      %v9292 = vld [vmem:[#allocation22 + $0x358] sm:$0xff]
      %v9293 = vld [vmem:[#allocation22 + $0x360] sm:$0xff]
      %v9294 = vld [vmem:[#allocation22 + $0x368] sm:$0xff]
      %v9295 = vld [vmem:[#allocation22 + $0x370] sm:$0xff]
      %v9296 = vld [vmem:[#allocation22 + $0x378] sm:$0xff]
      %v9297 = vld [vmem:[#allocation22 + $0x380] sm:$0xff]
      %v9298 = vld [vmem:[#allocation22 + $0x388] sm:$0xff]
      %v9299 = vld [vmem:[#allocation22 + $0x390] sm:$0xff]
      %v9300 = vld [vmem:[#allocation22 + $0x398] sm:$0xff]
      %v9301 = vld [vmem:[#allocation22 + $0x3a0] sm:$0xff]
      %v9302 = vld [vmem:[#allocation22 + $0x3a8] sm:$0xff]
      %v9303 = vld [vmem:[#allocation22 + $0x3b0] sm:$0xff]
      %v9304 = vld [vmem:[#allocation22 + $0x3b8] sm:$0xff]
      %v9305 = vld [vmem:[#allocation22 + $0x3c0] sm:$0xff]
      %v9306 = vld [vmem:[#allocation22 + $0x3c8] sm:$0xff]
      %v9307 = vld [vmem:[#allocation22 + $0x3d0] sm:$0xff]
      %v9308 = vld [vmem:[#allocation22 + $0x3d8] sm:$0xff]
      %v9309 = vld [vmem:[#allocation22 + $0x3e0] sm:$0xff]
      %v9310 = vld [vmem:[#allocation22 + $0x3e8] sm:$0xff]
      %v9311 = vld [vmem:[#allocation22 + $0x3f0] sm:$0xff]
      %v9312 = vld [vmem:[#allocation22 + $0x3f8] sm:$0xff]
      %v9441 = vunpack.c.l.b16 %v9185
      %v9442 = vunpack.c.h.b16 %v9185
      %v9443 = vunpack.c.l.b16 %v9186
      %v9444 = vunpack.c.h.b16 %v9186
      %v9445 = vunpack.c.l.b16 %v9187
      %v9446 = vunpack.c.h.b16 %v9187
      %v9447 = vunpack.c.l.b16 %v9188
      %v9448 = vunpack.c.h.b16 %v9188
      %v9449 = vunpack.c.l.b16 %v9189
      %v9450 = vunpack.c.h.b16 %v9189
      %v9451 = vunpack.c.l.b16 %v9190
      %v9452 = vunpack.c.h.b16 %v9190
      %v9453 = vunpack.c.l.b16 %v9191
      %v9454 = vunpack.c.h.b16 %v9191
      %v9455 = vunpack.c.l.b16 %v9192
      %v9456 = vunpack.c.h.b16 %v9192
      %v9457 = vunpack.c.l.b16 %v9193
      %v9458 = vunpack.c.h.b16 %v9193
      %v9459 = vunpack.c.l.b16 %v9194
      %v9460 = vunpack.c.h.b16 %v9194
      %v9461 = vunpack.c.l.b16 %v9195
      %v9462 = vunpack.c.h.b16 %v9195
      %v9463 = vunpack.c.l.b16 %v9196
      %v9464 = vunpack.c.h.b16 %v9196
      %v9465 = vunpack.c.l.b16 %v9197
      %v9466 = vunpack.c.h.b16 %v9197
      %v9467 = vunpack.c.l.b16 %v9198
      %v9468 = vunpack.c.h.b16 %v9198
      %v9469 = vunpack.c.l.b16 %v9199
      %v9470 = vunpack.c.h.b16 %v9199
      %v9471 = vunpack.c.l.b16 %v9200
      %v9472 = vunpack.c.h.b16 %v9200
      %v9473 = vunpack.c.l.b16 %v9201
      %v9474 = vunpack.c.h.b16 %v9201
      %v9475 = vunpack.c.l.b16 %v9202
      %v9476 = vunpack.c.h.b16 %v9202
      %v9477 = vunpack.c.l.b16 %v9203
      %v9478 = vunpack.c.h.b16 %v9203
      %v9479 = vunpack.c.l.b16 %v9204
      %v9480 = vunpack.c.h.b16 %v9204
      %v9481 = vunpack.c.l.b16 %v9205
      %v9482 = vunpack.c.h.b16 %v9205
      %v9483 = vunpack.c.l.b16 %v9206
      %v9484 = vunpack.c.h.b16 %v9206
      %v9485 = vunpack.c.l.b16 %v9207
      %v9486 = vunpack.c.h.b16 %v9207
      %v9487 = vunpack.c.l.b16 %v9208
      %v9488 = vunpack.c.h.b16 %v9208
      %v9489 = vunpack.c.l.b16 %v9209
      %v9490 = vunpack.c.h.b16 %v9209
      %v9491 = vunpack.c.l.b16 %v9210
      %v9492 = vunpack.c.h.b16 %v9210
      %v9493 = vunpack.c.l.b16 %v9211
      %v9494 = vunpack.c.h.b16 %v9211
      %v9495 = vunpack.c.l.b16 %v9212
      %v9496 = vunpack.c.h.b16 %v9212
      %v9497 = vunpack.c.l.b16 %v9213
      %v9498 = vunpack.c.h.b16 %v9213
      %v9499 = vunpack.c.l.b16 %v9214
      %v9500 = vunpack.c.h.b16 %v9214
      %v9501 = vunpack.c.l.b16 %v9215
      %v9502 = vunpack.c.h.b16 %v9215
      %v9503 = vunpack.c.l.b16 %v9216
      %v9504 = vunpack.c.h.b16 %v9216
      %v9505 = vunpack.c.l.b16 %v9217
      %v9506 = vunpack.c.h.b16 %v9217
      %v9507 = vunpack.c.l.b16 %v9218
      %v9508 = vunpack.c.h.b16 %v9218
      %v9509 = vunpack.c.l.b16 %v9219
      %v9510 = vunpack.c.h.b16 %v9219
      %v9511 = vunpack.c.l.b16 %v9220
      %v9512 = vunpack.c.h.b16 %v9220
      %v9513 = vunpack.c.l.b16 %v9221
      %v9514 = vunpack.c.h.b16 %v9221
      %v9515 = vunpack.c.l.b16 %v9222
      %v9516 = vunpack.c.h.b16 %v9222
      %v9517 = vunpack.c.l.b16 %v9223
      %v9518 = vunpack.c.h.b16 %v9223
      %v9519 = vunpack.c.l.b16 %v9224
      %v9520 = vunpack.c.h.b16 %v9224
      %v9521 = vunpack.c.l.b16 %v9225
      %v9522 = vunpack.c.h.b16 %v9225
      %v9523 = vunpack.c.l.b16 %v9226
      %v9524 = vunpack.c.h.b16 %v9226
      %v9525 = vunpack.c.l.b16 %v9227
      %v9526 = vunpack.c.h.b16 %v9227
      %v9527 = vunpack.c.l.b16 %v9228
      %v9528 = vunpack.c.h.b16 %v9228
      %v9529 = vunpack.c.l.b16 %v9229
      %v9530 = vunpack.c.h.b16 %v9229
      %v9531 = vunpack.c.l.b16 %v9230
      %v9532 = vunpack.c.h.b16 %v9230
      %v9533 = vunpack.c.l.b16 %v9231
      %v9534 = vunpack.c.h.b16 %v9231
      %v9535 = vunpack.c.l.b16 %v9232
      %v9536 = vunpack.c.h.b16 %v9232
      %v9537 = vunpack.c.l.b16 %v9233
      %v9538 = vunpack.c.h.b16 %v9233
      %v9539 = vunpack.c.l.b16 %v9234
      %v9540 = vunpack.c.h.b16 %v9234
      %v9541 = vunpack.c.l.b16 %v9235
      %v9542 = vunpack.c.h.b16 %v9235
      %v9543 = vunpack.c.l.b16 %v9236
      %v9544 = vunpack.c.h.b16 %v9236
      %v9545 = vunpack.c.l.b16 %v9237
      %v9546 = vunpack.c.h.b16 %v9237
      %v9547 = vunpack.c.l.b16 %v9238
      %v9548 = vunpack.c.h.b16 %v9238
      %v9549 = vunpack.c.l.b16 %v9239
      %v9550 = vunpack.c.h.b16 %v9239
      %v9551 = vunpack.c.l.b16 %v9240
      %v9552 = vunpack.c.h.b16 %v9240
      %v9553 = vunpack.c.l.b16 %v9241
      %v9554 = vunpack.c.h.b16 %v9241
      %v9555 = vunpack.c.l.b16 %v9242
      %v9556 = vunpack.c.h.b16 %v9242
      %v9557 = vunpack.c.l.b16 %v9243
      %v9558 = vunpack.c.h.b16 %v9243
      %v9559 = vunpack.c.l.b16 %v9244
      %v9560 = vunpack.c.h.b16 %v9244
      %v9561 = vunpack.c.l.b16 %v9245
      %v9562 = vunpack.c.h.b16 %v9245
      %v9563 = vunpack.c.l.b16 %v9246
      %v9564 = vunpack.c.h.b16 %v9246
      %v9565 = vunpack.c.l.b16 %v9247
      %v9566 = vunpack.c.h.b16 %v9247
      %v9567 = vunpack.c.l.b16 %v9248
      %v9568 = vunpack.c.h.b16 %v9248
      %v9569 = vunpack.c.l.b16 %v9249
      %v9570 = vunpack.c.h.b16 %v9249
      %v9571 = vunpack.c.l.b16 %v9250
      %v9572 = vunpack.c.h.b16 %v9250
      %v9573 = vunpack.c.l.b16 %v9251
      %v9574 = vunpack.c.h.b16 %v9251
      %v9575 = vunpack.c.l.b16 %v9252
      %v9576 = vunpack.c.h.b16 %v9252
      %v9577 = vunpack.c.l.b16 %v9253
      %v9578 = vunpack.c.h.b16 %v9253
      %v9579 = vunpack.c.l.b16 %v9254
      %v9580 = vunpack.c.h.b16 %v9254
      %v9581 = vunpack.c.l.b16 %v9255
      %v9582 = vunpack.c.h.b16 %v9255
      %v9583 = vunpack.c.l.b16 %v9256
      %v9584 = vunpack.c.h.b16 %v9256
      %v9585 = vunpack.c.l.b16 %v9257
      %v9586 = vunpack.c.h.b16 %v9257
      %v9587 = vunpack.c.l.b16 %v9258
      %v9588 = vunpack.c.h.b16 %v9258
      %v9589 = vunpack.c.l.b16 %v9259
      %v9590 = vunpack.c.h.b16 %v9259
      %v9591 = vunpack.c.l.b16 %v9260
      %v9592 = vunpack.c.h.b16 %v9260
      %v9593 = vunpack.c.l.b16 %v9261
      %v9594 = vunpack.c.h.b16 %v9261
      %v9595 = vunpack.c.l.b16 %v9262
      %v9596 = vunpack.c.h.b16 %v9262
      %v9597 = vunpack.c.l.b16 %v9263
      %v9598 = vunpack.c.h.b16 %v9263
      %v9599 = vunpack.c.l.b16 %v9264
      %v9600 = vunpack.c.h.b16 %v9264
      %v9601 = vunpack.c.l.b16 %v9265
      %v9602 = vunpack.c.h.b16 %v9265
      %v9603 = vunpack.c.l.b16 %v9266
      %v9604 = vunpack.c.h.b16 %v9266
      %v9605 = vunpack.c.l.b16 %v9267
      %v9606 = vunpack.c.h.b16 %v9267
      %v9607 = vunpack.c.l.b16 %v9268
      %v9608 = vunpack.c.h.b16 %v9268
      %v9609 = vunpack.c.l.b16 %v9269
      %v9610 = vunpack.c.h.b16 %v9269
      %v9611 = vunpack.c.l.b16 %v9270
      %v9612 = vunpack.c.h.b16 %v9270
      %v9613 = vunpack.c.l.b16 %v9271
      %v9614 = vunpack.c.h.b16 %v9271
      %v9615 = vunpack.c.l.b16 %v9272
      %v9616 = vunpack.c.h.b16 %v9272
      %v9617 = vunpack.c.l.b16 %v9273
      %v9618 = vunpack.c.h.b16 %v9273
      %v9619 = vunpack.c.l.b16 %v9274
      %v9620 = vunpack.c.h.b16 %v9274
      %v9621 = vunpack.c.l.b16 %v9275
      %v9622 = vunpack.c.h.b16 %v9275
      %v9623 = vunpack.c.l.b16 %v9276
      %v9624 = vunpack.c.h.b16 %v9276
      %v9625 = vunpack.c.l.b16 %v9277
      %v9626 = vunpack.c.h.b16 %v9277
      %v9627 = vunpack.c.l.b16 %v9278
      %v9628 = vunpack.c.h.b16 %v9278
      %v9629 = vunpack.c.l.b16 %v9279
      %v9630 = vunpack.c.h.b16 %v9279
      %v9631 = vunpack.c.l.b16 %v9280
      %v9632 = vunpack.c.h.b16 %v9280
      %v9633 = vunpack.c.l.b16 %v9281
      %v9634 = vunpack.c.h.b16 %v9281
      %v9635 = vunpack.c.l.b16 %v9282
      %v9636 = vunpack.c.h.b16 %v9282
      %v9637 = vunpack.c.l.b16 %v9283
      %v9638 = vunpack.c.h.b16 %v9283
      %v9639 = vunpack.c.l.b16 %v9284
      %v9640 = vunpack.c.h.b16 %v9284
      %v9641 = vunpack.c.l.b16 %v9285
      %v9642 = vunpack.c.h.b16 %v9285
      %v9643 = vunpack.c.l.b16 %v9286
      %v9644 = vunpack.c.h.b16 %v9286
      %v9645 = vunpack.c.l.b16 %v9287
      %v9646 = vunpack.c.h.b16 %v9287
      %v9647 = vunpack.c.l.b16 %v9288
      %v9648 = vunpack.c.h.b16 %v9288
      %v9649 = vunpack.c.l.b16 %v9289
      %v9650 = vunpack.c.h.b16 %v9289
      %v9651 = vunpack.c.l.b16 %v9290
      %v9652 = vunpack.c.h.b16 %v9290
      %v9653 = vunpack.c.l.b16 %v9291
      %v9654 = vunpack.c.h.b16 %v9291
      %v9655 = vunpack.c.l.b16 %v9292
      %v9656 = vunpack.c.h.b16 %v9292
      %v9657 = vunpack.c.l.b16 %v9293
      %v9658 = vunpack.c.h.b16 %v9293
      %v9659 = vunpack.c.l.b16 %v9294
      %v9660 = vunpack.c.h.b16 %v9294
      %v9661 = vunpack.c.l.b16 %v9295
      %v9662 = vunpack.c.h.b16 %v9295
      %v9663 = vunpack.c.l.b16 %v9296
      %v9664 = vunpack.c.h.b16 %v9296
      %v9665 = vunpack.c.l.b16 %v9297
      %v9666 = vunpack.c.h.b16 %v9297
      %v9667 = vunpack.c.l.b16 %v9298
      %v9668 = vunpack.c.h.b16 %v9298
      %v9669 = vunpack.c.l.b16 %v9299
      %v9670 = vunpack.c.h.b16 %v9299
      %v9671 = vunpack.c.l.b16 %v9300
      %v9672 = vunpack.c.h.b16 %v9300
      %v9673 = vunpack.c.l.b16 %v9301
      %v9674 = vunpack.c.h.b16 %v9301
      %v9675 = vunpack.c.l.b16 %v9302
      %v9676 = vunpack.c.h.b16 %v9302
      %v9677 = vunpack.c.l.b16 %v9303
      %v9678 = vunpack.c.h.b16 %v9303
      %v9679 = vunpack.c.l.b16 %v9304
      %v9680 = vunpack.c.h.b16 %v9304
      %v9681 = vunpack.c.l.b16 %v9305
      %v9682 = vunpack.c.h.b16 %v9305
      %v9683 = vunpack.c.l.b16 %v9306
      %v9684 = vunpack.c.h.b16 %v9306
      %v9685 = vunpack.c.l.b16 %v9307
      %v9686 = vunpack.c.h.b16 %v9307
      %v9687 = vunpack.c.l.b16 %v9308
      %v9688 = vunpack.c.h.b16 %v9308
      %v9689 = vunpack.c.l.b16 %v9309
      %v9690 = vunpack.c.h.b16 %v9309
      %v9691 = vunpack.c.l.b16 %v9310
      %v9692 = vunpack.c.h.b16 %v9310
      %v9693 = vunpack.c.l.b16 %v9311
      %v9694 = vunpack.c.h.b16 %v9311
      %v9695 = vunpack.c.l.b16 %v9312
      %v9696 = vunpack.c.h.b16 %v9312
      %v9697 = vpack.c.b16 %v9445, %v9441
      %v9698 = vpack.c.b16 %v9446, %v9442
      %v9699 = vpack.c.b16 %v9447, %v9443
      %v9700 = vpack.c.b16 %v9448, %v9444
      %v9701 = vpack.c.b16 %v9453, %v9449
      %v9702 = vpack.c.b16 %v9454, %v9450
      %v9703 = vpack.c.b16 %v9455, %v9451
      %v9704 = vpack.c.b16 %v9456, %v9452
      %v9705 = vpack.c.b16 %v9461, %v9457
      %v9706 = vpack.c.b16 %v9462, %v9458
      %v9707 = vpack.c.b16 %v9463, %v9459
      %v9708 = vpack.c.b16 %v9464, %v9460
      %v9709 = vpack.c.b16 %v9469, %v9465
      %v9710 = vpack.c.b16 %v9470, %v9466
      %v9711 = vpack.c.b16 %v9471, %v9467
      %v9712 = vpack.c.b16 %v9472, %v9468
      %v9713 = vpack.c.b16 %v9477, %v9473
      %v9714 = vpack.c.b16 %v9478, %v9474
      %v9715 = vpack.c.b16 %v9479, %v9475
      %v9716 = vpack.c.b16 %v9480, %v9476
      %v9717 = vpack.c.b16 %v9485, %v9481
      %v9718 = vpack.c.b16 %v9486, %v9482
      %v9719 = vpack.c.b16 %v9487, %v9483
      %v9720 = vpack.c.b16 %v9488, %v9484
      %v9721 = vpack.c.b16 %v9493, %v9489
      %v9722 = vpack.c.b16 %v9494, %v9490
      %v9723 = vpack.c.b16 %v9495, %v9491
      %v9724 = vpack.c.b16 %v9496, %v9492
      %v9725 = vpack.c.b16 %v9501, %v9497
      %v9726 = vpack.c.b16 %v9502, %v9498
      %v9727 = vpack.c.b16 %v9503, %v9499
      %v9728 = vpack.c.b16 %v9504, %v9500
      %v9729 = vpack.c.b16 %v9509, %v9505
      %v9730 = vpack.c.b16 %v9510, %v9506
      %v9731 = vpack.c.b16 %v9511, %v9507
      %v9732 = vpack.c.b16 %v9512, %v9508
      %v9733 = vpack.c.b16 %v9517, %v9513
      %v9734 = vpack.c.b16 %v9518, %v9514
      %v9735 = vpack.c.b16 %v9519, %v9515
      %v9736 = vpack.c.b16 %v9520, %v9516
      %v9737 = vpack.c.b16 %v9525, %v9521
      %v9738 = vpack.c.b16 %v9526, %v9522
      %v9739 = vpack.c.b16 %v9527, %v9523
      %v9740 = vpack.c.b16 %v9528, %v9524
      %v9741 = vpack.c.b16 %v9533, %v9529
      %v9742 = vpack.c.b16 %v9534, %v9530
      %v9743 = vpack.c.b16 %v9535, %v9531
      %v9744 = vpack.c.b16 %v9536, %v9532
      %v9745 = vpack.c.b16 %v9541, %v9537
      %v9746 = vpack.c.b16 %v9542, %v9538
      %v9747 = vpack.c.b16 %v9543, %v9539
      %v9748 = vpack.c.b16 %v9544, %v9540
      %v9749 = vpack.c.b16 %v9549, %v9545
      %v9750 = vpack.c.b16 %v9550, %v9546
      %v9751 = vpack.c.b16 %v9551, %v9547
      %v9752 = vpack.c.b16 %v9552, %v9548
      %v9753 = vpack.c.b16 %v9557, %v9553
      %v9754 = vpack.c.b16 %v9558, %v9554
      %v9755 = vpack.c.b16 %v9559, %v9555
      %v9756 = vpack.c.b16 %v9560, %v9556
      %v9757 = vpack.c.b16 %v9565, %v9561
      %v9758 = vpack.c.b16 %v9566, %v9562
      %v9759 = vpack.c.b16 %v9567, %v9563
      %v9760 = vpack.c.b16 %v9568, %v9564
      %v9761 = vpack.c.b16 %v9573, %v9569
      %v9762 = vpack.c.b16 %v9574, %v9570
      %v9763 = vpack.c.b16 %v9575, %v9571
      %v9764 = vpack.c.b16 %v9576, %v9572
      %v9765 = vpack.c.b16 %v9581, %v9577
      %v9766 = vpack.c.b16 %v9582, %v9578
      %v9767 = vpack.c.b16 %v9583, %v9579
      %v9768 = vpack.c.b16 %v9584, %v9580
      %v9769 = vpack.c.b16 %v9589, %v9585
      %v9770 = vpack.c.b16 %v9590, %v9586
      %v9771 = vpack.c.b16 %v9591, %v9587
      %v9772 = vpack.c.b16 %v9592, %v9588
      %v9773 = vpack.c.b16 %v9597, %v9593
      %v9774 = vpack.c.b16 %v9598, %v9594
      %v9775 = vpack.c.b16 %v9599, %v9595
      %v9776 = vpack.c.b16 %v9600, %v9596
      %v9777 = vpack.c.b16 %v9605, %v9601
      %v9778 = vpack.c.b16 %v9606, %v9602
      %v9779 = vpack.c.b16 %v9607, %v9603
      %v9780 = vpack.c.b16 %v9608, %v9604
      %v9781 = vpack.c.b16 %v9613, %v9609
      %v9782 = vpack.c.b16 %v9614, %v9610
      %v9783 = vpack.c.b16 %v9615, %v9611
      %v9784 = vpack.c.b16 %v9616, %v9612
      %v9785 = vpack.c.b16 %v9621, %v9617
      %v9786 = vpack.c.b16 %v9622, %v9618
      %v9787 = vpack.c.b16 %v9623, %v9619
      %v9788 = vpack.c.b16 %v9624, %v9620
      %v9789 = vpack.c.b16 %v9629, %v9625
      %v9790 = vpack.c.b16 %v9630, %v9626
      %v9791 = vpack.c.b16 %v9631, %v9627
      %v9792 = vpack.c.b16 %v9632, %v9628
      %v9793 = vpack.c.b16 %v9637, %v9633
      %v9794 = vpack.c.b16 %v9638, %v9634
      %v9795 = vpack.c.b16 %v9639, %v9635
      %v9796 = vpack.c.b16 %v9640, %v9636
      %v9797 = vpack.c.b16 %v9645, %v9641
      %v9798 = vpack.c.b16 %v9646, %v9642
      %v9799 = vpack.c.b16 %v9647, %v9643
      %v9800 = vpack.c.b16 %v9648, %v9644
      %v9801 = vpack.c.b16 %v9653, %v9649
      %v9802 = vpack.c.b16 %v9654, %v9650
      %v9803 = vpack.c.b16 %v9655, %v9651
      %v9804 = vpack.c.b16 %v9656, %v9652
      %v9805 = vpack.c.b16 %v9661, %v9657
      %v9806 = vpack.c.b16 %v9662, %v9658
      %v9807 = vpack.c.b16 %v9663, %v9659
      %v9808 = vpack.c.b16 %v9664, %v9660
      %v9809 = vpack.c.b16 %v9669, %v9665
      %v9810 = vpack.c.b16 %v9670, %v9666
      %v9811 = vpack.c.b16 %v9671, %v9667
      %v9812 = vpack.c.b16 %v9672, %v9668
      %v9813 = vpack.c.b16 %v9677, %v9673
      %v9814 = vpack.c.b16 %v9678, %v9674
      %v9815 = vpack.c.b16 %v9679, %v9675
      %v9816 = vpack.c.b16 %v9680, %v9676
      %v9817 = vpack.c.b16 %v9685, %v9681
      %v9818 = vpack.c.b16 %v9686, %v9682
      %v9819 = vpack.c.b16 %v9687, %v9683
      %v9820 = vpack.c.b16 %v9688, %v9684
      %v9821 = vpack.c.b16 %v9693, %v9689
      %v9822 = vpack.c.b16 %v9694, %v9690
      %v9823 = vpack.c.b16 %v9695, %v9691
      %v9824 = vpack.c.b16 %v9696, %v9692
      %9953 = vmatpush.bf16.msra.mxu0 %v9725
      %9954 = vmatpush.bf16.msra.mxu0 %v9721
      %9955 = vmatpush.bf16.msra.mxu0 %v9717
      %9956 = vmatpush.bf16.msra.mxu0 %v9713
      %9957 = vmatpush.bf16.msra.mxu0 %v9709
      %9958 = vmatpush.bf16.msra.mxu0 %v9705
      %9959 = vmatpush.bf16.msra.mxu0 %v9701
      %9960 = vmatpush.bf16.msra.mxu0 %v9697
      %9961 = vmatmul.bf16.gmra.mxu0 %v9181
      %v9962 = vpop.f32.mrf.mxu0
      %v9963 = vadd.f32 0.0, %v9962
      %v9964 = vpop.f32.mrf.mxu0
      %9965 = vdwg.mxu0
      %9966 = vmatpush.bf16.msra.mxu0 %v9757
      %9967 = vmatpush.bf16.msra.mxu0 %v9753
      %9968 = vmatpush.bf16.msra.mxu0 %v9749
      %9969 = vmatpush.bf16.msra.mxu0 %v9745
      %9970 = vmatpush.bf16.msra.mxu0 %v9741
      %9971 = vmatpush.bf16.msra.mxu0 %v9737
      %9972 = vmatpush.bf16.msra.mxu0 %v9733
      %9973 = vmatpush.bf16.msra.mxu0 %v9729
      %9974 = vmatmul.bf16.gmra.mxu0 %v9182
      %v9975 = vpop.f32.mrf.mxu0
      %v9976 = vadd.f32 %v9963, %v9975
      %v9977 = vpop.f32.mrf.mxu0
      %9978 = vdwg.mxu0
      %9979 = vmatpush.bf16.msra.mxu0 %v9789
      %9980 = vmatpush.bf16.msra.mxu0 %v9785
      %9981 = vmatpush.bf16.msra.mxu0 %v9781
      %9982 = vmatpush.bf16.msra.mxu0 %v9777
      %9983 = vmatpush.bf16.msra.mxu0 %v9773
      %9984 = vmatpush.bf16.msra.mxu0 %v9769
      %9985 = vmatpush.bf16.msra.mxu0 %v9765
      %9986 = vmatpush.bf16.msra.mxu0 %v9761
      %9987 = vmatmul.bf16.gmra.mxu0 %v9183
      %v9988 = vpop.f32.mrf.mxu0
      %v9989 = vadd.f32 %v9976, %v9988
      %v9990 = vpop.f32.mrf.mxu0
      %9991 = vdwg.mxu0
      %9992 = vmatpush.bf16.msra.mxu0 %v9821
      %9993 = vmatpush.bf16.msra.mxu0 %v9817
      %9994 = vmatpush.bf16.msra.mxu0 %v9813
      %9995 = vmatpush.bf16.msra.mxu0 %v9809
      %9996 = vmatpush.bf16.msra.mxu0 %v9805
      %9997 = vmatpush.bf16.msra.mxu0 %v9801
      %9998 = vmatpush.bf16.msra.mxu0 %v9797
      %9999 = vmatpush.bf16.msra.mxu0 %v9793
      %10000 = vmatmul.bf16.gmra.mxu0 %v9184
      %v10001 = vpop.f32.mrf.mxu0
      %v10002 = vadd.f32 %v9989, %v10001
      %v10003 = vpop.f32.mrf.mxu0
      %10004 = vdwg.mxu0
      %10005 = vmatpush.bf16.msra.mxu0 %v9726
      %10006 = vmatpush.bf16.msra.mxu0 %v9722
      %10007 = vmatpush.bf16.msra.mxu0 %v9718
      %10008 = vmatpush.bf16.msra.mxu0 %v9714
      %10009 = vmatpush.bf16.msra.mxu0 %v9710
      %10010 = vmatpush.bf16.msra.mxu0 %v9706
      %10011 = vmatpush.bf16.msra.mxu0 %v9702
      %10012 = vmatpush.bf16.msra.mxu0 %v9698
      %10013 = vmatmul.bf16.gmra.mxu0 %v9181
      %v10014 = vpop.f32.mrf.mxu0
      %v10015 = vadd.f32 0.0, %v10014
      %v10016 = vpop.f32.mrf.mxu0
      %10017 = vdwg.mxu0
      %10018 = vmatpush.bf16.msra.mxu0 %v9758
      %10019 = vmatpush.bf16.msra.mxu0 %v9754
      %10020 = vmatpush.bf16.msra.mxu0 %v9750
      %10021 = vmatpush.bf16.msra.mxu0 %v9746
      %10022 = vmatpush.bf16.msra.mxu0 %v9742
      %10023 = vmatpush.bf16.msra.mxu0 %v9738
      %10024 = vmatpush.bf16.msra.mxu0 %v9734
      %10025 = vmatpush.bf16.msra.mxu0 %v9730
      %10026 = vmatmul.bf16.gmra.mxu0 %v9182
      %v10027 = vpop.f32.mrf.mxu0
      %v10028 = vadd.f32 %v10015, %v10027
      %v10029 = vpop.f32.mrf.mxu0
      %10030 = vdwg.mxu0
      %10031 = vmatpush.bf16.msra.mxu0 %v9790
      %10032 = vmatpush.bf16.msra.mxu0 %v9786
      %10033 = vmatpush.bf16.msra.mxu0 %v9782
      %10034 = vmatpush.bf16.msra.mxu0 %v9778
      %10035 = vmatpush.bf16.msra.mxu0 %v9774
      %10036 = vmatpush.bf16.msra.mxu0 %v9770
      %10037 = vmatpush.bf16.msra.mxu0 %v9766
      %10038 = vmatpush.bf16.msra.mxu0 %v9762
      %10039 = vmatmul.bf16.gmra.mxu0 %v9183
      %v10040 = vpop.f32.mrf.mxu0
      %v10041 = vadd.f32 %v10028, %v10040
      %v10042 = vpop.f32.mrf.mxu0
      %10043 = vdwg.mxu0
      %10044 = vmatpush.bf16.msra.mxu0 %v9822
      %10045 = vmatpush.bf16.msra.mxu0 %v9818
      %10046 = vmatpush.bf16.msra.mxu0 %v9814
      %10047 = vmatpush.bf16.msra.mxu0 %v9810
      %10048 = vmatpush.bf16.msra.mxu0 %v9806
      %10049 = vmatpush.bf16.msra.mxu0 %v9802
      %10050 = vmatpush.bf16.msra.mxu0 %v9798
      %10051 = vmatpush.bf16.msra.mxu0 %v9794
      %10052 = vmatmul.bf16.gmra.mxu0 %v9184
      %v10053 = vpop.f32.mrf.mxu0
      %v10054 = vadd.f32 %v10041, %v10053
      %v10055 = vpop.f32.mrf.mxu0
      %10056 = vdwg.mxu0
      %10057 = vmatpush.bf16.msra.mxu0 %v9727
      %10058 = vmatpush.bf16.msra.mxu0 %v9723
      %10059 = vmatpush.bf16.msra.mxu0 %v9719
      %10060 = vmatpush.bf16.msra.mxu0 %v9715
      %10061 = vmatpush.bf16.msra.mxu0 %v9711
      %10062 = vmatpush.bf16.msra.mxu0 %v9707
      %10063 = vmatpush.bf16.msra.mxu0 %v9703
      %10064 = vmatpush.bf16.msra.mxu0 %v9699
      %10065 = vmatmul.bf16.gmra.mxu0 %v9181
      %v10066 = vpop.f32.mrf.mxu0
      %v10067 = vadd.f32 0.0, %v10066
      %v10068 = vpop.f32.mrf.mxu0
      %10069 = vdwg.mxu0
      %10070 = vmatpush.bf16.msra.mxu0 %v9759
      %10071 = vmatpush.bf16.msra.mxu0 %v9755
      %10072 = vmatpush.bf16.msra.mxu0 %v9751
      %10073 = vmatpush.bf16.msra.mxu0 %v9747
      %10074 = vmatpush.bf16.msra.mxu0 %v9743
      %10075 = vmatpush.bf16.msra.mxu0 %v9739
      %10076 = vmatpush.bf16.msra.mxu0 %v9735
      %10077 = vmatpush.bf16.msra.mxu0 %v9731
      %10078 = vmatmul.bf16.gmra.mxu0 %v9182
      %v10079 = vpop.f32.mrf.mxu0
      %v10080 = vadd.f32 %v10067, %v10079
      %v10081 = vpop.f32.mrf.mxu0
      %10082 = vdwg.mxu0
      %10083 = vmatpush.bf16.msra.mxu0 %v9791
      %10084 = vmatpush.bf16.msra.mxu0 %v9787
      %10085 = vmatpush.bf16.msra.mxu0 %v9783
      %10086 = vmatpush.bf16.msra.mxu0 %v9779
      %10087 = vmatpush.bf16.msra.mxu0 %v9775
      %10088 = vmatpush.bf16.msra.mxu0 %v9771
      %10089 = vmatpush.bf16.msra.mxu0 %v9767
      %10090 = vmatpush.bf16.msra.mxu0 %v9763
      %10091 = vmatmul.bf16.gmra.mxu0 %v9183
      %v10092 = vpop.f32.mrf.mxu0
      %v10093 = vadd.f32 %v10080, %v10092
      %v10094 = vpop.f32.mrf.mxu0
      %10095 = vdwg.mxu0
      %10096 = vmatpush.bf16.msra.mxu0 %v9823
      %10097 = vmatpush.bf16.msra.mxu0 %v9819
      %10098 = vmatpush.bf16.msra.mxu0 %v9815
      %10099 = vmatpush.bf16.msra.mxu0 %v9811
      %10100 = vmatpush.bf16.msra.mxu0 %v9807
      %10101 = vmatpush.bf16.msra.mxu0 %v9803
      %10102 = vmatpush.bf16.msra.mxu0 %v9799
      %10103 = vmatpush.bf16.msra.mxu0 %v9795
      %10104 = vmatmul.bf16.gmra.mxu0 %v9184
      %v10105 = vpop.f32.mrf.mxu0
      %v10106 = vadd.f32 %v10093, %v10105
      %v10107 = vpop.f32.mrf.mxu0
      %10108 = vdwg.mxu0
      %10109 = vmatpush.bf16.msra.mxu0 %v9728
      %10110 = vmatpush.bf16.msra.mxu0 %v9724
      %10111 = vmatpush.bf16.msra.mxu0 %v9720
      %10112 = vmatpush.bf16.msra.mxu0 %v9716
      %10113 = vmatpush.bf16.msra.mxu0 %v9712
      %10114 = vmatpush.bf16.msra.mxu0 %v9708
      %10115 = vmatpush.bf16.msra.mxu0 %v9704
      %10116 = vmatpush.bf16.msra.mxu0 %v9700
      %10117 = vmatmul.bf16.gmra.mxu0 %v9181
      %v10118 = vpop.f32.mrf.mxu0
      %v10119 = vadd.f32 0.0, %v10118
      %v10120 = vpop.f32.mrf.mxu0
      %10121 = vdwg.mxu0
      %10122 = vmatpush.bf16.msra.mxu0 %v9760
      %10123 = vmatpush.bf16.msra.mxu0 %v9756
      %10124 = vmatpush.bf16.msra.mxu0 %v9752
      %10125 = vmatpush.bf16.msra.mxu0 %v9748
      %10126 = vmatpush.bf16.msra.mxu0 %v9744
      %10127 = vmatpush.bf16.msra.mxu0 %v9740
      %10128 = vmatpush.bf16.msra.mxu0 %v9736
      %10129 = vmatpush.bf16.msra.mxu0 %v9732
      %10130 = vmatmul.bf16.gmra.mxu0 %v9182
      %v10131 = vpop.f32.mrf.mxu0
      %v10132 = vadd.f32 %v10119, %v10131
      %v10133 = vpop.f32.mrf.mxu0
      %10134 = vdwg.mxu0
      %10135 = vmatpush.bf16.msra.mxu0 %v9792
      %10136 = vmatpush.bf16.msra.mxu0 %v9788
      %10137 = vmatpush.bf16.msra.mxu0 %v9784
      %10138 = vmatpush.bf16.msra.mxu0 %v9780
      %10139 = vmatpush.bf16.msra.mxu0 %v9776
      %10140 = vmatpush.bf16.msra.mxu0 %v9772
      %10141 = vmatpush.bf16.msra.mxu0 %v9768
      %10142 = vmatpush.bf16.msra.mxu0 %v9764
      %10143 = vmatmul.bf16.gmra.mxu0 %v9183
      %v10144 = vpop.f32.mrf.mxu0
      %v10145 = vadd.f32 %v10132, %v10144
      %v10146 = vpop.f32.mrf.mxu0
      %10147 = vdwg.mxu0
      %10148 = vmatpush.bf16.msra.mxu0 %v9824
      %10149 = vmatpush.bf16.msra.mxu0 %v9820
      %10150 = vmatpush.bf16.msra.mxu0 %v9816
      %10151 = vmatpush.bf16.msra.mxu0 %v9812
      %10152 = vmatpush.bf16.msra.mxu0 %v9808
      %10153 = vmatpush.bf16.msra.mxu0 %v9804
      %10154 = vmatpush.bf16.msra.mxu0 %v9800
      %10155 = vmatpush.bf16.msra.mxu0 %v9796
      %10156 = vmatmul.bf16.gmra.mxu0 %v9184
      %v10157 = vpop.f32.mrf.mxu0
      %v10158 = vadd.f32 %v10145, %v10157
      %v10159 = vpop.f32.mrf.mxu0
      %10160 = vdwg.mxu0
      %v10161 = vadd.f32 %v9022, %v10002
      %v10162 = vadd.f32 %v9074, %v10054
      %v10163 = vadd.f32 %v9126, %v10106
      %v10164 = vadd.f32 %v9178, %v10158
      %v10165 = vld [vmem:[#allocation24] sm:$0xf]
      %v10167 = vperm.slane %v10165, 0
      %v10168 = vperm.slane %v10165, 1
      %v10169 = vperm.slane %v10165, 2
      %v10170 = vperm.slane %v10165, 3
      %v10175 = vadd.f32 %v10161, %v10167
      %v10176 = vadd.f32 %v10162, %v10168
      %v10177 = vadd.f32 %v10163, %v10169
      %v10178 = vadd.f32 %v10164, %v10170
      %v10179 = vmax.f32 %v10175, 0.0
      %v10180 = vmax.f32 %v10176, 0.0
      %v10181 = vmax.f32 %v10177, 0.0
      %v10182 = vmax.f32 %v10178, 0.0
      %v10183 = vpack.c.bf16 %v10179, %v10179
      %v10184 = vpack.c.bf16 %v10180, %v10180
      %v10185 = vpack.c.bf16 %v10181, %v10181
      %v10186 = vpack.c.bf16 %v10182, %v10182
      %v10187 = vld [vmem:[#allocation25] sm:$0xf]
      %v10188 = vld [vmem:[#allocation25 + $0x4] sm:$0xf]
      %v10189 = vld [vmem:[#allocation25 + $0x8] sm:$0xf]
      %v10190 = vld [vmem:[#allocation25 + $0xc] sm:$0xf]
      %v10191 = vld [vmem:[#allocation25 + $0x10] sm:$0xf]
      %v10192 = vld [vmem:[#allocation25 + $0x14] sm:$0xf]
      %v10193 = vld [vmem:[#allocation25 + $0x18] sm:$0xf]
      %v10194 = vld [vmem:[#allocation25 + $0x1c] sm:$0xf]
      %v10195 = vld [vmem:[#allocation25 + $0x20] sm:$0xf]
      %v10196 = vld [vmem:[#allocation25 + $0x24] sm:$0xf]
      %v10197 = vld [vmem:[#allocation25 + $0x28] sm:$0xf]
      %v10198 = vld [vmem:[#allocation25 + $0x2c] sm:$0xf]
      %v10199 = vld [vmem:[#allocation25 + $0x30] sm:$0xf]
      %v10200 = vld [vmem:[#allocation25 + $0x34] sm:$0xf]
      %v10201 = vld [vmem:[#allocation25 + $0x38] sm:$0xf]
      %v10202 = vld [vmem:[#allocation25 + $0x3c] sm:$0xf]
      %v10203 = vld [vmem:[#allocation25 + $0x40] sm:$0xf]
      %v10204 = vld [vmem:[#allocation25 + $0x44] sm:$0xf]
      %v10205 = vld [vmem:[#allocation25 + $0x48] sm:$0xf]
      %v10206 = vld [vmem:[#allocation25 + $0x4c] sm:$0xf]
      %v10207 = vld [vmem:[#allocation25 + $0x50] sm:$0xf]
      %v10208 = vld [vmem:[#allocation25 + $0x54] sm:$0xf]
      %v10209 = vld [vmem:[#allocation25 + $0x58] sm:$0xf]
      %v10210 = vld [vmem:[#allocation25 + $0x5c] sm:$0xf]
      %v10211 = vld [vmem:[#allocation25 + $0x60] sm:$0xf]
      %v10212 = vld [vmem:[#allocation25 + $0x64] sm:$0xf]
      %v10213 = vld [vmem:[#allocation25 + $0x68] sm:$0xf]
      %v10214 = vld [vmem:[#allocation25 + $0x6c] sm:$0xf]
      %v10215 = vld [vmem:[#allocation25 + $0x70] sm:$0xf]
      %v10216 = vld [vmem:[#allocation25 + $0x74] sm:$0xf]
      %v10217 = vld [vmem:[#allocation25 + $0x78] sm:$0xf]
      %v10218 = vld [vmem:[#allocation25 + $0x7c] sm:$0xf]
      %v10219 = vld [vmem:[#allocation25 + $0x80] sm:$0xf]
      %v10220 = vld [vmem:[#allocation25 + $0x84] sm:$0xf]
      %v10221 = vld [vmem:[#allocation25 + $0x88] sm:$0xf]
      %v10222 = vld [vmem:[#allocation25 + $0x8c] sm:$0xf]
      %v10223 = vld [vmem:[#allocation25 + $0x90] sm:$0xf]
      %v10224 = vld [vmem:[#allocation25 + $0x94] sm:$0xf]
      %v10225 = vld [vmem:[#allocation25 + $0x98] sm:$0xf]
      %v10226 = vld [vmem:[#allocation25 + $0x9c] sm:$0xf]
      %v10227 = vld [vmem:[#allocation25 + $0xa0] sm:$0xf]
      %v10228 = vld [vmem:[#allocation25 + $0xa4] sm:$0xf]
      %v10229 = vld [vmem:[#allocation25 + $0xa8] sm:$0xf]
      %v10230 = vld [vmem:[#allocation25 + $0xac] sm:$0xf]
      %v10231 = vld [vmem:[#allocation25 + $0xb0] sm:$0xf]
      %v10232 = vld [vmem:[#allocation25 + $0xb4] sm:$0xf]
      %v10233 = vld [vmem:[#allocation25 + $0xb8] sm:$0xf]
      %v10234 = vld [vmem:[#allocation25 + $0xbc] sm:$0xf]
      %v10235 = vld [vmem:[#allocation25 + $0xc0] sm:$0xf]
      %v10236 = vld [vmem:[#allocation25 + $0xc4] sm:$0xf]
      %v10237 = vld [vmem:[#allocation25 + $0xc8] sm:$0xf]
      %v10238 = vld [vmem:[#allocation25 + $0xcc] sm:$0xf]
      %v10239 = vld [vmem:[#allocation25 + $0xd0] sm:$0xf]
      %v10240 = vld [vmem:[#allocation25 + $0xd4] sm:$0xf]
      %v10241 = vld [vmem:[#allocation25 + $0xd8] sm:$0xf]
      %v10242 = vld [vmem:[#allocation25 + $0xdc] sm:$0xf]
      %v10243 = vld [vmem:[#allocation25 + $0xe0] sm:$0xf]
      %v10244 = vld [vmem:[#allocation25 + $0xe4] sm:$0xf]
      %v10245 = vld [vmem:[#allocation25 + $0xe8] sm:$0xf]
      %v10246 = vld [vmem:[#allocation25 + $0xec] sm:$0xf]
      %v10247 = vld [vmem:[#allocation25 + $0xf0] sm:$0xf]
      %v10248 = vld [vmem:[#allocation25 + $0xf4] sm:$0xf]
      %v10249 = vld [vmem:[#allocation25 + $0xf8] sm:$0xf]
      %v10250 = vld [vmem:[#allocation25 + $0xfc] sm:$0xf]
      %v10251 = vld [vmem:[#allocation27] sm:$0x1]
      %v10253 = vperm.slane %v10251, 0
      %v10319 = vunpack.c.l.b16 %v10187
      %v10320 = vunpack.c.l.b16 %v10188
      %v10321 = vunpack.c.l.b16 %v10189
      %v10322 = vunpack.c.l.b16 %v10190
      %v10323 = vunpack.c.l.b16 %v10191
      %v10324 = vunpack.c.l.b16 %v10192
      %v10325 = vunpack.c.l.b16 %v10193
      %v10326 = vunpack.c.l.b16 %v10194
      %v10327 = vunpack.c.l.b16 %v10195
      %v10328 = vunpack.c.l.b16 %v10196
      %v10329 = vunpack.c.l.b16 %v10197
      %v10330 = vunpack.c.l.b16 %v10198
      %v10331 = vunpack.c.l.b16 %v10199
      %v10332 = vunpack.c.l.b16 %v10200
      %v10333 = vunpack.c.l.b16 %v10201
      %v10334 = vunpack.c.l.b16 %v10202
      %v10335 = vunpack.c.l.b16 %v10203
      %v10336 = vunpack.c.l.b16 %v10204
      %v10337 = vunpack.c.l.b16 %v10205
      %v10338 = vunpack.c.l.b16 %v10206
      %v10339 = vunpack.c.l.b16 %v10207
      %v10340 = vunpack.c.l.b16 %v10208
      %v10341 = vunpack.c.l.b16 %v10209
      %v10342 = vunpack.c.l.b16 %v10210
      %v10343 = vunpack.c.l.b16 %v10211
      %v10344 = vunpack.c.l.b16 %v10212
      %v10345 = vunpack.c.l.b16 %v10213
      %v10346 = vunpack.c.l.b16 %v10214
      %v10347 = vunpack.c.l.b16 %v10215
      %v10348 = vunpack.c.l.b16 %v10216
      %v10349 = vunpack.c.l.b16 %v10217
      %v10350 = vunpack.c.l.b16 %v10218
      %v10351 = vunpack.c.l.b16 %v10219
      %v10352 = vunpack.c.l.b16 %v10220
      %v10353 = vunpack.c.l.b16 %v10221
      %v10354 = vunpack.c.l.b16 %v10222
      %v10355 = vunpack.c.l.b16 %v10223
      %v10356 = vunpack.c.l.b16 %v10224
      %v10357 = vunpack.c.l.b16 %v10225
      %v10358 = vunpack.c.l.b16 %v10226
      %v10359 = vunpack.c.l.b16 %v10227
      %v10360 = vunpack.c.l.b16 %v10228
      %v10361 = vunpack.c.l.b16 %v10229
      %v10362 = vunpack.c.l.b16 %v10230
      %v10363 = vunpack.c.l.b16 %v10231
      %v10364 = vunpack.c.l.b16 %v10232
      %v10365 = vunpack.c.l.b16 %v10233
      %v10366 = vunpack.c.l.b16 %v10234
      %v10367 = vunpack.c.l.b16 %v10235
      %v10368 = vunpack.c.l.b16 %v10236
      %v10369 = vunpack.c.l.b16 %v10237
      %v10370 = vunpack.c.l.b16 %v10238
      %v10371 = vunpack.c.l.b16 %v10239
      %v10372 = vunpack.c.l.b16 %v10240
      %v10373 = vunpack.c.l.b16 %v10241
      %v10374 = vunpack.c.l.b16 %v10242
      %v10375 = vunpack.c.l.b16 %v10243
      %v10376 = vunpack.c.l.b16 %v10244
      %v10377 = vunpack.c.l.b16 %v10245
      %v10378 = vunpack.c.l.b16 %v10246
      %v10379 = vunpack.c.l.b16 %v10247
      %v10380 = vunpack.c.l.b16 %v10248
      %v10381 = vunpack.c.l.b16 %v10249
      %v10382 = vunpack.c.l.b16 %v10250
      %v10383 = vpack.c.b16 %v10320, %v10319
      %v10384 = vpack.c.b16 %v10322, %v10321
      %v10385 = vpack.c.b16 %v10324, %v10323
      %v10386 = vpack.c.b16 %v10326, %v10325
      %v10387 = vpack.c.b16 %v10328, %v10327
      %v10388 = vpack.c.b16 %v10330, %v10329
      %v10389 = vpack.c.b16 %v10332, %v10331
      %v10390 = vpack.c.b16 %v10334, %v10333
      %v10391 = vpack.c.b16 %v10336, %v10335
      %v10392 = vpack.c.b16 %v10338, %v10337
      %v10393 = vpack.c.b16 %v10340, %v10339
      %v10394 = vpack.c.b16 %v10342, %v10341
      %v10395 = vpack.c.b16 %v10344, %v10343
      %v10396 = vpack.c.b16 %v10346, %v10345
      %v10397 = vpack.c.b16 %v10348, %v10347
      %v10398 = vpack.c.b16 %v10350, %v10349
      %v10399 = vpack.c.b16 %v10352, %v10351
      %v10400 = vpack.c.b16 %v10354, %v10353
      %v10401 = vpack.c.b16 %v10356, %v10355
      %v10402 = vpack.c.b16 %v10358, %v10357
      %v10403 = vpack.c.b16 %v10360, %v10359
      %v10404 = vpack.c.b16 %v10362, %v10361
      %v10405 = vpack.c.b16 %v10364, %v10363
      %v10406 = vpack.c.b16 %v10366, %v10365
      %v10407 = vpack.c.b16 %v10368, %v10367
      %v10408 = vpack.c.b16 %v10370, %v10369
      %v10409 = vpack.c.b16 %v10372, %v10371
      %v10410 = vpack.c.b16 %v10374, %v10373
      %v10411 = vpack.c.b16 %v10376, %v10375
      %v10412 = vpack.c.b16 %v10378, %v10377
      %v10413 = vpack.c.b16 %v10380, %v10379
      %v10414 = vpack.c.b16 %v10382, %v10381
      %10447 = vmatpush.bf16.msra.mxu0 %v10390
      %10448 = vmatpush.bf16.msra.mxu0 %v10389
      %10449 = vmatpush.bf16.msra.mxu0 %v10388
      %10450 = vmatpush.bf16.msra.mxu0 %v10387
      %10451 = vmatpush.bf16.msra.mxu0 %v10386
      %10452 = vmatpush.bf16.msra.mxu0 %v10385
      %10453 = vmatpush.bf16.msra.mxu0 %v10384
      %10454 = vmatpush.bf16.msra.mxu0 %v10383
      %10455 = vmatmul.bf16.gmra.mxu0 %v10183
      %v10456 = vpop.f32.mrf.mxu0
      %v10457 = vadd.f32 %v10253, %v10456
      %v10458 = vpop.f32.mrf.mxu0
      %10459 = vdwg.mxu0
      %10460 = vmatpush.bf16.msra.mxu0 %v10398
      %10461 = vmatpush.bf16.msra.mxu0 %v10397
      %10462 = vmatpush.bf16.msra.mxu0 %v10396
      %10463 = vmatpush.bf16.msra.mxu0 %v10395
      %10464 = vmatpush.bf16.msra.mxu0 %v10394
      %10465 = vmatpush.bf16.msra.mxu0 %v10393
      %10466 = vmatpush.bf16.msra.mxu0 %v10392
      %10467 = vmatpush.bf16.msra.mxu0 %v10391
      %10468 = vmatmul.bf16.gmra.mxu0 %v10184
      %v10469 = vpop.f32.mrf.mxu0
      %v10470 = vadd.f32 %v10457, %v10469
      %v10471 = vpop.f32.mrf.mxu0
      %10472 = vdwg.mxu0
      %10473 = vmatpush.bf16.msra.mxu0 %v10406
      %10474 = vmatpush.bf16.msra.mxu0 %v10405
      %10475 = vmatpush.bf16.msra.mxu0 %v10404
      %10476 = vmatpush.bf16.msra.mxu0 %v10403
      %10477 = vmatpush.bf16.msra.mxu0 %v10402
      %10478 = vmatpush.bf16.msra.mxu0 %v10401
      %10479 = vmatpush.bf16.msra.mxu0 %v10400
      %10480 = vmatpush.bf16.msra.mxu0 %v10399
      %10481 = vmatmul.bf16.gmra.mxu0 %v10185
      %v10482 = vpop.f32.mrf.mxu0
      %v10483 = vadd.f32 %v10470, %v10482
      %v10484 = vpop.f32.mrf.mxu0
      %10485 = vdwg.mxu0
      %10486 = vmatpush.bf16.msra.mxu0 %v10414
      %10487 = vmatpush.bf16.msra.mxu0 %v10413
      %10488 = vmatpush.bf16.msra.mxu0 %v10412
      %10489 = vmatpush.bf16.msra.mxu0 %v10411
      %10490 = vmatpush.bf16.msra.mxu0 %v10410
      %10491 = vmatpush.bf16.msra.mxu0 %v10409
      %10492 = vmatpush.bf16.msra.mxu0 %v10408
      %10493 = vmatpush.bf16.msra.mxu0 %v10407
      %10494 = vmatmul.bf16.gmra.mxu0 %v10186
      %v10495 = vpop.f32.mrf.mxu0
      %v10496 = vadd.f32 %v10483, %v10495
      %v10497 = vpop.f32.mrf.mxu0
      %10498 = vdwg.mxu0
      %10499 = vst [vmem:[#allocation28] sm:$0x3] %v10496
    $region129: #{tpu_custom_call.1} parent=1 // pred_fallthru
      _
    // Predicated region
    $region130: #{tpu_custom_call.1} parent=1 // pred_check
      _
    $region131: #{tpu_custom_call.1} parent=1 // pred_check_branch
      %10501 = sbr.rel (0) target = $region133
    $region132: #{tpu_custom_call.1} parent=1 // pred_region
      %10503 = vsyncadd [#allocation6], 0
      %s10505 = sshll.u32 [#allocation28], 4
      %s10506 = int_to_ptr.vmem [resolvable:$true] %s10505
      %s10507 = sshll.u32 %s15, 4
      %s10508 = int_to_ptr.hbm [resolvable:$true] %s10507
      %10510 = dma.vmem_to_hbm [thread:$0]  %s10506, 32, %s10508, [#allocation6]
    $region133: #{tpu_custom_call.1} parent=1 // pred_fallthru
      _
    // Predicated region
    $region134: #{tpu_custom_call.1} parent=1 // pred_check
      _
    $region135: #{tpu_custom_call.1} parent=1 // pred_check_branch
      %10512 = sbr.rel (0) target = $region137
    $region136: #{tpu_custom_call.1} parent=1 // pred_region
      %10514 = dma.done [#allocation6], 32
    $region137: #{tpu_custom_call.1} parent=1 // pred_fallthru
      _
    %10515 = vsyncpa [#allocation5], 1
    %10516 = vsyncpa [#allocation8], 1
    %10517 = vsyncpa [#allocation11], 1
    %10518 = vsyncpa [#allocation14], 1
    %10519 = vsyncpa [#allocation17], 1
    %10520 = vsyncpa [#allocation20], 1
    %10521 = vsyncpa [#allocation23], 1
    %10522 = vsyncpa [#allocation26], 1
    %10523 = vsyncpa [#allocation6], 1

</llo_original>
